<compile_context>
chip_gen: v7x
topology: tpu7x:2x2x1
jax: 0.10.0
libtpu: 0.0.40
codegen_flags: <defaults>
</compile_context>

<pallas_src>
import functools

import jax
import jax.numpy as jnp
from jax import lax
from jax.experimental import pallas as pl
from jax.experimental.pallas import tpu as pltpu


LN_EPS = 1e-5


def _layer_norm(x, gamma, beta):
    mean = jnp.mean(x, axis=-1, keepdims=True)
    var = jnp.mean(jnp.square(x - mean), axis=-1, keepdims=True)
    return (x - mean) * lax.rsqrt(var + LN_EPS) * gamma + beta


# ----------------------------------------------------------------------------
# Single fused kernel: input LN -> L x LSTM -> Linear -> output LN
# ----------------------------------------------------------------------------
def _predictor_fused_kernel(*refs, num_layers, seq_len, batch_pad, hidden):
    """Refs layout:
      inputs : emb (N,E) bf16, ln_in_g (1,E) f32, ln_in_b (1,E) f32,
               [w_ih_t_l (D_in,4H) bf16] * L, [w_hh_t_l (H,4H) bf16] * L,
               [bias_l (1,4H) f32] * L,
               lin_w_t (H,O) bf16, lin_b (1,O) f32, ln_out_g (1,O) f32,
               ln_out_b (1,O) f32
      outputs: out (N,O) f32, h_n (L,Bp,H) f32, c_n (L,Bp,H) f32
      scratch: y (N,H) f32, gates (N,4H) f32, h (Bp,H) f32, c (Bp,H) f32
    with N = seq_len * batch_pad (time-major rows).
    """
    n_in = 3 + 3 * num_layers + 4
    emb_ref, ln_in_g_ref, ln_in_b_ref = refs[0:3]
    w_ih_refs = refs[3:3 + num_layers]
    w_hh_refs = refs[3 + num_layers:3 + 2 * num_layers]
    bias_refs = refs[3 + 2 * num_layers:3 + 3 * num_layers]
    lin_w_ref, lin_b_ref, ln_out_g_ref, ln_out_b_ref = refs[3 + 3 * num_layers:n_in]
    out_ref, hn_ref, cn_ref = refs[n_in:n_in + 3]
    y_s, gates_s, h_s, c_s = refs[n_in + 3:]

    H = hidden
    Bp = batch_pad

    # ---- input LayerNorm (embedding activations read once, cast to bf16) ----
    x = emb_ref[...].astype(jnp.float32)
    x_ln = _layer_norm(x, ln_in_g_ref[...], ln_in_b_ref[...]).astype(jnp.bfloat16)

    for l in range(num_layers):
        # Hoisted input projection: one batched MXU matmul over all timesteps.
        x_in = x_ln if l == 0 else y_s[...].astype(jnp.bfloat16)
        gates_s[...] = (
            jnp.dot(x_in, w_ih_refs[l][...], preferred_element_type=jnp.float32)
            + bias_refs[l][...])

        h_s[...] = jnp.zeros_like(h_s)
        c_s[...] = jnp.zeros_like(c_s)

        w_hh_ref = w_hh_refs[l]

        def step(t, carry=0, _w_hh_ref=w_hh_ref):
            # sublane-aligned time slice (static when unrolled in Python)
            if isinstance(t, int):
                off = t * Bp
            else:
                off = pl.multiple_of(t * Bp, Bp)
            h = h_s[...]
            c = c_s[...]
            gates = gates_s[pl.ds(off, Bp), :] + jnp.dot(
                h.astype(jnp.bfloat16), _w_hh_ref[...],
                preferred_element_type=jnp.float32)
            # PyTorch gate order: i, f, g, o  (128-lane aligned slices)
            i_g = jax.nn.sigmoid(gates[:, 0:H])
            f_g = jax.nn.sigmoid(gates[:, H:2 * H])
            g_g = jnp.tanh(gates[:, 2 * H:3 * H])
            o_g = jax.nn.sigmoid(gates[:, 3 * H:4 * H])
            c_new = f_g * c + i_g * g_g
            h_new = o_g * jnp.tanh(c_new)
            h_s[...] = h_new
            c_s[...] = c_new
            y_s[pl.ds(off, Bp), :] = h_new
            return carry

        # Unrolled recurrence: full unroll for short sequences (gives the
        # scheduler visibility across steps), partial unroll otherwise.
        if seq_len <= 32:
            for t in range(seq_len):
                step(t)
        else:
            lax.fori_loop(0, seq_len, step, 0, unroll=8)

        # final state written once per layer (not every step)
        hn_ref[l] = h_s[...]
        cn_ref[l] = c_s[...]

    # ---- fused Linear + output LayerNorm on the VMEM-resident y ----
    lin = jnp.dot(y_s[...].astype(jnp.bfloat16), lin_w_ref[...],
                  preferred_element_type=jnp.float32) + lin_b_ref[...]
    out_ref[...] = _layer_norm(lin, ln_out_g_ref[...], ln_out_b_ref[...])


def predictor_fused(emb2d, params, *, seq_len, batch_pad):
    """emb2d: (U*Bp, E) bf16 time-major rows -> (out (U*Bp,O), h_n, c_n)."""
    n, _ = emb2d.shape
    lstm_params = params["lstm"]
    L = len(lstm_params)
    H = lstm_params[0]["w_hh_t"].shape[0]
    O = params["lin_w_t"].shape[1]

    args = [emb2d, params["ln_in_g"], params["ln_in_b"]]
    for p in lstm_params:
        args.append(p["w_ih_t"])
    for p in lstm_params:
        args.append(p["w_hh_t"])
    for p in lstm_params:
        args.append(p["bias"])
    args += [params["lin_w_t"], params["lin_b"],
             params["ln_out_g"], params["ln_out_b"]]

    kernel = functools.partial(
        _predictor_fused_kernel, num_layers=L, seq_len=seq_len,
        batch_pad=batch_pad, hidden=H)

    return pl.pallas_call(
        kernel,
        out_shape=(
            jax.ShapeDtypeStruct((n, O), jnp.float32),
            jax.ShapeDtypeStruct((L, batch_pad, H), jnp.float32),
            jax.ShapeDtypeStruct((L, batch_pad, H), jnp.float32),
        ),
        # No grid / no BlockSpecs: single invocation, every operand is the
        # whole array resident in VMEM (no pipeline double-buffering).
        scratch_shapes=[
            pltpu.VMEM((n, H), jnp.float32),            # inter-layer y
            pltpu.VMEM((n, 4 * H), jnp.float32),        # hoisted x@W_ih
            pltpu.VMEM((batch_pad, H), jnp.float32),    # h
            pltpu.VMEM((batch_pad, H), jnp.float32),    # c
        ],
        compiler_params=pltpu.CompilerParams(
            vmem_limit_bytes=48 * 1024 * 1024),
    )(*args)


# ----------------------------------------------------------------------------
# Parameter initialization (deterministic, synthetic; bf16 matmul weights)
# ----------------------------------------------------------------------------
def init_params(key, label_target_size, emb_dim, lstm_hidden, num_layers, out_dim):
    keys = jax.random.split(key, 3)
    p = {
        "embedding": (0.1 * jax.random.normal(
            keys[0], (label_target_size, emb_dim), jnp.float32)).astype(jnp.bfloat16),
        "ln_in_g": jnp.ones((1, emb_dim), jnp.float32),
        "ln_in_b": jnp.zeros((1, emb_dim), jnp.float32),
        "lin_w_t": (0.1 * jax.random.normal(
            keys[1], (lstm_hidden, out_dim), jnp.float32)).astype(jnp.bfloat16),
        "lin_b": 0.01 * jax.random.normal(keys[2], (1, out_dim), jnp.float32),
        "ln_out_g": jnp.ones((1, out_dim), jnp.float32),
        "ln_out_b": jnp.zeros((1, out_dim), jnp.float32),
        "lstm": [],
    }
    for l in range(num_layers):
        d_in = emb_dim if l == 0 else lstm_hidden
        k1, k2, k3 = jax.random.split(jax.random.fold_in(key, 100 + l), 3)
        p["lstm"].append({
            # stored transposed relative to PyTorch: (D, 4H) and (H, 4H), bf16
            "w_ih_t": (0.1 * jax.random.normal(
                k1, (d_in, 4 * lstm_hidden), jnp.float32)).astype(jnp.bfloat16),
            "w_hh_t": (0.1 * jax.random.normal(
                k2, (lstm_hidden, 4 * lstm_hidden), jnp.float32)).astype(jnp.bfloat16),
            # combined b_ih + b_hh of the torch LSTM, kept in f32
            "bias": 0.01 * jax.random.normal(k3, (1, 4 * lstm_hidden), jnp.float32),
        })
    return p


# ----------------------------------------------------------------------------
# Predictor forward (eval mode: both dropouts are identity)
# ----------------------------------------------------------------------------
def predictor_forward(params, tokens, lengths):
    B, U = tokens.shape
    Bp = ((B + 7) // 8) * 8                                  # pad batch to sublanes
    tokens_p = jnp.pad(tokens, ((0, Bp - B), (0, 0)))
    tokens_tb = tokens_p.T                                   # (U, Bp) time-major
    emb = jnp.take(params["embedding"], tokens_tb, axis=0)   # (U, Bp, E) bf16
    # TODO(synk): embedding_dropout / lstm dropout are identity in eval mode.
    E = emb.shape[-1]
    emb2d = emb.reshape(U * Bp, E)

    out2d, h_n, c_n = predictor_fused(emb2d, params, seq_len=U, batch_pad=Bp)

    O = out2d.shape[-1]
    out = out2d.reshape(U, Bp, O)[:, :B, :].transpose(1, 0, 2)   # (B, U, O)

    # torch returns per-layer state permuted to batch-first: (B, 1, H)
    state_out = []
    for l in range(len(params["lstm"])):
        state_out.append([h_n[l, :B][:, None, :], c_n[l, :B][:, None, :]])
    return out, lengths, state_out


if __name__ == "__main__":
    # Small config consistent with the module (128-aligned feature dims).
    B, U = 2, 8
    label_target_size = 32
    symbol_embedding_dim = 128
    lstm_hidden_dim = 128
    num_lstm_layers = 2
    output_dim = 128

    key = jax.random.PRNGKey(0)
    k_tok, k_param = jax.random.split(key)

    tokens = jax.random.randint(k_tok, (B, U), 0, label_target_size, dtype=jnp.int32)
    lengths = jnp.array([U, U - 2], dtype=jnp.int32)

    params = init_params(k_param, label_target_size, symbol_embedding_dim,
                         lstm_hidden_dim, num_lstm_layers, output_dim)

    out, out_lengths, state_out = predictor_forward(params, tokens, lengths)
    jax.block_until_ready(out)
    jax.block_until_ready(out_lengths)
    for s in state_out:
        jax.block_until_ready(s[0])
        jax.block_until_ready(s[1])

    assert out.shape == (B, U, output_dim)
    assert out_lengths.shape == (B,)
    assert len(state_out) == num_lstm_layers
    assert state_out[0][0].shape == (B, 1, lstm_hidden_dim)
    assert state_out[0][1].shape == (B, 1, lstm_hidden_dim)
    assert bool(jnp.all(jnp.isfinite(out)))
    print("KERNEL_OK")
</pallas_src>

<mosaic_0001>
module attributes {stable_mosaic.version = 11 : i64} {
  func.func @_predictor_fused_kernel(%arg0: memref<64x128xbf16, #tpu.memory_space<vmem>>, %arg1: memref<1x128xf32, #tpu.memory_space<vmem>>, %arg2: memref<1x128xf32, #tpu.memory_space<vmem>>, %arg3: memref<128x512xbf16, #tpu.memory_space<vmem>>, %arg4: memref<128x512xbf16, #tpu.memory_space<vmem>>, %arg5: memref<128x512xbf16, #tpu.memory_space<vmem>>, %arg6: memref<128x512xbf16, #tpu.memory_space<vmem>>, %arg7: memref<1x512xf32, #tpu.memory_space<vmem>>, %arg8: memref<1x512xf32, #tpu.memory_space<vmem>>, %arg9: memref<128x128xbf16, #tpu.memory_space<vmem>>, %arg10: memref<1x128xf32, #tpu.memory_space<vmem>>, %arg11: memref<1x128xf32, #tpu.memory_space<vmem>>, %arg12: memref<1x128xf32, #tpu.memory_space<vmem>>, %arg13: memref<64x128xf32, #tpu.memory_space<vmem>>, %arg14: memref<2x8x128xf32, #tpu.memory_space<vmem>>, %arg15: memref<2x8x128xf32, #tpu.memory_space<vmem>>, %arg16: memref<64x128xf32, #tpu.memory_space<vmem>>, %arg17: memref<64x512xf32, #tpu.memory_space<vmem>>, %arg18: memref<8x128xf32, #tpu.memory_space<vmem>>, %arg19: memref<8x128xf32, #tpu.memory_space<vmem>>) attributes {dimension_semantics = [], scalar_prefetch = 0 : i64, scratch_operands = 4 : i64, tpu.core_type = #tpu.core_type<tc>} {
    %c0 = arith.constant 0 : index
    %c0_0 = arith.constant 0 : index
    %0 = vector.load %arg0[%c0, %c0_0] : memref<64x128xbf16, #tpu.memory_space<vmem>>, vector<64x128xbf16>
    %1 = arith.extf %0 : vector<64x128xbf16> to vector<64x128xf32>
    %c0_1 = arith.constant 0 : index
    %c0_2 = arith.constant 0 : index
    %2 = vector.load %arg1[%c0_1, %c0_2] : memref<1x128xf32, #tpu.memory_space<vmem>>, vector<1x128xf32>
    %c0_3 = arith.constant 0 : index
    %c0_4 = arith.constant 0 : index
    %3 = vector.load %arg2[%c0_3, %c0_4] : memref<1x128xf32, #tpu.memory_space<vmem>>, vector<1x128xf32>
    %cst = arith.constant dense<0.000000e+00> : vector<64xf32>
    %4 = vector.multi_reduction <add>, %1, %cst [1] : vector<64x128xf32> to vector<64xf32>
    %5 = vector.shape_cast %4 : vector<64xf32> to vector<64x1xf32>
    %cst_5 = arith.constant 1.280000e+02 : f32
    %6 = vector.broadcast %cst_5 : f32 to vector<64x1xf32>
    %7 = arith.divf %5, %6 : vector<64x1xf32>
    %8 = vector.broadcast %7 : vector<64x1xf32> to vector<64x128xf32>
    %9 = arith.subf %1, %8 : vector<64x128xf32>
    %10 = arith.mulf %9, %9 : vector<64x128xf32>
    %cst_6 = arith.constant dense<0.000000e+00> : vector<64xf32>
    %11 = vector.multi_reduction <add>, %10, %cst_6 [1] : vector<64x128xf32> to vector<64xf32>
    %12 = vector.shape_cast %11 : vector<64xf32> to vector<64x1xf32>
    %cst_7 = arith.constant 1.280000e+02 : f32
    %13 = vector.broadcast %cst_7 : f32 to vector<64x1xf32>
    %14 = arith.divf %12, %13 : vector<64x1xf32>
    %15 = vector.broadcast %7 : vector<64x1xf32> to vector<64x128xf32>
    %16 = arith.subf %1, %15 : vector<64x128xf32>
    %cst_8 = arith.constant 9.99999974E-6 : f32
    %17 = vector.broadcast %cst_8 : f32 to vector<64x1xf32>
    %18 = arith.addf %14, %17 : vector<64x1xf32>
    %19 = math.rsqrt %18 : vector<64x1xf32>
    %20 = vector.broadcast %19 : vector<64x1xf32> to vector<64x128xf32>
    %21 = arith.mulf %16, %20 : vector<64x128xf32>
    %22 = vector.broadcast %2 : vector<1x128xf32> to vector<64x128xf32>
    %23 = arith.mulf %21, %22 : vector<64x128xf32>
    %24 = vector.broadcast %3 : vector<1x128xf32> to vector<64x128xf32>
    %25 = arith.addf %23, %24 : vector<64x128xf32>
    %26 = arith.truncf %25 : vector<64x128xf32> to vector<64x128xbf16>
    %c0_9 = arith.constant 0 : index
    %c0_10 = arith.constant 0 : index
    %27 = vector.load %arg3[%c0_9, %c0_10] : memref<128x512xbf16, #tpu.memory_space<vmem>>, vector<128x512xbf16>
    %cst_11 = arith.constant dense<0.000000e+00> : vector<64x512xf32>
    %28 = tpu.matmul %26, %27, %cst_11 {dimension_numbers = #tpu.dot_dimension_numbers<[1], [0], [0], [1], [0, 0, 1, 1], [], []>} : vector<64x128xbf16>, vector<128x512xbf16>, vector<64x512xf32> -> vector<64x512xf32>
    %c0_12 = arith.constant 0 : index
    %c0_13 = arith.constant 0 : index
    %29 = vector.load %arg7[%c0_12, %c0_13] : memref<1x512xf32, #tpu.memory_space<vmem>>, vector<1x512xf32>
    %30 = vector.broadcast %29 : vector<1x512xf32> to vector<64x512xf32>
    %31 = arith.addf %28, %30 : vector<64x512xf32>
    %c0_14 = arith.constant 0 : index
    %c0_15 = arith.constant 0 : index
    %32 = vector.load %arg17[%c0_14, %c0_15] : memref<64x512xf32, #tpu.memory_space<vmem>>, vector<64x512xf32>
    tpu.vector_store %arg17[%c0_14, %c0_15], %31 {strides = array<i32>} : memref<64x512xf32, #tpu.memory_space<vmem>>, vector<64x512xf32>,
    %cst_16 = arith.constant 0.000000e+00 : f32
    %33 = vector.broadcast %cst_16 : f32 to vector<8x128xf32>
    %c0_17 = arith.constant 0 : index
    %c0_18 = arith.constant 0 : index
    %34 = vector.load %arg18[%c0_17, %c0_18] : memref<8x128xf32, #tpu.memory_space<vmem>>, vector<8x128xf32>
    tpu.vector_store %arg18[%c0_17, %c0_18], %33 {strides = array<i32>} : memref<8x128xf32, #tpu.memory_space<vmem>>, vector<8x128xf32>,
    %cst_19 = arith.constant 0.000000e+00 : f32
    %35 = vector.broadcast %cst_19 : f32 to vector<8x128xf32>
    %c0_20 = arith.constant 0 : index
    %c0_21 = arith.constant 0 : index
    %36 = vector.load %arg19[%c0_20, %c0_21] : memref<8x128xf32, #tpu.memory_space<vmem>>, vector<8x128xf32>
    tpu.vector_store %arg19[%c0_20, %c0_21], %35 {strides = array<i32>} : memref<8x128xf32, #tpu.memory_space<vmem>>, vector<8x128xf32>,
    %c0_22 = arith.constant 0 : index
    %c0_23 = arith.constant 0 : index
    %37 = vector.load %arg18[%c0_22, %c0_23] : memref<8x128xf32, #tpu.memory_space<vmem>>, vector<8x128xf32>
    %c0_24 = arith.constant 0 : index
    %c0_25 = arith.constant 0 : index
    %38 = vector.load %arg19[%c0_24, %c0_25] : memref<8x128xf32, #tpu.memory_space<vmem>>, vector<8x128xf32>
    %c0_26 = arith.constant 0 : index
    %c0_27 = arith.constant 0 : index
    %39 = vector.load %arg17[%c0_26, %c0_27] : memref<64x512xf32, #tpu.memory_space<vmem>>, vector<8x512xf32>
    %40 = arith.truncf %37 : vector<8x128xf32> to vector<8x128xbf16>
    %c0_28 = arith.constant 0 : index
    %c0_29 = arith.constant 0 : index
    %41 = vector.load %arg5[%c0_28, %c0_29] : memref<128x512xbf16, #tpu.memory_space<vmem>>, vector<128x512xbf16>
    %cst_30 = arith.constant dense<0.000000e+00> : vector<8x512xf32>
    %42 = tpu.matmul %40, %41, %cst_30 {dimension_numbers = #tpu.dot_dimension_numbers<[1], [0], [0], [1], [0, 0, 1, 1], [], []>} : vector<8x128xbf16>, vector<128x512xbf16>, vector<8x512xf32> -> vector<8x512xf32>
    %43 = arith.addf %39, %42 : vector<8x512xf32>
    %44 = vector.extract_strided_slice %43 {offsets = [0, 0], sizes = [8, 128], strides = [1, 1]} : vector<8x512xf32> to vector<8x128xf32>
    %45 = arith.negf %44 : vector<8x128xf32>
    %46 = math.exp %45 : vector<8x128xf32>
    %cst_31 = arith.constant 1.000000e+00 : f32
    %47 = vector.broadcast %cst_31 : f32 to vector<8x128xf32>
    %48 = arith.addf %47, %46 : vector<8x128xf32>
    %49 = arith.divf %47, %48 : vector<8x128xf32>
    %50 = vector.extract_strided_slice %43 {offsets = [0, 128], sizes = [8, 128], strides = [1, 1]} : vector<8x512xf32> to vector<8x128xf32>
    %51 = arith.negf %50 : vector<8x128xf32>
    %52 = math.exp %51 : vector<8x128xf32>
    %cst_32 = arith.constant 1.000000e+00 : f32
    %53 = vector.broadcast %cst_32 : f32 to vector<8x128xf32>
    %54 = arith.addf %53, %52 : vector<8x128xf32>
    %55 = arith.divf %53, %54 : vector<8x128xf32>
    %56 = vector.extract_strided_slice %43 {offsets = [0, 256], sizes = [8, 128], strides = [1, 1]} : vector<8x512xf32> to vector<8x128xf32>
    %57 = math.tanh %56 : vector<8x128xf32>
    %58 = vector.extract_strided_slice %43 {offsets = [0, 384], sizes = [8, 128], strides = [1, 1]} : vector<8x512xf32> to vector<8x128xf32>
    %59 = arith.negf %58 : vector<8x128xf32>
    %60 = math.exp %59 : vector<8x128xf32>
    %cst_33 = arith.constant 1.000000e+00 : f32
    %61 = vector.broadcast %cst_33 : f32 to vector<8x128xf32>
    %62 = arith.addf %61, %60 : vector<8x128xf32>
    %63 = arith.divf %61, %62 : vector<8x128xf32>
    %64 = arith.mulf %55, %38 : vector<8x128xf32>
    %65 = arith.mulf %49, %57 : vector<8x128xf32>
    %66 = arith.addf %64, %65 : vector<8x128xf32>
    %67 = math.tanh %66 : vector<8x128xf32>
    %68 = arith.mulf %63, %67 : vector<8x128xf32>
    %c0_34 = arith.constant 0 : index
    %c0_35 = arith.constant 0 : index
    %69 = vector.load %arg18[%c0_34, %c0_35] : memref<8x128xf32, #tpu.memory_space<vmem>>, vector<8x128xf32>
    tpu.vector_store %arg18[%c0_34, %c0_35], %68 {strides = array<i32>} : memref<8x128xf32, #tpu.memory_space<vmem>>, vector<8x128xf32>,
    %c0_36 = arith.constant 0 : index
    %c0_37 = arith.constant 0 : index
    %70 = vector.load %arg19[%c0_36, %c0_37] : memref<8x128xf32, #tpu.memory_space<vmem>>, vector<8x128xf32>
    tpu.vector_store %arg19[%c0_36, %c0_37], %66 {strides = array<i32>} : memref<8x128xf32, #tpu.memory_space<vmem>>, vector<8x128xf32>,
    %c0_38 = arith.constant 0 : index
    %c0_39 = arith.constant 0 : index
    %71 = vector.load %arg16[%c0_38, %c0_39] : memref<64x128xf32, #tpu.memory_space<vmem>>, vector<8x128xf32>
    tpu.vector_store %arg16[%c0_38, %c0_39], %68 {strides = array<i32>} : memref<64x128xf32, #tpu.memory_space<vmem>>, vector<8x128xf32>,
    %c0_40 = arith.constant 0 : index
    %c0_41 = arith.constant 0 : index
    %72 = vector.load %arg18[%c0_40, %c0_41] : memref<8x128xf32, #tpu.memory_space<vmem>>, vector<8x128xf32>
    %c0_42 = arith.constant 0 : index
    %c0_43 = arith.constant 0 : index
    %73 = vector.load %arg19[%c0_42, %c0_43] : memref<8x128xf32, #tpu.memory_space<vmem>>, vector<8x128xf32>
    %c8 = arith.constant 8 : index
    %c0_44 = arith.constant 0 : index
    %74 = vector.load %arg17[%c8, %c0_44] : memref<64x512xf32, #tpu.memory_space<vmem>>, vector<8x512xf32>
    %75 = arith.truncf %72 : vector<8x128xf32> to vector<8x128xbf16>
    %c0_45 = arith.constant 0 : index
    %c0_46 = arith.constant 0 : index
    %76 = vector.load %arg5[%c0_45, %c0_46] : memref<128x512xbf16, #tpu.memory_space<vmem>>, vector<128x512xbf16>
    %cst_47 = arith.constant dense<0.000000e+00> : vector<8x512xf32>
    %77 = tpu.matmul %75, %76, %cst_47 {dimension_numbers = #tpu.dot_dimension_numbers<[1], [0], [0], [1], [0, 0, 1, 1], [], []>} : vector<8x128xbf16>, vector<128x512xbf16>, vector<8x512xf32> -> vector<8x512xf32>
    %78 = arith.addf %74, %77 : vector<8x512xf32>
    %79 = vector.extract_strided_slice %78 {offsets = [0, 0], sizes = [8, 128], strides = [1, 1]} : vector<8x512xf32> to vector<8x128xf32>
    %80 = arith.negf %79 : vector<8x128xf32>
    %81 = math.exp %80 : vector<8x128xf32>
    %cst_48 = arith.constant 1.000000e+00 : f32
    %82 = vector.broadcast %cst_48 : f32 to vector<8x128xf32>
    %83 = arith.addf %82, %81 : vector<8x128xf32>
    %84 = arith.divf %82, %83 : vector<8x128xf32>
    %85 = vector.extract_strided_slice %78 {offsets = [0, 128], sizes = [8, 128], strides = [1, 1]} : vector<8x512xf32> to vector<8x128xf32>
    %86 = arith.negf %85 : vector<8x128xf32>
    %87 = math.exp %86 : vector<8x128xf32>
    %cst_49 = arith.constant 1.000000e+00 : f32
    %88 = vector.broadcast %cst_49 : f32 to vector<8x128xf32>
    %89 = arith.addf %88, %87 : vector<8x128xf32>
    %90 = arith.divf %88, %89 : vector<8x128xf32>
    %91 = vector.extract_strided_slice %78 {offsets = [0, 256], sizes = [8, 128], strides = [1, 1]} : vector<8x512xf32> to vector<8x128xf32>
    %92 = math.tanh %91 : vector<8x128xf32>
    %93 = vector.extract_strided_slice %78 {offsets = [0, 384], sizes = [8, 128], strides = [1, 1]} : vector<8x512xf32> to vector<8x128xf32>
    %94 = arith.negf %93 : vector<8x128xf32>
    %95 = math.exp %94 : vector<8x128xf32>
    %cst_50 = arith.constant 1.000000e+00 : f32
    %96 = vector.broadcast %cst_50 : f32 to vector<8x128xf32>
    %97 = arith.addf %96, %95 : vector<8x128xf32>
    %98 = arith.divf %96, %97 : vector<8x128xf32>
    %99 = arith.mulf %90, %73 : vector<8x128xf32>
    %100 = arith.mulf %84, %92 : vector<8x128xf32>
    %101 = arith.addf %99, %100 : vector<8x128xf32>
    %102 = math.tanh %101 : vector<8x128xf32>
    %103 = arith.mulf %98, %102 : vector<8x128xf32>
    %c0_51 = arith.constant 0 : index
    %c0_52 = arith.constant 0 : index
    %104 = vector.load %arg18[%c0_51, %c0_52] : memref<8x128xf32, #tpu.memory_space<vmem>>, vector<8x128xf32>
    tpu.vector_store %arg18[%c0_51, %c0_52], %103 {strides = array<i32>} : memref<8x128xf32, #tpu.memory_space<vmem>>, vector<8x128xf32>,
    %c0_53 = arith.constant 0 : index
    %c0_54 = arith.constant 0 : index
    %105 = vector.load %arg19[%c0_53, %c0_54] : memref<8x128xf32, #tpu.memory_space<vmem>>, vector<8x128xf32>
    tpu.vector_store %arg19[%c0_53, %c0_54], %101 {strides = array<i32>} : memref<8x128xf32, #tpu.memory_space<vmem>>, vector<8x128xf32>,
    %c8_55 = arith.constant 8 : index
    %c0_56 = arith.constant 0 : index
    %106 = vector.load %arg16[%c8_55, %c0_56] : memref<64x128xf32, #tpu.memory_space<vmem>>, vector<8x128xf32>
    tpu.vector_store %arg16[%c8_55, %c0_56], %103 {strides = array<i32>} : memref<64x128xf32, #tpu.memory_space<vmem>>, vector<8x128xf32>,
    %c0_57 = arith.constant 0 : index
    %c0_58 = arith.constant 0 : index
    %107 = vector.load %arg18[%c0_57, %c0_58] : memref<8x128xf32, #tpu.memory_space<vmem>>, vector<8x128xf32>
    %c0_59 = arith.constant 0 : index
    %c0_60 = arith.constant 0 : index
    %108 = vector.load %arg19[%c0_59, %c0_60] : memref<8x128xf32, #tpu.memory_space<vmem>>, vector<8x128xf32>
    %c16 = arith.constant 16 : index
    %c0_61 = arith.constant 0 : index
    %109 = vector.load %arg17[%c16, %c0_61] : memref<64x512xf32, #tpu.memory_space<vmem>>, vector<8x512xf32>
    %110 = arith.truncf %107 : vector<8x128xf32> to vector<8x128xbf16>
    %c0_62 = arith.constant 0 : index
    %c0_63 = arith.constant 0 : index
    %111 = vector.load %arg5[%c0_62, %c0_63] : memref<128x512xbf16, #tpu.memory_space<vmem>>, vector<128x512xbf16>
    %cst_64 = arith.constant dense<0.000000e+00> : vector<8x512xf32>
    %112 = tpu.matmul %110, %111, %cst_64 {dimension_numbers = #tpu.dot_dimension_numbers<[1], [0], [0], [1], [0, 0, 1, 1], [], []>} : vector<8x128xbf16>, vector<128x512xbf16>, vector<8x512xf32> -> vector<8x512xf32>
    %113 = arith.addf %109, %112 : vector<8x512xf32>
    %114 = vector.extract_strided_slice %113 {offsets = [0, 0], sizes = [8, 128], strides = [1, 1]} : vector<8x512xf32> to vector<8x128xf32>
    %115 = arith.negf %114 : vector<8x128xf32>
    %116 = math.exp %115 : vector<8x128xf32>
    %cst_65 = arith.constant 1.000000e+00 : f32
    %117 = vector.broadcast %cst_65 : f32 to vector<8x128xf32>
    %118 = arith.addf %117, %116 : vector<8x128xf32>
    %119 = arith.divf %117, %118 : vector<8x128xf32>
    %120 = vector.extract_strided_slice %113 {offsets = [0, 128], sizes = [8, 128], strides = [1, 1]} : vector<8x512xf32> to vector<8x128xf32>
    %121 = arith.negf %120 : vector<8x128xf32>
    %122 = math.exp %121 : vector<8x128xf32>
    %cst_66 = arith.constant 1.000000e+00 : f32
    %123 = vector.broadcast %cst_66 : f32 to vector<8x128xf32>
    %124 = arith.addf %123, %122 : vector<8x128xf32>
    %125 = arith.divf %123, %124 : vector<8x128xf32>
    %126 = vector.extract_strided_slice %113 {offsets = [0, 256], sizes = [8, 128], strides = [1, 1]} : vector<8x512xf32> to vector<8x128xf32>
    %127 = math.tanh %126 : vector<8x128xf32>
    %128 = vector.extract_strided_slice %113 {offsets = [0, 384], sizes = [8, 128], strides = [1, 1]} : vector<8x512xf32> to vector<8x128xf32>
    %129 = arith.negf %128 : vector<8x128xf32>
    %130 = math.exp %129 : vector<8x128xf32>
    %cst_67 = arith.constant 1.000000e+00 : f32
    %131 = vector.broadcast %cst_67 : f32 to vector<8x128xf32>
    %132 = arith.addf %131, %130 : vector<8x128xf32>
    %133 = arith.divf %131, %132 : vector<8x128xf32>
    %134 = arith.mulf %125, %108 : vector<8x128xf32>
    %135 = arith.mulf %119, %127 : vector<8x128xf32>
    %136 = arith.addf %134, %135 : vector<8x128xf32>
    %137 = math.tanh %136 : vector<8x128xf32>
    %138 = arith.mulf %133, %137 : vector<8x128xf32>
    %c0_68 = arith.constant 0 : index
    %c0_69 = arith.constant 0 : index
    %139 = vector.load %arg18[%c0_68, %c0_69] : memref<8x128xf32, #tpu.memory_space<vmem>>, vector<8x128xf32>
    tpu.vector_store %arg18[%c0_68, %c0_69], %138 {strides = array<i32>} : memref<8x128xf32, #tpu.memory_space<vmem>>, vector<8x128xf32>,
    %c0_70 = arith.constant 0 : index
    %c0_71 = arith.constant 0 : index
    %140 = vector.load %arg19[%c0_70, %c0_71] : memref<8x128xf32, #tpu.memory_space<vmem>>, vector<8x128xf32>
    tpu.vector_store %arg19[%c0_70, %c0_71], %136 {strides = array<i32>} : memref<8x128xf32, #tpu.memory_space<vmem>>, vector<8x128xf32>,
    %c16_72 = arith.constant 16 : index
    %c0_73 = arith.constant 0 : index
    %141 = vector.load %arg16[%c16_72, %c0_73] : memref<64x128xf32, #tpu.memory_space<vmem>>, vector<8x128xf32>
    tpu.vector_store %arg16[%c16_72, %c0_73], %138 {strides = array<i32>} : memref<64x128xf32, #tpu.memory_space<vmem>>, vector<8x128xf32>,
    %c0_74 = arith.constant 0 : index
    %c0_75 = arith.constant 0 : index
    %142 = vector.load %arg18[%c0_74, %c0_75] : memref<8x128xf32, #tpu.memory_space<vmem>>, vector<8x128xf32>
    %c0_76 = arith.constant 0 : index
    %c0_77 = arith.constant 0 : index
    %143 = vector.load %arg19[%c0_76, %c0_77] : memref<8x128xf32, #tpu.memory_space<vmem>>, vector<8x128xf32>
    %c24 = arith.constant 24 : index
    %c0_78 = arith.constant 0 : index
    %144 = vector.load %arg17[%c24, %c0_78] : memref<64x512xf32, #tpu.memory_space<vmem>>, vector<8x512xf32>
    %145 = arith.truncf %142 : vector<8x128xf32> to vector<8x128xbf16>
    %c0_79 = arith.constant 0 : index
    %c0_80 = arith.constant 0 : index
    %146 = vector.load %arg5[%c0_79, %c0_80] : memref<128x512xbf16, #tpu.memory_space<vmem>>, vector<128x512xbf16>
    %cst_81 = arith.constant dense<0.000000e+00> : vector<8x512xf32>
    %147 = tpu.matmul %145, %146, %cst_81 {dimension_numbers = #tpu.dot_dimension_numbers<[1], [0], [0], [1], [0, 0, 1, 1], [], []>} : vector<8x128xbf16>, vector<128x512xbf16>, vector<8x512xf32> -> vector<8x512xf32>
    %148 = arith.addf %144, %147 : vector<8x512xf32>
    %149 = vector.extract_strided_slice %148 {offsets = [0, 0], sizes = [8, 128], strides = [1, 1]} : vector<8x512xf32> to vector<8x128xf32>
    %150 = arith.negf %149 : vector<8x128xf32>
    %151 = math.exp %150 : vector<8x128xf32>
    %cst_82 = arith.constant 1.000000e+00 : f32
    %152 = vector.broadcast %cst_82 : f32 to vector<8x128xf32>
    %153 = arith.addf %152, %151 : vector<8x128xf32>
    %154 = arith.divf %152, %153 : vector<8x128xf32>
    %155 = vector.extract_strided_slice %148 {offsets = [0, 128], sizes = [8, 128], strides = [1, 1]} : vector<8x512xf32> to vector<8x128xf32>
    %156 = arith.negf %155 : vector<8x128xf32>
    %157 = math.exp %156 : vector<8x128xf32>
    %cst_83 = arith.constant 1.000000e+00 : f32
    %158 = vector.broadcast %cst_83 : f32 to vector<8x128xf32>
    %159 = arith.addf %158, %157 : vector<8x128xf32>
    %160 = arith.divf %158, %159 : vector<8x128xf32>
    %161 = vector.extract_strided_slice %148 {offsets = [0, 256], sizes = [8, 128], strides = [1, 1]} : vector<8x512xf32> to vector<8x128xf32>
    %162 = math.tanh %161 : vector<8x128xf32>
    %163 = vector.extract_strided_slice %148 {offsets = [0, 384], sizes = [8, 128], strides = [1, 1]} : vector<8x512xf32> to vector<8x128xf32>
    %164 = arith.negf %163 : vector<8x128xf32>
    %165 = math.exp %164 : vector<8x128xf32>
    %cst_84 = arith.constant 1.000000e+00 : f32
    %166 = vector.broadcast %cst_84 : f32 to vector<8x128xf32>
    %167 = arith.addf %166, %165 : vector<8x128xf32>
    %168 = arith.divf %166, %167 : vector<8x128xf32>
    %169 = arith.mulf %160, %143 : vector<8x128xf32>
    %170 = arith.mulf %154, %162 : vector<8x128xf32>
    %171 = arith.addf %169, %170 : vector<8x128xf32>
    %172 = math.tanh %171 : vector<8x128xf32>
    %173 = arith.mulf %168, %172 : vector<8x128xf32>
    %c0_85 = arith.constant 0 : index
    %c0_86 = arith.constant 0 : index
    %174 = vector.load %arg18[%c0_85, %c0_86] : memref<8x128xf32, #tpu.memory_space<vmem>>, vector<8x128xf32>
    tpu.vector_store %arg18[%c0_85, %c0_86], %173 {strides = array<i32>} : memref<8x128xf32, #tpu.memory_space<vmem>>, vector<8x128xf32>,
    %c0_87 = arith.constant 0 : index
    %c0_88 = arith.constant 0 : index
    %175 = vector.load %arg19[%c0_87, %c0_88] : memref<8x128xf32, #tpu.memory_space<vmem>>, vector<8x128xf32>
    tpu.vector_store %arg19[%c0_87, %c0_88], %171 {strides = array<i32>} : memref<8x128xf32, #tpu.memory_space<vmem>>, vector<8x128xf32>,
    %c24_89 = arith.constant 24 : index
    %c0_90 = arith.constant 0 : index
    %176 = vector.load %arg16[%c24_89, %c0_90] : memref<64x128xf32, #tpu.memory_space<vmem>>, vector<8x128xf32>
    tpu.vector_store %arg16[%c24_89, %c0_90], %173 {strides = array<i32>} : memref<64x128xf32, #tpu.memory_space<vmem>>, vector<8x128xf32>,
    %c0_91 = arith.constant 0 : index
    %c0_92 = arith.constant 0 : index
    %177 = vector.load %arg18[%c0_91, %c0_92] : memref<8x128xf32, #tpu.memory_space<vmem>>, vector<8x128xf32>
    %c0_93 = arith.constant 0 : index
    %c0_94 = arith.constant 0 : index
    %178 = vector.load %arg19[%c0_93, %c0_94] : memref<8x128xf32, #tpu.memory_space<vmem>>, vector<8x128xf32>
    %c32 = arith.constant 32 : index
    %c0_95 = arith.constant 0 : index
    %179 = vector.load %arg17[%c32, %c0_95] : memref<64x512xf32, #tpu.memory_space<vmem>>, vector<8x512xf32>
    %180 = arith.truncf %177 : vector<8x128xf32> to vector<8x128xbf16>
    %c0_96 = arith.constant 0 : index
    %c0_97 = arith.constant 0 : index
    %181 = vector.load %arg5[%c0_96, %c0_97] : memref<128x512xbf16, #tpu.memory_space<vmem>>, vector<128x512xbf16>
    %cst_98 = arith.constant dense<0.000000e+00> : vector<8x512xf32>
    %182 = tpu.matmul %180, %181, %cst_98 {dimension_numbers = #tpu.dot_dimension_numbers<[1], [0], [0], [1], [0, 0, 1, 1], [], []>} : vector<8x128xbf16>, vector<128x512xbf16>, vector<8x512xf32> -> vector<8x512xf32>
    %183 = arith.addf %179, %182 : vector<8x512xf32>
    %184 = vector.extract_strided_slice %183 {offsets = [0, 0], sizes = [8, 128], strides = [1, 1]} : vector<8x512xf32> to vector<8x128xf32>
    %185 = arith.negf %184 : vector<8x128xf32>
    %186 = math.exp %185 : vector<8x128xf32>
    %cst_99 = arith.constant 1.000000e+00 : f32
    %187 = vector.broadcast %cst_99 : f32 to vector<8x128xf32>
    %188 = arith.addf %187, %186 : vector<8x128xf32>
    %189 = arith.divf %187, %188 : vector<8x128xf32>
    %190 = vector.extract_strided_slice %183 {offsets = [0, 128], sizes = [8, 128], strides = [1, 1]} : vector<8x512xf32> to vector<8x128xf32>
    %191 = arith.negf %190 : vector<8x128xf32>
    %192 = math.exp %191 : vector<8x128xf32>
    %cst_100 = arith.constant 1.000000e+00 : f32
    %193 = vector.broadcast %cst_100 : f32 to vector<8x128xf32>
    %194 = arith.addf %193, %192 : vector<8x128xf32>
    %195 = arith.divf %193, %194 : vector<8x128xf32>
    %196 = vector.extract_strided_slice %183 {offsets = [0, 256], sizes = [8, 128], strides = [1, 1]} : vector<8x512xf32> to vector<8x128xf32>
    %197 = math.tanh %196 : vector<8x128xf32>
    %198 = vector.extract_strided_slice %183 {offsets = [0, 384], sizes = [8, 128], strides = [1, 1]} : vector<8x512xf32> to vector<8x128xf32>
    %199 = arith.negf %198 : vector<8x128xf32>
    %200 = math.exp %199 : vector<8x128xf32>
    %cst_101 = arith.constant 1.000000e+00 : f32
    %201 = vector.broadcast %cst_101 : f32 to vector<8x128xf32>
    %202 = arith.addf %201, %200 : vector<8x128xf32>
    %203 = arith.divf %201, %202 : vector<8x128xf32>
    %204 = arith.mulf %195, %178 : vector<8x128xf32>
    %205 = arith.mulf %189, %197 : vector<8x128xf32>
    %206 = arith.addf %204, %205 : vector<8x128xf32>
    %207 = math.tanh %206 : vector<8x128xf32>
    %208 = arith.mulf %203, %207 : vector<8x128xf32>
    %c0_102 = arith.constant 0 : index
    %c0_103 = arith.constant 0 : index
    %209 = vector.load %arg18[%c0_102, %c0_103] : memref<8x128xf32, #tpu.memory_space<vmem>>, vector<8x128xf32>
    tpu.vector_store %arg18[%c0_102, %c0_103], %208 {strides = array<i32>} : memref<8x128xf32, #tpu.memory_space<vmem>>, vector<8x128xf32>,
    %c0_104 = arith.constant 0 : index
    %c0_105 = arith.constant 0 : index
    %210 = vector.load %arg19[%c0_104, %c0_105] : memref<8x128xf32, #tpu.memory_space<vmem>>, vector<8x128xf32>
    tpu.vector_store %arg19[%c0_104, %c0_105], %206 {strides = array<i32>} : memref<8x128xf32, #tpu.memory_space<vmem>>, vector<8x128xf32>,
    %c32_106 = arith.constant 32 : index
    %c0_107 = arith.constant 0 : index
    %211 = vector.load %arg16[%c32_106, %c0_107] : memref<64x128xf32, #tpu.memory_space<vmem>>, vector<8x128xf32>
    tpu.vector_store %arg16[%c32_106, %c0_107], %208 {strides = array<i32>} : memref<64x128xf32, #tpu.memory_space<vmem>>, vector<8x128xf32>,
    %c0_108 = arith.constant 0 : index
    %c0_109 = arith.constant 0 : index
    %212 = vector.load %arg18[%c0_108, %c0_109] : memref<8x128xf32, #tpu.memory_space<vmem>>, vector<8x128xf32>
    %c0_110 = arith.constant 0 : index
    %c0_111 = arith.constant 0 : index
    %213 = vector.load %arg19[%c0_110, %c0_111] : memref<8x128xf32, #tpu.memory_space<vmem>>, vector<8x128xf32>
    %c40 = arith.constant 40 : index
    %c0_112 = arith.constant 0 : index
    %214 = vector.load %arg17[%c40, %c0_112] : memref<64x512xf32, #tpu.memory_space<vmem>>, vector<8x512xf32>
    %215 = arith.truncf %212 : vector<8x128xf32> to vector<8x128xbf16>
    %c0_113 = arith.constant 0 : index
    %c0_114 = arith.constant 0 : index
    %216 = vector.load %arg5[%c0_113, %c0_114] : memref<128x512xbf16, #tpu.memory_space<vmem>>, vector<128x512xbf16>
    %cst_115 = arith.constant dense<0.000000e+00> : vector<8x512xf32>
    %217 = tpu.matmul %215, %216, %cst_115 {dimension_numbers = #tpu.dot_dimension_numbers<[1], [0], [0], [1], [0, 0, 1, 1], [], []>} : vector<8x128xbf16>, vector<128x512xbf16>, vector<8x512xf32> -> vector<8x512xf32>
    %218 = arith.addf %214, %217 : vector<8x512xf32>
    %219 = vector.extract_strided_slice %218 {offsets = [0, 0], sizes = [8, 128], strides = [1, 1]} : vector<8x512xf32> to vector<8x128xf32>
    %220 = arith.negf %219 : vector<8x128xf32>
    %221 = math.exp %220 : vector<8x128xf32>
    %cst_116 = arith.constant 1.000000e+00 : f32
    %222 = vector.broadcast %cst_116 : f32 to vector<8x128xf32>
    %223 = arith.addf %222, %221 : vector<8x128xf32>
    %224 = arith.divf %222, %223 : vector<8x128xf32>
    %225 = vector.extract_strided_slice %218 {offsets = [0, 128], sizes = [8, 128], strides = [1, 1]} : vector<8x512xf32> to vector<8x128xf32>
    %226 = arith.negf %225 : vector<8x128xf32>
    %227 = math.exp %226 : vector<8x128xf32>
    %cst_117 = arith.constant 1.000000e+00 : f32
    %228 = vector.broadcast %cst_117 : f32 to vector<8x128xf32>
    %229 = arith.addf %228, %227 : vector<8x128xf32>
    %230 = arith.divf %228, %229 : vector<8x128xf32>
    %231 = vector.extract_strided_slice %218 {offsets = [0, 256], sizes = [8, 128], strides = [1, 1]} : vector<8x512xf32> to vector<8x128xf32>
    %232 = math.tanh %231 : vector<8x128xf32>
    %233 = vector.extract_strided_slice %218 {offsets = [0, 384], sizes = [8, 128], strides = [1, 1]} : vector<8x512xf32> to vector<8x128xf32>
    %234 = arith.negf %233 : vector<8x128xf32>
    %235 = math.exp %234 : vector<8x128xf32>
    %cst_118 = arith.constant 1.000000e+00 : f32
    %236 = vector.broadcast %cst_118 : f32 to vector<8x128xf32>
    %237 = arith.addf %236, %235 : vector<8x128xf32>
    %238 = arith.divf %236, %237 : vector<8x128xf32>
    %239 = arith.mulf %230, %213 : vector<8x128xf32>
    %240 = arith.mulf %224, %232 : vector<8x128xf32>
    %241 = arith.addf %239, %240 : vector<8x128xf32>
    %242 = math.tanh %241 : vector<8x128xf32>
    %243 = arith.mulf %238, %242 : vector<8x128xf32>
    %c0_119 = arith.constant 0 : index
    %c0_120 = arith.constant 0 : index
    %244 = vector.load %arg18[%c0_119, %c0_120] : memref<8x128xf32, #tpu.memory_space<vmem>>, vector<8x128xf32>
    tpu.vector_store %arg18[%c0_119, %c0_120], %243 {strides = array<i32>} : memref<8x128xf32, #tpu.memory_space<vmem>>, vector<8x128xf32>,
    %c0_121 = arith.constant 0 : index
    %c0_122 = arith.constant 0 : index
    %245 = vector.load %arg19[%c0_121, %c0_122] : memref<8x128xf32, #tpu.memory_space<vmem>>, vector<8x128xf32>
    tpu.vector_store %arg19[%c0_121, %c0_122], %241 {strides = array<i32>} : memref<8x128xf32, #tpu.memory_space<vmem>>, vector<8x128xf32>,
    %c40_123 = arith.constant 40 : index
    %c0_124 = arith.constant 0 : index
    %246 = vector.load %arg16[%c40_123, %c0_124] : memref<64x128xf32, #tpu.memory_space<vmem>>, vector<8x128xf32>
    tpu.vector_store %arg16[%c40_123, %c0_124], %243 {strides = array<i32>} : memref<64x128xf32, #tpu.memory_space<vmem>>, vector<8x128xf32>,
    %c0_125 = arith.constant 0 : index
    %c0_126 = arith.constant 0 : index
    %247 = vector.load %arg18[%c0_125, %c0_126] : memref<8x128xf32, #tpu.memory_space<vmem>>, vector<8x128xf32>
    %c0_127 = arith.constant 0 : index
    %c0_128 = arith.constant 0 : index
    %248 = vector.load %arg19[%c0_127, %c0_128] : memref<8x128xf32, #tpu.memory_space<vmem>>, vector<8x128xf32>
    %c48 = arith.constant 48 : index
    %c0_129 = arith.constant 0 : index
    %249 = vector.load %arg17[%c48, %c0_129] : memref<64x512xf32, #tpu.memory_space<vmem>>, vector<8x512xf32>
    %250 = arith.truncf %247 : vector<8x128xf32> to vector<8x128xbf16>
    %c0_130 = arith.constant 0 : index
    %c0_131 = arith.constant 0 : index
    %251 = vector.load %arg5[%c0_130, %c0_131] : memref<128x512xbf16, #tpu.memory_space<vmem>>, vector<128x512xbf16>
    %cst_132 = arith.constant dense<0.000000e+00> : vector<8x512xf32>
    %252 = tpu.matmul %250, %251, %cst_132 {dimension_numbers = #tpu.dot_dimension_numbers<[1], [0], [0], [1], [0, 0, 1, 1], [], []>} : vector<8x128xbf16>, vector<128x512xbf16>, vector<8x512xf32> -> vector<8x512xf32>
    %253 = arith.addf %249, %252 : vector<8x512xf32>
    %254 = vector.extract_strided_slice %253 {offsets = [0, 0], sizes = [8, 128], strides = [1, 1]} : vector<8x512xf32> to vector<8x128xf32>
    %255 = arith.negf %254 : vector<8x128xf32>
    %256 = math.exp %255 : vector<8x128xf32>
    %cst_133 = arith.constant 1.000000e+00 : f32
    %257 = vector.broadcast %cst_133 : f32 to vector<8x128xf32>
    %258 = arith.addf %257, %256 : vector<8x128xf32>
    %259 = arith.divf %257, %258 : vector<8x128xf32>
    %260 = vector.extract_strided_slice %253 {offsets = [0, 128], sizes = [8, 128], strides = [1, 1]} : vector<8x512xf32> to vector<8x128xf32>
    %261 = arith.negf %260 : vector<8x128xf32>
    %262 = math.exp %261 : vector<8x128xf32>
    %cst_134 = arith.constant 1.000000e+00 : f32
    %263 = vector.broadcast %cst_134 : f32 to vector<8x128xf32>
    %264 = arith.addf %263, %262 : vector<8x128xf32>
    %265 = arith.divf %263, %264 : vector<8x128xf32>
    %266 = vector.extract_strided_slice %253 {offsets = [0, 256], sizes = [8, 128], strides = [1, 1]} : vector<8x512xf32> to vector<8x128xf32>
    %267 = math.tanh %266 : vector<8x128xf32>
    %268 = vector.extract_strided_slice %253 {offsets = [0, 384], sizes = [8, 128], strides = [1, 1]} : vector<8x512xf32> to vector<8x128xf32>
    %269 = arith.negf %268 : vector<8x128xf32>
    %270 = math.exp %269 : vector<8x128xf32>
    %cst_135 = arith.constant 1.000000e+00 : f32
    %271 = vector.broadcast %cst_135 : f32 to vector<8x128xf32>
    %272 = arith.addf %271, %270 : vector<8x128xf32>
    %273 = arith.divf %271, %272 : vector<8x128xf32>
    %274 = arith.mulf %265, %248 : vector<8x128xf32>
    %275 = arith.mulf %259, %267 : vector<8x128xf32>
    %276 = arith.addf %274, %275 : vector<8x128xf32>
    %277 = math.tanh %276 : vector<8x128xf32>
    %278 = arith.mulf %273, %277 : vector<8x128xf32>
    %c0_136 = arith.constant 0 : index
    %c0_137 = arith.constant 0 : index
    %279 = vector.load %arg18[%c0_136, %c0_137] : memref<8x128xf32, #tpu.memory_space<vmem>>, vector<8x128xf32>
    tpu.vector_store %arg18[%c0_136, %c0_137], %278 {strides = array<i32>} : memref<8x128xf32, #tpu.memory_space<vmem>>, vector<8x128xf32>,
    %c0_138 = arith.constant 0 : index
    %c0_139 = arith.constant 0 : index
    %280 = vector.load %arg19[%c0_138, %c0_139] : memref<8x128xf32, #tpu.memory_space<vmem>>, vector<8x128xf32>
    tpu.vector_store %arg19[%c0_138, %c0_139], %276 {strides = array<i32>} : memref<8x128xf32, #tpu.memory_space<vmem>>, vector<8x128xf32>,
    %c48_140 = arith.constant 48 : index
    %c0_141 = arith.constant 0 : index
    %281 = vector.load %arg16[%c48_140, %c0_141] : memref<64x128xf32, #tpu.memory_space<vmem>>, vector<8x128xf32>
    tpu.vector_store %arg16[%c48_140, %c0_141], %278 {strides = array<i32>} : memref<64x128xf32, #tpu.memory_space<vmem>>, vector<8x128xf32>,
    %c0_142 = arith.constant 0 : index
    %c0_143 = arith.constant 0 : index
    %282 = vector.load %arg18[%c0_142, %c0_143] : memref<8x128xf32, #tpu.memory_space<vmem>>, vector<8x128xf32>
    %c0_144 = arith.constant 0 : index
    %c0_145 = arith.constant 0 : index
    %283 = vector.load %arg19[%c0_144, %c0_145] : memref<8x128xf32, #tpu.memory_space<vmem>>, vector<8x128xf32>
    %c56 = arith.constant 56 : index
    %c0_146 = arith.constant 0 : index
    %284 = vector.load %arg17[%c56, %c0_146] : memref<64x512xf32, #tpu.memory_space<vmem>>, vector<8x512xf32>
    %285 = arith.truncf %282 : vector<8x128xf32> to vector<8x128xbf16>
    %c0_147 = arith.constant 0 : index
    %c0_148 = arith.constant 0 : index
    %286 = vector.load %arg5[%c0_147, %c0_148] : memref<128x512xbf16, #tpu.memory_space<vmem>>, vector<128x512xbf16>
    %cst_149 = arith.constant dense<0.000000e+00> : vector<8x512xf32>
    %287 = tpu.matmul %285, %286, %cst_149 {dimension_numbers = #tpu.dot_dimension_numbers<[1], [0], [0], [1], [0, 0, 1, 1], [], []>} : vector<8x128xbf16>, vector<128x512xbf16>, vector<8x512xf32> -> vector<8x512xf32>
    %288 = arith.addf %284, %287 : vector<8x512xf32>
    %289 = vector.extract_strided_slice %288 {offsets = [0, 0], sizes = [8, 128], strides = [1, 1]} : vector<8x512xf32> to vector<8x128xf32>
    %290 = arith.negf %289 : vector<8x128xf32>
    %291 = math.exp %290 : vector<8x128xf32>
    %cst_150 = arith.constant 1.000000e+00 : f32
    %292 = vector.broadcast %cst_150 : f32 to vector<8x128xf32>
    %293 = arith.addf %292, %291 : vector<8x128xf32>
    %294 = arith.divf %292, %293 : vector<8x128xf32>
    %295 = vector.extract_strided_slice %288 {offsets = [0, 128], sizes = [8, 128], strides = [1, 1]} : vector<8x512xf32> to vector<8x128xf32>
    %296 = arith.negf %295 : vector<8x128xf32>
    %297 = math.exp %296 : vector<8x128xf32>
    %cst_151 = arith.constant 1.000000e+00 : f32
    %298 = vector.broadcast %cst_151 : f32 to vector<8x128xf32>
    %299 = arith.addf %298, %297 : vector<8x128xf32>
    %300 = arith.divf %298, %299 : vector<8x128xf32>
    %301 = vector.extract_strided_slice %288 {offsets = [0, 256], sizes = [8, 128], strides = [1, 1]} : vector<8x512xf32> to vector<8x128xf32>
    %302 = math.tanh %301 : vector<8x128xf32>
    %303 = vector.extract_strided_slice %288 {offsets = [0, 384], sizes = [8, 128], strides = [1, 1]} : vector<8x512xf32> to vector<8x128xf32>
    %304 = arith.negf %303 : vector<8x128xf32>
    %305 = math.exp %304 : vector<8x128xf32>
    %cst_152 = arith.constant 1.000000e+00 : f32
    %306 = vector.broadcast %cst_152 : f32 to vector<8x128xf32>
    %307 = arith.addf %306, %305 : vector<8x128xf32>
    %308 = arith.divf %306, %307 : vector<8x128xf32>
    %309 = arith.mulf %300, %283 : vector<8x128xf32>
    %310 = arith.mulf %294, %302 : vector<8x128xf32>
    %311 = arith.addf %309, %310 : vector<8x128xf32>
    %312 = math.tanh %311 : vector<8x128xf32>
    %313 = arith.mulf %308, %312 : vector<8x128xf32>
    %c0_153 = arith.constant 0 : index
    %c0_154 = arith.constant 0 : index
    %314 = vector.load %arg18[%c0_153, %c0_154] : memref<8x128xf32, #tpu.memory_space<vmem>>, vector<8x128xf32>
    tpu.vector_store %arg18[%c0_153, %c0_154], %313 {strides = array<i32>} : memref<8x128xf32, #tpu.memory_space<vmem>>, vector<8x128xf32>,
    %c0_155 = arith.constant 0 : index
    %c0_156 = arith.constant 0 : index
    %315 = vector.load %arg19[%c0_155, %c0_156] : memref<8x128xf32, #tpu.memory_space<vmem>>, vector<8x128xf32>
    tpu.vector_store %arg19[%c0_155, %c0_156], %311 {strides = array<i32>} : memref<8x128xf32, #tpu.memory_space<vmem>>, vector<8x128xf32>,
    %c56_157 = arith.constant 56 : index
    %c0_158 = arith.constant 0 : index
    %316 = vector.load %arg16[%c56_157, %c0_158] : memref<64x128xf32, #tpu.memory_space<vmem>>, vector<8x128xf32>
    tpu.vector_store %arg16[%c56_157, %c0_158], %313 {strides = array<i32>} : memref<64x128xf32, #tpu.memory_space<vmem>>, vector<8x128xf32>,
    %c0_159 = arith.constant 0 : index
    %c0_160 = arith.constant 0 : index
    %317 = vector.load %arg18[%c0_159, %c0_160] : memref<8x128xf32, #tpu.memory_space<vmem>>, vector<8x128xf32>
    %c0_161 = arith.constant 0 : index
    %c0_162 = arith.constant 0 : index
    %c0_163 = arith.constant 0 : index
    %318 = vector.load %arg14[%c0_161, %c0_162, %c0_163] : memref<2x8x128xf32, #tpu.memory_space<vmem>>, vector<1x8x128xf32>
    %319 = vector.shape_cast %318 : vector<1x8x128xf32> to vector<8x128xf32>
    %320 = vector.shape_cast %317 : vector<8x128xf32> to vector<1x8x128xf32>
    tpu.vector_store %arg14[%c0_161, %c0_162, %c0_163], %320 {strides = array<i32>} : memref<2x8x128xf32, #tpu.memory_space<vmem>>, vector<1x8x128xf32>,
    %c0_164 = arith.constant 0 : index
    %c0_165 = arith.constant 0 : index
    %321 = vector.load %arg19[%c0_164, %c0_165] : memref<8x128xf32, #tpu.memory_space<vmem>>, vector<8x128xf32>
    %c0_166 = arith.constant 0 : index
    %c0_167 = arith.constant 0 : index
    %c0_168 = arith.constant 0 : index
    %322 = vector.load %arg15[%c0_166, %c0_167, %c0_168] : memref<2x8x128xf32, #tpu.memory_space<vmem>>, vector<1x8x128xf32>
    %323 = vector.shape_cast %322 : vector<1x8x128xf32> to vector<8x128xf32>
    %324 = vector.shape_cast %321 : vector<8x128xf32> to vector<1x8x128xf32>
    tpu.vector_store %arg15[%c0_166, %c0_167, %c0_168], %324 {strides = array<i32>} : memref<2x8x128xf32, #tpu.memory_space<vmem>>, vector<1x8x128xf32>,
    %c0_169 = arith.constant 0 : index
    %c0_170 = arith.constant 0 : index
    %325 = vector.load %arg16[%c0_169, %c0_170] : memref<64x128xf32, #tpu.memory_space<vmem>>, vector<64x128xf32>
    %326 = arith.truncf %325 : vector<64x128xf32> to vector<64x128xbf16>
    %c0_171 = arith.constant 0 : index
    %c0_172 = arith.constant 0 : index
    %327 = vector.load %arg4[%c0_171, %c0_172] : memref<128x512xbf16, #tpu.memory_space<vmem>>, vector<128x512xbf16>
    %cst_173 = arith.constant dense<0.000000e+00> : vector<64x512xf32>
    %328 = tpu.matmul %326, %327, %cst_173 {dimension_numbers = #tpu.dot_dimension_numbers<[1], [0], [0], [1], [0, 0, 1, 1], [], []>} : vector<64x128xbf16>, vector<128x512xbf16>, vector<64x512xf32> -> vector<64x512xf32>
    %c0_174 = arith.constant 0 : index
    %c0_175 = arith.constant 0 : index
    %329 = vector.load %arg8[%c0_174, %c0_175] : memref<1x512xf32, #tpu.memory_space<vmem>>, vector<1x512xf32>
    %330 = vector.broadcast %329 : vector<1x512xf32> to vector<64x512xf32>
    %331 = arith.addf %328, %330 : vector<64x512xf32>
    %c0_176 = arith.constant 0 : index
    %c0_177 = arith.constant 0 : index
    %332 = vector.load %arg17[%c0_176, %c0_177] : memref<64x512xf32, #tpu.memory_space<vmem>>, vector<64x512xf32>
    tpu.vector_store %arg17[%c0_176, %c0_177], %331 {strides = array<i32>} : memref<64x512xf32, #tpu.memory_space<vmem>>, vector<64x512xf32>,
    %cst_178 = arith.constant 0.000000e+00 : f32
    %333 = vector.broadcast %cst_178 : f32 to vector<8x128xf32>
    %c0_179 = arith.constant 0 : index
    %c0_180 = arith.constant 0 : index
    %334 = vector.load %arg18[%c0_179, %c0_180] : memref<8x128xf32, #tpu.memory_space<vmem>>, vector<8x128xf32>
    tpu.vector_store %arg18[%c0_179, %c0_180], %333 {strides = array<i32>} : memref<8x128xf32, #tpu.memory_space<vmem>>, vector<8x128xf32>,
    %cst_181 = arith.constant 0.000000e+00 : f32
    %335 = vector.broadcast %cst_181 : f32 to vector<8x128xf32>
    %c0_182 = arith.constant 0 : index
    %c0_183 = arith.constant 0 : index
    %336 = vector.load %arg19[%c0_182, %c0_183] : memref<8x128xf32, #tpu.memory_space<vmem>>, vector<8x128xf32>
    tpu.vector_store %arg19[%c0_182, %c0_183], %335 {strides = array<i32>} : memref<8x128xf32, #tpu.memory_space<vmem>>, vector<8x128xf32>,
    %c0_184 = arith.constant 0 : index
    %c0_185 = arith.constant 0 : index
    %337 = vector.load %arg18[%c0_184, %c0_185] : memref<8x128xf32, #tpu.memory_space<vmem>>, vector<8x128xf32>
    %c0_186 = arith.constant 0 : index
    %c0_187 = arith.constant 0 : index
    %338 = vector.load %arg19[%c0_186, %c0_187] : memref<8x128xf32, #tpu.memory_space<vmem>>, vector<8x128xf32>
    %c0_188 = arith.constant 0 : index
    %c0_189 = arith.constant 0 : index
    %339 = vector.load %arg17[%c0_188, %c0_189] : memref<64x512xf32, #tpu.memory_space<vmem>>, vector<8x512xf32>
    %340 = arith.truncf %337 : vector<8x128xf32> to vector<8x128xbf16>
    %c0_190 = arith.constant 0 : index
    %c0_191 = arith.constant 0 : index
    %341 = vector.load %arg6[%c0_190, %c0_191] : memref<128x512xbf16, #tpu.memory_space<vmem>>, vector<128x512xbf16>
    %cst_192 = arith.constant dense<0.000000e+00> : vector<8x512xf32>
    %342 = tpu.matmul %340, %341, %cst_192 {dimension_numbers = #tpu.dot_dimension_numbers<[1], [0], [0], [1], [0, 0, 1, 1], [], []>} : vector<8x128xbf16>, vector<128x512xbf16>, vector<8x512xf32> -> vector<8x512xf32>
    %343 = arith.addf %339, %342 : vector<8x512xf32>
    %344 = vector.extract_strided_slice %343 {offsets = [0, 0], sizes = [8, 128], strides = [1, 1]} : vector<8x512xf32> to vector<8x128xf32>
    %345 = arith.negf %344 : vector<8x128xf32>
    %346 = math.exp %345 : vector<8x128xf32>
    %cst_193 = arith.constant 1.000000e+00 : f32
    %347 = vector.broadcast %cst_193 : f32 to vector<8x128xf32>
    %348 = arith.addf %347, %346 : vector<8x128xf32>
    %349 = arith.divf %347, %348 : vector<8x128xf32>
    %350 = vector.extract_strided_slice %343 {offsets = [0, 128], sizes = [8, 128], strides = [1, 1]} : vector<8x512xf32> to vector<8x128xf32>
    %351 = arith.negf %350 : vector<8x128xf32>
    %352 = math.exp %351 : vector<8x128xf32>
    %cst_194 = arith.constant 1.000000e+00 : f32
    %353 = vector.broadcast %cst_194 : f32 to vector<8x128xf32>
    %354 = arith.addf %353, %352 : vector<8x128xf32>
    %355 = arith.divf %353, %354 : vector<8x128xf32>
    %356 = vector.extract_strided_slice %343 {offsets = [0, 256], sizes = [8, 128], strides = [1, 1]} : vector<8x512xf32> to vector<8x128xf32>
    %357 = math.tanh %356 : vector<8x128xf32>
    %358 = vector.extract_strided_slice %343 {offsets = [0, 384], sizes = [8, 128], strides = [1, 1]} : vector<8x512xf32> to vector<8x128xf32>
    %359 = arith.negf %358 : vector<8x128xf32>
    %360 = math.exp %359 : vector<8x128xf32>
    %cst_195 = arith.constant 1.000000e+00 : f32
    %361 = vector.broadcast %cst_195 : f32 to vector<8x128xf32>
    %362 = arith.addf %361, %360 : vector<8x128xf32>
    %363 = arith.divf %361, %362 : vector<8x128xf32>
    %364 = arith.mulf %355, %338 : vector<8x128xf32>
    %365 = arith.mulf %349, %357 : vector<8x128xf32>
    %366 = arith.addf %364, %365 : vector<8x128xf32>
    %367 = math.tanh %366 : vector<8x128xf32>
    %368 = arith.mulf %363, %367 : vector<8x128xf32>
    %c0_196 = arith.constant 0 : index
    %c0_197 = arith.constant 0 : index
    %369 = vector.load %arg18[%c0_196, %c0_197] : memref<8x128xf32, #tpu.memory_space<vmem>>, vector<8x128xf32>
    tpu.vector_store %arg18[%c0_196, %c0_197], %368 {strides = array<i32>} : memref<8x128xf32, #tpu.memory_space<vmem>>, vector<8x128xf32>,
    %c0_198 = arith.constant 0 : index
    %c0_199 = arith.constant 0 : index
    %370 = vector.load %arg19[%c0_198, %c0_199] : memref<8x128xf32, #tpu.memory_space<vmem>>, vector<8x128xf32>
    tpu.vector_store %arg19[%c0_198, %c0_199], %366 {strides = array<i32>} : memref<8x128xf32, #tpu.memory_space<vmem>>, vector<8x128xf32>,
    %c0_200 = arith.constant 0 : index
    %c0_201 = arith.constant 0 : index
    %371 = vector.load %arg16[%c0_200, %c0_201] : memref<64x128xf32, #tpu.memory_space<vmem>>, vector<8x128xf32>
    tpu.vector_store %arg16[%c0_200, %c0_201], %368 {strides = array<i32>} : memref<64x128xf32, #tpu.memory_space<vmem>>, vector<8x128xf32>,
    %c0_202 = arith.constant 0 : index
    %c0_203 = arith.constant 0 : index
    %372 = vector.load %arg18[%c0_202, %c0_203] : memref<8x128xf32, #tpu.memory_space<vmem>>, vector<8x128xf32>
    %c0_204 = arith.constant 0 : index
    %c0_205 = arith.constant 0 : index
    %373 = vector.load %arg19[%c0_204, %c0_205] : memref<8x128xf32, #tpu.memory_space<vmem>>, vector<8x128xf32>
    %c8_206 = arith.constant 8 : index
    %c0_207 = arith.constant 0 : index
    %374 = vector.load %arg17[%c8_206, %c0_207] : memref<64x512xf32, #tpu.memory_space<vmem>>, vector<8x512xf32>
    %375 = arith.truncf %372 : vector<8x128xf32> to vector<8x128xbf16>
    %c0_208 = arith.constant 0 : index
    %c0_209 = arith.constant 0 : index
    %376 = vector.load %arg6[%c0_208, %c0_209] : memref<128x512xbf16, #tpu.memory_space<vmem>>, vector<128x512xbf16>
    %cst_210 = arith.constant dense<0.000000e+00> : vector<8x512xf32>
    %377 = tpu.matmul %375, %376, %cst_210 {dimension_numbers = #tpu.dot_dimension_numbers<[1], [0], [0], [1], [0, 0, 1, 1], [], []>} : vector<8x128xbf16>, vector<128x512xbf16>, vector<8x512xf32> -> vector<8x512xf32>
    %378 = arith.addf %374, %377 : vector<8x512xf32>
    %379 = vector.extract_strided_slice %378 {offsets = [0, 0], sizes = [8, 128], strides = [1, 1]} : vector<8x512xf32> to vector<8x128xf32>
    %380 = arith.negf %379 : vector<8x128xf32>
    %381 = math.exp %380 : vector<8x128xf32>
    %cst_211 = arith.constant 1.000000e+00 : f32
    %382 = vector.broadcast %cst_211 : f32 to vector<8x128xf32>
    %383 = arith.addf %382, %381 : vector<8x128xf32>
    %384 = arith.divf %382, %383 : vector<8x128xf32>
    %385 = vector.extract_strided_slice %378 {offsets = [0, 128], sizes = [8, 128], strides = [1, 1]} : vector<8x512xf32> to vector<8x128xf32>
    %386 = arith.negf %385 : vector<8x128xf32>
    %387 = math.exp %386 : vector<8x128xf32>
    %cst_212 = arith.constant 1.000000e+00 : f32
    %388 = vector.broadcast %cst_212 : f32 to vector<8x128xf32>
    %389 = arith.addf %388, %387 : vector<8x128xf32>
    %390 = arith.divf %388, %389 : vector<8x128xf32>
    %391 = vector.extract_strided_slice %378 {offsets = [0, 256], sizes = [8, 128], strides = [1, 1]} : vector<8x512xf32> to vector<8x128xf32>
    %392 = math.tanh %391 : vector<8x128xf32>
    %393 = vector.extract_strided_slice %378 {offsets = [0, 384], sizes = [8, 128], strides = [1, 1]} : vector<8x512xf32> to vector<8x128xf32>
    %394 = arith.negf %393 : vector<8x128xf32>
    %395 = math.exp %394 : vector<8x128xf32>
    %cst_213 = arith.constant 1.000000e+00 : f32
    %396 = vector.broadcast %cst_213 : f32 to vector<8x128xf32>
    %397 = arith.addf %396, %395 : vector<8x128xf32>
    %398 = arith.divf %396, %397 : vector<8x128xf32>
    %399 = arith.mulf %390, %373 : vector<8x128xf32>
    %400 = arith.mulf %384, %392 : vector<8x128xf32>
    %401 = arith.addf %399, %400 : vector<8x128xf32>
    %402 = math.tanh %401 : vector<8x128xf32>
    %403 = arith.mulf %398, %402 : vector<8x128xf32>
    %c0_214 = arith.constant 0 : index
    %c0_215 = arith.constant 0 : index
    %404 = vector.load %arg18[%c0_214, %c0_215] : memref<8x128xf32, #tpu.memory_space<vmem>>, vector<8x128xf32>
    tpu.vector_store %arg18[%c0_214, %c0_215], %403 {strides = array<i32>} : memref<8x128xf32, #tpu.memory_space<vmem>>, vector<8x128xf32>,
    %c0_216 = arith.constant 0 : index
    %c0_217 = arith.constant 0 : index
    %405 = vector.load %arg19[%c0_216, %c0_217] : memref<8x128xf32, #tpu.memory_space<vmem>>, vector<8x128xf32>
    tpu.vector_store %arg19[%c0_216, %c0_217], %401 {strides = array<i32>} : memref<8x128xf32, #tpu.memory_space<vmem>>, vector<8x128xf32>,
    %c8_218 = arith.constant 8 : index
    %c0_219 = arith.constant 0 : index
    %406 = vector.load %arg16[%c8_218, %c0_219] : memref<64x128xf32, #tpu.memory_space<vmem>>, vector<8x128xf32>
    tpu.vector_store %arg16[%c8_218, %c0_219], %403 {strides = array<i32>} : memref<64x128xf32, #tpu.memory_space<vmem>>, vector<8x128xf32>,
    %c0_220 = arith.constant 0 : index
    %c0_221 = arith.constant 0 : index
    %407 = vector.load %arg18[%c0_220, %c0_221] : memref<8x128xf32, #tpu.memory_space<vmem>>, vector<8x128xf32>
    %c0_222 = arith.constant 0 : index
    %c0_223 = arith.constant 0 : index
    %408 = vector.load %arg19[%c0_222, %c0_223] : memref<8x128xf32, #tpu.memory_space<vmem>>, vector<8x128xf32>
    %c16_224 = arith.constant 16 : index
    %c0_225 = arith.constant 0 : index
    %409 = vector.load %arg17[%c16_224, %c0_225] : memref<64x512xf32, #tpu.memory_space<vmem>>, vector<8x512xf32>
    %410 = arith.truncf %407 : vector<8x128xf32> to vector<8x128xbf16>
    %c0_226 = arith.constant 0 : index
    %c0_227 = arith.constant 0 : index
    %411 = vector.load %arg6[%c0_226, %c0_227] : memref<128x512xbf16, #tpu.memory_space<vmem>>, vector<128x512xbf16>
    %cst_228 = arith.constant dense<0.000000e+00> : vector<8x512xf32>
    %412 = tpu.matmul %410, %411, %cst_228 {dimension_numbers = #tpu.dot_dimension_numbers<[1], [0], [0], [1], [0, 0, 1, 1], [], []>} : vector<8x128xbf16>, vector<128x512xbf16>, vector<8x512xf32> -> vector<8x512xf32>
    %413 = arith.addf %409, %412 : vector<8x512xf32>
    %414 = vector.extract_strided_slice %413 {offsets = [0, 0], sizes = [8, 128], strides = [1, 1]} : vector<8x512xf32> to vector<8x128xf32>
    %415 = arith.negf %414 : vector<8x128xf32>
    %416 = math.exp %415 : vector<8x128xf32>
    %cst_229 = arith.constant 1.000000e+00 : f32
    %417 = vector.broadcast %cst_229 : f32 to vector<8x128xf32>
    %418 = arith.addf %417, %416 : vector<8x128xf32>
    %419 = arith.divf %417, %418 : vector<8x128xf32>
    %420 = vector.extract_strided_slice %413 {offsets = [0, 128], sizes = [8, 128], strides = [1, 1]} : vector<8x512xf32> to vector<8x128xf32>
    %421 = arith.negf %420 : vector<8x128xf32>
    %422 = math.exp %421 : vector<8x128xf32>
    %cst_230 = arith.constant 1.000000e+00 : f32
    %423 = vector.broadcast %cst_230 : f32 to vector<8x128xf32>
    %424 = arith.addf %423, %422 : vector<8x128xf32>
    %425 = arith.divf %423, %424 : vector<8x128xf32>
    %426 = vector.extract_strided_slice %413 {offsets = [0, 256], sizes = [8, 128], strides = [1, 1]} : vector<8x512xf32> to vector<8x128xf32>
    %427 = math.tanh %426 : vector<8x128xf32>
    %428 = vector.extract_strided_slice %413 {offsets = [0, 384], sizes = [8, 128], strides = [1, 1]} : vector<8x512xf32> to vector<8x128xf32>
    %429 = arith.negf %428 : vector<8x128xf32>
    %430 = math.exp %429 : vector<8x128xf32>
    %cst_231 = arith.constant 1.000000e+00 : f32
    %431 = vector.broadcast %cst_231 : f32 to vector<8x128xf32>
    %432 = arith.addf %431, %430 : vector<8x128xf32>
    %433 = arith.divf %431, %432 : vector<8x128xf32>
    %434 = arith.mulf %425, %408 : vector<8x128xf32>
    %435 = arith.mulf %419, %427 : vector<8x128xf32>
    %436 = arith.addf %434, %435 : vector<8x128xf32>
    %437 = math.tanh %436 : vector<8x128xf32>
    %438 = arith.mulf %433, %437 : vector<8x128xf32>
    %c0_232 = arith.constant 0 : index
    %c0_233 = arith.constant 0 : index
    %439 = vector.load %arg18[%c0_232, %c0_233] : memref<8x128xf32, #tpu.memory_space<vmem>>, vector<8x128xf32>
    tpu.vector_store %arg18[%c0_232, %c0_233], %438 {strides = array<i32>} : memref<8x128xf32, #tpu.memory_space<vmem>>, vector<8x128xf32>,
    %c0_234 = arith.constant 0 : index
    %c0_235 = arith.constant 0 : index
    %440 = vector.load %arg19[%c0_234, %c0_235] : memref<8x128xf32, #tpu.memory_space<vmem>>, vector<8x128xf32>
    tpu.vector_store %arg19[%c0_234, %c0_235], %436 {strides = array<i32>} : memref<8x128xf32, #tpu.memory_space<vmem>>, vector<8x128xf32>,
    %c16_236 = arith.constant 16 : index
    %c0_237 = arith.constant 0 : index
    %441 = vector.load %arg16[%c16_236, %c0_237] : memref<64x128xf32, #tpu.memory_space<vmem>>, vector<8x128xf32>
    tpu.vector_store %arg16[%c16_236, %c0_237], %438 {strides = array<i32>} : memref<64x128xf32, #tpu.memory_space<vmem>>, vector<8x128xf32>,
    %c0_238 = arith.constant 0 : index
    %c0_239 = arith.constant 0 : index
    %442 = vector.load %arg18[%c0_238, %c0_239] : memref<8x128xf32, #tpu.memory_space<vmem>>, vector<8x128xf32>
    %c0_240 = arith.constant 0 : index
    %c0_241 = arith.constant 0 : index
    %443 = vector.load %arg19[%c0_240, %c0_241] : memref<8x128xf32, #tpu.memory_space<vmem>>, vector<8x128xf32>
    %c24_242 = arith.constant 24 : index
    %c0_243 = arith.constant 0 : index
    %444 = vector.load %arg17[%c24_242, %c0_243] : memref<64x512xf32, #tpu.memory_space<vmem>>, vector<8x512xf32>
    %445 = arith.truncf %442 : vector<8x128xf32> to vector<8x128xbf16>
    %c0_244 = arith.constant 0 : index
    %c0_245 = arith.constant 0 : index
    %446 = vector.load %arg6[%c0_244, %c0_245] : memref<128x512xbf16, #tpu.memory_space<vmem>>, vector<128x512xbf16>
    %cst_246 = arith.constant dense<0.000000e+00> : vector<8x512xf32>
    %447 = tpu.matmul %445, %446, %cst_246 {dimension_numbers = #tpu.dot_dimension_numbers<[1], [0], [0], [1], [0, 0, 1, 1], [], []>} : vector<8x128xbf16>, vector<128x512xbf16>, vector<8x512xf32> -> vector<8x512xf32>
    %448 = arith.addf %444, %447 : vector<8x512xf32>
    %449 = vector.extract_strided_slice %448 {offsets = [0, 0], sizes = [8, 128], strides = [1, 1]} : vector<8x512xf32> to vector<8x128xf32>
    %450 = arith.negf %449 : vector<8x128xf32>
    %451 = math.exp %450 : vector<8x128xf32>
    %cst_247 = arith.constant 1.000000e+00 : f32
    %452 = vector.broadcast %cst_247 : f32 to vector<8x128xf32>
    %453 = arith.addf %452, %451 : vector<8x128xf32>
    %454 = arith.divf %452, %453 : vector<8x128xf32>
    %455 = vector.extract_strided_slice %448 {offsets = [0, 128], sizes = [8, 128], strides = [1, 1]} : vector<8x512xf32> to vector<8x128xf32>
    %456 = arith.negf %455 : vector<8x128xf32>
    %457 = math.exp %456 : vector<8x128xf32>
    %cst_248 = arith.constant 1.000000e+00 : f32
    %458 = vector.broadcast %cst_248 : f32 to vector<8x128xf32>
    %459 = arith.addf %458, %457 : vector<8x128xf32>
    %460 = arith.divf %458, %459 : vector<8x128xf32>
    %461 = vector.extract_strided_slice %448 {offsets = [0, 256], sizes = [8, 128], strides = [1, 1]} : vector<8x512xf32> to vector<8x128xf32>
    %462 = math.tanh %461 : vector<8x128xf32>
    %463 = vector.extract_strided_slice %448 {offsets = [0, 384], sizes = [8, 128], strides = [1, 1]} : vector<8x512xf32> to vector<8x128xf32>
    %464 = arith.negf %463 : vector<8x128xf32>
    %465 = math.exp %464 : vector<8x128xf32>
    %cst_249 = arith.constant 1.000000e+00 : f32
    %466 = vector.broadcast %cst_249 : f32 to vector<8x128xf32>
    %467 = arith.addf %466, %465 : vector<8x128xf32>
    %468 = arith.divf %466, %467 : vector<8x128xf32>
    %469 = arith.mulf %460, %443 : vector<8x128xf32>
    %470 = arith.mulf %454, %462 : vector<8x128xf32>
    %471 = arith.addf %469, %470 : vector<8x128xf32>
    %472 = math.tanh %471 : vector<8x128xf32>
    %473 = arith.mulf %468, %472 : vector<8x128xf32>
    %c0_250 = arith.constant 0 : index
    %c0_251 = arith.constant 0 : index
    %474 = vector.load %arg18[%c0_250, %c0_251] : memref<8x128xf32, #tpu.memory_space<vmem>>, vector<8x128xf32>
    tpu.vector_store %arg18[%c0_250, %c0_251], %473 {strides = array<i32>} : memref<8x128xf32, #tpu.memory_space<vmem>>, vector<8x128xf32>,
    %c0_252 = arith.constant 0 : index
    %c0_253 = arith.constant 0 : index
    %475 = vector.load %arg19[%c0_252, %c0_253] : memref<8x128xf32, #tpu.memory_space<vmem>>, vector<8x128xf32>
    tpu.vector_store %arg19[%c0_252, %c0_253], %471 {strides = array<i32>} : memref<8x128xf32, #tpu.memory_space<vmem>>, vector<8x128xf32>,
    %c24_254 = arith.constant 24 : index
    %c0_255 = arith.constant 0 : index
    %476 = vector.load %arg16[%c24_254, %c0_255] : memref<64x128xf32, #tpu.memory_space<vmem>>, vector<8x128xf32>
    tpu.vector_store %arg16[%c24_254, %c0_255], %473 {strides = array<i32>} : memref<64x128xf32, #tpu.memory_space<vmem>>, vector<8x128xf32>,
    %c0_256 = arith.constant 0 : index
    %c0_257 = arith.constant 0 : index
    %477 = vector.load %arg18[%c0_256, %c0_257] : memref<8x128xf32, #tpu.memory_space<vmem>>, vector<8x128xf32>
    %c0_258 = arith.constant 0 : index
    %c0_259 = arith.constant 0 : index
    %478 = vector.load %arg19[%c0_258, %c0_259] : memref<8x128xf32, #tpu.memory_space<vmem>>, vector<8x128xf32>
    %c32_260 = arith.constant 32 : index
    %c0_261 = arith.constant 0 : index
    %479 = vector.load %arg17[%c32_260, %c0_261] : memref<64x512xf32, #tpu.memory_space<vmem>>, vector<8x512xf32>
    %480 = arith.truncf %477 : vector<8x128xf32> to vector<8x128xbf16>
    %c0_262 = arith.constant 0 : index
    %c0_263 = arith.constant 0 : index
    %481 = vector.load %arg6[%c0_262, %c0_263] : memref<128x512xbf16, #tpu.memory_space<vmem>>, vector<128x512xbf16>
    %cst_264 = arith.constant dense<0.000000e+00> : vector<8x512xf32>
    %482 = tpu.matmul %480, %481, %cst_264 {dimension_numbers = #tpu.dot_dimension_numbers<[1], [0], [0], [1], [0, 0, 1, 1], [], []>} : vector<8x128xbf16>, vector<128x512xbf16>, vector<8x512xf32> -> vector<8x512xf32>
    %483 = arith.addf %479, %482 : vector<8x512xf32>
    %484 = vector.extract_strided_slice %483 {offsets = [0, 0], sizes = [8, 128], strides = [1, 1]} : vector<8x512xf32> to vector<8x128xf32>
    %485 = arith.negf %484 : vector<8x128xf32>
    %486 = math.exp %485 : vector<8x128xf32>
    %cst_265 = arith.constant 1.000000e+00 : f32
    %487 = vector.broadcast %cst_265 : f32 to vector<8x128xf32>
    %488 = arith.addf %487, %486 : vector<8x128xf32>
    %489 = arith.divf %487, %488 : vector<8x128xf32>
    %490 = vector.extract_strided_slice %483 {offsets = [0, 128], sizes = [8, 128], strides = [1, 1]} : vector<8x512xf32> to vector<8x128xf32>
    %491 = arith.negf %490 : vector<8x128xf32>
    %492 = math.exp %491 : vector<8x128xf32>
    %cst_266 = arith.constant 1.000000e+00 : f32
    %493 = vector.broadcast %cst_266 : f32 to vector<8x128xf32>
    %494 = arith.addf %493, %492 : vector<8x128xf32>
    %495 = arith.divf %493, %494 : vector<8x128xf32>
    %496 = vector.extract_strided_slice %483 {offsets = [0, 256], sizes = [8, 128], strides = [1, 1]} : vector<8x512xf32> to vector<8x128xf32>
    %497 = math.tanh %496 : vector<8x128xf32>
    %498 = vector.extract_strided_slice %483 {offsets = [0, 384], sizes = [8, 128], strides = [1, 1]} : vector<8x512xf32> to vector<8x128xf32>
    %499 = arith.negf %498 : vector<8x128xf32>
    %500 = math.exp %499 : vector<8x128xf32>
    %cst_267 = arith.constant 1.000000e+00 : f32
    %501 = vector.broadcast %cst_267 : f32 to vector<8x128xf32>
    %502 = arith.addf %501, %500 : vector<8x128xf32>
    %503 = arith.divf %501, %502 : vector<8x128xf32>
    %504 = arith.mulf %495, %478 : vector<8x128xf32>
    %505 = arith.mulf %489, %497 : vector<8x128xf32>
    %506 = arith.addf %504, %505 : vector<8x128xf32>
    %507 = math.tanh %506 : vector<8x128xf32>
    %508 = arith.mulf %503, %507 : vector<8x128xf32>
    %c0_268 = arith.constant 0 : index
    %c0_269 = arith.constant 0 : index
    %509 = vector.load %arg18[%c0_268, %c0_269] : memref<8x128xf32, #tpu.memory_space<vmem>>, vector<8x128xf32>
    tpu.vector_store %arg18[%c0_268, %c0_269], %508 {strides = array<i32>} : memref<8x128xf32, #tpu.memory_space<vmem>>, vector<8x128xf32>,
    %c0_270 = arith.constant 0 : index
    %c0_271 = arith.constant 0 : index
    %510 = vector.load %arg19[%c0_270, %c0_271] : memref<8x128xf32, #tpu.memory_space<vmem>>, vector<8x128xf32>
    tpu.vector_store %arg19[%c0_270, %c0_271], %506 {strides = array<i32>} : memref<8x128xf32, #tpu.memory_space<vmem>>, vector<8x128xf32>,
    %c32_272 = arith.constant 32 : index
    %c0_273 = arith.constant 0 : index
    %511 = vector.load %arg16[%c32_272, %c0_273] : memref<64x128xf32, #tpu.memory_space<vmem>>, vector<8x128xf32>
    tpu.vector_store %arg16[%c32_272, %c0_273], %508 {strides = array<i32>} : memref<64x128xf32, #tpu.memory_space<vmem>>, vector<8x128xf32>,
    %c0_274 = arith.constant 0 : index
    %c0_275 = arith.constant 0 : index
    %512 = vector.load %arg18[%c0_274, %c0_275] : memref<8x128xf32, #tpu.memory_space<vmem>>, vector<8x128xf32>
    %c0_276 = arith.constant 0 : index
    %c0_277 = arith.constant 0 : index
    %513 = vector.load %arg19[%c0_276, %c0_277] : memref<8x128xf32, #tpu.memory_space<vmem>>, vector<8x128xf32>
    %c40_278 = arith.constant 40 : index
    %c0_279 = arith.constant 0 : index
    %514 = vector.load %arg17[%c40_278, %c0_279] : memref<64x512xf32, #tpu.memory_space<vmem>>, vector<8x512xf32>
    %515 = arith.truncf %512 : vector<8x128xf32> to vector<8x128xbf16>
    %c0_280 = arith.constant 0 : index
    %c0_281 = arith.constant 0 : index
    %516 = vector.load %arg6[%c0_280, %c0_281] : memref<128x512xbf16, #tpu.memory_space<vmem>>, vector<128x512xbf16>
    %cst_282 = arith.constant dense<0.000000e+00> : vector<8x512xf32>
    %517 = tpu.matmul %515, %516, %cst_282 {dimension_numbers = #tpu.dot_dimension_numbers<[1], [0], [0], [1], [0, 0, 1, 1], [], []>} : vector<8x128xbf16>, vector<128x512xbf16>, vector<8x512xf32> -> vector<8x512xf32>
    %518 = arith.addf %514, %517 : vector<8x512xf32>
    %519 = vector.extract_strided_slice %518 {offsets = [0, 0], sizes = [8, 128], strides = [1, 1]} : vector<8x512xf32> to vector<8x128xf32>
    %520 = arith.negf %519 : vector<8x128xf32>
    %521 = math.exp %520 : vector<8x128xf32>
    %cst_283 = arith.constant 1.000000e+00 : f32
    %522 = vector.broadcast %cst_283 : f32 to vector<8x128xf32>
    %523 = arith.addf %522, %521 : vector<8x128xf32>
    %524 = arith.divf %522, %523 : vector<8x128xf32>
    %525 = vector.extract_strided_slice %518 {offsets = [0, 128], sizes = [8, 128], strides = [1, 1]} : vector<8x512xf32> to vector<8x128xf32>
    %526 = arith.negf %525 : vector<8x128xf32>
    %527 = math.exp %526 : vector<8x128xf32>
    %cst_284 = arith.constant 1.000000e+00 : f32
    %528 = vector.broadcast %cst_284 : f32 to vector<8x128xf32>
    %529 = arith.addf %528, %527 : vector<8x128xf32>
    %530 = arith.divf %528, %529 : vector<8x128xf32>
    %531 = vector.extract_strided_slice %518 {offsets = [0, 256], sizes = [8, 128], strides = [1, 1]} : vector<8x512xf32> to vector<8x128xf32>
    %532 = math.tanh %531 : vector<8x128xf32>
    %533 = vector.extract_strided_slice %518 {offsets = [0, 384], sizes = [8, 128], strides = [1, 1]} : vector<8x512xf32> to vector<8x128xf32>
    %534 = arith.negf %533 : vector<8x128xf32>
    %535 = math.exp %534 : vector<8x128xf32>
    %cst_285 = arith.constant 1.000000e+00 : f32
    %536 = vector.broadcast %cst_285 : f32 to vector<8x128xf32>
    %537 = arith.addf %536, %535 : vector<8x128xf32>
    %538 = arith.divf %536, %537 : vector<8x128xf32>
    %539 = arith.mulf %530, %513 : vector<8x128xf32>
    %540 = arith.mulf %524, %532 : vector<8x128xf32>
    %541 = arith.addf %539, %540 : vector<8x128xf32>
    %542 = math.tanh %541 : vector<8x128xf32>
    %543 = arith.mulf %538, %542 : vector<8x128xf32>
    %c0_286 = arith.constant 0 : index
    %c0_287 = arith.constant 0 : index
    %544 = vector.load %arg18[%c0_286, %c0_287] : memref<8x128xf32, #tpu.memory_space<vmem>>, vector<8x128xf32>
    tpu.vector_store %arg18[%c0_286, %c0_287], %543 {strides = array<i32>} : memref<8x128xf32, #tpu.memory_space<vmem>>, vector<8x128xf32>,
    %c0_288 = arith.constant 0 : index
    %c0_289 = arith.constant 0 : index
    %545 = vector.load %arg19[%c0_288, %c0_289] : memref<8x128xf32, #tpu.memory_space<vmem>>, vector<8x128xf32>
    tpu.vector_store %arg19[%c0_288, %c0_289], %541 {strides = array<i32>} : memref<8x128xf32, #tpu.memory_space<vmem>>, vector<8x128xf32>,
    %c40_290 = arith.constant 40 : index
    %c0_291 = arith.constant 0 : index
    %546 = vector.load %arg16[%c40_290, %c0_291] : memref<64x128xf32, #tpu.memory_space<vmem>>, vector<8x128xf32>
    tpu.vector_store %arg16[%c40_290, %c0_291], %543 {strides = array<i32>} : memref<64x128xf32, #tpu.memory_space<vmem>>, vector<8x128xf32>,
    %c0_292 = arith.constant 0 : index
    %c0_293 = arith.constant 0 : index
    %547 = vector.load %arg18[%c0_292, %c0_293] : memref<8x128xf32, #tpu.memory_space<vmem>>, vector<8x128xf32>
    %c0_294 = arith.constant 0 : index
    %c0_295 = arith.constant 0 : index
    %548 = vector.load %arg19[%c0_294, %c0_295] : memref<8x128xf32, #tpu.memory_space<vmem>>, vector<8x128xf32>
    %c48_296 = arith.constant 48 : index
    %c0_297 = arith.constant 0 : index
    %549 = vector.load %arg17[%c48_296, %c0_297] : memref<64x512xf32, #tpu.memory_space<vmem>>, vector<8x512xf32>
    %550 = arith.truncf %547 : vector<8x128xf32> to vector<8x128xbf16>
    %c0_298 = arith.constant 0 : index
    %c0_299 = arith.constant 0 : index
    %551 = vector.load %arg6[%c0_298, %c0_299] : memref<128x512xbf16, #tpu.memory_space<vmem>>, vector<128x512xbf16>
    %cst_300 = arith.constant dense<0.000000e+00> : vector<8x512xf32>
    %552 = tpu.matmul %550, %551, %cst_300 {dimension_numbers = #tpu.dot_dimension_numbers<[1], [0], [0], [1], [0, 0, 1, 1], [], []>} : vector<8x128xbf16>, vector<128x512xbf16>, vector<8x512xf32> -> vector<8x512xf32>
    %553 = arith.addf %549, %552 : vector<8x512xf32>
    %554 = vector.extract_strided_slice %553 {offsets = [0, 0], sizes = [8, 128], strides = [1, 1]} : vector<8x512xf32> to vector<8x128xf32>
    %555 = arith.negf %554 : vector<8x128xf32>
    %556 = math.exp %555 : vector<8x128xf32>
    %cst_301 = arith.constant 1.000000e+00 : f32
    %557 = vector.broadcast %cst_301 : f32 to vector<8x128xf32>
    %558 = arith.addf %557, %556 : vector<8x128xf32>
    %559 = arith.divf %557, %558 : vector<8x128xf32>
    %560 = vector.extract_strided_slice %553 {offsets = [0, 128], sizes = [8, 128], strides = [1, 1]} : vector<8x512xf32> to vector<8x128xf32>
    %561 = arith.negf %560 : vector<8x128xf32>
    %562 = math.exp %561 : vector<8x128xf32>
    %cst_302 = arith.constant 1.000000e+00 : f32
    %563 = vector.broadcast %cst_302 : f32 to vector<8x128xf32>
    %564 = arith.addf %563, %562 : vector<8x128xf32>
    %565 = arith.divf %563, %564 : vector<8x128xf32>
    %566 = vector.extract_strided_slice %553 {offsets = [0, 256], sizes = [8, 128], strides = [1, 1]} : vector<8x512xf32> to vector<8x128xf32>
    %567 = math.tanh %566 : vector<8x128xf32>
    %568 = vector.extract_strided_slice %553 {offsets = [0, 384], sizes = [8, 128], strides = [1, 1]} : vector<8x512xf32> to vector<8x128xf32>
    %569 = arith.negf %568 : vector<8x128xf32>
    %570 = math.exp %569 : vector<8x128xf32>
    %cst_303 = arith.constant 1.000000e+00 : f32
    %571 = vector.broadcast %cst_303 : f32 to vector<8x128xf32>
    %572 = arith.addf %571, %570 : vector<8x128xf32>
    %573 = arith.divf %571, %572 : vector<8x128xf32>
    %574 = arith.mulf %565, %548 : vector<8x128xf32>
    %575 = arith.mulf %559, %567 : vector<8x128xf32>
    %576 = arith.addf %574, %575 : vector<8x128xf32>
    %577 = math.tanh %576 : vector<8x128xf32>
    %578 = arith.mulf %573, %577 : vector<8x128xf32>
    %c0_304 = arith.constant 0 : index
    %c0_305 = arith.constant 0 : index
    %579 = vector.load %arg18[%c0_304, %c0_305] : memref<8x128xf32, #tpu.memory_space<vmem>>, vector<8x128xf32>
    tpu.vector_store %arg18[%c0_304, %c0_305], %578 {strides = array<i32>} : memref<8x128xf32, #tpu.memory_space<vmem>>, vector<8x128xf32>,
    %c0_306 = arith.constant 0 : index
    %c0_307 = arith.constant 0 : index
    %580 = vector.load %arg19[%c0_306, %c0_307] : memref<8x128xf32, #tpu.memory_space<vmem>>, vector<8x128xf32>
    tpu.vector_store %arg19[%c0_306, %c0_307], %576 {strides = array<i32>} : memref<8x128xf32, #tpu.memory_space<vmem>>, vector<8x128xf32>,
    %c48_308 = arith.constant 48 : index
    %c0_309 = arith.constant 0 : index
    %581 = vector.load %arg16[%c48_308, %c0_309] : memref<64x128xf32, #tpu.memory_space<vmem>>, vector<8x128xf32>
    tpu.vector_store %arg16[%c48_308, %c0_309], %578 {strides = array<i32>} : memref<64x128xf32, #tpu.memory_space<vmem>>, vector<8x128xf32>,
    %c0_310 = arith.constant 0 : index
    %c0_311 = arith.constant 0 : index
    %582 = vector.load %arg18[%c0_310, %c0_311] : memref<8x128xf32, #tpu.memory_space<vmem>>, vector<8x128xf32>
    %c0_312 = arith.constant 0 : index
    %c0_313 = arith.constant 0 : index
    %583 = vector.load %arg19[%c0_312, %c0_313] : memref<8x128xf32, #tpu.memory_space<vmem>>, vector<8x128xf32>
    %c56_314 = arith.constant 56 : index
    %c0_315 = arith.constant 0 : index
    %584 = vector.load %arg17[%c56_314, %c0_315] : memref<64x512xf32, #tpu.memory_space<vmem>>, vector<8x512xf32>
    %585 = arith.truncf %582 : vector<8x128xf32> to vector<8x128xbf16>
    %c0_316 = arith.constant 0 : index
    %c0_317 = arith.constant 0 : index
    %586 = vector.load %arg6[%c0_316, %c0_317] : memref<128x512xbf16, #tpu.memory_space<vmem>>, vector<128x512xbf16>
    %cst_318 = arith.constant dense<0.000000e+00> : vector<8x512xf32>
    %587 = tpu.matmul %585, %586, %cst_318 {dimension_numbers = #tpu.dot_dimension_numbers<[1], [0], [0], [1], [0, 0, 1, 1], [], []>} : vector<8x128xbf16>, vector<128x512xbf16>, vector<8x512xf32> -> vector<8x512xf32>
    %588 = arith.addf %584, %587 : vector<8x512xf32>
    %589 = vector.extract_strided_slice %588 {offsets = [0, 0], sizes = [8, 128], strides = [1, 1]} : vector<8x512xf32> to vector<8x128xf32>
    %590 = arith.negf %589 : vector<8x128xf32>
    %591 = math.exp %590 : vector<8x128xf32>
    %cst_319 = arith.constant 1.000000e+00 : f32
    %592 = vector.broadcast %cst_319 : f32 to vector<8x128xf32>
    %593 = arith.addf %592, %591 : vector<8x128xf32>
    %594 = arith.divf %592, %593 : vector<8x128xf32>
    %595 = vector.extract_strided_slice %588 {offsets = [0, 128], sizes = [8, 128], strides = [1, 1]} : vector<8x512xf32> to vector<8x128xf32>
    %596 = arith.negf %595 : vector<8x128xf32>
    %597 = math.exp %596 : vector<8x128xf32>
    %cst_320 = arith.constant 1.000000e+00 : f32
    %598 = vector.broadcast %cst_320 : f32 to vector<8x128xf32>
    %599 = arith.addf %598, %597 : vector<8x128xf32>
    %600 = arith.divf %598, %599 : vector<8x128xf32>
    %601 = vector.extract_strided_slice %588 {offsets = [0, 256], sizes = [8, 128], strides = [1, 1]} : vector<8x512xf32> to vector<8x128xf32>
    %602 = math.tanh %601 : vector<8x128xf32>
    %603 = vector.extract_strided_slice %588 {offsets = [0, 384], sizes = [8, 128], strides = [1, 1]} : vector<8x512xf32> to vector<8x128xf32>
    %604 = arith.negf %603 : vector<8x128xf32>
    %605 = math.exp %604 : vector<8x128xf32>
    %cst_321 = arith.constant 1.000000e+00 : f32
    %606 = vector.broadcast %cst_321 : f32 to vector<8x128xf32>
    %607 = arith.addf %606, %605 : vector<8x128xf32>
    %608 = arith.divf %606, %607 : vector<8x128xf32>
    %609 = arith.mulf %600, %583 : vector<8x128xf32>
    %610 = arith.mulf %594, %602 : vector<8x128xf32>
    %611 = arith.addf %609, %610 : vector<8x128xf32>
    %612 = math.tanh %611 : vector<8x128xf32>
    %613 = arith.mulf %608, %612 : vector<8x128xf32>
    %c0_322 = arith.constant 0 : index
    %c0_323 = arith.constant 0 : index
    %614 = vector.load %arg18[%c0_322, %c0_323] : memref<8x128xf32, #tpu.memory_space<vmem>>, vector<8x128xf32>
    tpu.vector_store %arg18[%c0_322, %c0_323], %613 {strides = array<i32>} : memref<8x128xf32, #tpu.memory_space<vmem>>, vector<8x128xf32>,
    %c0_324 = arith.constant 0 : index
    %c0_325 = arith.constant 0 : index
    %615 = vector.load %arg19[%c0_324, %c0_325] : memref<8x128xf32, #tpu.memory_space<vmem>>, vector<8x128xf32>
    tpu.vector_store %arg19[%c0_324, %c0_325], %611 {strides = array<i32>} : memref<8x128xf32, #tpu.memory_space<vmem>>, vector<8x128xf32>,
    %c56_326 = arith.constant 56 : index
    %c0_327 = arith.constant 0 : index
    %616 = vector.load %arg16[%c56_326, %c0_327] : memref<64x128xf32, #tpu.memory_space<vmem>>, vector<8x128xf32>
    tpu.vector_store %arg16[%c56_326, %c0_327], %613 {strides = array<i32>} : memref<64x128xf32, #tpu.memory_space<vmem>>, vector<8x128xf32>,
    %c0_328 = arith.constant 0 : index
    %c0_329 = arith.constant 0 : index
    %617 = vector.load %arg18[%c0_328, %c0_329] : memref<8x128xf32, #tpu.memory_space<vmem>>, vector<8x128xf32>
    %c1 = arith.constant 1 : index
    %c0_330 = arith.constant 0 : index
    %c0_331 = arith.constant 0 : index
    %618 = vector.load %arg14[%c1, %c0_330, %c0_331] : memref<2x8x128xf32, #tpu.memory_space<vmem>>, vector<1x8x128xf32>
    %619 = vector.shape_cast %618 : vector<1x8x128xf32> to vector<8x128xf32>
    %620 = vector.shape_cast %617 : vector<8x128xf32> to vector<1x8x128xf32>
    tpu.vector_store %arg14[%c1, %c0_330, %c0_331], %620 {strides = array<i32>} : memref<2x8x128xf32, #tpu.memory_space<vmem>>, vector<1x8x128xf32>,
    %c0_332 = arith.constant 0 : index
    %c0_333 = arith.constant 0 : index
    %621 = vector.load %arg19[%c0_332, %c0_333] : memref<8x128xf32, #tpu.memory_space<vmem>>, vector<8x128xf32>
    %c1_334 = arith.constant 1 : index
    %c0_335 = arith.constant 0 : index
    %c0_336 = arith.constant 0 : index
    %622 = vector.load %arg15[%c1_334, %c0_335, %c0_336] : memref<2x8x128xf32, #tpu.memory_space<vmem>>, vector<1x8x128xf32>
    %623 = vector.shape_cast %622 : vector<1x8x128xf32> to vector<8x128xf32>
    %624 = vector.shape_cast %621 : vector<8x128xf32> to vector<1x8x128xf32>
    tpu.vector_store %arg15[%c1_334, %c0_335, %c0_336], %624 {strides = array<i32>} : memref<2x8x128xf32, #tpu.memory_space<vmem>>, vector<1x8x128xf32>,
    %c0_337 = arith.constant 0 : index
    %c0_338 = arith.constant 0 : index
    %625 = vector.load %arg16[%c0_337, %c0_338] : memref<64x128xf32, #tpu.memory_space<vmem>>, vector<64x128xf32>
    %626 = arith.truncf %625 : vector<64x128xf32> to vector<64x128xbf16>
    %c0_339 = arith.constant 0 : index
    %c0_340 = arith.constant 0 : index
    %627 = vector.load %arg9[%c0_339, %c0_340] : memref<128x128xbf16, #tpu.memory_space<vmem>>, vector<128x128xbf16>
    %cst_341 = arith.constant dense<0.000000e+00> : vector<64x128xf32>
    %628 = tpu.matmul %626, %627, %cst_341 {dimension_numbers = #tpu.dot_dimension_numbers<[1], [0], [0], [1], [0, 0, 1, 1], [], []>} : vector<64x128xbf16>, vector<128x128xbf16>, vector<64x128xf32> -> vector<64x128xf32>
    %c0_342 = arith.constant 0 : index
    %c0_343 = arith.constant 0 : index
    %629 = vector.load %arg10[%c0_342, %c0_343] : memref<1x128xf32, #tpu.memory_space<vmem>>, vector<1x128xf32>
    %630 = vector.broadcast %629 : vector<1x128xf32> to vector<64x128xf32>
    %631 = arith.addf %628, %630 : vector<64x128xf32>
    %c0_344 = arith.constant 0 : index
    %c0_345 = arith.constant 0 : index
    %632 = vector.load %arg11[%c0_344, %c0_345] : memref<1x128xf32, #tpu.memory_space<vmem>>, vector<1x128xf32>
    %c0_346 = arith.constant 0 : index
    %c0_347 = arith.constant 0 : index
    %633 = vector.load %arg12[%c0_346, %c0_347] : memref<1x128xf32, #tpu.memory_space<vmem>>, vector<1x128xf32>
    %cst_348 = arith.constant dense<0.000000e+00> : vector<64xf32>
    %634 = vector.multi_reduction <add>, %631, %cst_348 [1] : vector<64x128xf32> to vector<64xf32>
    %635 = vector.shape_cast %634 : vector<64xf32> to vector<64x1xf32>
    %cst_349 = arith.constant 1.280000e+02 : f32
    %636 = vector.broadcast %cst_349 : f32 to vector<64x1xf32>
    %637 = arith.divf %635, %636 : vector<64x1xf32>
    %638 = vector.broadcast %637 : vector<64x1xf32> to vector<64x128xf32>
    %639 = arith.subf %631, %638 : vector<64x128xf32>
    %640 = arith.mulf %639, %639 : vector<64x128xf32>
    %cst_350 = arith.constant dense<0.000000e+00> : vector<64xf32>
    %641 = vector.multi_reduction <add>, %640, %cst_350 [1] : vector<64x128xf32> to vector<64xf32>
    %642 = vector.shape_cast %641 : vector<64xf32> to vector<64x1xf32>
    %cst_351 = arith.constant 1.280000e+02 : f32
    %643 = vector.broadcast %cst_351 : f32 to vector<64x1xf32>
    %644 = arith.divf %642, %643 : vector<64x1xf32>
    %645 = vector.broadcast %637 : vector<64x1xf32> to vector<64x128xf32>
    %646 = arith.subf %631, %645 : vector<64x128xf32>
    %cst_352 = arith.constant 9.99999974E-6 : f32
    %647 = vector.broadcast %cst_352 : f32 to vector<64x1xf32>
    %648 = arith.addf %644, %647 : vector<64x1xf32>
    %649 = math.rsqrt %648 : vector<64x1xf32>
    %650 = vector.broadcast %649 : vector<64x1xf32> to vector<64x128xf32>
    %651 = arith.mulf %646, %650 : vector<64x128xf32>
    %652 = vector.broadcast %632 : vector<1x128xf32> to vector<64x128xf32>
    %653 = arith.mulf %651, %652 : vector<64x128xf32>
    %654 = vector.broadcast %633 : vector<1x128xf32> to vector<64x128xf32>
    %655 = arith.addf %653, %654 : vector<64x128xf32>
    %c0_353 = arith.constant 0 : index
    %c0_354 = arith.constant 0 : index
    %656 = vector.load %arg13[%c0_353, %c0_354] : memref<64x128xf32, #tpu.memory_space<vmem>>, vector<64x128xf32>
    tpu.vector_store %arg13[%c0_353, %c0_354], %655 {strides = array<i32>} : memref<64x128xf32, #tpu.memory_space<vmem>>, vector<64x128xf32>,
    return
  }
}

</mosaic_0001>

<llo_original>
// kernel: tpu_custom_call.1
$region0: #{tpu_custom_call.1}
  #allocation0 [shape = 'u32[]', space=smem, size = 0x4, offset = 0x4, fixed_abs, tag = 'smem constant byte address 0x4 - core index']
  #allocation1 [shape = 'u32[144,128]{1,0:T(1,128)}', space=vmem, size = 0x12000, scoped, tag = 'internal scratch']
  #allocation2 [shape = 'f32[64,128]{1,0:T(8,128)}', space=vmem, size = 0x8000, scoped, tag = 'scratch operand']
  #allocation3 [shape = 'f32[64,512]{1,0:T(8,128)}', space=vmem, size = 0x20000, scoped, tag = 'scratch operand']
  #allocation4 [shape = 'f32[8,128]{1,0:T(8,128)}', space=vmem, size = 0x1000, scoped, tag = 'scratch operand']
  #allocation5 [shape = 'f32[8,128]{1,0:T(8,128)}', space=vmem, size = 0x1000, scoped, tag = 'scratch operand']
  %s0 = inlined_call_operand.hbm [shape: bf16[64,128], index: 0, kind: input, shape index: {}]
  %s1 = inlined_call_operand.vmem [shape: f32[1,128], index: 1, kind: input, shape index: {}]
  %s2 = inlined_call_operand.vmem [shape: f32[1,128], index: 2, kind: input, shape index: {}]
  %s3 = inlined_call_operand.hbm [shape: bf16[128,512], index: 3, kind: input, shape index: {}]
  %s4 = inlined_call_operand.hbm [shape: bf16[128,512], index: 4, kind: input, shape index: {}]
  %s5 = inlined_call_operand.hbm [shape: bf16[128,512], index: 5, kind: input, shape index: {}]
  %s6 = inlined_call_operand.hbm [shape: bf16[128,512], index: 6, kind: input, shape index: {}]
  %s7 = inlined_call_operand.vmem [shape: f32[1,512], index: 7, kind: input, shape index: {}]
  %s8 = inlined_call_operand.vmem [shape: f32[1,512], index: 8, kind: input, shape index: {}]
  %s9 = inlined_call_operand.hbm [shape: bf16[128,128], index: 9, kind: input, shape index: {}]
  %s10 = inlined_call_operand.vmem [shape: f32[1,128], index: 10, kind: input, shape index: {}]
  %s11 = inlined_call_operand.vmem [shape: f32[1,128], index: 11, kind: input, shape index: {}]
  %s12 = inlined_call_operand.vmem [shape: f32[1,128], index: 12, kind: input, shape index: {}]
  %s13 = inlined_call_operand.hbm [shape: f32[64,128], index: 13, kind: output, shape index: {0}]
  %s14 = inlined_call_operand.hbm [shape: f32[2,8,128], index: 14, kind: output, shape index: {1}]
  %s15 = inlined_call_operand.hbm [shape: f32[2,8,128], index: 15, kind: output, shape index: {2}]
  %16 = xla_tuple %s13, %s14, %s15
  %s17 = sld [smem:[#allocation0]]
  $region102: #{tpu_custom_call.1} parent=0
    _
  %s19 = ssub.s32 1, %s17
  %s20 = scalar_select 0, %s19, %s17
  $region1: #{tpu_custom_call.1} parent=0
    #allocation6 [shape = 'u8[16384]{0}', space=vmem, size = 0x4000, scoped, tag = 'input window, operand 0, single buffered']
    #allocation7 [shape = 's32[1]{0}', space=sflag, size = 0x4, scoped, tag = 'scoped memory for tpu_custom_call.1']
    #allocation8 [shape = 's32[1]{0}', space=sflag, size = 0x4, scoped, tag = 'scoped memory for tpu_custom_call.1']
    #allocation9 [shape = 'u8[131072]{0}', space=vmem, size = 0x20000, scoped, tag = 'input window, operand 3, single buffered']
    #allocation10 [shape = 's32[1]{0}', space=sflag, size = 0x4, scoped, tag = 'scoped memory for tpu_custom_call.1']
    #allocation11 [shape = 'u8[131072]{0}', space=vmem, size = 0x20000, scoped, tag = 'input window, operand 4, single buffered']
    #allocation12 [shape = 'u8[131072]{0}', space=vmem, size = 0x20000, scoped, tag = 'input window, operand 5, single buffered']
    #allocation13 [shape = 's32[1]{0}', space=sflag, size = 0x4, scoped, tag = 'scoped memory for tpu_custom_call.1']
    #allocation14 [shape = 'u8[131072]{0}', space=vmem, size = 0x20000, scoped, tag = 'input window, operand 6, single buffered']
    #allocation15 [shape = 'u8[32768]{0}', space=vmem, size = 0x8000, scoped, tag = 'input window, operand 9, single buffered']
    #allocation16 [shape = 's32[1]{0}', space=sflag, size = 0x4, scoped, tag = 'scoped memory for tpu_custom_call.1']
    #allocation17 [shape = 'u8[32768]{0}', space=vmem, size = 0x8000, scoped, tag = 'output window, operand 0, single buffered']
    #allocation18 [shape = 'u8[8192]{0}', space=vmem, size = 0x2000, scoped, tag = 'output window, operand 1, single buffered']
    #allocation19 [shape = 's32[1]{0}', space=sflag, size = 0x4, scoped, tag = 'scoped memory for tpu_custom_call.1']
    #allocation20 [shape = 'u8[8192]{0}', space=vmem, size = 0x2000, scoped, tag = 'output window, operand 2, single buffered']
    %21 = vsyncpa [#allocation7], 0
    %22 = vsyncpa [#allocation10], 0
    %23 = vsyncpa [#allocation13], 0
    %24 = vsyncpa [#allocation16], 0
    %25 = vsyncpa [#allocation8], 0
    %26 = vsyncpa [#allocation19], 0
    // Predicated region
    $region2: #{tpu_custom_call.1} parent=1 // pred_check
      _
    $region3: #{tpu_custom_call.1} parent=1 // pred_check_branch
      %28 = sbr.rel (0) target = $region5
    $region4: #{tpu_custom_call.1} parent=1 // pred_region
      %s30 = ssub.s32 512, 512
      %31 = vsyncadd [#allocation7], %s30
      %s32 = sshll.u32 [#allocation6], 4
      %s33 = int_to_ptr.vmem [resolvable:$true] %s32
      %38 = dma.hbm_to_vmem [thread:$0]  %s0, 512, %s33, [#allocation7], 64, 64, 4
    $region5: #{tpu_custom_call.1} parent=1 // pred_fallthru
      _
    // Predicated region
    $region6: #{tpu_custom_call.1} parent=1 // pred_check
      _
    $region7: #{tpu_custom_call.1} parent=1 // pred_check_branch
      %40 = sbr.rel (0) target = $region9
    $region8: #{tpu_custom_call.1} parent=1 // pred_region
      _
    $region9: #{tpu_custom_call.1} parent=1 // pred_fallthru
      _
    // Predicated region
    $region10: #{tpu_custom_call.1} parent=1 // pred_check
      _
    $region11: #{tpu_custom_call.1} parent=1 // pred_check_branch
      %42 = sbr.rel (0) target = $region13
    $region12: #{tpu_custom_call.1} parent=1 // pred_region
      _
    $region13: #{tpu_custom_call.1} parent=1 // pred_fallthru
      _
    // Predicated region
    $region14: #{tpu_custom_call.1} parent=1 // pred_check
      _
    $region15: #{tpu_custom_call.1} parent=1 // pred_check_branch
      %44 = sbr.rel (0) target = $region17
    $region16: #{tpu_custom_call.1} parent=1 // pred_region
      %s46 = ssub.s32 4096, 4096
      %47 = vsyncadd [#allocation10], %s46
      %s48 = sshll.u32 [#allocation9], 4
      %s49 = int_to_ptr.vmem [resolvable:$true] %s48
      %54 = dma.hbm_to_vmem [thread:$0]  %s3, 4096, %s49, [#allocation10], 256, 256, 16
    $region17: #{tpu_custom_call.1} parent=1 // pred_fallthru
      _
    // Predicated region
    $region18: #{tpu_custom_call.1} parent=1 // pred_check
      _
    $region19: #{tpu_custom_call.1} parent=1 // pred_check_branch
      %56 = sbr.rel (0) target = $region21
    $region20: #{tpu_custom_call.1} parent=1 // pred_region
      %s58 = ssub.s32 4096, 4096
      %59 = vsyncadd [#allocation10], %s58
      %s60 = sshll.u32 [#allocation11], 4
      %s61 = int_to_ptr.vmem [resolvable:$true] %s60
      %66 = dma.hbm_to_vmem [thread:$0]  %s4, 4096, %s61, [#allocation10], 256, 256, 16
    $region21: #{tpu_custom_call.1} parent=1 // pred_fallthru
      _
    // Predicated region
    $region22: #{tpu_custom_call.1} parent=1 // pred_check
      _
    $region23: #{tpu_custom_call.1} parent=1 // pred_check_branch
      %68 = sbr.rel (0) target = $region25
    $region24: #{tpu_custom_call.1} parent=1 // pred_region
      %s70 = ssub.s32 4096, 4096
      %71 = vsyncadd [#allocation13], %s70
      %s72 = sshll.u32 [#allocation12], 4
      %s73 = int_to_ptr.vmem [resolvable:$true] %s72
      %78 = dma.hbm_to_vmem [thread:$0]  %s5, 4096, %s73, [#allocation13], 256, 256, 16
    $region25: #{tpu_custom_call.1} parent=1 // pred_fallthru
      _
    // Predicated region
    $region26: #{tpu_custom_call.1} parent=1 // pred_check
      _
    $region27: #{tpu_custom_call.1} parent=1 // pred_check_branch
      %80 = sbr.rel (0) target = $region29
    $region28: #{tpu_custom_call.1} parent=1 // pred_region
      %s82 = ssub.s32 4096, 4096
      %83 = vsyncadd [#allocation13], %s82
      %s84 = sshll.u32 [#allocation14], 4
      %s85 = int_to_ptr.vmem [resolvable:$true] %s84
      %90 = dma.hbm_to_vmem [thread:$0]  %s6, 4096, %s85, [#allocation13], 256, 256, 16
    $region29: #{tpu_custom_call.1} parent=1 // pred_fallthru
      _
    // Predicated region
    $region30: #{tpu_custom_call.1} parent=1 // pred_check
      _
    $region31: #{tpu_custom_call.1} parent=1 // pred_check_branch
      %92 = sbr.rel (0) target = $region33
    $region32: #{tpu_custom_call.1} parent=1 // pred_region
      _
    $region33: #{tpu_custom_call.1} parent=1 // pred_fallthru
      _
    // Predicated region
    $region34: #{tpu_custom_call.1} parent=1 // pred_check
      _
    $region35: #{tpu_custom_call.1} parent=1 // pred_check_branch
      %94 = sbr.rel (0) target = $region37
    $region36: #{tpu_custom_call.1} parent=1 // pred_region
      _
    $region37: #{tpu_custom_call.1} parent=1 // pred_fallthru
      _
    // Predicated region
    $region38: #{tpu_custom_call.1} parent=1 // pred_check
      _
    $region39: #{tpu_custom_call.1} parent=1 // pred_check_branch
      %96 = sbr.rel (0) target = $region41
    $region40: #{tpu_custom_call.1} parent=1 // pred_region
      %s98 = ssub.s32 1024, 1024
      %99 = vsyncadd [#allocation16], %s98
      %s100 = sshll.u32 [#allocation15], 4
      %s101 = int_to_ptr.vmem [resolvable:$true] %s100
      %106 = dma.hbm_to_vmem [thread:$0]  %s9, 1024, %s101, [#allocation16], 64, 64, 4
    $region41: #{tpu_custom_call.1} parent=1 // pred_fallthru
      _
    // Predicated region
    $region42: #{tpu_custom_call.1} parent=1 // pred_check
      _
    $region43: #{tpu_custom_call.1} parent=1 // pred_check_branch
      %108 = sbr.rel (0) target = $region45
    $region44: #{tpu_custom_call.1} parent=1 // pred_region
      _
    $region45: #{tpu_custom_call.1} parent=1 // pred_fallthru
      _
    // Predicated region
    $region46: #{tpu_custom_call.1} parent=1 // pred_check
      _
    $region47: #{tpu_custom_call.1} parent=1 // pred_check_branch
      %110 = sbr.rel (0) target = $region49
    $region48: #{tpu_custom_call.1} parent=1 // pred_region
      _
    $region49: #{tpu_custom_call.1} parent=1 // pred_fallthru
      _
    // Predicated region
    $region50: #{tpu_custom_call.1} parent=1 // pred_check
      _
    $region51: #{tpu_custom_call.1} parent=1 // pred_check_branch
      %112 = sbr.rel (0) target = $region53
    $region52: #{tpu_custom_call.1} parent=1 // pred_region
      _
    $region53: #{tpu_custom_call.1} parent=1 // pred_fallthru
      _
    // Predicated region
    $region54: #{tpu_custom_call.1} parent=1 // pred_check
      _
    $region55: #{tpu_custom_call.1} parent=1 // pred_check_branch
      %114 = sbr.rel (0) target = $region57
    $region56: #{tpu_custom_call.1} parent=1 // pred_region
      %115 = dma.done [#allocation7], 512
    $region57: #{tpu_custom_call.1} parent=1 // pred_fallthru
      _
    // Predicated region
    $region58: #{tpu_custom_call.1} parent=1 // pred_check
      _
    $region59: #{tpu_custom_call.1} parent=1 // pred_check_branch
      %117 = sbr.rel (0) target = $region61
    $region60: #{tpu_custom_call.1} parent=1 // pred_region
      %118 = dma.done [#allocation10], 4096
    $region61: #{tpu_custom_call.1} parent=1 // pred_fallthru
      _
    // Predicated region
    $region62: #{tpu_custom_call.1} parent=1 // pred_check
      _
    $region63: #{tpu_custom_call.1} parent=1 // pred_check_branch
      %120 = sbr.rel (0) target = $region65
    $region64: #{tpu_custom_call.1} parent=1 // pred_region
      %121 = dma.done [#allocation10], 4096
    $region65: #{tpu_custom_call.1} parent=1 // pred_fallthru
      _
    // Predicated region
    $region66: #{tpu_custom_call.1} parent=1 // pred_check
      _
    $region67: #{tpu_custom_call.1} parent=1 // pred_check_branch
      %123 = sbr.rel (0) target = $region69
    $region68: #{tpu_custom_call.1} parent=1 // pred_region
      %124 = dma.done [#allocation13], 4096
    $region69: #{tpu_custom_call.1} parent=1 // pred_fallthru
      _
    // Predicated region
    $region70: #{tpu_custom_call.1} parent=1 // pred_check
      _
    $region71: #{tpu_custom_call.1} parent=1 // pred_check_branch
      %126 = sbr.rel (0) target = $region73
    $region72: #{tpu_custom_call.1} parent=1 // pred_region
      %127 = dma.done [#allocation13], 4096
    $region73: #{tpu_custom_call.1} parent=1 // pred_fallthru
      _
    // Predicated region
    $region74: #{tpu_custom_call.1} parent=1 // pred_check
      _
    $region75: #{tpu_custom_call.1} parent=1 // pred_check_branch
      %129 = sbr.rel (0) target = $region77
    $region76: #{tpu_custom_call.1} parent=1 // pred_region
      %130 = dma.done [#allocation16], 1024
    $region77: #{tpu_custom_call.1} parent=1 // pred_fallthru
      _
    %v132 = vld [vmem:[#allocation6] sm:$0xf]
    %v133 = vld [vmem:[#allocation6 + $0x4] sm:$0xf]
    %v134 = vld [vmem:[#allocation6 + $0x8] sm:$0xf]
    %v135 = vld [vmem:[#allocation6 + $0xc] sm:$0xf]
    %v136 = vld [vmem:[#allocation6 + $0x10] sm:$0xf]
    %v137 = vld [vmem:[#allocation6 + $0x14] sm:$0xf]
    %v138 = vld [vmem:[#allocation6 + $0x18] sm:$0xf]
    %v139 = vld [vmem:[#allocation6 + $0x1c] sm:$0xf]
    %v140 = vunpack.c.l.bf16 %v132
    %v141 = vunpack.c.l.bf16 %v133
    %v142 = vunpack.c.l.bf16 %v134
    %v143 = vunpack.c.l.bf16 %v135
    %v144 = vunpack.c.l.bf16 %v136
    %v145 = vunpack.c.l.bf16 %v137
    %v146 = vunpack.c.l.bf16 %v138
    %v147 = vunpack.c.l.bf16 %v139
    %v148 = vld [vmem:[%s1] sm:$0x1]
    %v149 = vld [vmem:[%s2] sm:$0x1]
    %150 = vadd.xlane.f32.xlu0 %v140
    %v151 = vpop.xlane.xlu0 %150
    %152 = vadd.xlane.f32.xlu0 %v141
    %v153 = vpop.xlane.xlu0 %152
    %154 = vadd.xlane.f32.xlu0 %v142
    %v155 = vpop.xlane.xlu0 %154
    %156 = vadd.xlane.f32.xlu0 %v143
    %v157 = vpop.xlane.xlu0 %156
    %158 = vadd.xlane.f32.xlu0 %v144
    %v159 = vpop.xlane.xlu0 %158
    %160 = vadd.xlane.f32.xlu0 %v145
    %v161 = vpop.xlane.xlu0 %160
    %162 = vadd.xlane.f32.xlu0 %v146
    %v163 = vpop.xlane.xlu0 %162
    %164 = vadd.xlane.f32.xlu0 %v147
    %v165 = vpop.xlane.xlu0 %164
    %v166 = vrcp.pop 128.0
    %v167 = vmul.f32 %v151, %v166
    %v168 = vmul.f32 %v153, %v166
    %v169 = vmul.f32 %v155, %v166
    %v170 = vmul.f32 %v157, %v166
    %v171 = vmul.f32 %v159, %v166
    %v172 = vmul.f32 %v161, %v166
    %v173 = vmul.f32 %v163, %v166
    %v174 = vmul.f32 %v165, %v166
    %v175 = vsub.f32 %v140, %v167
    %v176 = vsub.f32 %v141, %v168
    %v177 = vsub.f32 %v142, %v169
    %v178 = vsub.f32 %v143, %v170
    %v179 = vsub.f32 %v144, %v171
    %v180 = vsub.f32 %v145, %v172
    %v181 = vsub.f32 %v146, %v173
    %v182 = vsub.f32 %v147, %v174
    %v183 = vmul.f32 %v175, %v175
    %v184 = vmul.f32 %v176, %v176
    %v185 = vmul.f32 %v177, %v177
    %v186 = vmul.f32 %v178, %v178
    %v187 = vmul.f32 %v179, %v179
    %v188 = vmul.f32 %v180, %v180
    %v189 = vmul.f32 %v181, %v181
    %v190 = vmul.f32 %v182, %v182
    %191 = vadd.xlane.f32.xlu0 %v183
    %v192 = vpop.xlane.xlu0 %191
    %193 = vadd.xlane.f32.xlu0 %v184
    %v194 = vpop.xlane.xlu0 %193
    %195 = vadd.xlane.f32.xlu0 %v185
    %v196 = vpop.xlane.xlu0 %195
    %197 = vadd.xlane.f32.xlu0 %v186
    %v198 = vpop.xlane.xlu0 %197
    %199 = vadd.xlane.f32.xlu0 %v187
    %v200 = vpop.xlane.xlu0 %199
    %201 = vadd.xlane.f32.xlu0 %v188
    %v202 = vpop.xlane.xlu0 %201
    %203 = vadd.xlane.f32.xlu0 %v189
    %v204 = vpop.xlane.xlu0 %203
    %205 = vadd.xlane.f32.xlu0 %v190
    %v206 = vpop.xlane.xlu0 %205
    %v207 = vmul.f32 %v192, %v166
    %v208 = vmul.f32 %v194, %v166
    %v209 = vmul.f32 %v196, %v166
    %v210 = vmul.f32 %v198, %v166
    %v211 = vmul.f32 %v200, %v166
    %v212 = vmul.f32 %v202, %v166
    %v213 = vmul.f32 %v204, %v166
    %v214 = vmul.f32 %v206, %v166
    %v215 = vadd.f32 %v207, 1e-05
    %v216 = vadd.f32 %v208, 1e-05
    %v217 = vadd.f32 %v209, 1e-05
    %v218 = vadd.f32 %v210, 1e-05
    %v219 = vadd.f32 %v211, 1e-05
    %v220 = vadd.f32 %v212, 1e-05
    %v221 = vadd.f32 %v213, 1e-05
    %v222 = vadd.f32 %v214, 1e-05
    %v223 = vrsqrt.pop %v215
    %v224 = vrsqrt.pop %v216
    %v225 = vrsqrt.pop %v217
    %v226 = vrsqrt.pop %v218
    %v227 = vrsqrt.pop %v219
    %v228 = vrsqrt.pop %v220
    %v229 = vrsqrt.pop %v221
    %v230 = vrsqrt.pop %v222
    %v231 = vmul.f32 %v175, %v223
    %v232 = vmul.f32 %v176, %v224
    %v233 = vmul.f32 %v177, %v225
    %v234 = vmul.f32 %v178, %v226
    %v235 = vmul.f32 %v179, %v227
    %v236 = vmul.f32 %v180, %v228
    %v237 = vmul.f32 %v181, %v229
    %v238 = vmul.f32 %v182, %v230
    %v240 = vlaneseq
    %v241 = vshrl.u32 %v240, 7
    %v242 = vsub.s32 0, %v241
    %v243 = vrot.slane %v148, %v242
    %v245 = vmul.f32 %v231, %v243
    %v246 = vmul.f32 %v232, %v243
    %v247 = vmul.f32 %v233, %v243
    %v248 = vmul.f32 %v234, %v243
    %v249 = vmul.f32 %v235, %v243
    %v250 = vmul.f32 %v236, %v243
    %v251 = vmul.f32 %v237, %v243
    %v252 = vmul.f32 %v238, %v243
    %v254 = vlaneseq
    %v255 = vshrl.u32 %v254, 7
    %v256 = vsub.s32 0, %v255
    %v257 = vrot.slane %v149, %v256
    %v259 = vadd.f32 %v245, %v257
    %v260 = vadd.f32 %v246, %v257
    %v261 = vadd.f32 %v247, %v257
    %v262 = vadd.f32 %v248, %v257
    %v263 = vadd.f32 %v249, %v257
    %v264 = vadd.f32 %v250, %v257
    %v265 = vadd.f32 %v251, %v257
    %v266 = vadd.f32 %v252, %v257
    %v267 = vpack.c.bf16 %v260, %v259
    %v268 = vpack.c.bf16 %v262, %v261
    %v269 = vpack.c.bf16 %v264, %v263
    %v270 = vpack.c.bf16 %v266, %v265
    %v271 = vld [vmem:[#allocation9] sm:$0xff]
    %v272 = vld [vmem:[#allocation9 + $0x8] sm:$0xff]
    %v273 = vld [vmem:[#allocation9 + $0x10] sm:$0xff]
    %v274 = vld [vmem:[#allocation9 + $0x18] sm:$0xff]
    %v275 = vld [vmem:[#allocation9 + $0x20] sm:$0xff]
    %v276 = vld [vmem:[#allocation9 + $0x28] sm:$0xff]
    %v277 = vld [vmem:[#allocation9 + $0x30] sm:$0xff]
    %v278 = vld [vmem:[#allocation9 + $0x38] sm:$0xff]
    %v279 = vld [vmem:[#allocation9 + $0x40] sm:$0xff]
    %v280 = vld [vmem:[#allocation9 + $0x48] sm:$0xff]
    %v281 = vld [vmem:[#allocation9 + $0x50] sm:$0xff]
    %v282 = vld [vmem:[#allocation9 + $0x58] sm:$0xff]
    %v283 = vld [vmem:[#allocation9 + $0x60] sm:$0xff]
    %v284 = vld [vmem:[#allocation9 + $0x68] sm:$0xff]
    %v285 = vld [vmem:[#allocation9 + $0x70] sm:$0xff]
    %v286 = vld [vmem:[#allocation9 + $0x78] sm:$0xff]
    %v287 = vld [vmem:[#allocation9 + $0x80] sm:$0xff]
    %v288 = vld [vmem:[#allocation9 + $0x88] sm:$0xff]
    %v289 = vld [vmem:[#allocation9 + $0x90] sm:$0xff]
    %v290 = vld [vmem:[#allocation9 + $0x98] sm:$0xff]
    %v291 = vld [vmem:[#allocation9 + $0xa0] sm:$0xff]
    %v292 = vld [vmem:[#allocation9 + $0xa8] sm:$0xff]
    %v293 = vld [vmem:[#allocation9 + $0xb0] sm:$0xff]
    %v294 = vld [vmem:[#allocation9 + $0xb8] sm:$0xff]
    %v295 = vld [vmem:[#allocation9 + $0xc0] sm:$0xff]
    %v296 = vld [vmem:[#allocation9 + $0xc8] sm:$0xff]
    %v297 = vld [vmem:[#allocation9 + $0xd0] sm:$0xff]
    %v298 = vld [vmem:[#allocation9 + $0xd8] sm:$0xff]
    %v299 = vld [vmem:[#allocation9 + $0xe0] sm:$0xff]
    %v300 = vld [vmem:[#allocation9 + $0xe8] sm:$0xff]
    %v301 = vld [vmem:[#allocation9 + $0xf0] sm:$0xff]
    %v302 = vld [vmem:[#allocation9 + $0xf8] sm:$0xff]
    %v303 = vld [vmem:[%s7] sm:$0xf]
    %v305 = vlaneseq
    %v306 = vshrl.u32 %v305, 7
    %v307 = vsub.s32 0, %v306
    %v308 = vrot.slane %v303, %v307
    %v309 = vlaneseq
    %v310 = vshrl.u32 %v309, 7
    %v311 = vsub.s32 1, %v310
    %v312 = vrot.slane %v303, %v311
    %v313 = vlaneseq
    %v314 = vshrl.u32 %v313, 7
    %v315 = vsub.s32 2, %v314
    %v316 = vrot.slane %v303, %v315
    %v317 = vlaneseq
    %v318 = vshrl.u32 %v317, 7
    %v319 = vsub.s32 3, %v318
    %v320 = vrot.slane %v303, %v319
    %v357 = vunpack.c.l.b16 %v271
    %v358 = vunpack.c.h.b16 %v271
    %v359 = vunpack.c.l.b16 %v272
    %v360 = vunpack.c.h.b16 %v272
    %v361 = vunpack.c.l.b16 %v273
    %v362 = vunpack.c.h.b16 %v273
    %v363 = vunpack.c.l.b16 %v274
    %v364 = vunpack.c.h.b16 %v274
    %v365 = vunpack.c.l.b16 %v275
    %v366 = vunpack.c.h.b16 %v275
    %v367 = vunpack.c.l.b16 %v276
    %v368 = vunpack.c.h.b16 %v276
    %v369 = vunpack.c.l.b16 %v277
    %v370 = vunpack.c.h.b16 %v277
    %v371 = vunpack.c.l.b16 %v278
    %v372 = vunpack.c.h.b16 %v278
    %v373 = vunpack.c.l.b16 %v279
    %v374 = vunpack.c.h.b16 %v279
    %v375 = vunpack.c.l.b16 %v280
    %v376 = vunpack.c.h.b16 %v280
    %v377 = vunpack.c.l.b16 %v281
    %v378 = vunpack.c.h.b16 %v281
    %v379 = vunpack.c.l.b16 %v282
    %v380 = vunpack.c.h.b16 %v282
    %v381 = vunpack.c.l.b16 %v283
    %v382 = vunpack.c.h.b16 %v283
    %v383 = vunpack.c.l.b16 %v284
    %v384 = vunpack.c.h.b16 %v284
    %v385 = vunpack.c.l.b16 %v285
    %v386 = vunpack.c.h.b16 %v285
    %v387 = vunpack.c.l.b16 %v286
    %v388 = vunpack.c.h.b16 %v286
    %v389 = vunpack.c.l.b16 %v287
    %v390 = vunpack.c.h.b16 %v287
    %v391 = vunpack.c.l.b16 %v288
    %v392 = vunpack.c.h.b16 %v288
    %v393 = vunpack.c.l.b16 %v289
    %v394 = vunpack.c.h.b16 %v289
    %v395 = vunpack.c.l.b16 %v290
    %v396 = vunpack.c.h.b16 %v290
    %v397 = vunpack.c.l.b16 %v291
    %v398 = vunpack.c.h.b16 %v291
    %v399 = vunpack.c.l.b16 %v292
    %v400 = vunpack.c.h.b16 %v292
    %v401 = vunpack.c.l.b16 %v293
    %v402 = vunpack.c.h.b16 %v293
    %v403 = vunpack.c.l.b16 %v294
    %v404 = vunpack.c.h.b16 %v294
    %v405 = vunpack.c.l.b16 %v295
    %v406 = vunpack.c.h.b16 %v295
    %v407 = vunpack.c.l.b16 %v296
    %v408 = vunpack.c.h.b16 %v296
    %v409 = vunpack.c.l.b16 %v297
    %v410 = vunpack.c.h.b16 %v297
    %v411 = vunpack.c.l.b16 %v298
    %v412 = vunpack.c.h.b16 %v298
    %v413 = vunpack.c.l.b16 %v299
    %v414 = vunpack.c.h.b16 %v299
    %v415 = vunpack.c.l.b16 %v300
    %v416 = vunpack.c.h.b16 %v300
    %v417 = vunpack.c.l.b16 %v301
    %v418 = vunpack.c.h.b16 %v301
    %v419 = vunpack.c.l.b16 %v302
    %v420 = vunpack.c.h.b16 %v302
    %v421 = vpack.c.b16 %v361, %v357
    %v422 = vpack.c.b16 %v362, %v358
    %v423 = vpack.c.b16 %v363, %v359
    %v424 = vpack.c.b16 %v364, %v360
    %v425 = vpack.c.b16 %v369, %v365
    %v426 = vpack.c.b16 %v370, %v366
    %v427 = vpack.c.b16 %v371, %v367
    %v428 = vpack.c.b16 %v372, %v368
    %v429 = vpack.c.b16 %v377, %v373
    %v430 = vpack.c.b16 %v378, %v374
    %v431 = vpack.c.b16 %v379, %v375
    %v432 = vpack.c.b16 %v380, %v376
    %v433 = vpack.c.b16 %v385, %v381
    %v434 = vpack.c.b16 %v386, %v382
    %v435 = vpack.c.b16 %v387, %v383
    %v436 = vpack.c.b16 %v388, %v384
    %v437 = vpack.c.b16 %v393, %v389
    %v438 = vpack.c.b16 %v394, %v390
    %v439 = vpack.c.b16 %v395, %v391
    %v440 = vpack.c.b16 %v396, %v392
    %v441 = vpack.c.b16 %v401, %v397
    %v442 = vpack.c.b16 %v402, %v398
    %v443 = vpack.c.b16 %v403, %v399
    %v444 = vpack.c.b16 %v404, %v400
    %v445 = vpack.c.b16 %v409, %v405
    %v446 = vpack.c.b16 %v410, %v406
    %v447 = vpack.c.b16 %v411, %v407
    %v448 = vpack.c.b16 %v412, %v408
    %v449 = vpack.c.b16 %v417, %v413
    %v450 = vpack.c.b16 %v418, %v414
    %v451 = vpack.c.b16 %v419, %v415
    %v452 = vpack.c.b16 %v420, %v416
    %485 = vmatprep.subr.bf16.mxu0 %v422
    %486 = vmatpush1.bf16.msra.mxu0 %v421
    %487 = vmatprep.subr.bf16.mxu0 %v426
    %488 = vmatpush1.bf16.msra.mxu0 %v425
    %489 = vmatprep.subr.bf16.mxu0 %v430
    %490 = vmatpush1.bf16.msra.mxu0 %v429
    %491 = vmatprep.subr.bf16.mxu0 %v434
    %492 = vmatpush1.bf16.msra.mxu0 %v433
    %493 = vmatprep.subr.bf16.mxu0 %v438
    %494 = vmatpush1.bf16.msra.mxu0 %v437
    %495 = vmatprep.subr.bf16.mxu0 %v442
    %496 = vmatpush1.bf16.msra.mxu0 %v441
    %497 = vmatprep.subr.bf16.mxu0 %v446
    %498 = vmatpush1.bf16.msra.mxu0 %v445
    %499 = vmatprep.subr.bf16.mxu0 %v450
    %500 = vmatpush1.bf16.msra.mxu0 %v449
    %501 = vmatprep.subr.bf16.mxu0 0
    %502 = vmatpush1.bf16.msra.mxu0 0
    %503 = vmatprep.subr.bf16.mxu0 0
    %504 = vmatpush1.bf16.msra.mxu0 0
    %505 = vmatprep.subr.bf16.mxu0 0
    %506 = vmatpush1.bf16.msra.mxu0 0
    %507 = vmatprep.subr.bf16.mxu0 0
    %508 = vmatpush1.bf16.msra.mxu0 0
    %509 = vmatprep.subr.bf16.mxu0 0
    %510 = vmatpush1.bf16.msra.mxu0 0
    %511 = vmatprep.subr.bf16.mxu0 0
    %512 = vmatpush1.bf16.msra.mxu0 0
    %513 = vmatprep.subr.bf16.mxu0 0
    %514 = vmatpush1.bf16.msra.mxu0 0
    %515 = vmatprep.subr.bf16.mxu0 0
    %516 = vmatpush1.bf16.msra.mxu0 0
    %517 = vmatprep.mubr.bf16.mxu0 0
    %518 = vmatmul.mubr.bf16.gmra.mrb[0].mxu0 %v267
    %v519 = vpop.f32.mrb[0].mxu0
    %v520 = vadd.f32 %v308, %v519
    %v521 = vpop.f32.mrb[0].mxu0
    %v522 = vadd.f32 %v312, %v521
    %v523 = vpop.f32.mrb[0].mxu0
    %v524 = vadd.f32 %v308, %v523
    %v525 = vpop.f32.mrb[0].mxu0
    %v526 = vadd.f32 %v312, %v525
    %527 = vmatprep.mubr.bf16.mxu0 0
    %528 = vmatmul.mubr.bf16.gmra.mrb[0].mxu0 %v268
    %v529 = vpop.f32.mrb[0].mxu0
    %v530 = vadd.f32 %v308, %v529
    %v531 = vpop.f32.mrb[0].mxu0
    %v532 = vadd.f32 %v312, %v531
    %v533 = vpop.f32.mrb[0].mxu0
    %v534 = vadd.f32 %v308, %v533
    %v535 = vpop.f32.mrb[0].mxu0
    %v536 = vadd.f32 %v312, %v535
    %537 = vmatprep.mubr.bf16.mxu0 0
    %538 = vmatmul.mubr.bf16.gmra.mrb[0].mxu0 %v269
    %v539 = vpop.f32.mrb[0].mxu0
    %v540 = vadd.f32 %v308, %v539
    %v541 = vpop.f32.mrb[0].mxu0
    %v542 = vadd.f32 %v312, %v541
    %v543 = vpop.f32.mrb[0].mxu0
    %v544 = vadd.f32 %v308, %v543
    %v545 = vpop.f32.mrb[0].mxu0
    %v546 = vadd.f32 %v312, %v545
    %547 = vmatprep.mubr.bf16.mxu0 0
    %548 = vmatmul.mubr.bf16.gmra.mrb[0].mxu0 %v270
    %v549 = vpop.f32.mrb[0].mxu0
    %v550 = vadd.f32 %v308, %v549
    %v551 = vpop.f32.mrb[0].mxu0
    %v552 = vadd.f32 %v312, %v551
    %v553 = vpop.f32.mrb[0].mxu0
    %v554 = vadd.f32 %v308, %v553
    %v555 = vpop.f32.mrb[0].mxu0
    %v556 = vadd.f32 %v312, %v555
    %557 = vdwg.mxu0
    %558 = vmatprep.subr.bf16.mxu0 %v424
    %559 = vmatpush1.bf16.msra.mxu0 %v423
    %560 = vmatprep.subr.bf16.mxu0 %v428
    %561 = vmatpush1.bf16.msra.mxu0 %v427
    %562 = vmatprep.subr.bf16.mxu0 %v432
    %563 = vmatpush1.bf16.msra.mxu0 %v431
    %564 = vmatprep.subr.bf16.mxu0 %v436
    %565 = vmatpush1.bf16.msra.mxu0 %v435
    %566 = vmatprep.subr.bf16.mxu0 %v440
    %567 = vmatpush1.bf16.msra.mxu0 %v439
    %568 = vmatprep.subr.bf16.mxu0 %v444
    %569 = vmatpush1.bf16.msra.mxu0 %v443
    %570 = vmatprep.subr.bf16.mxu0 %v448
    %571 = vmatpush1.bf16.msra.mxu0 %v447
    %572 = vmatprep.subr.bf16.mxu0 %v452
    %573 = vmatpush1.bf16.msra.mxu0 %v451
    %574 = vmatprep.subr.bf16.mxu0 0
    %575 = vmatpush1.bf16.msra.mxu0 0
    %576 = vmatprep.subr.bf16.mxu0 0
    %577 = vmatpush1.bf16.msra.mxu0 0
    %578 = vmatprep.subr.bf16.mxu0 0
    %579 = vmatpush1.bf16.msra.mxu0 0
    %580 = vmatprep.subr.bf16.mxu0 0
    %581 = vmatpush1.bf16.msra.mxu0 0
    %582 = vmatprep.subr.bf16.mxu0 0
    %583 = vmatpush1.bf16.msra.mxu0 0
    %584 = vmatprep.subr.bf16.mxu0 0
    %585 = vmatpush1.bf16.msra.mxu0 0
    %586 = vmatprep.subr.bf16.mxu0 0
    %587 = vmatpush1.bf16.msra.mxu0 0
    %588 = vmatprep.subr.bf16.mxu0 0
    %589 = vmatpush1.bf16.msra.mxu0 0
    %590 = vmatprep.mubr.bf16.mxu0 0
    %591 = vmatmul.mubr.bf16.gmra.mrb[0].mxu0 %v267
    %v592 = vpop.f32.mrb[0].mxu0
    %v593 = vadd.f32 %v316, %v592
    %v594 = vpop.f32.mrb[0].mxu0
    %v595 = vadd.f32 %v320, %v594
    %v596 = vpop.f32.mrb[0].mxu0
    %v597 = vadd.f32 %v316, %v596
    %v598 = vpop.f32.mrb[0].mxu0
    %v599 = vadd.f32 %v320, %v598
    %600 = vmatprep.mubr.bf16.mxu0 0
    %601 = vmatmul.mubr.bf16.gmra.mrb[0].mxu0 %v268
    %v602 = vpop.f32.mrb[0].mxu0
    %v603 = vadd.f32 %v316, %v602
    %v604 = vpop.f32.mrb[0].mxu0
    %v605 = vadd.f32 %v320, %v604
    %v606 = vpop.f32.mrb[0].mxu0
    %v607 = vadd.f32 %v316, %v606
    %v608 = vpop.f32.mrb[0].mxu0
    %v609 = vadd.f32 %v320, %v608
    %610 = vmatprep.mubr.bf16.mxu0 0
    %611 = vmatmul.mubr.bf16.gmra.mrb[0].mxu0 %v269
    %v612 = vpop.f32.mrb[0].mxu0
    %v613 = vadd.f32 %v316, %v612
    %v614 = vpop.f32.mrb[0].mxu0
    %v615 = vadd.f32 %v320, %v614
    %v616 = vpop.f32.mrb[0].mxu0
    %v617 = vadd.f32 %v316, %v616
    %v618 = vpop.f32.mrb[0].mxu0
    %v619 = vadd.f32 %v320, %v618
    %620 = vmatprep.mubr.bf16.mxu0 0
    %621 = vmatmul.mubr.bf16.gmra.mrb[0].mxu0 %v270
    %v622 = vpop.f32.mrb[0].mxu0
    %v623 = vadd.f32 %v316, %v622
    %v624 = vpop.f32.mrb[0].mxu0
    %v625 = vadd.f32 %v320, %v624
    %v626 = vpop.f32.mrb[0].mxu0
    %v627 = vadd.f32 %v316, %v626
    %v628 = vpop.f32.mrb[0].mxu0
    %v629 = vadd.f32 %v320, %v628
    %630 = vdwg.mxu0
    %631 = vst [vmem:[#allocation3] sm:$0xff] %v520
    %632 = vst [vmem:[#allocation3 + $0x8] sm:$0xff] %v522
    %633 = vst [vmem:[#allocation3 + $0x10] sm:$0xff] %v593
    %634 = vst [vmem:[#allocation3 + $0x18] sm:$0xff] %v595
    %635 = vst [vmem:[#allocation3 + $0x20] sm:$0xff] %v524
    %636 = vst [vmem:[#allocation3 + $0x28] sm:$0xff] %v526
    %637 = vst [vmem:[#allocation3 + $0x30] sm:$0xff] %v597
    %638 = vst [vmem:[#allocation3 + $0x38] sm:$0xff] %v599
    %639 = vst [vmem:[#allocation3 + $0x40] sm:$0xff] %v530
    %640 = vst [vmem:[#allocation3 + $0x48] sm:$0xff] %v532
    %641 = vst [vmem:[#allocation3 + $0x50] sm:$0xff] %v603
    %642 = vst [vmem:[#allocation3 + $0x58] sm:$0xff] %v605
    %643 = vst [vmem:[#allocation3 + $0x60] sm:$0xff] %v534
    %644 = vst [vmem:[#allocation3 + $0x68] sm:$0xff] %v536
    %645 = vst [vmem:[#allocation3 + $0x70] sm:$0xff] %v607
    %646 = vst [vmem:[#allocation3 + $0x78] sm:$0xff] %v609
    %647 = vst [vmem:[#allocation3 + $0x80] sm:$0xff] %v540
    %648 = vst [vmem:[#allocation3 + $0x88] sm:$0xff] %v542
    %649 = vst [vmem:[#allocation3 + $0x90] sm:$0xff] %v613
    %650 = vst [vmem:[#allocation3 + $0x98] sm:$0xff] %v615
    %651 = vst [vmem:[#allocation3 + $0xa0] sm:$0xff] %v544
    %652 = vst [vmem:[#allocation3 + $0xa8] sm:$0xff] %v546
    %653 = vst [vmem:[#allocation3 + $0xb0] sm:$0xff] %v617
    %654 = vst [vmem:[#allocation3 + $0xb8] sm:$0xff] %v619
    %655 = vst [vmem:[#allocation3 + $0xc0] sm:$0xff] %v550
    %656 = vst [vmem:[#allocation3 + $0xc8] sm:$0xff] %v552
    %657 = vst [vmem:[#allocation3 + $0xd0] sm:$0xff] %v623
    %658 = vst [vmem:[#allocation3 + $0xd8] sm:$0xff] %v625
    %659 = vst [vmem:[#allocation3 + $0xe0] sm:$0xff] %v554
    %660 = vst [vmem:[#allocation3 + $0xe8] sm:$0xff] %v556
    %661 = vst [vmem:[#allocation3 + $0xf0] sm:$0xff] %v627
    %662 = vst [vmem:[#allocation3 + $0xf8] sm:$0xff] %v629
    %663 = vst [vmem:[#allocation4] sm:$0xff] 0.0
    %664 = vst [vmem:[#allocation5] sm:$0xff] 0.0
    %v665 = vld [vmem:[#allocation4] sm:$0xff]
    %v666 = vld [vmem:[#allocation5] sm:$0xff]
    %v667 = vld [vmem:[#allocation3] sm:$0xff]
    %v668 = vld [vmem:[#allocation3 + $0x8] sm:$0xff]
    %v669 = vld [vmem:[#allocation3 + $0x10] sm:$0xff]
    %v670 = vld [vmem:[#allocation3 + $0x18] sm:$0xff]
    %v671 = vpack.c.bf16 %v665, %v665
    %v672 = vld [vmem:[#allocation12] sm:$0xff]
    %v673 = vld [vmem:[#allocation12 + $0x8] sm:$0xff]
    %v674 = vld [vmem:[#allocation12 + $0x10] sm:$0xff]
    %v675 = vld [vmem:[#allocation12 + $0x18] sm:$0xff]
    %v676 = vld [vmem:[#allocation12 + $0x20] sm:$0xff]
    %v677 = vld [vmem:[#allocation12 + $0x28] sm:$0xff]
    %v678 = vld [vmem:[#allocation12 + $0x30] sm:$0xff]
    %v679 = vld [vmem:[#allocation12 + $0x38] sm:$0xff]
    %v680 = vld [vmem:[#allocation12 + $0x40] sm:$0xff]
    %v681 = vld [vmem:[#allocation12 + $0x48] sm:$0xff]
    %v682 = vld [vmem:[#allocation12 + $0x50] sm:$0xff]
    %v683 = vld [vmem:[#allocation12 + $0x58] sm:$0xff]
    %v684 = vld [vmem:[#allocation12 + $0x60] sm:$0xff]
    %v685 = vld [vmem:[#allocation12 + $0x68] sm:$0xff]
    %v686 = vld [vmem:[#allocation12 + $0x70] sm:$0xff]
    %v687 = vld [vmem:[#allocation12 + $0x78] sm:$0xff]
    %v688 = vld [vmem:[#allocation12 + $0x80] sm:$0xff]
    %v689 = vld [vmem:[#allocation12 + $0x88] sm:$0xff]
    %v690 = vld [vmem:[#allocation12 + $0x90] sm:$0xff]
    %v691 = vld [vmem:[#allocation12 + $0x98] sm:$0xff]
    %v692 = vld [vmem:[#allocation12 + $0xa0] sm:$0xff]
    %v693 = vld [vmem:[#allocation12 + $0xa8] sm:$0xff]
    %v694 = vld [vmem:[#allocation12 + $0xb0] sm:$0xff]
    %v695 = vld [vmem:[#allocation12 + $0xb8] sm:$0xff]
    %v696 = vld [vmem:[#allocation12 + $0xc0] sm:$0xff]
    %v697 = vld [vmem:[#allocation12 + $0xc8] sm:$0xff]
    %v698 = vld [vmem:[#allocation12 + $0xd0] sm:$0xff]
    %v699 = vld [vmem:[#allocation12 + $0xd8] sm:$0xff]
    %v700 = vld [vmem:[#allocation12 + $0xe0] sm:$0xff]
    %v701 = vld [vmem:[#allocation12 + $0xe8] sm:$0xff]
    %v702 = vld [vmem:[#allocation12 + $0xf0] sm:$0xff]
    %v703 = vld [vmem:[#allocation12 + $0xf8] sm:$0xff]
    %v736 = vunpack.c.l.b16 %v672
    %v737 = vunpack.c.h.b16 %v672
    %v738 = vunpack.c.l.b16 %v673
    %v739 = vunpack.c.h.b16 %v673
    %v740 = vunpack.c.l.b16 %v674
    %v741 = vunpack.c.h.b16 %v674
    %v742 = vunpack.c.l.b16 %v675
    %v743 = vunpack.c.h.b16 %v675
    %v744 = vunpack.c.l.b16 %v676
    %v745 = vunpack.c.h.b16 %v676
    %v746 = vunpack.c.l.b16 %v677
    %v747 = vunpack.c.h.b16 %v677
    %v748 = vunpack.c.l.b16 %v678
    %v749 = vunpack.c.h.b16 %v678
    %v750 = vunpack.c.l.b16 %v679
    %v751 = vunpack.c.h.b16 %v679
    %v752 = vunpack.c.l.b16 %v680
    %v753 = vunpack.c.h.b16 %v680
    %v754 = vunpack.c.l.b16 %v681
    %v755 = vunpack.c.h.b16 %v681
    %v756 = vunpack.c.l.b16 %v682
    %v757 = vunpack.c.h.b16 %v682
    %v758 = vunpack.c.l.b16 %v683
    %v759 = vunpack.c.h.b16 %v683
    %v760 = vunpack.c.l.b16 %v684
    %v761 = vunpack.c.h.b16 %v684
    %v762 = vunpack.c.l.b16 %v685
    %v763 = vunpack.c.h.b16 %v685
    %v764 = vunpack.c.l.b16 %v686
    %v765 = vunpack.c.h.b16 %v686
    %v766 = vunpack.c.l.b16 %v687
    %v767 = vunpack.c.h.b16 %v687
    %v768 = vunpack.c.l.b16 %v688
    %v769 = vunpack.c.h.b16 %v688
    %v770 = vunpack.c.l.b16 %v689
    %v771 = vunpack.c.h.b16 %v689
    %v772 = vunpack.c.l.b16 %v690
    %v773 = vunpack.c.h.b16 %v690
    %v774 = vunpack.c.l.b16 %v691
    %v775 = vunpack.c.h.b16 %v691
    %v776 = vunpack.c.l.b16 %v692
    %v777 = vunpack.c.h.b16 %v692
    %v778 = vunpack.c.l.b16 %v693
    %v779 = vunpack.c.h.b16 %v693
    %v780 = vunpack.c.l.b16 %v694
    %v781 = vunpack.c.h.b16 %v694
    %v782 = vunpack.c.l.b16 %v695
    %v783 = vunpack.c.h.b16 %v695
    %v784 = vunpack.c.l.b16 %v696
    %v785 = vunpack.c.h.b16 %v696
    %v786 = vunpack.c.l.b16 %v697
    %v787 = vunpack.c.h.b16 %v697
    %v788 = vunpack.c.l.b16 %v698
    %v789 = vunpack.c.h.b16 %v698
    %v790 = vunpack.c.l.b16 %v699
    %v791 = vunpack.c.h.b16 %v699
    %v792 = vunpack.c.l.b16 %v700
    %v793 = vunpack.c.h.b16 %v700
    %v794 = vunpack.c.l.b16 %v701
    %v795 = vunpack.c.h.b16 %v701
    %v796 = vunpack.c.l.b16 %v702
    %v797 = vunpack.c.h.b16 %v702
    %v798 = vunpack.c.l.b16 %v703
    %v799 = vunpack.c.h.b16 %v703
    %v800 = vpack.c.b16 %v740, %v736
    %v801 = vpack.c.b16 %v741, %v737
    %v802 = vpack.c.b16 %v742, %v738
    %v803 = vpack.c.b16 %v743, %v739
    %v804 = vpack.c.b16 %v748, %v744
    %v805 = vpack.c.b16 %v749, %v745
    %v806 = vpack.c.b16 %v750, %v746
    %v807 = vpack.c.b16 %v751, %v747
    %v808 = vpack.c.b16 %v756, %v752
    %v809 = vpack.c.b16 %v757, %v753
    %v810 = vpack.c.b16 %v758, %v754
    %v811 = vpack.c.b16 %v759, %v755
    %v812 = vpack.c.b16 %v764, %v760
    %v813 = vpack.c.b16 %v765, %v761
    %v814 = vpack.c.b16 %v766, %v762
    %v815 = vpack.c.b16 %v767, %v763
    %v816 = vpack.c.b16 %v772, %v768
    %v817 = vpack.c.b16 %v773, %v769
    %v818 = vpack.c.b16 %v774, %v770
    %v819 = vpack.c.b16 %v775, %v771
    %v820 = vpack.c.b16 %v780, %v776
    %v821 = vpack.c.b16 %v781, %v777
    %v822 = vpack.c.b16 %v782, %v778
    %v823 = vpack.c.b16 %v783, %v779
    %v824 = vpack.c.b16 %v788, %v784
    %v825 = vpack.c.b16 %v789, %v785
    %v826 = vpack.c.b16 %v790, %v786
    %v827 = vpack.c.b16 %v791, %v787
    %v828 = vpack.c.b16 %v796, %v792
    %v829 = vpack.c.b16 %v797, %v793
    %v830 = vpack.c.b16 %v798, %v794
    %v831 = vpack.c.b16 %v799, %v795
    %864 = vmatprep.subr.bf16.mxu0 %v801
    %865 = vmatpush1.bf16.msra.mxu0 %v800
    %866 = vmatprep.subr.bf16.mxu0 %v805
    %867 = vmatpush1.bf16.msra.mxu0 %v804
    %868 = vmatprep.subr.bf16.mxu0 %v809
    %869 = vmatpush1.bf16.msra.mxu0 %v808
    %870 = vmatprep.subr.bf16.mxu0 %v813
    %871 = vmatpush1.bf16.msra.mxu0 %v812
    %872 = vmatprep.subr.bf16.mxu0 %v817
    %873 = vmatpush1.bf16.msra.mxu0 %v816
    %874 = vmatprep.subr.bf16.mxu0 %v821
    %875 = vmatpush1.bf16.msra.mxu0 %v820
    %876 = vmatprep.subr.bf16.mxu0 %v825
    %877 = vmatpush1.bf16.msra.mxu0 %v824
    %878 = vmatprep.subr.bf16.mxu0 %v829
    %879 = vmatpush1.bf16.msra.mxu0 %v828
    %880 = vmatprep.subr.bf16.mxu0 0
    %881 = vmatpush1.bf16.msra.mxu0 0
    %882 = vmatprep.subr.bf16.mxu0 0
    %883 = vmatpush1.bf16.msra.mxu0 0
    %884 = vmatprep.subr.bf16.mxu0 0
    %885 = vmatpush1.bf16.msra.mxu0 0
    %886 = vmatprep.subr.bf16.mxu0 0
    %887 = vmatpush1.bf16.msra.mxu0 0
    %888 = vmatprep.subr.bf16.mxu0 0
    %889 = vmatpush1.bf16.msra.mxu0 0
    %890 = vmatprep.subr.bf16.mxu0 0
    %891 = vmatpush1.bf16.msra.mxu0 0
    %892 = vmatprep.subr.bf16.mxu0 0
    %893 = vmatpush1.bf16.msra.mxu0 0
    %894 = vmatprep.subr.bf16.mxu0 0
    %895 = vmatpush1.bf16.msra.mxu0 0
    %896 = vmatprep.mubr.bf16.mxu0 0
    %897 = vmatmul.mubr.bf16.gmra.mrb[0].mxu0 %v671
    %v898 = vpop.f32.mrb[0].mxu0
    %v899 = vadd.f32 0.0, %v898
    %v900 = vpop.f32.mrb[0].mxu0
    %v901 = vadd.f32 0.0, %v900
    %v902 = vpop.f32.mrb[0].mxu0
    %v903 = vpop.f32.mrb[0].mxu0
    %904 = vdwg.mxu0
    %905 = vmatprep.subr.bf16.mxu0 %v803
    %906 = vmatpush1.bf16.msra.mxu0 %v802
    %907 = vmatprep.subr.bf16.mxu0 %v807
    %908 = vmatpush1.bf16.msra.mxu0 %v806
    %909 = vmatprep.subr.bf16.mxu0 %v811
    %910 = vmatpush1.bf16.msra.mxu0 %v810
    %911 = vmatprep.subr.bf16.mxu0 %v815
    %912 = vmatpush1.bf16.msra.mxu0 %v814
    %913 = vmatprep.subr.bf16.mxu0 %v819
    %914 = vmatpush1.bf16.msra.mxu0 %v818
    %915 = vmatprep.subr.bf16.mxu0 %v823
    %916 = vmatpush1.bf16.msra.mxu0 %v822
    %917 = vmatprep.subr.bf16.mxu0 %v827
    %918 = vmatpush1.bf16.msra.mxu0 %v826
    %919 = vmatprep.subr.bf16.mxu0 %v831
    %920 = vmatpush1.bf16.msra.mxu0 %v830
    %921 = vmatprep.subr.bf16.mxu0 0
    %922 = vmatpush1.bf16.msra.mxu0 0
    %923 = vmatprep.subr.bf16.mxu0 0
    %924 = vmatpush1.bf16.msra.mxu0 0
    %925 = vmatprep.subr.bf16.mxu0 0
    %926 = vmatpush1.bf16.msra.mxu0 0
    %927 = vmatprep.subr.bf16.mxu0 0
    %928 = vmatpush1.bf16.msra.mxu0 0
    %929 = vmatprep.subr.bf16.mxu0 0
    %930 = vmatpush1.bf16.msra.mxu0 0
    %931 = vmatprep.subr.bf16.mxu0 0
    %932 = vmatpush1.bf16.msra.mxu0 0
    %933 = vmatprep.subr.bf16.mxu0 0
    %934 = vmatpush1.bf16.msra.mxu0 0
    %935 = vmatprep.subr.bf16.mxu0 0
    %936 = vmatpush1.bf16.msra.mxu0 0
    %937 = vmatprep.mubr.bf16.mxu0 0
    %938 = vmatmul.mubr.bf16.gmra.mrb[0].mxu0 %v671
    %v939 = vpop.f32.mrb[0].mxu0
    %v940 = vadd.f32 0.0, %v939
    %v941 = vpop.f32.mrb[0].mxu0
    %v942 = vadd.f32 0.0, %v941
    %v943 = vpop.f32.mrb[0].mxu0
    %v944 = vpop.f32.mrb[0].mxu0
    %945 = vdwg.mxu0
    %v946 = vadd.f32 %v667, %v899
    %v947 = vadd.f32 %v668, %v901
    %v948 = vadd.f32 %v669, %v940
    %v949 = vadd.f32 %v670, %v942
    %v950 = vxor.u32 %v946, 2147483648
    %v951 = vmul.f32 %v950, 1.442695
    %v952 = vpow.pop %v951
    %v953 = vadd.f32 %v952, 1.0
    %v954 = vrcp.pop %v953
    %v955 = vmul.f32 1.0, %v954
    %v956 = vxor.u32 %v947, 2147483648
    %v957 = vmul.f32 %v956, 1.442695
    %v958 = vpow.pop %v957
    %v959 = vadd.f32 %v958, 1.0
    %v960 = vrcp.pop %v959
    %v961 = vmul.f32 1.0, %v960
    %v962 = vtanh.pop %v948
    %v963 = vxor.u32 %v949, 2147483648
    %v964 = vmul.f32 %v963, 1.442695
    %v965 = vpow.pop %v964
    %v966 = vadd.f32 %v965, 1.0
    %v967 = vrcp.pop %v966
    %v968 = vmul.f32 1.0, %v967
    %v969 = vmul.f32 %v961, %v666
    %v970 = vmul.f32 %v955, %v962
    %v971 = vadd.f32 %v969, %v970
    %v972 = vtanh.pop %v971
    %v973 = vmul.f32 %v968, %v972
    %974 = vst [vmem:[#allocation4] sm:$0xff] %v973
    %975 = vst [vmem:[#allocation5] sm:$0xff] %v971
    %976 = vst [vmem:[#allocation2] sm:$0xff] %v973
    %v977 = vld [vmem:[#allocation4] sm:$0xff]
    %v978 = vld [vmem:[#allocation5] sm:$0xff]
    %v979 = vld [vmem:[#allocation3 + $0x20] sm:$0xff]
    %v980 = vld [vmem:[#allocation3 + $0x28] sm:$0xff]
    %v981 = vld [vmem:[#allocation3 + $0x30] sm:$0xff]
    %v982 = vld [vmem:[#allocation3 + $0x38] sm:$0xff]
    %v983 = vpack.c.bf16 %v977, %v977
    %v984 = vld [vmem:[#allocation12] sm:$0xff]
    %v985 = vld [vmem:[#allocation12 + $0x8] sm:$0xff]
    %v986 = vld [vmem:[#allocation12 + $0x10] sm:$0xff]
    %v987 = vld [vmem:[#allocation12 + $0x18] sm:$0xff]
    %v988 = vld [vmem:[#allocation12 + $0x20] sm:$0xff]
    %v989 = vld [vmem:[#allocation12 + $0x28] sm:$0xff]
    %v990 = vld [vmem:[#allocation12 + $0x30] sm:$0xff]
    %v991 = vld [vmem:[#allocation12 + $0x38] sm:$0xff]
    %v992 = vld [vmem:[#allocation12 + $0x40] sm:$0xff]
    %v993 = vld [vmem:[#allocation12 + $0x48] sm:$0xff]
    %v994 = vld [vmem:[#allocation12 + $0x50] sm:$0xff]
    %v995 = vld [vmem:[#allocation12 + $0x58] sm:$0xff]
    %v996 = vld [vmem:[#allocation12 + $0x60] sm:$0xff]
    %v997 = vld [vmem:[#allocation12 + $0x68] sm:$0xff]
    %v998 = vld [vmem:[#allocation12 + $0x70] sm:$0xff]
    %v999 = vld [vmem:[#allocation12 + $0x78] sm:$0xff]
    %v1000 = vld [vmem:[#allocation12 + $0x80] sm:$0xff]
    %v1001 = vld [vmem:[#allocation12 + $0x88] sm:$0xff]
    %v1002 = vld [vmem:[#allocation12 + $0x90] sm:$0xff]
    %v1003 = vld [vmem:[#allocation12 + $0x98] sm:$0xff]
    %v1004 = vld [vmem:[#allocation12 + $0xa0] sm:$0xff]
    %v1005 = vld [vmem:[#allocation12 + $0xa8] sm:$0xff]
    %v1006 = vld [vmem:[#allocation12 + $0xb0] sm:$0xff]
    %v1007 = vld [vmem:[#allocation12 + $0xb8] sm:$0xff]
    %v1008 = vld [vmem:[#allocation12 + $0xc0] sm:$0xff]
    %v1009 = vld [vmem:[#allocation12 + $0xc8] sm:$0xff]
    %v1010 = vld [vmem:[#allocation12 + $0xd0] sm:$0xff]
    %v1011 = vld [vmem:[#allocation12 + $0xd8] sm:$0xff]
    %v1012 = vld [vmem:[#allocation12 + $0xe0] sm:$0xff]
    %v1013 = vld [vmem:[#allocation12 + $0xe8] sm:$0xff]
    %v1014 = vld [vmem:[#allocation12 + $0xf0] sm:$0xff]
    %v1015 = vld [vmem:[#allocation12 + $0xf8] sm:$0xff]
    %v1048 = vunpack.c.l.b16 %v984
    %v1049 = vunpack.c.h.b16 %v984
    %v1050 = vunpack.c.l.b16 %v985
    %v1051 = vunpack.c.h.b16 %v985
    %v1052 = vunpack.c.l.b16 %v986
    %v1053 = vunpack.c.h.b16 %v986
    %v1054 = vunpack.c.l.b16 %v987
    %v1055 = vunpack.c.h.b16 %v987
    %v1056 = vunpack.c.l.b16 %v988
    %v1057 = vunpack.c.h.b16 %v988
    %v1058 = vunpack.c.l.b16 %v989
    %v1059 = vunpack.c.h.b16 %v989
    %v1060 = vunpack.c.l.b16 %v990
    %v1061 = vunpack.c.h.b16 %v990
    %v1062 = vunpack.c.l.b16 %v991
    %v1063 = vunpack.c.h.b16 %v991
    %v1064 = vunpack.c.l.b16 %v992
    %v1065 = vunpack.c.h.b16 %v992
    %v1066 = vunpack.c.l.b16 %v993
    %v1067 = vunpack.c.h.b16 %v993
    %v1068 = vunpack.c.l.b16 %v994
    %v1069 = vunpack.c.h.b16 %v994
    %v1070 = vunpack.c.l.b16 %v995
    %v1071 = vunpack.c.h.b16 %v995
    %v1072 = vunpack.c.l.b16 %v996
    %v1073 = vunpack.c.h.b16 %v996
    %v1074 = vunpack.c.l.b16 %v997
    %v1075 = vunpack.c.h.b16 %v997
    %v1076 = vunpack.c.l.b16 %v998
    %v1077 = vunpack.c.h.b16 %v998
    %v1078 = vunpack.c.l.b16 %v999
    %v1079 = vunpack.c.h.b16 %v999
    %v1080 = vunpack.c.l.b16 %v1000
    %v1081 = vunpack.c.h.b16 %v1000
    %v1082 = vunpack.c.l.b16 %v1001
    %v1083 = vunpack.c.h.b16 %v1001
    %v1084 = vunpack.c.l.b16 %v1002
    %v1085 = vunpack.c.h.b16 %v1002
    %v1086 = vunpack.c.l.b16 %v1003
    %v1087 = vunpack.c.h.b16 %v1003
    %v1088 = vunpack.c.l.b16 %v1004
    %v1089 = vunpack.c.h.b16 %v1004
    %v1090 = vunpack.c.l.b16 %v1005
    %v1091 = vunpack.c.h.b16 %v1005
    %v1092 = vunpack.c.l.b16 %v1006
    %v1093 = vunpack.c.h.b16 %v1006
    %v1094 = vunpack.c.l.b16 %v1007
    %v1095 = vunpack.c.h.b16 %v1007
    %v1096 = vunpack.c.l.b16 %v1008
    %v1097 = vunpack.c.h.b16 %v1008
    %v1098 = vunpack.c.l.b16 %v1009
    %v1099 = vunpack.c.h.b16 %v1009
    %v1100 = vunpack.c.l.b16 %v1010
    %v1101 = vunpack.c.h.b16 %v1010
    %v1102 = vunpack.c.l.b16 %v1011
    %v1103 = vunpack.c.h.b16 %v1011
    %v1104 = vunpack.c.l.b16 %v1012
    %v1105 = vunpack.c.h.b16 %v1012
    %v1106 = vunpack.c.l.b16 %v1013
    %v1107 = vunpack.c.h.b16 %v1013
    %v1108 = vunpack.c.l.b16 %v1014
    %v1109 = vunpack.c.h.b16 %v1014
    %v1110 = vunpack.c.l.b16 %v1015
    %v1111 = vunpack.c.h.b16 %v1015
    %v1112 = vpack.c.b16 %v1052, %v1048
    %v1113 = vpack.c.b16 %v1053, %v1049
    %v1114 = vpack.c.b16 %v1054, %v1050
    %v1115 = vpack.c.b16 %v1055, %v1051
    %v1116 = vpack.c.b16 %v1060, %v1056
    %v1117 = vpack.c.b16 %v1061, %v1057
    %v1118 = vpack.c.b16 %v1062, %v1058
    %v1119 = vpack.c.b16 %v1063, %v1059
    %v1120 = vpack.c.b16 %v1068, %v1064
    %v1121 = vpack.c.b16 %v1069, %v1065
    %v1122 = vpack.c.b16 %v1070, %v1066
    %v1123 = vpack.c.b16 %v1071, %v1067
    %v1124 = vpack.c.b16 %v1076, %v1072
    %v1125 = vpack.c.b16 %v1077, %v1073
    %v1126 = vpack.c.b16 %v1078, %v1074
    %v1127 = vpack.c.b16 %v1079, %v1075
    %v1128 = vpack.c.b16 %v1084, %v1080
    %v1129 = vpack.c.b16 %v1085, %v1081
    %v1130 = vpack.c.b16 %v1086, %v1082
    %v1131 = vpack.c.b16 %v1087, %v1083
    %v1132 = vpack.c.b16 %v1092, %v1088
    %v1133 = vpack.c.b16 %v1093, %v1089
    %v1134 = vpack.c.b16 %v1094, %v1090
    %v1135 = vpack.c.b16 %v1095, %v1091
    %v1136 = vpack.c.b16 %v1100, %v1096
    %v1137 = vpack.c.b16 %v1101, %v1097
    %v1138 = vpack.c.b16 %v1102, %v1098
    %v1139 = vpack.c.b16 %v1103, %v1099
    %v1140 = vpack.c.b16 %v1108, %v1104
    %v1141 = vpack.c.b16 %v1109, %v1105
    %v1142 = vpack.c.b16 %v1110, %v1106
    %v1143 = vpack.c.b16 %v1111, %v1107
    %1176 = vmatprep.subr.bf16.mxu0 %v1113
    %1177 = vmatpush1.bf16.msra.mxu0 %v1112
    %1178 = vmatprep.subr.bf16.mxu0 %v1117
    %1179 = vmatpush1.bf16.msra.mxu0 %v1116
    %1180 = vmatprep.subr.bf16.mxu0 %v1121
    %1181 = vmatpush1.bf16.msra.mxu0 %v1120
    %1182 = vmatprep.subr.bf16.mxu0 %v1125
    %1183 = vmatpush1.bf16.msra.mxu0 %v1124
    %1184 = vmatprep.subr.bf16.mxu0 %v1129
    %1185 = vmatpush1.bf16.msra.mxu0 %v1128
    %1186 = vmatprep.subr.bf16.mxu0 %v1133
    %1187 = vmatpush1.bf16.msra.mxu0 %v1132
    %1188 = vmatprep.subr.bf16.mxu0 %v1137
    %1189 = vmatpush1.bf16.msra.mxu0 %v1136
    %1190 = vmatprep.subr.bf16.mxu0 %v1141
    %1191 = vmatpush1.bf16.msra.mxu0 %v1140
    %1192 = vmatprep.subr.bf16.mxu0 0
    %1193 = vmatpush1.bf16.msra.mxu0 0
    %1194 = vmatprep.subr.bf16.mxu0 0
    %1195 = vmatpush1.bf16.msra.mxu0 0
    %1196 = vmatprep.subr.bf16.mxu0 0
    %1197 = vmatpush1.bf16.msra.mxu0 0
    %1198 = vmatprep.subr.bf16.mxu0 0
    %1199 = vmatpush1.bf16.msra.mxu0 0
    %1200 = vmatprep.subr.bf16.mxu0 0
    %1201 = vmatpush1.bf16.msra.mxu0 0
    %1202 = vmatprep.subr.bf16.mxu0 0
    %1203 = vmatpush1.bf16.msra.mxu0 0
    %1204 = vmatprep.subr.bf16.mxu0 0
    %1205 = vmatpush1.bf16.msra.mxu0 0
    %1206 = vmatprep.subr.bf16.mxu0 0
    %1207 = vmatpush1.bf16.msra.mxu0 0
    %1208 = vmatprep.mubr.bf16.mxu0 0
    %1209 = vmatmul.mubr.bf16.gmra.mrb[0].mxu0 %v983
    %v1210 = vpop.f32.mrb[0].mxu0
    %v1211 = vadd.f32 0.0, %v1210
    %v1212 = vpop.f32.mrb[0].mxu0
    %v1213 = vadd.f32 0.0, %v1212
    %v1214 = vpop.f32.mrb[0].mxu0
    %v1215 = vpop.f32.mrb[0].mxu0
    %1216 = vdwg.mxu0
    %1217 = vmatprep.subr.bf16.mxu0 %v1115
    %1218 = vmatpush1.bf16.msra.mxu0 %v1114
    %1219 = vmatprep.subr.bf16.mxu0 %v1119
    %1220 = vmatpush1.bf16.msra.mxu0 %v1118
    %1221 = vmatprep.subr.bf16.mxu0 %v1123
    %1222 = vmatpush1.bf16.msra.mxu0 %v1122
    %1223 = vmatprep.subr.bf16.mxu0 %v1127
    %1224 = vmatpush1.bf16.msra.mxu0 %v1126
    %1225 = vmatprep.subr.bf16.mxu0 %v1131
    %1226 = vmatpush1.bf16.msra.mxu0 %v1130
    %1227 = vmatprep.subr.bf16.mxu0 %v1135
    %1228 = vmatpush1.bf16.msra.mxu0 %v1134
    %1229 = vmatprep.subr.bf16.mxu0 %v1139
    %1230 = vmatpush1.bf16.msra.mxu0 %v1138
    %1231 = vmatprep.subr.bf16.mxu0 %v1143
    %1232 = vmatpush1.bf16.msra.mxu0 %v1142
    %1233 = vmatprep.subr.bf16.mxu0 0
    %1234 = vmatpush1.bf16.msra.mxu0 0
    %1235 = vmatprep.subr.bf16.mxu0 0
    %1236 = vmatpush1.bf16.msra.mxu0 0
    %1237 = vmatprep.subr.bf16.mxu0 0
    %1238 = vmatpush1.bf16.msra.mxu0 0
    %1239 = vmatprep.subr.bf16.mxu0 0
    %1240 = vmatpush1.bf16.msra.mxu0 0
    %1241 = vmatprep.subr.bf16.mxu0 0
    %1242 = vmatpush1.bf16.msra.mxu0 0
    %1243 = vmatprep.subr.bf16.mxu0 0
    %1244 = vmatpush1.bf16.msra.mxu0 0
    %1245 = vmatprep.subr.bf16.mxu0 0
    %1246 = vmatpush1.bf16.msra.mxu0 0
    %1247 = vmatprep.subr.bf16.mxu0 0
    %1248 = vmatpush1.bf16.msra.mxu0 0
    %1249 = vmatprep.mubr.bf16.mxu0 0
    %1250 = vmatmul.mubr.bf16.gmra.mrb[0].mxu0 %v983
    %v1251 = vpop.f32.mrb[0].mxu0
    %v1252 = vadd.f32 0.0, %v1251
    %v1253 = vpop.f32.mrb[0].mxu0
    %v1254 = vadd.f32 0.0, %v1253
    %v1255 = vpop.f32.mrb[0].mxu0
    %v1256 = vpop.f32.mrb[0].mxu0
    %1257 = vdwg.mxu0
    %v1258 = vadd.f32 %v979, %v1211
    %v1259 = vadd.f32 %v980, %v1213
    %v1260 = vadd.f32 %v981, %v1252
    %v1261 = vadd.f32 %v982, %v1254
    %v1262 = vxor.u32 %v1258, 2147483648
    %v1263 = vmul.f32 %v1262, 1.442695
    %v1264 = vpow.pop %v1263
    %v1265 = vadd.f32 %v1264, 1.0
    %v1266 = vrcp.pop %v1265
    %v1267 = vmul.f32 1.0, %v1266
    %v1268 = vxor.u32 %v1259, 2147483648
    %v1269 = vmul.f32 %v1268, 1.442695
    %v1270 = vpow.pop %v1269
    %v1271 = vadd.f32 %v1270, 1.0
    %v1272 = vrcp.pop %v1271
    %v1273 = vmul.f32 1.0, %v1272
    %v1274 = vtanh.pop %v1260
    %v1275 = vxor.u32 %v1261, 2147483648
    %v1276 = vmul.f32 %v1275, 1.442695
    %v1277 = vpow.pop %v1276
    %v1278 = vadd.f32 %v1277, 1.0
    %v1279 = vrcp.pop %v1278
    %v1280 = vmul.f32 1.0, %v1279
    %v1281 = vmul.f32 %v1273, %v978
    %v1282 = vmul.f32 %v1267, %v1274
    %v1283 = vadd.f32 %v1281, %v1282
    %v1284 = vtanh.pop %v1283
    %v1285 = vmul.f32 %v1280, %v1284
    %1286 = vst [vmem:[#allocation4] sm:$0xff] %v1285
    %1287 = vst [vmem:[#allocation5] sm:$0xff] %v1283
    %1288 = vst [vmem:[#allocation2 + $0x8] sm:$0xff] %v1285
    %v1289 = vld [vmem:[#allocation4] sm:$0xff]
    %v1290 = vld [vmem:[#allocation5] sm:$0xff]
    %v1291 = vld [vmem:[#allocation3 + $0x40] sm:$0xff]
    %v1292 = vld [vmem:[#allocation3 + $0x48] sm:$0xff]
    %v1293 = vld [vmem:[#allocation3 + $0x50] sm:$0xff]
    %v1294 = vld [vmem:[#allocation3 + $0x58] sm:$0xff]
    %v1295 = vpack.c.bf16 %v1289, %v1289
    %v1296 = vld [vmem:[#allocation12] sm:$0xff]
    %v1297 = vld [vmem:[#allocation12 + $0x8] sm:$0xff]
    %v1298 = vld [vmem:[#allocation12 + $0x10] sm:$0xff]
    %v1299 = vld [vmem:[#allocation12 + $0x18] sm:$0xff]
    %v1300 = vld [vmem:[#allocation12 + $0x20] sm:$0xff]
    %v1301 = vld [vmem:[#allocation12 + $0x28] sm:$0xff]
    %v1302 = vld [vmem:[#allocation12 + $0x30] sm:$0xff]
    %v1303 = vld [vmem:[#allocation12 + $0x38] sm:$0xff]
    %v1304 = vld [vmem:[#allocation12 + $0x40] sm:$0xff]
    %v1305 = vld [vmem:[#allocation12 + $0x48] sm:$0xff]
    %v1306 = vld [vmem:[#allocation12 + $0x50] sm:$0xff]
    %v1307 = vld [vmem:[#allocation12 + $0x58] sm:$0xff]
    %v1308 = vld [vmem:[#allocation12 + $0x60] sm:$0xff]
    %v1309 = vld [vmem:[#allocation12 + $0x68] sm:$0xff]
    %v1310 = vld [vmem:[#allocation12 + $0x70] sm:$0xff]
    %v1311 = vld [vmem:[#allocation12 + $0x78] sm:$0xff]
    %v1312 = vld [vmem:[#allocation12 + $0x80] sm:$0xff]
    %v1313 = vld [vmem:[#allocation12 + $0x88] sm:$0xff]
    %v1314 = vld [vmem:[#allocation12 + $0x90] sm:$0xff]
    %v1315 = vld [vmem:[#allocation12 + $0x98] sm:$0xff]
    %v1316 = vld [vmem:[#allocation12 + $0xa0] sm:$0xff]
    %v1317 = vld [vmem:[#allocation12 + $0xa8] sm:$0xff]
    %v1318 = vld [vmem:[#allocation12 + $0xb0] sm:$0xff]
    %v1319 = vld [vmem:[#allocation12 + $0xb8] sm:$0xff]
    %v1320 = vld [vmem:[#allocation12 + $0xc0] sm:$0xff]
    %v1321 = vld [vmem:[#allocation12 + $0xc8] sm:$0xff]
    %v1322 = vld [vmem:[#allocation12 + $0xd0] sm:$0xff]
    %v1323 = vld [vmem:[#allocation12 + $0xd8] sm:$0xff]
    %v1324 = vld [vmem:[#allocation12 + $0xe0] sm:$0xff]
    %v1325 = vld [vmem:[#allocation12 + $0xe8] sm:$0xff]
    %v1326 = vld [vmem:[#allocation12 + $0xf0] sm:$0xff]
    %v1327 = vld [vmem:[#allocation12 + $0xf8] sm:$0xff]
    %v1360 = vunpack.c.l.b16 %v1296
    %v1361 = vunpack.c.h.b16 %v1296
    %v1362 = vunpack.c.l.b16 %v1297
    %v1363 = vunpack.c.h.b16 %v1297
    %v1364 = vunpack.c.l.b16 %v1298
    %v1365 = vunpack.c.h.b16 %v1298
    %v1366 = vunpack.c.l.b16 %v1299
    %v1367 = vunpack.c.h.b16 %v1299
    %v1368 = vunpack.c.l.b16 %v1300
    %v1369 = vunpack.c.h.b16 %v1300
    %v1370 = vunpack.c.l.b16 %v1301
    %v1371 = vunpack.c.h.b16 %v1301
    %v1372 = vunpack.c.l.b16 %v1302
    %v1373 = vunpack.c.h.b16 %v1302
    %v1374 = vunpack.c.l.b16 %v1303
    %v1375 = vunpack.c.h.b16 %v1303
    %v1376 = vunpack.c.l.b16 %v1304
    %v1377 = vunpack.c.h.b16 %v1304
    %v1378 = vunpack.c.l.b16 %v1305
    %v1379 = vunpack.c.h.b16 %v1305
    %v1380 = vunpack.c.l.b16 %v1306
    %v1381 = vunpack.c.h.b16 %v1306
    %v1382 = vunpack.c.l.b16 %v1307
    %v1383 = vunpack.c.h.b16 %v1307
    %v1384 = vunpack.c.l.b16 %v1308
    %v1385 = vunpack.c.h.b16 %v1308
    %v1386 = vunpack.c.l.b16 %v1309
    %v1387 = vunpack.c.h.b16 %v1309
    %v1388 = vunpack.c.l.b16 %v1310
    %v1389 = vunpack.c.h.b16 %v1310
    %v1390 = vunpack.c.l.b16 %v1311
    %v1391 = vunpack.c.h.b16 %v1311
    %v1392 = vunpack.c.l.b16 %v1312
    %v1393 = vunpack.c.h.b16 %v1312
    %v1394 = vunpack.c.l.b16 %v1313
    %v1395 = vunpack.c.h.b16 %v1313
    %v1396 = vunpack.c.l.b16 %v1314
    %v1397 = vunpack.c.h.b16 %v1314
    %v1398 = vunpack.c.l.b16 %v1315
    %v1399 = vunpack.c.h.b16 %v1315
    %v1400 = vunpack.c.l.b16 %v1316
    %v1401 = vunpack.c.h.b16 %v1316
    %v1402 = vunpack.c.l.b16 %v1317
    %v1403 = vunpack.c.h.b16 %v1317
    %v1404 = vunpack.c.l.b16 %v1318
    %v1405 = vunpack.c.h.b16 %v1318
    %v1406 = vunpack.c.l.b16 %v1319
    %v1407 = vunpack.c.h.b16 %v1319
    %v1408 = vunpack.c.l.b16 %v1320
    %v1409 = vunpack.c.h.b16 %v1320
    %v1410 = vunpack.c.l.b16 %v1321
    %v1411 = vunpack.c.h.b16 %v1321
    %v1412 = vunpack.c.l.b16 %v1322
    %v1413 = vunpack.c.h.b16 %v1322
    %v1414 = vunpack.c.l.b16 %v1323
    %v1415 = vunpack.c.h.b16 %v1323
    %v1416 = vunpack.c.l.b16 %v1324
    %v1417 = vunpack.c.h.b16 %v1324
    %v1418 = vunpack.c.l.b16 %v1325
    %v1419 = vunpack.c.h.b16 %v1325
    %v1420 = vunpack.c.l.b16 %v1326
    %v1421 = vunpack.c.h.b16 %v1326
    %v1422 = vunpack.c.l.b16 %v1327
    %v1423 = vunpack.c.h.b16 %v1327
    %v1424 = vpack.c.b16 %v1364, %v1360
    %v1425 = vpack.c.b16 %v1365, %v1361
    %v1426 = vpack.c.b16 %v1366, %v1362
    %v1427 = vpack.c.b16 %v1367, %v1363
    %v1428 = vpack.c.b16 %v1372, %v1368
    %v1429 = vpack.c.b16 %v1373, %v1369
    %v1430 = vpack.c.b16 %v1374, %v1370
    %v1431 = vpack.c.b16 %v1375, %v1371
    %v1432 = vpack.c.b16 %v1380, %v1376
    %v1433 = vpack.c.b16 %v1381, %v1377
    %v1434 = vpack.c.b16 %v1382, %v1378
    %v1435 = vpack.c.b16 %v1383, %v1379
    %v1436 = vpack.c.b16 %v1388, %v1384
    %v1437 = vpack.c.b16 %v1389, %v1385
    %v1438 = vpack.c.b16 %v1390, %v1386
    %v1439 = vpack.c.b16 %v1391, %v1387
    %v1440 = vpack.c.b16 %v1396, %v1392
    %v1441 = vpack.c.b16 %v1397, %v1393
    %v1442 = vpack.c.b16 %v1398, %v1394
    %v1443 = vpack.c.b16 %v1399, %v1395
    %v1444 = vpack.c.b16 %v1404, %v1400
    %v1445 = vpack.c.b16 %v1405, %v1401
    %v1446 = vpack.c.b16 %v1406, %v1402
    %v1447 = vpack.c.b16 %v1407, %v1403
    %v1448 = vpack.c.b16 %v1412, %v1408
    %v1449 = vpack.c.b16 %v1413, %v1409
    %v1450 = vpack.c.b16 %v1414, %v1410
    %v1451 = vpack.c.b16 %v1415, %v1411
    %v1452 = vpack.c.b16 %v1420, %v1416
    %v1453 = vpack.c.b16 %v1421, %v1417
    %v1454 = vpack.c.b16 %v1422, %v1418
    %v1455 = vpack.c.b16 %v1423, %v1419
    %1488 = vmatprep.subr.bf16.mxu0 %v1425
    %1489 = vmatpush1.bf16.msra.mxu0 %v1424
    %1490 = vmatprep.subr.bf16.mxu0 %v1429
    %1491 = vmatpush1.bf16.msra.mxu0 %v1428
    %1492 = vmatprep.subr.bf16.mxu0 %v1433
    %1493 = vmatpush1.bf16.msra.mxu0 %v1432
    %1494 = vmatprep.subr.bf16.mxu0 %v1437
    %1495 = vmatpush1.bf16.msra.mxu0 %v1436
    %1496 = vmatprep.subr.bf16.mxu0 %v1441
    %1497 = vmatpush1.bf16.msra.mxu0 %v1440
    %1498 = vmatprep.subr.bf16.mxu0 %v1445
    %1499 = vmatpush1.bf16.msra.mxu0 %v1444
    %1500 = vmatprep.subr.bf16.mxu0 %v1449
    %1501 = vmatpush1.bf16.msra.mxu0 %v1448
    %1502 = vmatprep.subr.bf16.mxu0 %v1453
    %1503 = vmatpush1.bf16.msra.mxu0 %v1452
    %1504 = vmatprep.subr.bf16.mxu0 0
    %1505 = vmatpush1.bf16.msra.mxu0 0
    %1506 = vmatprep.subr.bf16.mxu0 0
    %1507 = vmatpush1.bf16.msra.mxu0 0
    %1508 = vmatprep.subr.bf16.mxu0 0
    %1509 = vmatpush1.bf16.msra.mxu0 0
    %1510 = vmatprep.subr.bf16.mxu0 0
    %1511 = vmatpush1.bf16.msra.mxu0 0
    %1512 = vmatprep.subr.bf16.mxu0 0
    %1513 = vmatpush1.bf16.msra.mxu0 0
    %1514 = vmatprep.subr.bf16.mxu0 0
    %1515 = vmatpush1.bf16.msra.mxu0 0
    %1516 = vmatprep.subr.bf16.mxu0 0
    %1517 = vmatpush1.bf16.msra.mxu0 0
    %1518 = vmatprep.subr.bf16.mxu0 0
    %1519 = vmatpush1.bf16.msra.mxu0 0
    %1520 = vmatprep.mubr.bf16.mxu0 0
    %1521 = vmatmul.mubr.bf16.gmra.mrb[0].mxu0 %v1295
    %v1522 = vpop.f32.mrb[0].mxu0
    %v1523 = vadd.f32 0.0, %v1522
    %v1524 = vpop.f32.mrb[0].mxu0
    %v1525 = vadd.f32 0.0, %v1524
    %v1526 = vpop.f32.mrb[0].mxu0
    %v1527 = vpop.f32.mrb[0].mxu0
    %1528 = vdwg.mxu0
    %1529 = vmatprep.subr.bf16.mxu0 %v1427
    %1530 = vmatpush1.bf16.msra.mxu0 %v1426
    %1531 = vmatprep.subr.bf16.mxu0 %v1431
    %1532 = vmatpush1.bf16.msra.mxu0 %v1430
    %1533 = vmatprep.subr.bf16.mxu0 %v1435
    %1534 = vmatpush1.bf16.msra.mxu0 %v1434
    %1535 = vmatprep.subr.bf16.mxu0 %v1439
    %1536 = vmatpush1.bf16.msra.mxu0 %v1438
    %1537 = vmatprep.subr.bf16.mxu0 %v1443
    %1538 = vmatpush1.bf16.msra.mxu0 %v1442
    %1539 = vmatprep.subr.bf16.mxu0 %v1447
    %1540 = vmatpush1.bf16.msra.mxu0 %v1446
    %1541 = vmatprep.subr.bf16.mxu0 %v1451
    %1542 = vmatpush1.bf16.msra.mxu0 %v1450
    %1543 = vmatprep.subr.bf16.mxu0 %v1455
    %1544 = vmatpush1.bf16.msra.mxu0 %v1454
    %1545 = vmatprep.subr.bf16.mxu0 0
    %1546 = vmatpush1.bf16.msra.mxu0 0
    %1547 = vmatprep.subr.bf16.mxu0 0
    %1548 = vmatpush1.bf16.msra.mxu0 0
    %1549 = vmatprep.subr.bf16.mxu0 0
    %1550 = vmatpush1.bf16.msra.mxu0 0
    %1551 = vmatprep.subr.bf16.mxu0 0
    %1552 = vmatpush1.bf16.msra.mxu0 0
    %1553 = vmatprep.subr.bf16.mxu0 0
    %1554 = vmatpush1.bf16.msra.mxu0 0
    %1555 = vmatprep.subr.bf16.mxu0 0
    %1556 = vmatpush1.bf16.msra.mxu0 0
    %1557 = vmatprep.subr.bf16.mxu0 0
    %1558 = vmatpush1.bf16.msra.mxu0 0
    %1559 = vmatprep.subr.bf16.mxu0 0
    %1560 = vmatpush1.bf16.msra.mxu0 0
    %1561 = vmatprep.mubr.bf16.mxu0 0
    %1562 = vmatmul.mubr.bf16.gmra.mrb[0].mxu0 %v1295
    %v1563 = vpop.f32.mrb[0].mxu0
    %v1564 = vadd.f32 0.0, %v1563
    %v1565 = vpop.f32.mrb[0].mxu0
    %v1566 = vadd.f32 0.0, %v1565
    %v1567 = vpop.f32.mrb[0].mxu0
    %v1568 = vpop.f32.mrb[0].mxu0
    %1569 = vdwg.mxu0
    %v1570 = vadd.f32 %v1291, %v1523
    %v1571 = vadd.f32 %v1292, %v1525
    %v1572 = vadd.f32 %v1293, %v1564
    %v1573 = vadd.f32 %v1294, %v1566
    %v1574 = vxor.u32 %v1570, 2147483648
    %v1575 = vmul.f32 %v1574, 1.442695
    %v1576 = vpow.pop %v1575
    %v1577 = vadd.f32 %v1576, 1.0
    %v1578 = vrcp.pop %v1577
    %v1579 = vmul.f32 1.0, %v1578
    %v1580 = vxor.u32 %v1571, 2147483648
    %v1581 = vmul.f32 %v1580, 1.442695
    %v1582 = vpow.pop %v1581
    %v1583 = vadd.f32 %v1582, 1.0
    %v1584 = vrcp.pop %v1583
    %v1585 = vmul.f32 1.0, %v1584
    %v1586 = vtanh.pop %v1572
    %v1587 = vxor.u32 %v1573, 2147483648
    %v1588 = vmul.f32 %v1587, 1.442695
    %v1589 = vpow.pop %v1588
    %v1590 = vadd.f32 %v1589, 1.0
    %v1591 = vrcp.pop %v1590
    %v1592 = vmul.f32 1.0, %v1591
    %v1593 = vmul.f32 %v1585, %v1290
    %v1594 = vmul.f32 %v1579, %v1586
    %v1595 = vadd.f32 %v1593, %v1594
    %v1596 = vtanh.pop %v1595
    %v1597 = vmul.f32 %v1592, %v1596
    %1598 = vst [vmem:[#allocation4] sm:$0xff] %v1597
    %1599 = vst [vmem:[#allocation5] sm:$0xff] %v1595
    %1600 = vst [vmem:[#allocation2 + $0x10] sm:$0xff] %v1597
    %v1601 = vld [vmem:[#allocation4] sm:$0xff]
    %v1602 = vld [vmem:[#allocation5] sm:$0xff]
    %v1603 = vld [vmem:[#allocation3 + $0x60] sm:$0xff]
    %v1604 = vld [vmem:[#allocation3 + $0x68] sm:$0xff]
    %v1605 = vld [vmem:[#allocation3 + $0x70] sm:$0xff]
    %v1606 = vld [vmem:[#allocation3 + $0x78] sm:$0xff]
    %v1607 = vpack.c.bf16 %v1601, %v1601
    %v1608 = vld [vmem:[#allocation12] sm:$0xff]
    %v1609 = vld [vmem:[#allocation12 + $0x8] sm:$0xff]
    %v1610 = vld [vmem:[#allocation12 + $0x10] sm:$0xff]
    %v1611 = vld [vmem:[#allocation12 + $0x18] sm:$0xff]
    %v1612 = vld [vmem:[#allocation12 + $0x20] sm:$0xff]
    %v1613 = vld [vmem:[#allocation12 + $0x28] sm:$0xff]
    %v1614 = vld [vmem:[#allocation12 + $0x30] sm:$0xff]
    %v1615 = vld [vmem:[#allocation12 + $0x38] sm:$0xff]
    %v1616 = vld [vmem:[#allocation12 + $0x40] sm:$0xff]
    %v1617 = vld [vmem:[#allocation12 + $0x48] sm:$0xff]
    %v1618 = vld [vmem:[#allocation12 + $0x50] sm:$0xff]
    %v1619 = vld [vmem:[#allocation12 + $0x58] sm:$0xff]
    %v1620 = vld [vmem:[#allocation12 + $0x60] sm:$0xff]
    %v1621 = vld [vmem:[#allocation12 + $0x68] sm:$0xff]
    %v1622 = vld [vmem:[#allocation12 + $0x70] sm:$0xff]
    %v1623 = vld [vmem:[#allocation12 + $0x78] sm:$0xff]
    %v1624 = vld [vmem:[#allocation12 + $0x80] sm:$0xff]
    %v1625 = vld [vmem:[#allocation12 + $0x88] sm:$0xff]
    %v1626 = vld [vmem:[#allocation12 + $0x90] sm:$0xff]
    %v1627 = vld [vmem:[#allocation12 + $0x98] sm:$0xff]
    %v1628 = vld [vmem:[#allocation12 + $0xa0] sm:$0xff]
    %v1629 = vld [vmem:[#allocation12 + $0xa8] sm:$0xff]
    %v1630 = vld [vmem:[#allocation12 + $0xb0] sm:$0xff]
    %v1631 = vld [vmem:[#allocation12 + $0xb8] sm:$0xff]
    %v1632 = vld [vmem:[#allocation12 + $0xc0] sm:$0xff]
    %v1633 = vld [vmem:[#allocation12 + $0xc8] sm:$0xff]
    %v1634 = vld [vmem:[#allocation12 + $0xd0] sm:$0xff]
    %v1635 = vld [vmem:[#allocation12 + $0xd8] sm:$0xff]
    %v1636 = vld [vmem:[#allocation12 + $0xe0] sm:$0xff]
    %v1637 = vld [vmem:[#allocation12 + $0xe8] sm:$0xff]
    %v1638 = vld [vmem:[#allocation12 + $0xf0] sm:$0xff]
    %v1639 = vld [vmem:[#allocation12 + $0xf8] sm:$0xff]
    %v1672 = vunpack.c.l.b16 %v1608
    %v1673 = vunpack.c.h.b16 %v1608
    %v1674 = vunpack.c.l.b16 %v1609
    %v1675 = vunpack.c.h.b16 %v1609
    %v1676 = vunpack.c.l.b16 %v1610
    %v1677 = vunpack.c.h.b16 %v1610
    %v1678 = vunpack.c.l.b16 %v1611
    %v1679 = vunpack.c.h.b16 %v1611
    %v1680 = vunpack.c.l.b16 %v1612
    %v1681 = vunpack.c.h.b16 %v1612
    %v1682 = vunpack.c.l.b16 %v1613
    %v1683 = vunpack.c.h.b16 %v1613
    %v1684 = vunpack.c.l.b16 %v1614
    %v1685 = vunpack.c.h.b16 %v1614
    %v1686 = vunpack.c.l.b16 %v1615
    %v1687 = vunpack.c.h.b16 %v1615
    %v1688 = vunpack.c.l.b16 %v1616
    %v1689 = vunpack.c.h.b16 %v1616
    %v1690 = vunpack.c.l.b16 %v1617
    %v1691 = vunpack.c.h.b16 %v1617
    %v1692 = vunpack.c.l.b16 %v1618
    %v1693 = vunpack.c.h.b16 %v1618
    %v1694 = vunpack.c.l.b16 %v1619
    %v1695 = vunpack.c.h.b16 %v1619
    %v1696 = vunpack.c.l.b16 %v1620
    %v1697 = vunpack.c.h.b16 %v1620
    %v1698 = vunpack.c.l.b16 %v1621
    %v1699 = vunpack.c.h.b16 %v1621
    %v1700 = vunpack.c.l.b16 %v1622
    %v1701 = vunpack.c.h.b16 %v1622
    %v1702 = vunpack.c.l.b16 %v1623
    %v1703 = vunpack.c.h.b16 %v1623
    %v1704 = vunpack.c.l.b16 %v1624
    %v1705 = vunpack.c.h.b16 %v1624
    %v1706 = vunpack.c.l.b16 %v1625
    %v1707 = vunpack.c.h.b16 %v1625
    %v1708 = vunpack.c.l.b16 %v1626
    %v1709 = vunpack.c.h.b16 %v1626
    %v1710 = vunpack.c.l.b16 %v1627
    %v1711 = vunpack.c.h.b16 %v1627
    %v1712 = vunpack.c.l.b16 %v1628
    %v1713 = vunpack.c.h.b16 %v1628
    %v1714 = vunpack.c.l.b16 %v1629
    %v1715 = vunpack.c.h.b16 %v1629
    %v1716 = vunpack.c.l.b16 %v1630
    %v1717 = vunpack.c.h.b16 %v1630
    %v1718 = vunpack.c.l.b16 %v1631
    %v1719 = vunpack.c.h.b16 %v1631
    %v1720 = vunpack.c.l.b16 %v1632
    %v1721 = vunpack.c.h.b16 %v1632
    %v1722 = vunpack.c.l.b16 %v1633
    %v1723 = vunpack.c.h.b16 %v1633
    %v1724 = vunpack.c.l.b16 %v1634
    %v1725 = vunpack.c.h.b16 %v1634
    %v1726 = vunpack.c.l.b16 %v1635
    %v1727 = vunpack.c.h.b16 %v1635
    %v1728 = vunpack.c.l.b16 %v1636
    %v1729 = vunpack.c.h.b16 %v1636
    %v1730 = vunpack.c.l.b16 %v1637
    %v1731 = vunpack.c.h.b16 %v1637
    %v1732 = vunpack.c.l.b16 %v1638
    %v1733 = vunpack.c.h.b16 %v1638
    %v1734 = vunpack.c.l.b16 %v1639
    %v1735 = vunpack.c.h.b16 %v1639
    %v1736 = vpack.c.b16 %v1676, %v1672
    %v1737 = vpack.c.b16 %v1677, %v1673
    %v1738 = vpack.c.b16 %v1678, %v1674
    %v1739 = vpack.c.b16 %v1679, %v1675
    %v1740 = vpack.c.b16 %v1684, %v1680
    %v1741 = vpack.c.b16 %v1685, %v1681
    %v1742 = vpack.c.b16 %v1686, %v1682
    %v1743 = vpack.c.b16 %v1687, %v1683
    %v1744 = vpack.c.b16 %v1692, %v1688
    %v1745 = vpack.c.b16 %v1693, %v1689
    %v1746 = vpack.c.b16 %v1694, %v1690
    %v1747 = vpack.c.b16 %v1695, %v1691
    %v1748 = vpack.c.b16 %v1700, %v1696
    %v1749 = vpack.c.b16 %v1701, %v1697
    %v1750 = vpack.c.b16 %v1702, %v1698
    %v1751 = vpack.c.b16 %v1703, %v1699
    %v1752 = vpack.c.b16 %v1708, %v1704
    %v1753 = vpack.c.b16 %v1709, %v1705
    %v1754 = vpack.c.b16 %v1710, %v1706
    %v1755 = vpack.c.b16 %v1711, %v1707
    %v1756 = vpack.c.b16 %v1716, %v1712
    %v1757 = vpack.c.b16 %v1717, %v1713
    %v1758 = vpack.c.b16 %v1718, %v1714
    %v1759 = vpack.c.b16 %v1719, %v1715
    %v1760 = vpack.c.b16 %v1724, %v1720
    %v1761 = vpack.c.b16 %v1725, %v1721
    %v1762 = vpack.c.b16 %v1726, %v1722
    %v1763 = vpack.c.b16 %v1727, %v1723
    %v1764 = vpack.c.b16 %v1732, %v1728
    %v1765 = vpack.c.b16 %v1733, %v1729
    %v1766 = vpack.c.b16 %v1734, %v1730
    %v1767 = vpack.c.b16 %v1735, %v1731
    %1800 = vmatprep.subr.bf16.mxu0 %v1737
    %1801 = vmatpush1.bf16.msra.mxu0 %v1736
    %1802 = vmatprep.subr.bf16.mxu0 %v1741
    %1803 = vmatpush1.bf16.msra.mxu0 %v1740
    %1804 = vmatprep.subr.bf16.mxu0 %v1745
    %1805 = vmatpush1.bf16.msra.mxu0 %v1744
    %1806 = vmatprep.subr.bf16.mxu0 %v1749
    %1807 = vmatpush1.bf16.msra.mxu0 %v1748
    %1808 = vmatprep.subr.bf16.mxu0 %v1753
    %1809 = vmatpush1.bf16.msra.mxu0 %v1752
    %1810 = vmatprep.subr.bf16.mxu0 %v1757
    %1811 = vmatpush1.bf16.msra.mxu0 %v1756
    %1812 = vmatprep.subr.bf16.mxu0 %v1761
    %1813 = vmatpush1.bf16.msra.mxu0 %v1760
    %1814 = vmatprep.subr.bf16.mxu0 %v1765
    %1815 = vmatpush1.bf16.msra.mxu0 %v1764
    %1816 = vmatprep.subr.bf16.mxu0 0
    %1817 = vmatpush1.bf16.msra.mxu0 0
    %1818 = vmatprep.subr.bf16.mxu0 0
    %1819 = vmatpush1.bf16.msra.mxu0 0
    %1820 = vmatprep.subr.bf16.mxu0 0
    %1821 = vmatpush1.bf16.msra.mxu0 0
    %1822 = vmatprep.subr.bf16.mxu0 0
    %1823 = vmatpush1.bf16.msra.mxu0 0
    %1824 = vmatprep.subr.bf16.mxu0 0
    %1825 = vmatpush1.bf16.msra.mxu0 0
    %1826 = vmatprep.subr.bf16.mxu0 0
    %1827 = vmatpush1.bf16.msra.mxu0 0
    %1828 = vmatprep.subr.bf16.mxu0 0
    %1829 = vmatpush1.bf16.msra.mxu0 0
    %1830 = vmatprep.subr.bf16.mxu0 0
    %1831 = vmatpush1.bf16.msra.mxu0 0
    %1832 = vmatprep.mubr.bf16.mxu0 0
    %1833 = vmatmul.mubr.bf16.gmra.mrb[0].mxu0 %v1607
    %v1834 = vpop.f32.mrb[0].mxu0
    %v1835 = vadd.f32 0.0, %v1834
    %v1836 = vpop.f32.mrb[0].mxu0
    %v1837 = vadd.f32 0.0, %v1836
    %v1838 = vpop.f32.mrb[0].mxu0
    %v1839 = vpop.f32.mrb[0].mxu0
    %1840 = vdwg.mxu0
    %1841 = vmatprep.subr.bf16.mxu0 %v1739
    %1842 = vmatpush1.bf16.msra.mxu0 %v1738
    %1843 = vmatprep.subr.bf16.mxu0 %v1743
    %1844 = vmatpush1.bf16.msra.mxu0 %v1742
    %1845 = vmatprep.subr.bf16.mxu0 %v1747
    %1846 = vmatpush1.bf16.msra.mxu0 %v1746
    %1847 = vmatprep.subr.bf16.mxu0 %v1751
    %1848 = vmatpush1.bf16.msra.mxu0 %v1750
    %1849 = vmatprep.subr.bf16.mxu0 %v1755
    %1850 = vmatpush1.bf16.msra.mxu0 %v1754
    %1851 = vmatprep.subr.bf16.mxu0 %v1759
    %1852 = vmatpush1.bf16.msra.mxu0 %v1758
    %1853 = vmatprep.subr.bf16.mxu0 %v1763
    %1854 = vmatpush1.bf16.msra.mxu0 %v1762
    %1855 = vmatprep.subr.bf16.mxu0 %v1767
    %1856 = vmatpush1.bf16.msra.mxu0 %v1766
    %1857 = vmatprep.subr.bf16.mxu0 0
    %1858 = vmatpush1.bf16.msra.mxu0 0
    %1859 = vmatprep.subr.bf16.mxu0 0
    %1860 = vmatpush1.bf16.msra.mxu0 0
    %1861 = vmatprep.subr.bf16.mxu0 0
    %1862 = vmatpush1.bf16.msra.mxu0 0
    %1863 = vmatprep.subr.bf16.mxu0 0
    %1864 = vmatpush1.bf16.msra.mxu0 0
    %1865 = vmatprep.subr.bf16.mxu0 0
    %1866 = vmatpush1.bf16.msra.mxu0 0
    %1867 = vmatprep.subr.bf16.mxu0 0
    %1868 = vmatpush1.bf16.msra.mxu0 0
    %1869 = vmatprep.subr.bf16.mxu0 0
    %1870 = vmatpush1.bf16.msra.mxu0 0
    %1871 = vmatprep.subr.bf16.mxu0 0
    %1872 = vmatpush1.bf16.msra.mxu0 0
    %1873 = vmatprep.mubr.bf16.mxu0 0
    %1874 = vmatmul.mubr.bf16.gmra.mrb[0].mxu0 %v1607
    %v1875 = vpop.f32.mrb[0].mxu0
    %v1876 = vadd.f32 0.0, %v1875
    %v1877 = vpop.f32.mrb[0].mxu0
    %v1878 = vadd.f32 0.0, %v1877
    %v1879 = vpop.f32.mrb[0].mxu0
    %v1880 = vpop.f32.mrb[0].mxu0
    %1881 = vdwg.mxu0
    %v1882 = vadd.f32 %v1603, %v1835
    %v1883 = vadd.f32 %v1604, %v1837
    %v1884 = vadd.f32 %v1605, %v1876
    %v1885 = vadd.f32 %v1606, %v1878
    %v1886 = vxor.u32 %v1882, 2147483648
    %v1887 = vmul.f32 %v1886, 1.442695
    %v1888 = vpow.pop %v1887
    %v1889 = vadd.f32 %v1888, 1.0
    %v1890 = vrcp.pop %v1889
    %v1891 = vmul.f32 1.0, %v1890
    %v1892 = vxor.u32 %v1883, 2147483648
    %v1893 = vmul.f32 %v1892, 1.442695
    %v1894 = vpow.pop %v1893
    %v1895 = vadd.f32 %v1894, 1.0
    %v1896 = vrcp.pop %v1895
    %v1897 = vmul.f32 1.0, %v1896
    %v1898 = vtanh.pop %v1884
    %v1899 = vxor.u32 %v1885, 2147483648
    %v1900 = vmul.f32 %v1899, 1.442695
    %v1901 = vpow.pop %v1900
    %v1902 = vadd.f32 %v1901, 1.0
    %v1903 = vrcp.pop %v1902
    %v1904 = vmul.f32 1.0, %v1903
    %v1905 = vmul.f32 %v1897, %v1602
    %v1906 = vmul.f32 %v1891, %v1898
    %v1907 = vadd.f32 %v1905, %v1906
    %v1908 = vtanh.pop %v1907
    %v1909 = vmul.f32 %v1904, %v1908
    %1910 = vst [vmem:[#allocation4] sm:$0xff] %v1909
    %1911 = vst [vmem:[#allocation5] sm:$0xff] %v1907
    %1912 = vst [vmem:[#allocation2 + $0x18] sm:$0xff] %v1909
    %v1913 = vld [vmem:[#allocation4] sm:$0xff]
    %v1914 = vld [vmem:[#allocation5] sm:$0xff]
    %v1915 = vld [vmem:[#allocation3 + $0x80] sm:$0xff]
    %v1916 = vld [vmem:[#allocation3 + $0x88] sm:$0xff]
    %v1917 = vld [vmem:[#allocation3 + $0x90] sm:$0xff]
    %v1918 = vld [vmem:[#allocation3 + $0x98] sm:$0xff]
    %v1919 = vpack.c.bf16 %v1913, %v1913
    %v1920 = vld [vmem:[#allocation12] sm:$0xff]
    %v1921 = vld [vmem:[#allocation12 + $0x8] sm:$0xff]
    %v1922 = vld [vmem:[#allocation12 + $0x10] sm:$0xff]
    %v1923 = vld [vmem:[#allocation12 + $0x18] sm:$0xff]
    %v1924 = vld [vmem:[#allocation12 + $0x20] sm:$0xff]
    %v1925 = vld [vmem:[#allocation12 + $0x28] sm:$0xff]
    %v1926 = vld [vmem:[#allocation12 + $0x30] sm:$0xff]
    %v1927 = vld [vmem:[#allocation12 + $0x38] sm:$0xff]
    %v1928 = vld [vmem:[#allocation12 + $0x40] sm:$0xff]
    %v1929 = vld [vmem:[#allocation12 + $0x48] sm:$0xff]
    %v1930 = vld [vmem:[#allocation12 + $0x50] sm:$0xff]
    %v1931 = vld [vmem:[#allocation12 + $0x58] sm:$0xff]
    %v1932 = vld [vmem:[#allocation12 + $0x60] sm:$0xff]
    %v1933 = vld [vmem:[#allocation12 + $0x68] sm:$0xff]
    %v1934 = vld [vmem:[#allocation12 + $0x70] sm:$0xff]
    %v1935 = vld [vmem:[#allocation12 + $0x78] sm:$0xff]
    %v1936 = vld [vmem:[#allocation12 + $0x80] sm:$0xff]
    %v1937 = vld [vmem:[#allocation12 + $0x88] sm:$0xff]
    %v1938 = vld [vmem:[#allocation12 + $0x90] sm:$0xff]
    %v1939 = vld [vmem:[#allocation12 + $0x98] sm:$0xff]
    %v1940 = vld [vmem:[#allocation12 + $0xa0] sm:$0xff]
    %v1941 = vld [vmem:[#allocation12 + $0xa8] sm:$0xff]
    %v1942 = vld [vmem:[#allocation12 + $0xb0] sm:$0xff]
    %v1943 = vld [vmem:[#allocation12 + $0xb8] sm:$0xff]
    %v1944 = vld [vmem:[#allocation12 + $0xc0] sm:$0xff]
    %v1945 = vld [vmem:[#allocation12 + $0xc8] sm:$0xff]
    %v1946 = vld [vmem:[#allocation12 + $0xd0] sm:$0xff]
    %v1947 = vld [vmem:[#allocation12 + $0xd8] sm:$0xff]
    %v1948 = vld [vmem:[#allocation12 + $0xe0] sm:$0xff]
    %v1949 = vld [vmem:[#allocation12 + $0xe8] sm:$0xff]
    %v1950 = vld [vmem:[#allocation12 + $0xf0] sm:$0xff]
    %v1951 = vld [vmem:[#allocation12 + $0xf8] sm:$0xff]
    %v1984 = vunpack.c.l.b16 %v1920
    %v1985 = vunpack.c.h.b16 %v1920
    %v1986 = vunpack.c.l.b16 %v1921
    %v1987 = vunpack.c.h.b16 %v1921
    %v1988 = vunpack.c.l.b16 %v1922
    %v1989 = vunpack.c.h.b16 %v1922
    %v1990 = vunpack.c.l.b16 %v1923
    %v1991 = vunpack.c.h.b16 %v1923
    %v1992 = vunpack.c.l.b16 %v1924
    %v1993 = vunpack.c.h.b16 %v1924
    %v1994 = vunpack.c.l.b16 %v1925
    %v1995 = vunpack.c.h.b16 %v1925
    %v1996 = vunpack.c.l.b16 %v1926
    %v1997 = vunpack.c.h.b16 %v1926
    %v1998 = vunpack.c.l.b16 %v1927
    %v1999 = vunpack.c.h.b16 %v1927
    %v2000 = vunpack.c.l.b16 %v1928
    %v2001 = vunpack.c.h.b16 %v1928
    %v2002 = vunpack.c.l.b16 %v1929
    %v2003 = vunpack.c.h.b16 %v1929
    %v2004 = vunpack.c.l.b16 %v1930
    %v2005 = vunpack.c.h.b16 %v1930
    %v2006 = vunpack.c.l.b16 %v1931
    %v2007 = vunpack.c.h.b16 %v1931
    %v2008 = vunpack.c.l.b16 %v1932
    %v2009 = vunpack.c.h.b16 %v1932
    %v2010 = vunpack.c.l.b16 %v1933
    %v2011 = vunpack.c.h.b16 %v1933
    %v2012 = vunpack.c.l.b16 %v1934
    %v2013 = vunpack.c.h.b16 %v1934
    %v2014 = vunpack.c.l.b16 %v1935
    %v2015 = vunpack.c.h.b16 %v1935
    %v2016 = vunpack.c.l.b16 %v1936
    %v2017 = vunpack.c.h.b16 %v1936
    %v2018 = vunpack.c.l.b16 %v1937
    %v2019 = vunpack.c.h.b16 %v1937
    %v2020 = vunpack.c.l.b16 %v1938
    %v2021 = vunpack.c.h.b16 %v1938
    %v2022 = vunpack.c.l.b16 %v1939
    %v2023 = vunpack.c.h.b16 %v1939
    %v2024 = vunpack.c.l.b16 %v1940
    %v2025 = vunpack.c.h.b16 %v1940
    %v2026 = vunpack.c.l.b16 %v1941
    %v2027 = vunpack.c.h.b16 %v1941
    %v2028 = vunpack.c.l.b16 %v1942
    %v2029 = vunpack.c.h.b16 %v1942
    %v2030 = vunpack.c.l.b16 %v1943
    %v2031 = vunpack.c.h.b16 %v1943
    %v2032 = vunpack.c.l.b16 %v1944
    %v2033 = vunpack.c.h.b16 %v1944
    %v2034 = vunpack.c.l.b16 %v1945
    %v2035 = vunpack.c.h.b16 %v1945
    %v2036 = vunpack.c.l.b16 %v1946
    %v2037 = vunpack.c.h.b16 %v1946
    %v2038 = vunpack.c.l.b16 %v1947
    %v2039 = vunpack.c.h.b16 %v1947
    %v2040 = vunpack.c.l.b16 %v1948
    %v2041 = vunpack.c.h.b16 %v1948
    %v2042 = vunpack.c.l.b16 %v1949
    %v2043 = vunpack.c.h.b16 %v1949
    %v2044 = vunpack.c.l.b16 %v1950
    %v2045 = vunpack.c.h.b16 %v1950
    %v2046 = vunpack.c.l.b16 %v1951
    %v2047 = vunpack.c.h.b16 %v1951
    %v2048 = vpack.c.b16 %v1988, %v1984
    %v2049 = vpack.c.b16 %v1989, %v1985
    %v2050 = vpack.c.b16 %v1990, %v1986
    %v2051 = vpack.c.b16 %v1991, %v1987
    %v2052 = vpack.c.b16 %v1996, %v1992
    %v2053 = vpack.c.b16 %v1997, %v1993
    %v2054 = vpack.c.b16 %v1998, %v1994
    %v2055 = vpack.c.b16 %v1999, %v1995
    %v2056 = vpack.c.b16 %v2004, %v2000
    %v2057 = vpack.c.b16 %v2005, %v2001
    %v2058 = vpack.c.b16 %v2006, %v2002
    %v2059 = vpack.c.b16 %v2007, %v2003
    %v2060 = vpack.c.b16 %v2012, %v2008
    %v2061 = vpack.c.b16 %v2013, %v2009
    %v2062 = vpack.c.b16 %v2014, %v2010
    %v2063 = vpack.c.b16 %v2015, %v2011
    %v2064 = vpack.c.b16 %v2020, %v2016
    %v2065 = vpack.c.b16 %v2021, %v2017
    %v2066 = vpack.c.b16 %v2022, %v2018
    %v2067 = vpack.c.b16 %v2023, %v2019
    %v2068 = vpack.c.b16 %v2028, %v2024
    %v2069 = vpack.c.b16 %v2029, %v2025
    %v2070 = vpack.c.b16 %v2030, %v2026
    %v2071 = vpack.c.b16 %v2031, %v2027
    %v2072 = vpack.c.b16 %v2036, %v2032
    %v2073 = vpack.c.b16 %v2037, %v2033
    %v2074 = vpack.c.b16 %v2038, %v2034
    %v2075 = vpack.c.b16 %v2039, %v2035
    %v2076 = vpack.c.b16 %v2044, %v2040
    %v2077 = vpack.c.b16 %v2045, %v2041
    %v2078 = vpack.c.b16 %v2046, %v2042
    %v2079 = vpack.c.b16 %v2047, %v2043
    %2112 = vmatprep.subr.bf16.mxu0 %v2049
    %2113 = vmatpush1.bf16.msra.mxu0 %v2048
    %2114 = vmatprep.subr.bf16.mxu0 %v2053
    %2115 = vmatpush1.bf16.msra.mxu0 %v2052
    %2116 = vmatprep.subr.bf16.mxu0 %v2057
    %2117 = vmatpush1.bf16.msra.mxu0 %v2056
    %2118 = vmatprep.subr.bf16.mxu0 %v2061
    %2119 = vmatpush1.bf16.msra.mxu0 %v2060
    %2120 = vmatprep.subr.bf16.mxu0 %v2065
    %2121 = vmatpush1.bf16.msra.mxu0 %v2064
    %2122 = vmatprep.subr.bf16.mxu0 %v2069
    %2123 = vmatpush1.bf16.msra.mxu0 %v2068
    %2124 = vmatprep.subr.bf16.mxu0 %v2073
    %2125 = vmatpush1.bf16.msra.mxu0 %v2072
    %2126 = vmatprep.subr.bf16.mxu0 %v2077
    %2127 = vmatpush1.bf16.msra.mxu0 %v2076
    %2128 = vmatprep.subr.bf16.mxu0 0
    %2129 = vmatpush1.bf16.msra.mxu0 0
    %2130 = vmatprep.subr.bf16.mxu0 0
    %2131 = vmatpush1.bf16.msra.mxu0 0
    %2132 = vmatprep.subr.bf16.mxu0 0
    %2133 = vmatpush1.bf16.msra.mxu0 0
    %2134 = vmatprep.subr.bf16.mxu0 0
    %2135 = vmatpush1.bf16.msra.mxu0 0
    %2136 = vmatprep.subr.bf16.mxu0 0
    %2137 = vmatpush1.bf16.msra.mxu0 0
    %2138 = vmatprep.subr.bf16.mxu0 0
    %2139 = vmatpush1.bf16.msra.mxu0 0
    %2140 = vmatprep.subr.bf16.mxu0 0
    %2141 = vmatpush1.bf16.msra.mxu0 0
    %2142 = vmatprep.subr.bf16.mxu0 0
    %2143 = vmatpush1.bf16.msra.mxu0 0
    %2144 = vmatprep.mubr.bf16.mxu0 0
    %2145 = vmatmul.mubr.bf16.gmra.mrb[0].mxu0 %v1919
    %v2146 = vpop.f32.mrb[0].mxu0
    %v2147 = vadd.f32 0.0, %v2146
    %v2148 = vpop.f32.mrb[0].mxu0
    %v2149 = vadd.f32 0.0, %v2148
    %v2150 = vpop.f32.mrb[0].mxu0
    %v2151 = vpop.f32.mrb[0].mxu0
    %2152 = vdwg.mxu0
    %2153 = vmatprep.subr.bf16.mxu0 %v2051
    %2154 = vmatpush1.bf16.msra.mxu0 %v2050
    %2155 = vmatprep.subr.bf16.mxu0 %v2055
    %2156 = vmatpush1.bf16.msra.mxu0 %v2054
    %2157 = vmatprep.subr.bf16.mxu0 %v2059
    %2158 = vmatpush1.bf16.msra.mxu0 %v2058
    %2159 = vmatprep.subr.bf16.mxu0 %v2063
    %2160 = vmatpush1.bf16.msra.mxu0 %v2062
    %2161 = vmatprep.subr.bf16.mxu0 %v2067
    %2162 = vmatpush1.bf16.msra.mxu0 %v2066
    %2163 = vmatprep.subr.bf16.mxu0 %v2071
    %2164 = vmatpush1.bf16.msra.mxu0 %v2070
    %2165 = vmatprep.subr.bf16.mxu0 %v2075
    %2166 = vmatpush1.bf16.msra.mxu0 %v2074
    %2167 = vmatprep.subr.bf16.mxu0 %v2079
    %2168 = vmatpush1.bf16.msra.mxu0 %v2078
    %2169 = vmatprep.subr.bf16.mxu0 0
    %2170 = vmatpush1.bf16.msra.mxu0 0
    %2171 = vmatprep.subr.bf16.mxu0 0
    %2172 = vmatpush1.bf16.msra.mxu0 0
    %2173 = vmatprep.subr.bf16.mxu0 0
    %2174 = vmatpush1.bf16.msra.mxu0 0
    %2175 = vmatprep.subr.bf16.mxu0 0
    %2176 = vmatpush1.bf16.msra.mxu0 0
    %2177 = vmatprep.subr.bf16.mxu0 0
    %2178 = vmatpush1.bf16.msra.mxu0 0
    %2179 = vmatprep.subr.bf16.mxu0 0
    %2180 = vmatpush1.bf16.msra.mxu0 0
    %2181 = vmatprep.subr.bf16.mxu0 0
    %2182 = vmatpush1.bf16.msra.mxu0 0
    %2183 = vmatprep.subr.bf16.mxu0 0
    %2184 = vmatpush1.bf16.msra.mxu0 0
    %2185 = vmatprep.mubr.bf16.mxu0 0
    %2186 = vmatmul.mubr.bf16.gmra.mrb[0].mxu0 %v1919
    %v2187 = vpop.f32.mrb[0].mxu0
    %v2188 = vadd.f32 0.0, %v2187
    %v2189 = vpop.f32.mrb[0].mxu0
    %v2190 = vadd.f32 0.0, %v2189
    %v2191 = vpop.f32.mrb[0].mxu0
    %v2192 = vpop.f32.mrb[0].mxu0
    %2193 = vdwg.mxu0
    %v2194 = vadd.f32 %v1915, %v2147
    %v2195 = vadd.f32 %v1916, %v2149
    %v2196 = vadd.f32 %v1917, %v2188
    %v2197 = vadd.f32 %v1918, %v2190
    %v2198 = vxor.u32 %v2194, 2147483648
    %v2199 = vmul.f32 %v2198, 1.442695
    %v2200 = vpow.pop %v2199
    %v2201 = vadd.f32 %v2200, 1.0
    %v2202 = vrcp.pop %v2201
    %v2203 = vmul.f32 1.0, %v2202
    %v2204 = vxor.u32 %v2195, 2147483648
    %v2205 = vmul.f32 %v2204, 1.442695
    %v2206 = vpow.pop %v2205
    %v2207 = vadd.f32 %v2206, 1.0
    %v2208 = vrcp.pop %v2207
    %v2209 = vmul.f32 1.0, %v2208
    %v2210 = vtanh.pop %v2196
    %v2211 = vxor.u32 %v2197, 2147483648
    %v2212 = vmul.f32 %v2211, 1.442695
    %v2213 = vpow.pop %v2212
    %v2214 = vadd.f32 %v2213, 1.0
    %v2215 = vrcp.pop %v2214
    %v2216 = vmul.f32 1.0, %v2215
    %v2217 = vmul.f32 %v2209, %v1914
    %v2218 = vmul.f32 %v2203, %v2210
    %v2219 = vadd.f32 %v2217, %v2218
    %v2220 = vtanh.pop %v2219
    %v2221 = vmul.f32 %v2216, %v2220
    %2222 = vst [vmem:[#allocation4] sm:$0xff] %v2221
    %2223 = vst [vmem:[#allocation5] sm:$0xff] %v2219
    %2224 = vst [vmem:[#allocation2 + $0x20] sm:$0xff] %v2221
    %v2225 = vld [vmem:[#allocation4] sm:$0xff]
    %v2226 = vld [vmem:[#allocation5] sm:$0xff]
    %v2227 = vld [vmem:[#allocation3 + $0xa0] sm:$0xff]
    %v2228 = vld [vmem:[#allocation3 + $0xa8] sm:$0xff]
    %v2229 = vld [vmem:[#allocation3 + $0xb0] sm:$0xff]
    %v2230 = vld [vmem:[#allocation3 + $0xb8] sm:$0xff]
    %v2231 = vpack.c.bf16 %v2225, %v2225
    %v2232 = vld [vmem:[#allocation12] sm:$0xff]
    %v2233 = vld [vmem:[#allocation12 + $0x8] sm:$0xff]
    %v2234 = vld [vmem:[#allocation12 + $0x10] sm:$0xff]
    %v2235 = vld [vmem:[#allocation12 + $0x18] sm:$0xff]
    %v2236 = vld [vmem:[#allocation12 + $0x20] sm:$0xff]
    %v2237 = vld [vmem:[#allocation12 + $0x28] sm:$0xff]
    %v2238 = vld [vmem:[#allocation12 + $0x30] sm:$0xff]
    %v2239 = vld [vmem:[#allocation12 + $0x38] sm:$0xff]
    %v2240 = vld [vmem:[#allocation12 + $0x40] sm:$0xff]
    %v2241 = vld [vmem:[#allocation12 + $0x48] sm:$0xff]
    %v2242 = vld [vmem:[#allocation12 + $0x50] sm:$0xff]
    %v2243 = vld [vmem:[#allocation12 + $0x58] sm:$0xff]
    %v2244 = vld [vmem:[#allocation12 + $0x60] sm:$0xff]
    %v2245 = vld [vmem:[#allocation12 + $0x68] sm:$0xff]
    %v2246 = vld [vmem:[#allocation12 + $0x70] sm:$0xff]
    %v2247 = vld [vmem:[#allocation12 + $0x78] sm:$0xff]
    %v2248 = vld [vmem:[#allocation12 + $0x80] sm:$0xff]
    %v2249 = vld [vmem:[#allocation12 + $0x88] sm:$0xff]
    %v2250 = vld [vmem:[#allocation12 + $0x90] sm:$0xff]
    %v2251 = vld [vmem:[#allocation12 + $0x98] sm:$0xff]
    %v2252 = vld [vmem:[#allocation12 + $0xa0] sm:$0xff]
    %v2253 = vld [vmem:[#allocation12 + $0xa8] sm:$0xff]
    %v2254 = vld [vmem:[#allocation12 + $0xb0] sm:$0xff]
    %v2255 = vld [vmem:[#allocation12 + $0xb8] sm:$0xff]
    %v2256 = vld [vmem:[#allocation12 + $0xc0] sm:$0xff]
    %v2257 = vld [vmem:[#allocation12 + $0xc8] sm:$0xff]
    %v2258 = vld [vmem:[#allocation12 + $0xd0] sm:$0xff]
    %v2259 = vld [vmem:[#allocation12 + $0xd8] sm:$0xff]
    %v2260 = vld [vmem:[#allocation12 + $0xe0] sm:$0xff]
    %v2261 = vld [vmem:[#allocation12 + $0xe8] sm:$0xff]
    %v2262 = vld [vmem:[#allocation12 + $0xf0] sm:$0xff]
    %v2263 = vld [vmem:[#allocation12 + $0xf8] sm:$0xff]
    %v2296 = vunpack.c.l.b16 %v2232
    %v2297 = vunpack.c.h.b16 %v2232
    %v2298 = vunpack.c.l.b16 %v2233
    %v2299 = vunpack.c.h.b16 %v2233
    %v2300 = vunpack.c.l.b16 %v2234
    %v2301 = vunpack.c.h.b16 %v2234
    %v2302 = vunpack.c.l.b16 %v2235
    %v2303 = vunpack.c.h.b16 %v2235
    %v2304 = vunpack.c.l.b16 %v2236
    %v2305 = vunpack.c.h.b16 %v2236
    %v2306 = vunpack.c.l.b16 %v2237
    %v2307 = vunpack.c.h.b16 %v2237
    %v2308 = vunpack.c.l.b16 %v2238
    %v2309 = vunpack.c.h.b16 %v2238
    %v2310 = vunpack.c.l.b16 %v2239
    %v2311 = vunpack.c.h.b16 %v2239
    %v2312 = vunpack.c.l.b16 %v2240
    %v2313 = vunpack.c.h.b16 %v2240
    %v2314 = vunpack.c.l.b16 %v2241
    %v2315 = vunpack.c.h.b16 %v2241
    %v2316 = vunpack.c.l.b16 %v2242
    %v2317 = vunpack.c.h.b16 %v2242
    %v2318 = vunpack.c.l.b16 %v2243
    %v2319 = vunpack.c.h.b16 %v2243
    %v2320 = vunpack.c.l.b16 %v2244
    %v2321 = vunpack.c.h.b16 %v2244
    %v2322 = vunpack.c.l.b16 %v2245
    %v2323 = vunpack.c.h.b16 %v2245
    %v2324 = vunpack.c.l.b16 %v2246
    %v2325 = vunpack.c.h.b16 %v2246
    %v2326 = vunpack.c.l.b16 %v2247
    %v2327 = vunpack.c.h.b16 %v2247
    %v2328 = vunpack.c.l.b16 %v2248
    %v2329 = vunpack.c.h.b16 %v2248
    %v2330 = vunpack.c.l.b16 %v2249
    %v2331 = vunpack.c.h.b16 %v2249
    %v2332 = vunpack.c.l.b16 %v2250
    %v2333 = vunpack.c.h.b16 %v2250
    %v2334 = vunpack.c.l.b16 %v2251
    %v2335 = vunpack.c.h.b16 %v2251
    %v2336 = vunpack.c.l.b16 %v2252
    %v2337 = vunpack.c.h.b16 %v2252
    %v2338 = vunpack.c.l.b16 %v2253
    %v2339 = vunpack.c.h.b16 %v2253
    %v2340 = vunpack.c.l.b16 %v2254
    %v2341 = vunpack.c.h.b16 %v2254
    %v2342 = vunpack.c.l.b16 %v2255
    %v2343 = vunpack.c.h.b16 %v2255
    %v2344 = vunpack.c.l.b16 %v2256
    %v2345 = vunpack.c.h.b16 %v2256
    %v2346 = vunpack.c.l.b16 %v2257
    %v2347 = vunpack.c.h.b16 %v2257
    %v2348 = vunpack.c.l.b16 %v2258
    %v2349 = vunpack.c.h.b16 %v2258
    %v2350 = vunpack.c.l.b16 %v2259
    %v2351 = vunpack.c.h.b16 %v2259
    %v2352 = vunpack.c.l.b16 %v2260
    %v2353 = vunpack.c.h.b16 %v2260
    %v2354 = vunpack.c.l.b16 %v2261
    %v2355 = vunpack.c.h.b16 %v2261
    %v2356 = vunpack.c.l.b16 %v2262
    %v2357 = vunpack.c.h.b16 %v2262
    %v2358 = vunpack.c.l.b16 %v2263
    %v2359 = vunpack.c.h.b16 %v2263
    %v2360 = vpack.c.b16 %v2300, %v2296
    %v2361 = vpack.c.b16 %v2301, %v2297
    %v2362 = vpack.c.b16 %v2302, %v2298
    %v2363 = vpack.c.b16 %v2303, %v2299
    %v2364 = vpack.c.b16 %v2308, %v2304
    %v2365 = vpack.c.b16 %v2309, %v2305
    %v2366 = vpack.c.b16 %v2310, %v2306
    %v2367 = vpack.c.b16 %v2311, %v2307
    %v2368 = vpack.c.b16 %v2316, %v2312
    %v2369 = vpack.c.b16 %v2317, %v2313
    %v2370 = vpack.c.b16 %v2318, %v2314
    %v2371 = vpack.c.b16 %v2319, %v2315
    %v2372 = vpack.c.b16 %v2324, %v2320
    %v2373 = vpack.c.b16 %v2325, %v2321
    %v2374 = vpack.c.b16 %v2326, %v2322
    %v2375 = vpack.c.b16 %v2327, %v2323
    %v2376 = vpack.c.b16 %v2332, %v2328
    %v2377 = vpack.c.b16 %v2333, %v2329
    %v2378 = vpack.c.b16 %v2334, %v2330
    %v2379 = vpack.c.b16 %v2335, %v2331
    %v2380 = vpack.c.b16 %v2340, %v2336
    %v2381 = vpack.c.b16 %v2341, %v2337
    %v2382 = vpack.c.b16 %v2342, %v2338
    %v2383 = vpack.c.b16 %v2343, %v2339
    %v2384 = vpack.c.b16 %v2348, %v2344
    %v2385 = vpack.c.b16 %v2349, %v2345
    %v2386 = vpack.c.b16 %v2350, %v2346
    %v2387 = vpack.c.b16 %v2351, %v2347
    %v2388 = vpack.c.b16 %v2356, %v2352
    %v2389 = vpack.c.b16 %v2357, %v2353
    %v2390 = vpack.c.b16 %v2358, %v2354
    %v2391 = vpack.c.b16 %v2359, %v2355
    %2424 = vmatprep.subr.bf16.mxu0 %v2361
    %2425 = vmatpush1.bf16.msra.mxu0 %v2360
    %2426 = vmatprep.subr.bf16.mxu0 %v2365
    %2427 = vmatpush1.bf16.msra.mxu0 %v2364
    %2428 = vmatprep.subr.bf16.mxu0 %v2369
    %2429 = vmatpush1.bf16.msra.mxu0 %v2368
    %2430 = vmatprep.subr.bf16.mxu0 %v2373
    %2431 = vmatpush1.bf16.msra.mxu0 %v2372
    %2432 = vmatprep.subr.bf16.mxu0 %v2377
    %2433 = vmatpush1.bf16.msra.mxu0 %v2376
    %2434 = vmatprep.subr.bf16.mxu0 %v2381
    %2435 = vmatpush1.bf16.msra.mxu0 %v2380
    %2436 = vmatprep.subr.bf16.mxu0 %v2385
    %2437 = vmatpush1.bf16.msra.mxu0 %v2384
    %2438 = vmatprep.subr.bf16.mxu0 %v2389
    %2439 = vmatpush1.bf16.msra.mxu0 %v2388
    %2440 = vmatprep.subr.bf16.mxu0 0
    %2441 = vmatpush1.bf16.msra.mxu0 0
    %2442 = vmatprep.subr.bf16.mxu0 0
    %2443 = vmatpush1.bf16.msra.mxu0 0
    %2444 = vmatprep.subr.bf16.mxu0 0
    %2445 = vmatpush1.bf16.msra.mxu0 0
    %2446 = vmatprep.subr.bf16.mxu0 0
    %2447 = vmatpush1.bf16.msra.mxu0 0
    %2448 = vmatprep.subr.bf16.mxu0 0
    %2449 = vmatpush1.bf16.msra.mxu0 0
    %2450 = vmatprep.subr.bf16.mxu0 0
    %2451 = vmatpush1.bf16.msra.mxu0 0
    %2452 = vmatprep.subr.bf16.mxu0 0
    %2453 = vmatpush1.bf16.msra.mxu0 0
    %2454 = vmatprep.subr.bf16.mxu0 0
    %2455 = vmatpush1.bf16.msra.mxu0 0
    %2456 = vmatprep.mubr.bf16.mxu0 0
    %2457 = vmatmul.mubr.bf16.gmra.mrb[0].mxu0 %v2231
    %v2458 = vpop.f32.mrb[0].mxu0
    %v2459 = vadd.f32 0.0, %v2458
    %v2460 = vpop.f32.mrb[0].mxu0
    %v2461 = vadd.f32 0.0, %v2460
    %v2462 = vpop.f32.mrb[0].mxu0
    %v2463 = vpop.f32.mrb[0].mxu0
    %2464 = vdwg.mxu0
    %2465 = vmatprep.subr.bf16.mxu0 %v2363
    %2466 = vmatpush1.bf16.msra.mxu0 %v2362
    %2467 = vmatprep.subr.bf16.mxu0 %v2367
    %2468 = vmatpush1.bf16.msra.mxu0 %v2366
    %2469 = vmatprep.subr.bf16.mxu0 %v2371
    %2470 = vmatpush1.bf16.msra.mxu0 %v2370
    %2471 = vmatprep.subr.bf16.mxu0 %v2375
    %2472 = vmatpush1.bf16.msra.mxu0 %v2374
    %2473 = vmatprep.subr.bf16.mxu0 %v2379
    %2474 = vmatpush1.bf16.msra.mxu0 %v2378
    %2475 = vmatprep.subr.bf16.mxu0 %v2383
    %2476 = vmatpush1.bf16.msra.mxu0 %v2382
    %2477 = vmatprep.subr.bf16.mxu0 %v2387
    %2478 = vmatpush1.bf16.msra.mxu0 %v2386
    %2479 = vmatprep.subr.bf16.mxu0 %v2391
    %2480 = vmatpush1.bf16.msra.mxu0 %v2390
    %2481 = vmatprep.subr.bf16.mxu0 0
    %2482 = vmatpush1.bf16.msra.mxu0 0
    %2483 = vmatprep.subr.bf16.mxu0 0
    %2484 = vmatpush1.bf16.msra.mxu0 0
    %2485 = vmatprep.subr.bf16.mxu0 0
    %2486 = vmatpush1.bf16.msra.mxu0 0
    %2487 = vmatprep.subr.bf16.mxu0 0
    %2488 = vmatpush1.bf16.msra.mxu0 0
    %2489 = vmatprep.subr.bf16.mxu0 0
    %2490 = vmatpush1.bf16.msra.mxu0 0
    %2491 = vmatprep.subr.bf16.mxu0 0
    %2492 = vmatpush1.bf16.msra.mxu0 0
    %2493 = vmatprep.subr.bf16.mxu0 0
    %2494 = vmatpush1.bf16.msra.mxu0 0
    %2495 = vmatprep.subr.bf16.mxu0 0
    %2496 = vmatpush1.bf16.msra.mxu0 0
    %2497 = vmatprep.mubr.bf16.mxu0 0
    %2498 = vmatmul.mubr.bf16.gmra.mrb[0].mxu0 %v2231
    %v2499 = vpop.f32.mrb[0].mxu0
    %v2500 = vadd.f32 0.0, %v2499
    %v2501 = vpop.f32.mrb[0].mxu0
    %v2502 = vadd.f32 0.0, %v2501
    %v2503 = vpop.f32.mrb[0].mxu0
    %v2504 = vpop.f32.mrb[0].mxu0
    %2505 = vdwg.mxu0
    %v2506 = vadd.f32 %v2227, %v2459
    %v2507 = vadd.f32 %v2228, %v2461
    %v2508 = vadd.f32 %v2229, %v2500
    %v2509 = vadd.f32 %v2230, %v2502
    %v2510 = vxor.u32 %v2506, 2147483648
    %v2511 = vmul.f32 %v2510, 1.442695
    %v2512 = vpow.pop %v2511
    %v2513 = vadd.f32 %v2512, 1.0
    %v2514 = vrcp.pop %v2513
    %v2515 = vmul.f32 1.0, %v2514
    %v2516 = vxor.u32 %v2507, 2147483648
    %v2517 = vmul.f32 %v2516, 1.442695
    %v2518 = vpow.pop %v2517
    %v2519 = vadd.f32 %v2518, 1.0
    %v2520 = vrcp.pop %v2519
    %v2521 = vmul.f32 1.0, %v2520
    %v2522 = vtanh.pop %v2508
    %v2523 = vxor.u32 %v2509, 2147483648
    %v2524 = vmul.f32 %v2523, 1.442695
    %v2525 = vpow.pop %v2524
    %v2526 = vadd.f32 %v2525, 1.0
    %v2527 = vrcp.pop %v2526
    %v2528 = vmul.f32 1.0, %v2527
    %v2529 = vmul.f32 %v2521, %v2226
    %v2530 = vmul.f32 %v2515, %v2522
    %v2531 = vadd.f32 %v2529, %v2530
    %v2532 = vtanh.pop %v2531
    %v2533 = vmul.f32 %v2528, %v2532
    %2534 = vst [vmem:[#allocation4] sm:$0xff] %v2533
    %2535 = vst [vmem:[#allocation5] sm:$0xff] %v2531
    %2536 = vst [vmem:[#allocation2 + $0x28] sm:$0xff] %v2533
    %v2537 = vld [vmem:[#allocation4] sm:$0xff]
    %v2538 = vld [vmem:[#allocation5] sm:$0xff]
    %v2539 = vld [vmem:[#allocation3 + $0xc0] sm:$0xff]
    %v2540 = vld [vmem:[#allocation3 + $0xc8] sm:$0xff]
    %v2541 = vld [vmem:[#allocation3 + $0xd0] sm:$0xff]
    %v2542 = vld [vmem:[#allocation3 + $0xd8] sm:$0xff]
    %v2543 = vpack.c.bf16 %v2537, %v2537
    %v2544 = vld [vmem:[#allocation12] sm:$0xff]
    %v2545 = vld [vmem:[#allocation12 + $0x8] sm:$0xff]
    %v2546 = vld [vmem:[#allocation12 + $0x10] sm:$0xff]
    %v2547 = vld [vmem:[#allocation12 + $0x18] sm:$0xff]
    %v2548 = vld [vmem:[#allocation12 + $0x20] sm:$0xff]
    %v2549 = vld [vmem:[#allocation12 + $0x28] sm:$0xff]
    %v2550 = vld [vmem:[#allocation12 + $0x30] sm:$0xff]
    %v2551 = vld [vmem:[#allocation12 + $0x38] sm:$0xff]
    %v2552 = vld [vmem:[#allocation12 + $0x40] sm:$0xff]
    %v2553 = vld [vmem:[#allocation12 + $0x48] sm:$0xff]
    %v2554 = vld [vmem:[#allocation12 + $0x50] sm:$0xff]
    %v2555 = vld [vmem:[#allocation12 + $0x58] sm:$0xff]
    %v2556 = vld [vmem:[#allocation12 + $0x60] sm:$0xff]
    %v2557 = vld [vmem:[#allocation12 + $0x68] sm:$0xff]
    %v2558 = vld [vmem:[#allocation12 + $0x70] sm:$0xff]
    %v2559 = vld [vmem:[#allocation12 + $0x78] sm:$0xff]
    %v2560 = vld [vmem:[#allocation12 + $0x80] sm:$0xff]
    %v2561 = vld [vmem:[#allocation12 + $0x88] sm:$0xff]
    %v2562 = vld [vmem:[#allocation12 + $0x90] sm:$0xff]
    %v2563 = vld [vmem:[#allocation12 + $0x98] sm:$0xff]
    %v2564 = vld [vmem:[#allocation12 + $0xa0] sm:$0xff]
    %v2565 = vld [vmem:[#allocation12 + $0xa8] sm:$0xff]
    %v2566 = vld [vmem:[#allocation12 + $0xb0] sm:$0xff]
    %v2567 = vld [vmem:[#allocation12 + $0xb8] sm:$0xff]
    %v2568 = vld [vmem:[#allocation12 + $0xc0] sm:$0xff]
    %v2569 = vld [vmem:[#allocation12 + $0xc8] sm:$0xff]
    %v2570 = vld [vmem:[#allocation12 + $0xd0] sm:$0xff]
    %v2571 = vld [vmem:[#allocation12 + $0xd8] sm:$0xff]
    %v2572 = vld [vmem:[#allocation12 + $0xe0] sm:$0xff]
    %v2573 = vld [vmem:[#allocation12 + $0xe8] sm:$0xff]
    %v2574 = vld [vmem:[#allocation12 + $0xf0] sm:$0xff]
    %v2575 = vld [vmem:[#allocation12 + $0xf8] sm:$0xff]
    %v2608 = vunpack.c.l.b16 %v2544
    %v2609 = vunpack.c.h.b16 %v2544
    %v2610 = vunpack.c.l.b16 %v2545
    %v2611 = vunpack.c.h.b16 %v2545
    %v2612 = vunpack.c.l.b16 %v2546
    %v2613 = vunpack.c.h.b16 %v2546
    %v2614 = vunpack.c.l.b16 %v2547
    %v2615 = vunpack.c.h.b16 %v2547
    %v2616 = vunpack.c.l.b16 %v2548
    %v2617 = vunpack.c.h.b16 %v2548
    %v2618 = vunpack.c.l.b16 %v2549
    %v2619 = vunpack.c.h.b16 %v2549
    %v2620 = vunpack.c.l.b16 %v2550
    %v2621 = vunpack.c.h.b16 %v2550
    %v2622 = vunpack.c.l.b16 %v2551
    %v2623 = vunpack.c.h.b16 %v2551
    %v2624 = vunpack.c.l.b16 %v2552
    %v2625 = vunpack.c.h.b16 %v2552
    %v2626 = vunpack.c.l.b16 %v2553
    %v2627 = vunpack.c.h.b16 %v2553
    %v2628 = vunpack.c.l.b16 %v2554
    %v2629 = vunpack.c.h.b16 %v2554
    %v2630 = vunpack.c.l.b16 %v2555
    %v2631 = vunpack.c.h.b16 %v2555
    %v2632 = vunpack.c.l.b16 %v2556
    %v2633 = vunpack.c.h.b16 %v2556
    %v2634 = vunpack.c.l.b16 %v2557
    %v2635 = vunpack.c.h.b16 %v2557
    %v2636 = vunpack.c.l.b16 %v2558
    %v2637 = vunpack.c.h.b16 %v2558
    %v2638 = vunpack.c.l.b16 %v2559
    %v2639 = vunpack.c.h.b16 %v2559
    %v2640 = vunpack.c.l.b16 %v2560
    %v2641 = vunpack.c.h.b16 %v2560
    %v2642 = vunpack.c.l.b16 %v2561
    %v2643 = vunpack.c.h.b16 %v2561
    %v2644 = vunpack.c.l.b16 %v2562
    %v2645 = vunpack.c.h.b16 %v2562
    %v2646 = vunpack.c.l.b16 %v2563
    %v2647 = vunpack.c.h.b16 %v2563
    %v2648 = vunpack.c.l.b16 %v2564
    %v2649 = vunpack.c.h.b16 %v2564
    %v2650 = vunpack.c.l.b16 %v2565
    %v2651 = vunpack.c.h.b16 %v2565
    %v2652 = vunpack.c.l.b16 %v2566
    %v2653 = vunpack.c.h.b16 %v2566
    %v2654 = vunpack.c.l.b16 %v2567
    %v2655 = vunpack.c.h.b16 %v2567
    %v2656 = vunpack.c.l.b16 %v2568
    %v2657 = vunpack.c.h.b16 %v2568
    %v2658 = vunpack.c.l.b16 %v2569
    %v2659 = vunpack.c.h.b16 %v2569
    %v2660 = vunpack.c.l.b16 %v2570
    %v2661 = vunpack.c.h.b16 %v2570
    %v2662 = vunpack.c.l.b16 %v2571
    %v2663 = vunpack.c.h.b16 %v2571
    %v2664 = vunpack.c.l.b16 %v2572
    %v2665 = vunpack.c.h.b16 %v2572
    %v2666 = vunpack.c.l.b16 %v2573
    %v2667 = vunpack.c.h.b16 %v2573
    %v2668 = vunpack.c.l.b16 %v2574
    %v2669 = vunpack.c.h.b16 %v2574
    %v2670 = vunpack.c.l.b16 %v2575
    %v2671 = vunpack.c.h.b16 %v2575
    %v2672 = vpack.c.b16 %v2612, %v2608
    %v2673 = vpack.c.b16 %v2613, %v2609
    %v2674 = vpack.c.b16 %v2614, %v2610
    %v2675 = vpack.c.b16 %v2615, %v2611
    %v2676 = vpack.c.b16 %v2620, %v2616
    %v2677 = vpack.c.b16 %v2621, %v2617
    %v2678 = vpack.c.b16 %v2622, %v2618
    %v2679 = vpack.c.b16 %v2623, %v2619
    %v2680 = vpack.c.b16 %v2628, %v2624
    %v2681 = vpack.c.b16 %v2629, %v2625
    %v2682 = vpack.c.b16 %v2630, %v2626
    %v2683 = vpack.c.b16 %v2631, %v2627
    %v2684 = vpack.c.b16 %v2636, %v2632
    %v2685 = vpack.c.b16 %v2637, %v2633
    %v2686 = vpack.c.b16 %v2638, %v2634
    %v2687 = vpack.c.b16 %v2639, %v2635
    %v2688 = vpack.c.b16 %v2644, %v2640
    %v2689 = vpack.c.b16 %v2645, %v2641
    %v2690 = vpack.c.b16 %v2646, %v2642
    %v2691 = vpack.c.b16 %v2647, %v2643
    %v2692 = vpack.c.b16 %v2652, %v2648
    %v2693 = vpack.c.b16 %v2653, %v2649
    %v2694 = vpack.c.b16 %v2654, %v2650
    %v2695 = vpack.c.b16 %v2655, %v2651
    %v2696 = vpack.c.b16 %v2660, %v2656
    %v2697 = vpack.c.b16 %v2661, %v2657
    %v2698 = vpack.c.b16 %v2662, %v2658
    %v2699 = vpack.c.b16 %v2663, %v2659
    %v2700 = vpack.c.b16 %v2668, %v2664
    %v2701 = vpack.c.b16 %v2669, %v2665
    %v2702 = vpack.c.b16 %v2670, %v2666
    %v2703 = vpack.c.b16 %v2671, %v2667
    %2736 = vmatprep.subr.bf16.mxu0 %v2673
    %2737 = vmatpush1.bf16.msra.mxu0 %v2672
    %2738 = vmatprep.subr.bf16.mxu0 %v2677
    %2739 = vmatpush1.bf16.msra.mxu0 %v2676
    %2740 = vmatprep.subr.bf16.mxu0 %v2681
    %2741 = vmatpush1.bf16.msra.mxu0 %v2680
    %2742 = vmatprep.subr.bf16.mxu0 %v2685
    %2743 = vmatpush1.bf16.msra.mxu0 %v2684
    %2744 = vmatprep.subr.bf16.mxu0 %v2689
    %2745 = vmatpush1.bf16.msra.mxu0 %v2688
    %2746 = vmatprep.subr.bf16.mxu0 %v2693
    %2747 = vmatpush1.bf16.msra.mxu0 %v2692
    %2748 = vmatprep.subr.bf16.mxu0 %v2697
    %2749 = vmatpush1.bf16.msra.mxu0 %v2696
    %2750 = vmatprep.subr.bf16.mxu0 %v2701
    %2751 = vmatpush1.bf16.msra.mxu0 %v2700
    %2752 = vmatprep.subr.bf16.mxu0 0
    %2753 = vmatpush1.bf16.msra.mxu0 0
    %2754 = vmatprep.subr.bf16.mxu0 0
    %2755 = vmatpush1.bf16.msra.mxu0 0
    %2756 = vmatprep.subr.bf16.mxu0 0
    %2757 = vmatpush1.bf16.msra.mxu0 0
    %2758 = vmatprep.subr.bf16.mxu0 0
    %2759 = vmatpush1.bf16.msra.mxu0 0
    %2760 = vmatprep.subr.bf16.mxu0 0
    %2761 = vmatpush1.bf16.msra.mxu0 0
    %2762 = vmatprep.subr.bf16.mxu0 0
    %2763 = vmatpush1.bf16.msra.mxu0 0
    %2764 = vmatprep.subr.bf16.mxu0 0
    %2765 = vmatpush1.bf16.msra.mxu0 0
    %2766 = vmatprep.subr.bf16.mxu0 0
    %2767 = vmatpush1.bf16.msra.mxu0 0
    %2768 = vmatprep.mubr.bf16.mxu0 0
    %2769 = vmatmul.mubr.bf16.gmra.mrb[0].mxu0 %v2543
    %v2770 = vpop.f32.mrb[0].mxu0
    %v2771 = vadd.f32 0.0, %v2770
    %v2772 = vpop.f32.mrb[0].mxu0
    %v2773 = vadd.f32 0.0, %v2772
    %v2774 = vpop.f32.mrb[0].mxu0
    %v2775 = vpop.f32.mrb[0].mxu0
    %2776 = vdwg.mxu0
    %2777 = vmatprep.subr.bf16.mxu0 %v2675
    %2778 = vmatpush1.bf16.msra.mxu0 %v2674
    %2779 = vmatprep.subr.bf16.mxu0 %v2679
    %2780 = vmatpush1.bf16.msra.mxu0 %v2678
    %2781 = vmatprep.subr.bf16.mxu0 %v2683
    %2782 = vmatpush1.bf16.msra.mxu0 %v2682
    %2783 = vmatprep.subr.bf16.mxu0 %v2687
    %2784 = vmatpush1.bf16.msra.mxu0 %v2686
    %2785 = vmatprep.subr.bf16.mxu0 %v2691
    %2786 = vmatpush1.bf16.msra.mxu0 %v2690
    %2787 = vmatprep.subr.bf16.mxu0 %v2695
    %2788 = vmatpush1.bf16.msra.mxu0 %v2694
    %2789 = vmatprep.subr.bf16.mxu0 %v2699
    %2790 = vmatpush1.bf16.msra.mxu0 %v2698
    %2791 = vmatprep.subr.bf16.mxu0 %v2703
    %2792 = vmatpush1.bf16.msra.mxu0 %v2702
    %2793 = vmatprep.subr.bf16.mxu0 0
    %2794 = vmatpush1.bf16.msra.mxu0 0
    %2795 = vmatprep.subr.bf16.mxu0 0
    %2796 = vmatpush1.bf16.msra.mxu0 0
    %2797 = vmatprep.subr.bf16.mxu0 0
    %2798 = vmatpush1.bf16.msra.mxu0 0
    %2799 = vmatprep.subr.bf16.mxu0 0
    %2800 = vmatpush1.bf16.msra.mxu0 0
    %2801 = vmatprep.subr.bf16.mxu0 0
    %2802 = vmatpush1.bf16.msra.mxu0 0
    %2803 = vmatprep.subr.bf16.mxu0 0
    %2804 = vmatpush1.bf16.msra.mxu0 0
    %2805 = vmatprep.subr.bf16.mxu0 0
    %2806 = vmatpush1.bf16.msra.mxu0 0
    %2807 = vmatprep.subr.bf16.mxu0 0
    %2808 = vmatpush1.bf16.msra.mxu0 0
    %2809 = vmatprep.mubr.bf16.mxu0 0
    %2810 = vmatmul.mubr.bf16.gmra.mrb[0].mxu0 %v2543
    %v2811 = vpop.f32.mrb[0].mxu0
    %v2812 = vadd.f32 0.0, %v2811
    %v2813 = vpop.f32.mrb[0].mxu0
    %v2814 = vadd.f32 0.0, %v2813
    %v2815 = vpop.f32.mrb[0].mxu0
    %v2816 = vpop.f32.mrb[0].mxu0
    %2817 = vdwg.mxu0
    %v2818 = vadd.f32 %v2539, %v2771
    %v2819 = vadd.f32 %v2540, %v2773
    %v2820 = vadd.f32 %v2541, %v2812
    %v2821 = vadd.f32 %v2542, %v2814
    %v2822 = vxor.u32 %v2818, 2147483648
    %v2823 = vmul.f32 %v2822, 1.442695
    %v2824 = vpow.pop %v2823
    %v2825 = vadd.f32 %v2824, 1.0
    %v2826 = vrcp.pop %v2825
    %v2827 = vmul.f32 1.0, %v2826
    %v2828 = vxor.u32 %v2819, 2147483648
    %v2829 = vmul.f32 %v2828, 1.442695
    %v2830 = vpow.pop %v2829
    %v2831 = vadd.f32 %v2830, 1.0
    %v2832 = vrcp.pop %v2831
    %v2833 = vmul.f32 1.0, %v2832
    %v2834 = vtanh.pop %v2820
    %v2835 = vxor.u32 %v2821, 2147483648
    %v2836 = vmul.f32 %v2835, 1.442695
    %v2837 = vpow.pop %v2836
    %v2838 = vadd.f32 %v2837, 1.0
    %v2839 = vrcp.pop %v2838
    %v2840 = vmul.f32 1.0, %v2839
    %v2841 = vmul.f32 %v2833, %v2538
    %v2842 = vmul.f32 %v2827, %v2834
    %v2843 = vadd.f32 %v2841, %v2842
    %v2844 = vtanh.pop %v2843
    %v2845 = vmul.f32 %v2840, %v2844
    %2846 = vst [vmem:[#allocation4] sm:$0xff] %v2845
    %2847 = vst [vmem:[#allocation5] sm:$0xff] %v2843
    %2848 = vst [vmem:[#allocation2 + $0x30] sm:$0xff] %v2845
    %v2849 = vld [vmem:[#allocation4] sm:$0xff]
    %v2850 = vld [vmem:[#allocation5] sm:$0xff]
    %v2851 = vld [vmem:[#allocation3 + $0xe0] sm:$0xff]
    %v2852 = vld [vmem:[#allocation3 + $0xe8] sm:$0xff]
    %v2853 = vld [vmem:[#allocation3 + $0xf0] sm:$0xff]
    %v2854 = vld [vmem:[#allocation3 + $0xf8] sm:$0xff]
    %v2855 = vpack.c.bf16 %v2849, %v2849
    %v2856 = vld [vmem:[#allocation12] sm:$0xff]
    %v2857 = vld [vmem:[#allocation12 + $0x8] sm:$0xff]
    %v2858 = vld [vmem:[#allocation12 + $0x10] sm:$0xff]
    %v2859 = vld [vmem:[#allocation12 + $0x18] sm:$0xff]
    %v2860 = vld [vmem:[#allocation12 + $0x20] sm:$0xff]
    %v2861 = vld [vmem:[#allocation12 + $0x28] sm:$0xff]
    %v2862 = vld [vmem:[#allocation12 + $0x30] sm:$0xff]
    %v2863 = vld [vmem:[#allocation12 + $0x38] sm:$0xff]
    %v2864 = vld [vmem:[#allocation12 + $0x40] sm:$0xff]
    %v2865 = vld [vmem:[#allocation12 + $0x48] sm:$0xff]
    %v2866 = vld [vmem:[#allocation12 + $0x50] sm:$0xff]
    %v2867 = vld [vmem:[#allocation12 + $0x58] sm:$0xff]
    %v2868 = vld [vmem:[#allocation12 + $0x60] sm:$0xff]
    %v2869 = vld [vmem:[#allocation12 + $0x68] sm:$0xff]
    %v2870 = vld [vmem:[#allocation12 + $0x70] sm:$0xff]
    %v2871 = vld [vmem:[#allocation12 + $0x78] sm:$0xff]
    %v2872 = vld [vmem:[#allocation12 + $0x80] sm:$0xff]
    %v2873 = vld [vmem:[#allocation12 + $0x88] sm:$0xff]
    %v2874 = vld [vmem:[#allocation12 + $0x90] sm:$0xff]
    %v2875 = vld [vmem:[#allocation12 + $0x98] sm:$0xff]
    %v2876 = vld [vmem:[#allocation12 + $0xa0] sm:$0xff]
    %v2877 = vld [vmem:[#allocation12 + $0xa8] sm:$0xff]
    %v2878 = vld [vmem:[#allocation12 + $0xb0] sm:$0xff]
    %v2879 = vld [vmem:[#allocation12 + $0xb8] sm:$0xff]
    %v2880 = vld [vmem:[#allocation12 + $0xc0] sm:$0xff]
    %v2881 = vld [vmem:[#allocation12 + $0xc8] sm:$0xff]
    %v2882 = vld [vmem:[#allocation12 + $0xd0] sm:$0xff]
    %v2883 = vld [vmem:[#allocation12 + $0xd8] sm:$0xff]
    %v2884 = vld [vmem:[#allocation12 + $0xe0] sm:$0xff]
    %v2885 = vld [vmem:[#allocation12 + $0xe8] sm:$0xff]
    %v2886 = vld [vmem:[#allocation12 + $0xf0] sm:$0xff]
    %v2887 = vld [vmem:[#allocation12 + $0xf8] sm:$0xff]
    %v2920 = vunpack.c.l.b16 %v2856
    %v2921 = vunpack.c.h.b16 %v2856
    %v2922 = vunpack.c.l.b16 %v2857
    %v2923 = vunpack.c.h.b16 %v2857
    %v2924 = vunpack.c.l.b16 %v2858
    %v2925 = vunpack.c.h.b16 %v2858
    %v2926 = vunpack.c.l.b16 %v2859
    %v2927 = vunpack.c.h.b16 %v2859
    %v2928 = vunpack.c.l.b16 %v2860
    %v2929 = vunpack.c.h.b16 %v2860
    %v2930 = vunpack.c.l.b16 %v2861
    %v2931 = vunpack.c.h.b16 %v2861
    %v2932 = vunpack.c.l.b16 %v2862
    %v2933 = vunpack.c.h.b16 %v2862
    %v2934 = vunpack.c.l.b16 %v2863
    %v2935 = vunpack.c.h.b16 %v2863
    %v2936 = vunpack.c.l.b16 %v2864
    %v2937 = vunpack.c.h.b16 %v2864
    %v2938 = vunpack.c.l.b16 %v2865
    %v2939 = vunpack.c.h.b16 %v2865
    %v2940 = vunpack.c.l.b16 %v2866
    %v2941 = vunpack.c.h.b16 %v2866
    %v2942 = vunpack.c.l.b16 %v2867
    %v2943 = vunpack.c.h.b16 %v2867
    %v2944 = vunpack.c.l.b16 %v2868
    %v2945 = vunpack.c.h.b16 %v2868
    %v2946 = vunpack.c.l.b16 %v2869
    %v2947 = vunpack.c.h.b16 %v2869
    %v2948 = vunpack.c.l.b16 %v2870
    %v2949 = vunpack.c.h.b16 %v2870
    %v2950 = vunpack.c.l.b16 %v2871
    %v2951 = vunpack.c.h.b16 %v2871
    %v2952 = vunpack.c.l.b16 %v2872
    %v2953 = vunpack.c.h.b16 %v2872
    %v2954 = vunpack.c.l.b16 %v2873
    %v2955 = vunpack.c.h.b16 %v2873
    %v2956 = vunpack.c.l.b16 %v2874
    %v2957 = vunpack.c.h.b16 %v2874
    %v2958 = vunpack.c.l.b16 %v2875
    %v2959 = vunpack.c.h.b16 %v2875
    %v2960 = vunpack.c.l.b16 %v2876
    %v2961 = vunpack.c.h.b16 %v2876
    %v2962 = vunpack.c.l.b16 %v2877
    %v2963 = vunpack.c.h.b16 %v2877
    %v2964 = vunpack.c.l.b16 %v2878
    %v2965 = vunpack.c.h.b16 %v2878
    %v2966 = vunpack.c.l.b16 %v2879
    %v2967 = vunpack.c.h.b16 %v2879
    %v2968 = vunpack.c.l.b16 %v2880
    %v2969 = vunpack.c.h.b16 %v2880
    %v2970 = vunpack.c.l.b16 %v2881
    %v2971 = vunpack.c.h.b16 %v2881
    %v2972 = vunpack.c.l.b16 %v2882
    %v2973 = vunpack.c.h.b16 %v2882
    %v2974 = vunpack.c.l.b16 %v2883
    %v2975 = vunpack.c.h.b16 %v2883
    %v2976 = vunpack.c.l.b16 %v2884
    %v2977 = vunpack.c.h.b16 %v2884
    %v2978 = vunpack.c.l.b16 %v2885
    %v2979 = vunpack.c.h.b16 %v2885
    %v2980 = vunpack.c.l.b16 %v2886
    %v2981 = vunpack.c.h.b16 %v2886
    %v2982 = vunpack.c.l.b16 %v2887
    %v2983 = vunpack.c.h.b16 %v2887
    %v2984 = vpack.c.b16 %v2924, %v2920
    %v2985 = vpack.c.b16 %v2925, %v2921
    %v2986 = vpack.c.b16 %v2926, %v2922
    %v2987 = vpack.c.b16 %v2927, %v2923
    %v2988 = vpack.c.b16 %v2932, %v2928
    %v2989 = vpack.c.b16 %v2933, %v2929
    %v2990 = vpack.c.b16 %v2934, %v2930
    %v2991 = vpack.c.b16 %v2935, %v2931
    %v2992 = vpack.c.b16 %v2940, %v2936
    %v2993 = vpack.c.b16 %v2941, %v2937
    %v2994 = vpack.c.b16 %v2942, %v2938
    %v2995 = vpack.c.b16 %v2943, %v2939
    %v2996 = vpack.c.b16 %v2948, %v2944
    %v2997 = vpack.c.b16 %v2949, %v2945
    %v2998 = vpack.c.b16 %v2950, %v2946
    %v2999 = vpack.c.b16 %v2951, %v2947
    %v3000 = vpack.c.b16 %v2956, %v2952
    %v3001 = vpack.c.b16 %v2957, %v2953
    %v3002 = vpack.c.b16 %v2958, %v2954
    %v3003 = vpack.c.b16 %v2959, %v2955
    %v3004 = vpack.c.b16 %v2964, %v2960
    %v3005 = vpack.c.b16 %v2965, %v2961
    %v3006 = vpack.c.b16 %v2966, %v2962
    %v3007 = vpack.c.b16 %v2967, %v2963
    %v3008 = vpack.c.b16 %v2972, %v2968
    %v3009 = vpack.c.b16 %v2973, %v2969
    %v3010 = vpack.c.b16 %v2974, %v2970
    %v3011 = vpack.c.b16 %v2975, %v2971
    %v3012 = vpack.c.b16 %v2980, %v2976
    %v3013 = vpack.c.b16 %v2981, %v2977
    %v3014 = vpack.c.b16 %v2982, %v2978
    %v3015 = vpack.c.b16 %v2983, %v2979
    %3048 = vmatprep.subr.bf16.mxu0 %v2985
    %3049 = vmatpush1.bf16.msra.mxu0 %v2984
    %3050 = vmatprep.subr.bf16.mxu0 %v2989
    %3051 = vmatpush1.bf16.msra.mxu0 %v2988
    %3052 = vmatprep.subr.bf16.mxu0 %v2993
    %3053 = vmatpush1.bf16.msra.mxu0 %v2992
    %3054 = vmatprep.subr.bf16.mxu0 %v2997
    %3055 = vmatpush1.bf16.msra.mxu0 %v2996
    %3056 = vmatprep.subr.bf16.mxu0 %v3001
    %3057 = vmatpush1.bf16.msra.mxu0 %v3000
    %3058 = vmatprep.subr.bf16.mxu0 %v3005
    %3059 = vmatpush1.bf16.msra.mxu0 %v3004
    %3060 = vmatprep.subr.bf16.mxu0 %v3009
    %3061 = vmatpush1.bf16.msra.mxu0 %v3008
    %3062 = vmatprep.subr.bf16.mxu0 %v3013
    %3063 = vmatpush1.bf16.msra.mxu0 %v3012
    %3064 = vmatprep.subr.bf16.mxu0 0
    %3065 = vmatpush1.bf16.msra.mxu0 0
    %3066 = vmatprep.subr.bf16.mxu0 0
    %3067 = vmatpush1.bf16.msra.mxu0 0
    %3068 = vmatprep.subr.bf16.mxu0 0
    %3069 = vmatpush1.bf16.msra.mxu0 0
    %3070 = vmatprep.subr.bf16.mxu0 0
    %3071 = vmatpush1.bf16.msra.mxu0 0
    %3072 = vmatprep.subr.bf16.mxu0 0
    %3073 = vmatpush1.bf16.msra.mxu0 0
    %3074 = vmatprep.subr.bf16.mxu0 0
    %3075 = vmatpush1.bf16.msra.mxu0 0
    %3076 = vmatprep.subr.bf16.mxu0 0
    %3077 = vmatpush1.bf16.msra.mxu0 0
    %3078 = vmatprep.subr.bf16.mxu0 0
    %3079 = vmatpush1.bf16.msra.mxu0 0
    %3080 = vmatprep.mubr.bf16.mxu0 0
    %3081 = vmatmul.mubr.bf16.gmra.mrb[0].mxu0 %v2855
    %v3082 = vpop.f32.mrb[0].mxu0
    %v3083 = vadd.f32 0.0, %v3082
    %v3084 = vpop.f32.mrb[0].mxu0
    %v3085 = vadd.f32 0.0, %v3084
    %v3086 = vpop.f32.mrb[0].mxu0
    %v3087 = vpop.f32.mrb[0].mxu0
    %3088 = vdwg.mxu0
    %3089 = vmatprep.subr.bf16.mxu0 %v2987
    %3090 = vmatpush1.bf16.msra.mxu0 %v2986
    %3091 = vmatprep.subr.bf16.mxu0 %v2991
    %3092 = vmatpush1.bf16.msra.mxu0 %v2990
    %3093 = vmatprep.subr.bf16.mxu0 %v2995
    %3094 = vmatpush1.bf16.msra.mxu0 %v2994
    %3095 = vmatprep.subr.bf16.mxu0 %v2999
    %3096 = vmatpush1.bf16.msra.mxu0 %v2998
    %3097 = vmatprep.subr.bf16.mxu0 %v3003
    %3098 = vmatpush1.bf16.msra.mxu0 %v3002
    %3099 = vmatprep.subr.bf16.mxu0 %v3007
    %3100 = vmatpush1.bf16.msra.mxu0 %v3006
    %3101 = vmatprep.subr.bf16.mxu0 %v3011
    %3102 = vmatpush1.bf16.msra.mxu0 %v3010
    %3103 = vmatprep.subr.bf16.mxu0 %v3015
    %3104 = vmatpush1.bf16.msra.mxu0 %v3014
    %3105 = vmatprep.subr.bf16.mxu0 0
    %3106 = vmatpush1.bf16.msra.mxu0 0
    %3107 = vmatprep.subr.bf16.mxu0 0
    %3108 = vmatpush1.bf16.msra.mxu0 0
    %3109 = vmatprep.subr.bf16.mxu0 0
    %3110 = vmatpush1.bf16.msra.mxu0 0
    %3111 = vmatprep.subr.bf16.mxu0 0
    %3112 = vmatpush1.bf16.msra.mxu0 0
    %3113 = vmatprep.subr.bf16.mxu0 0
    %3114 = vmatpush1.bf16.msra.mxu0 0
    %3115 = vmatprep.subr.bf16.mxu0 0
    %3116 = vmatpush1.bf16.msra.mxu0 0
    %3117 = vmatprep.subr.bf16.mxu0 0
    %3118 = vmatpush1.bf16.msra.mxu0 0
    %3119 = vmatprep.subr.bf16.mxu0 0
    %3120 = vmatpush1.bf16.msra.mxu0 0
    %3121 = vmatprep.mubr.bf16.mxu0 0
    %3122 = vmatmul.mubr.bf16.gmra.mrb[0].mxu0 %v2855
    %v3123 = vpop.f32.mrb[0].mxu0
    %v3124 = vadd.f32 0.0, %v3123
    %v3125 = vpop.f32.mrb[0].mxu0
    %v3126 = vadd.f32 0.0, %v3125
    %v3127 = vpop.f32.mrb[0].mxu0
    %v3128 = vpop.f32.mrb[0].mxu0
    %3129 = vdwg.mxu0
    %v3130 = vadd.f32 %v2851, %v3083
    %v3131 = vadd.f32 %v2852, %v3085
    %v3132 = vadd.f32 %v2853, %v3124
    %v3133 = vadd.f32 %v2854, %v3126
    %v3134 = vxor.u32 %v3130, 2147483648
    %v3135 = vmul.f32 %v3134, 1.442695
    %v3136 = vpow.pop %v3135
    %v3137 = vadd.f32 %v3136, 1.0
    %v3138 = vrcp.pop %v3137
    %v3139 = vmul.f32 1.0, %v3138
    %v3140 = vxor.u32 %v3131, 2147483648
    %v3141 = vmul.f32 %v3140, 1.442695
    %v3142 = vpow.pop %v3141
    %v3143 = vadd.f32 %v3142, 1.0
    %v3144 = vrcp.pop %v3143
    %v3145 = vmul.f32 1.0, %v3144
    %v3146 = vtanh.pop %v3132
    %v3147 = vxor.u32 %v3133, 2147483648
    %v3148 = vmul.f32 %v3147, 1.442695
    %v3149 = vpow.pop %v3148
    %v3150 = vadd.f32 %v3149, 1.0
    %v3151 = vrcp.pop %v3150
    %v3152 = vmul.f32 1.0, %v3151
    %v3153 = vmul.f32 %v3145, %v2850
    %v3154 = vmul.f32 %v3139, %v3146
    %v3155 = vadd.f32 %v3153, %v3154
    %v3156 = vtanh.pop %v3155
    %v3157 = vmul.f32 %v3152, %v3156
    %3158 = vst [vmem:[#allocation4] sm:$0xff] %v3157
    %3159 = vst [vmem:[#allocation5] sm:$0xff] %v3155
    %3160 = vst [vmem:[#allocation2 + $0x38] sm:$0xff] %v3157
    %v3161 = vld [vmem:[#allocation4] sm:$0xff]
    %3162 = vst [vmem:[#allocation18] sm:$0xff] %v3161
    %v3163 = vld [vmem:[#allocation5] sm:$0xff]
    %3164 = vst [vmem:[#allocation20] sm:$0xff] %v3163
    %v3165 = vld [vmem:[#allocation2] sm:$0xff]
    %v3166 = vld [vmem:[#allocation2 + $0x8] sm:$0xff]
    %v3167 = vld [vmem:[#allocation2 + $0x10] sm:$0xff]
    %v3168 = vld [vmem:[#allocation2 + $0x18] sm:$0xff]
    %v3169 = vld [vmem:[#allocation2 + $0x20] sm:$0xff]
    %v3170 = vld [vmem:[#allocation2 + $0x28] sm:$0xff]
    %v3171 = vld [vmem:[#allocation2 + $0x30] sm:$0xff]
    %v3172 = vld [vmem:[#allocation2 + $0x38] sm:$0xff]
    %v3173 = vpack.c.bf16 %v3166, %v3165
    %v3174 = vpack.c.bf16 %v3168, %v3167
    %v3175 = vpack.c.bf16 %v3170, %v3169
    %v3176 = vpack.c.bf16 %v3172, %v3171
    %v3177 = vld [vmem:[#allocation11] sm:$0xff]
    %v3178 = vld [vmem:[#allocation11 + $0x8] sm:$0xff]
    %v3179 = vld [vmem:[#allocation11 + $0x10] sm:$0xff]
    %v3180 = vld [vmem:[#allocation11 + $0x18] sm:$0xff]
    %v3181 = vld [vmem:[#allocation11 + $0x20] sm:$0xff]
    %v3182 = vld [vmem:[#allocation11 + $0x28] sm:$0xff]
    %v3183 = vld [vmem:[#allocation11 + $0x30] sm:$0xff]
    %v3184 = vld [vmem:[#allocation11 + $0x38] sm:$0xff]
    %v3185 = vld [vmem:[#allocation11 + $0x40] sm:$0xff]
    %v3186 = vld [vmem:[#allocation11 + $0x48] sm:$0xff]
    %v3187 = vld [vmem:[#allocation11 + $0x50] sm:$0xff]
    %v3188 = vld [vmem:[#allocation11 + $0x58] sm:$0xff]
    %v3189 = vld [vmem:[#allocation11 + $0x60] sm:$0xff]
    %v3190 = vld [vmem:[#allocation11 + $0x68] sm:$0xff]
    %v3191 = vld [vmem:[#allocation11 + $0x70] sm:$0xff]
    %v3192 = vld [vmem:[#allocation11 + $0x78] sm:$0xff]
    %v3193 = vld [vmem:[#allocation11 + $0x80] sm:$0xff]
    %v3194 = vld [vmem:[#allocation11 + $0x88] sm:$0xff]
    %v3195 = vld [vmem:[#allocation11 + $0x90] sm:$0xff]
    %v3196 = vld [vmem:[#allocation11 + $0x98] sm:$0xff]
    %v3197 = vld [vmem:[#allocation11 + $0xa0] sm:$0xff]
    %v3198 = vld [vmem:[#allocation11 + $0xa8] sm:$0xff]
    %v3199 = vld [vmem:[#allocation11 + $0xb0] sm:$0xff]
    %v3200 = vld [vmem:[#allocation11 + $0xb8] sm:$0xff]
    %v3201 = vld [vmem:[#allocation11 + $0xc0] sm:$0xff]
    %v3202 = vld [vmem:[#allocation11 + $0xc8] sm:$0xff]
    %v3203 = vld [vmem:[#allocation11 + $0xd0] sm:$0xff]
    %v3204 = vld [vmem:[#allocation11 + $0xd8] sm:$0xff]
    %v3205 = vld [vmem:[#allocation11 + $0xe0] sm:$0xff]
    %v3206 = vld [vmem:[#allocation11 + $0xe8] sm:$0xff]
    %v3207 = vld [vmem:[#allocation11 + $0xf0] sm:$0xff]
    %v3208 = vld [vmem:[#allocation11 + $0xf8] sm:$0xff]
    %v3209 = vld [vmem:[%s8] sm:$0xf]
    %v3211 = vlaneseq
    %v3212 = vshrl.u32 %v3211, 7
    %v3213 = vsub.s32 0, %v3212
    %v3214 = vrot.slane %v3209, %v3213
    %v3215 = vlaneseq
    %v3216 = vshrl.u32 %v3215, 7
    %v3217 = vsub.s32 1, %v3216
    %v3218 = vrot.slane %v3209, %v3217
    %v3219 = vlaneseq
    %v3220 = vshrl.u32 %v3219, 7
    %v3221 = vsub.s32 2, %v3220
    %v3222 = vrot.slane %v3209, %v3221
    %v3223 = vlaneseq
    %v3224 = vshrl.u32 %v3223, 7
    %v3225 = vsub.s32 3, %v3224
    %v3226 = vrot.slane %v3209, %v3225
    %v3263 = vunpack.c.l.b16 %v3177
    %v3264 = vunpack.c.h.b16 %v3177
    %v3265 = vunpack.c.l.b16 %v3178
    %v3266 = vunpack.c.h.b16 %v3178
    %v3267 = vunpack.c.l.b16 %v3179
    %v3268 = vunpack.c.h.b16 %v3179
    %v3269 = vunpack.c.l.b16 %v3180
    %v3270 = vunpack.c.h.b16 %v3180
    %v3271 = vunpack.c.l.b16 %v3181
    %v3272 = vunpack.c.h.b16 %v3181
    %v3273 = vunpack.c.l.b16 %v3182
    %v3274 = vunpack.c.h.b16 %v3182
    %v3275 = vunpack.c.l.b16 %v3183
    %v3276 = vunpack.c.h.b16 %v3183
    %v3277 = vunpack.c.l.b16 %v3184
    %v3278 = vunpack.c.h.b16 %v3184
    %v3279 = vunpack.c.l.b16 %v3185
    %v3280 = vunpack.c.h.b16 %v3185
    %v3281 = vunpack.c.l.b16 %v3186
    %v3282 = vunpack.c.h.b16 %v3186
    %v3283 = vunpack.c.l.b16 %v3187
    %v3284 = vunpack.c.h.b16 %v3187
    %v3285 = vunpack.c.l.b16 %v3188
    %v3286 = vunpack.c.h.b16 %v3188
    %v3287 = vunpack.c.l.b16 %v3189
    %v3288 = vunpack.c.h.b16 %v3189
    %v3289 = vunpack.c.l.b16 %v3190
    %v3290 = vunpack.c.h.b16 %v3190
    %v3291 = vunpack.c.l.b16 %v3191
    %v3292 = vunpack.c.h.b16 %v3191
    %v3293 = vunpack.c.l.b16 %v3192
    %v3294 = vunpack.c.h.b16 %v3192
    %v3295 = vunpack.c.l.b16 %v3193
    %v3296 = vunpack.c.h.b16 %v3193
    %v3297 = vunpack.c.l.b16 %v3194
    %v3298 = vunpack.c.h.b16 %v3194
    %v3299 = vunpack.c.l.b16 %v3195
    %v3300 = vunpack.c.h.b16 %v3195
    %v3301 = vunpack.c.l.b16 %v3196
    %v3302 = vunpack.c.h.b16 %v3196
    %v3303 = vunpack.c.l.b16 %v3197
    %v3304 = vunpack.c.h.b16 %v3197
    %v3305 = vunpack.c.l.b16 %v3198
    %v3306 = vunpack.c.h.b16 %v3198
    %v3307 = vunpack.c.l.b16 %v3199
    %v3308 = vunpack.c.h.b16 %v3199
    %v3309 = vunpack.c.l.b16 %v3200
    %v3310 = vunpack.c.h.b16 %v3200
    %v3311 = vunpack.c.l.b16 %v3201
    %v3312 = vunpack.c.h.b16 %v3201
    %v3313 = vunpack.c.l.b16 %v3202
    %v3314 = vunpack.c.h.b16 %v3202
    %v3315 = vunpack.c.l.b16 %v3203
    %v3316 = vunpack.c.h.b16 %v3203
    %v3317 = vunpack.c.l.b16 %v3204
    %v3318 = vunpack.c.h.b16 %v3204
    %v3319 = vunpack.c.l.b16 %v3205
    %v3320 = vunpack.c.h.b16 %v3205
    %v3321 = vunpack.c.l.b16 %v3206
    %v3322 = vunpack.c.h.b16 %v3206
    %v3323 = vunpack.c.l.b16 %v3207
    %v3324 = vunpack.c.h.b16 %v3207
    %v3325 = vunpack.c.l.b16 %v3208
    %v3326 = vunpack.c.h.b16 %v3208
    %v3327 = vpack.c.b16 %v3267, %v3263
    %v3328 = vpack.c.b16 %v3268, %v3264
    %v3329 = vpack.c.b16 %v3269, %v3265
    %v3330 = vpack.c.b16 %v3270, %v3266
    %v3331 = vpack.c.b16 %v3275, %v3271
    %v3332 = vpack.c.b16 %v3276, %v3272
    %v3333 = vpack.c.b16 %v3277, %v3273
    %v3334 = vpack.c.b16 %v3278, %v3274
    %v3335 = vpack.c.b16 %v3283, %v3279
    %v3336 = vpack.c.b16 %v3284, %v3280
    %v3337 = vpack.c.b16 %v3285, %v3281
    %v3338 = vpack.c.b16 %v3286, %v3282
    %v3339 = vpack.c.b16 %v3291, %v3287
    %v3340 = vpack.c.b16 %v3292, %v3288
    %v3341 = vpack.c.b16 %v3293, %v3289
    %v3342 = vpack.c.b16 %v3294, %v3290
    %v3343 = vpack.c.b16 %v3299, %v3295
    %v3344 = vpack.c.b16 %v3300, %v3296
    %v3345 = vpack.c.b16 %v3301, %v3297
    %v3346 = vpack.c.b16 %v3302, %v3298
    %v3347 = vpack.c.b16 %v3307, %v3303
    %v3348 = vpack.c.b16 %v3308, %v3304
    %v3349 = vpack.c.b16 %v3309, %v3305
    %v3350 = vpack.c.b16 %v3310, %v3306
    %v3351 = vpack.c.b16 %v3315, %v3311
    %v3352 = vpack.c.b16 %v3316, %v3312
    %v3353 = vpack.c.b16 %v3317, %v3313
    %v3354 = vpack.c.b16 %v3318, %v3314
    %v3355 = vpack.c.b16 %v3323, %v3319
    %v3356 = vpack.c.b16 %v3324, %v3320
    %v3357 = vpack.c.b16 %v3325, %v3321
    %v3358 = vpack.c.b16 %v3326, %v3322
    %3391 = vmatprep.subr.bf16.mxu0 %v3328
    %3392 = vmatpush1.bf16.msra.mxu0 %v3327
    %3393 = vmatprep.subr.bf16.mxu0 %v3332
    %3394 = vmatpush1.bf16.msra.mxu0 %v3331
    %3395 = vmatprep.subr.bf16.mxu0 %v3336
    %3396 = vmatpush1.bf16.msra.mxu0 %v3335
    %3397 = vmatprep.subr.bf16.mxu0 %v3340
    %3398 = vmatpush1.bf16.msra.mxu0 %v3339
    %3399 = vmatprep.subr.bf16.mxu0 %v3344
    %3400 = vmatpush1.bf16.msra.mxu0 %v3343
    %3401 = vmatprep.subr.bf16.mxu0 %v3348
    %3402 = vmatpush1.bf16.msra.mxu0 %v3347
    %3403 = vmatprep.subr.bf16.mxu0 %v3352
    %3404 = vmatpush1.bf16.msra.mxu0 %v3351
    %3405 = vmatprep.subr.bf16.mxu0 %v3356
    %3406 = vmatpush1.bf16.msra.mxu0 %v3355
    %3407 = vmatprep.subr.bf16.mxu0 0
    %3408 = vmatpush1.bf16.msra.mxu0 0
    %3409 = vmatprep.subr.bf16.mxu0 0
    %3410 = vmatpush1.bf16.msra.mxu0 0
    %3411 = vmatprep.subr.bf16.mxu0 0
    %3412 = vmatpush1.bf16.msra.mxu0 0
    %3413 = vmatprep.subr.bf16.mxu0 0
    %3414 = vmatpush1.bf16.msra.mxu0 0
    %3415 = vmatprep.subr.bf16.mxu0 0
    %3416 = vmatpush1.bf16.msra.mxu0 0
    %3417 = vmatprep.subr.bf16.mxu0 0
    %3418 = vmatpush1.bf16.msra.mxu0 0
    %3419 = vmatprep.subr.bf16.mxu0 0
    %3420 = vmatpush1.bf16.msra.mxu0 0
    %3421 = vmatprep.subr.bf16.mxu0 0
    %3422 = vmatpush1.bf16.msra.mxu0 0
    %3423 = vmatprep.mubr.bf16.mxu0 0
    %3424 = vmatmul.mubr.bf16.gmra.mrb[0].mxu0 %v3173
    %v3425 = vpop.f32.mrb[0].mxu0
    %v3426 = vadd.f32 %v3214, %v3425
    %v3427 = vpop.f32.mrb[0].mxu0
    %v3428 = vadd.f32 %v3218, %v3427
    %v3429 = vpop.f32.mrb[0].mxu0
    %v3430 = vadd.f32 %v3214, %v3429
    %v3431 = vpop.f32.mrb[0].mxu0
    %v3432 = vadd.f32 %v3218, %v3431
    %3433 = vmatprep.mubr.bf16.mxu0 0
    %3434 = vmatmul.mubr.bf16.gmra.mrb[0].mxu0 %v3174
    %v3435 = vpop.f32.mrb[0].mxu0
    %v3436 = vadd.f32 %v3214, %v3435
    %v3437 = vpop.f32.mrb[0].mxu0
    %v3438 = vadd.f32 %v3218, %v3437
    %v3439 = vpop.f32.mrb[0].mxu0
    %v3440 = vadd.f32 %v3214, %v3439
    %v3441 = vpop.f32.mrb[0].mxu0
    %v3442 = vadd.f32 %v3218, %v3441
    %3443 = vmatprep.mubr.bf16.mxu0 0
    %3444 = vmatmul.mubr.bf16.gmra.mrb[0].mxu0 %v3175
    %v3445 = vpop.f32.mrb[0].mxu0
    %v3446 = vadd.f32 %v3214, %v3445
    %v3447 = vpop.f32.mrb[0].mxu0
    %v3448 = vadd.f32 %v3218, %v3447
    %v3449 = vpop.f32.mrb[0].mxu0
    %v3450 = vadd.f32 %v3214, %v3449
    %v3451 = vpop.f32.mrb[0].mxu0
    %v3452 = vadd.f32 %v3218, %v3451
    %3453 = vmatprep.mubr.bf16.mxu0 0
    %3454 = vmatmul.mubr.bf16.gmra.mrb[0].mxu0 %v3176
    %v3455 = vpop.f32.mrb[0].mxu0
    %v3456 = vadd.f32 %v3214, %v3455
    %v3457 = vpop.f32.mrb[0].mxu0
    %v3458 = vadd.f32 %v3218, %v3457
    %v3459 = vpop.f32.mrb[0].mxu0
    %v3460 = vadd.f32 %v3214, %v3459
    %v3461 = vpop.f32.mrb[0].mxu0
    %v3462 = vadd.f32 %v3218, %v3461
    %3463 = vdwg.mxu0
    %3464 = vmatprep.subr.bf16.mxu0 %v3330
    %3465 = vmatpush1.bf16.msra.mxu0 %v3329
    %3466 = vmatprep.subr.bf16.mxu0 %v3334
    %3467 = vmatpush1.bf16.msra.mxu0 %v3333
    %3468 = vmatprep.subr.bf16.mxu0 %v3338
    %3469 = vmatpush1.bf16.msra.mxu0 %v3337
    %3470 = vmatprep.subr.bf16.mxu0 %v3342
    %3471 = vmatpush1.bf16.msra.mxu0 %v3341
    %3472 = vmatprep.subr.bf16.mxu0 %v3346
    %3473 = vmatpush1.bf16.msra.mxu0 %v3345
    %3474 = vmatprep.subr.bf16.mxu0 %v3350
    %3475 = vmatpush1.bf16.msra.mxu0 %v3349
    %3476 = vmatprep.subr.bf16.mxu0 %v3354
    %3477 = vmatpush1.bf16.msra.mxu0 %v3353
    %3478 = vmatprep.subr.bf16.mxu0 %v3358
    %3479 = vmatpush1.bf16.msra.mxu0 %v3357
    %3480 = vmatprep.subr.bf16.mxu0 0
    %3481 = vmatpush1.bf16.msra.mxu0 0
    %3482 = vmatprep.subr.bf16.mxu0 0
    %3483 = vmatpush1.bf16.msra.mxu0 0
    %3484 = vmatprep.subr.bf16.mxu0 0
    %3485 = vmatpush1.bf16.msra.mxu0 0
    %3486 = vmatprep.subr.bf16.mxu0 0
    %3487 = vmatpush1.bf16.msra.mxu0 0
    %3488 = vmatprep.subr.bf16.mxu0 0
    %3489 = vmatpush1.bf16.msra.mxu0 0
    %3490 = vmatprep.subr.bf16.mxu0 0
    %3491 = vmatpush1.bf16.msra.mxu0 0
    %3492 = vmatprep.subr.bf16.mxu0 0
    %3493 = vmatpush1.bf16.msra.mxu0 0
    %3494 = vmatprep.subr.bf16.mxu0 0
    %3495 = vmatpush1.bf16.msra.mxu0 0
    %3496 = vmatprep.mubr.bf16.mxu0 0
    %3497 = vmatmul.mubr.bf16.gmra.mrb[0].mxu0 %v3173
    %v3498 = vpop.f32.mrb[0].mxu0
    %v3499 = vadd.f32 %v3222, %v3498
    %v3500 = vpop.f32.mrb[0].mxu0
    %v3501 = vadd.f32 %v3226, %v3500
    %v3502 = vpop.f32.mrb[0].mxu0
    %v3503 = vadd.f32 %v3222, %v3502
    %v3504 = vpop.f32.mrb[0].mxu0
    %v3505 = vadd.f32 %v3226, %v3504
    %3506 = vmatprep.mubr.bf16.mxu0 0
    %3507 = vmatmul.mubr.bf16.gmra.mrb[0].mxu0 %v3174
    %v3508 = vpop.f32.mrb[0].mxu0
    %v3509 = vadd.f32 %v3222, %v3508
    %v3510 = vpop.f32.mrb[0].mxu0
    %v3511 = vadd.f32 %v3226, %v3510
    %v3512 = vpop.f32.mrb[0].mxu0
    %v3513 = vadd.f32 %v3222, %v3512
    %v3514 = vpop.f32.mrb[0].mxu0
    %v3515 = vadd.f32 %v3226, %v3514
    %3516 = vmatprep.mubr.bf16.mxu0 0
    %3517 = vmatmul.mubr.bf16.gmra.mrb[0].mxu0 %v3175
    %v3518 = vpop.f32.mrb[0].mxu0
    %v3519 = vadd.f32 %v3222, %v3518
    %v3520 = vpop.f32.mrb[0].mxu0
    %v3521 = vadd.f32 %v3226, %v3520
    %v3522 = vpop.f32.mrb[0].mxu0
    %v3523 = vadd.f32 %v3222, %v3522
    %v3524 = vpop.f32.mrb[0].mxu0
    %v3525 = vadd.f32 %v3226, %v3524
    %3526 = vmatprep.mubr.bf16.mxu0 0
    %3527 = vmatmul.mubr.bf16.gmra.mrb[0].mxu0 %v3176
    %v3528 = vpop.f32.mrb[0].mxu0
    %v3529 = vadd.f32 %v3222, %v3528
    %v3530 = vpop.f32.mrb[0].mxu0
    %v3531 = vadd.f32 %v3226, %v3530
    %v3532 = vpop.f32.mrb[0].mxu0
    %v3533 = vadd.f32 %v3222, %v3532
    %v3534 = vpop.f32.mrb[0].mxu0
    %v3535 = vadd.f32 %v3226, %v3534
    %3536 = vdwg.mxu0
    %3537 = vst [vmem:[#allocation3] sm:$0xff] %v3426
    %3538 = vst [vmem:[#allocation3 + $0x8] sm:$0xff] %v3428
    %3539 = vst [vmem:[#allocation3 + $0x10] sm:$0xff] %v3499
    %3540 = vst [vmem:[#allocation3 + $0x18] sm:$0xff] %v3501
    %3541 = vst [vmem:[#allocation3 + $0x20] sm:$0xff] %v3430
    %3542 = vst [vmem:[#allocation3 + $0x28] sm:$0xff] %v3432
    %3543 = vst [vmem:[#allocation3 + $0x30] sm:$0xff] %v3503
    %3544 = vst [vmem:[#allocation3 + $0x38] sm:$0xff] %v3505
    %3545 = vst [vmem:[#allocation3 + $0x40] sm:$0xff] %v3436
    %3546 = vst [vmem:[#allocation3 + $0x48] sm:$0xff] %v3438
    %3547 = vst [vmem:[#allocation3 + $0x50] sm:$0xff] %v3509
    %3548 = vst [vmem:[#allocation3 + $0x58] sm:$0xff] %v3511
    %3549 = vst [vmem:[#allocation3 + $0x60] sm:$0xff] %v3440
    %3550 = vst [vmem:[#allocation3 + $0x68] sm:$0xff] %v3442
    %3551 = vst [vmem:[#allocation3 + $0x70] sm:$0xff] %v3513
    %3552 = vst [vmem:[#allocation3 + $0x78] sm:$0xff] %v3515
    %3553 = vst [vmem:[#allocation3 + $0x80] sm:$0xff] %v3446
    %3554 = vst [vmem:[#allocation3 + $0x88] sm:$0xff] %v3448
    %3555 = vst [vmem:[#allocation3 + $0x90] sm:$0xff] %v3519
    %3556 = vst [vmem:[#allocation3 + $0x98] sm:$0xff] %v3521
    %3557 = vst [vmem:[#allocation3 + $0xa0] sm:$0xff] %v3450
    %3558 = vst [vmem:[#allocation3 + $0xa8] sm:$0xff] %v3452
    %3559 = vst [vmem:[#allocation3 + $0xb0] sm:$0xff] %v3523
    %3560 = vst [vmem:[#allocation3 + $0xb8] sm:$0xff] %v3525
    %3561 = vst [vmem:[#allocation3 + $0xc0] sm:$0xff] %v3456
    %3562 = vst [vmem:[#allocation3 + $0xc8] sm:$0xff] %v3458
    %3563 = vst [vmem:[#allocation3 + $0xd0] sm:$0xff] %v3529
    %3564 = vst [vmem:[#allocation3 + $0xd8] sm:$0xff] %v3531
    %3565 = vst [vmem:[#allocation3 + $0xe0] sm:$0xff] %v3460
    %3566 = vst [vmem:[#allocation3 + $0xe8] sm:$0xff] %v3462
    %3567 = vst [vmem:[#allocation3 + $0xf0] sm:$0xff] %v3533
    %3568 = vst [vmem:[#allocation3 + $0xf8] sm:$0xff] %v3535
    %3569 = vst [vmem:[#allocation4] sm:$0xff] 0.0
    %3570 = vst [vmem:[#allocation5] sm:$0xff] 0.0
    %v3571 = vld [vmem:[#allocation4] sm:$0xff]
    %v3572 = vld [vmem:[#allocation5] sm:$0xff]
    %v3573 = vld [vmem:[#allocation3] sm:$0xff]
    %v3574 = vld [vmem:[#allocation3 + $0x8] sm:$0xff]
    %v3575 = vld [vmem:[#allocation3 + $0x10] sm:$0xff]
    %v3576 = vld [vmem:[#allocation3 + $0x18] sm:$0xff]
    %v3577 = vpack.c.bf16 %v3571, %v3571
    %v3578 = vld [vmem:[#allocation14] sm:$0xff]
    %v3579 = vld [vmem:[#allocation14 + $0x8] sm:$0xff]
    %v3580 = vld [vmem:[#allocation14 + $0x10] sm:$0xff]
    %v3581 = vld [vmem:[#allocation14 + $0x18] sm:$0xff]
    %v3582 = vld [vmem:[#allocation14 + $0x20] sm:$0xff]
    %v3583 = vld [vmem:[#allocation14 + $0x28] sm:$0xff]
    %v3584 = vld [vmem:[#allocation14 + $0x30] sm:$0xff]
    %v3585 = vld [vmem:[#allocation14 + $0x38] sm:$0xff]
    %v3586 = vld [vmem:[#allocation14 + $0x40] sm:$0xff]
    %v3587 = vld [vmem:[#allocation14 + $0x48] sm:$0xff]
    %v3588 = vld [vmem:[#allocation14 + $0x50] sm:$0xff]
    %v3589 = vld [vmem:[#allocation14 + $0x58] sm:$0xff]
    %v3590 = vld [vmem:[#allocation14 + $0x60] sm:$0xff]
    %v3591 = vld [vmem:[#allocation14 + $0x68] sm:$0xff]
    %v3592 = vld [vmem:[#allocation14 + $0x70] sm:$0xff]
    %v3593 = vld [vmem:[#allocation14 + $0x78] sm:$0xff]
    %v3594 = vld [vmem:[#allocation14 + $0x80] sm:$0xff]
    %v3595 = vld [vmem:[#allocation14 + $0x88] sm:$0xff]
    %v3596 = vld [vmem:[#allocation14 + $0x90] sm:$0xff]
    %v3597 = vld [vmem:[#allocation14 + $0x98] sm:$0xff]
    %v3598 = vld [vmem:[#allocation14 + $0xa0] sm:$0xff]
    %v3599 = vld [vmem:[#allocation14 + $0xa8] sm:$0xff]
    %v3600 = vld [vmem:[#allocation14 + $0xb0] sm:$0xff]
    %v3601 = vld [vmem:[#allocation14 + $0xb8] sm:$0xff]
    %v3602 = vld [vmem:[#allocation14 + $0xc0] sm:$0xff]
    %v3603 = vld [vmem:[#allocation14 + $0xc8] sm:$0xff]
    %v3604 = vld [vmem:[#allocation14 + $0xd0] sm:$0xff]
    %v3605 = vld [vmem:[#allocation14 + $0xd8] sm:$0xff]
    %v3606 = vld [vmem:[#allocation14 + $0xe0] sm:$0xff]
    %v3607 = vld [vmem:[#allocation14 + $0xe8] sm:$0xff]
    %v3608 = vld [vmem:[#allocation14 + $0xf0] sm:$0xff]
    %v3609 = vld [vmem:[#allocation14 + $0xf8] sm:$0xff]
    %v3642 = vunpack.c.l.b16 %v3578
    %v3643 = vunpack.c.h.b16 %v3578
    %v3644 = vunpack.c.l.b16 %v3579
    %v3645 = vunpack.c.h.b16 %v3579
    %v3646 = vunpack.c.l.b16 %v3580
    %v3647 = vunpack.c.h.b16 %v3580
    %v3648 = vunpack.c.l.b16 %v3581
    %v3649 = vunpack.c.h.b16 %v3581
    %v3650 = vunpack.c.l.b16 %v3582
    %v3651 = vunpack.c.h.b16 %v3582
    %v3652 = vunpack.c.l.b16 %v3583
    %v3653 = vunpack.c.h.b16 %v3583
    %v3654 = vunpack.c.l.b16 %v3584
    %v3655 = vunpack.c.h.b16 %v3584
    %v3656 = vunpack.c.l.b16 %v3585
    %v3657 = vunpack.c.h.b16 %v3585
    %v3658 = vunpack.c.l.b16 %v3586
    %v3659 = vunpack.c.h.b16 %v3586
    %v3660 = vunpack.c.l.b16 %v3587
    %v3661 = vunpack.c.h.b16 %v3587
    %v3662 = vunpack.c.l.b16 %v3588
    %v3663 = vunpack.c.h.b16 %v3588
    %v3664 = vunpack.c.l.b16 %v3589
    %v3665 = vunpack.c.h.b16 %v3589
    %v3666 = vunpack.c.l.b16 %v3590
    %v3667 = vunpack.c.h.b16 %v3590
    %v3668 = vunpack.c.l.b16 %v3591
    %v3669 = vunpack.c.h.b16 %v3591
    %v3670 = vunpack.c.l.b16 %v3592
    %v3671 = vunpack.c.h.b16 %v3592
    %v3672 = vunpack.c.l.b16 %v3593
    %v3673 = vunpack.c.h.b16 %v3593
    %v3674 = vunpack.c.l.b16 %v3594
    %v3675 = vunpack.c.h.b16 %v3594
    %v3676 = vunpack.c.l.b16 %v3595
    %v3677 = vunpack.c.h.b16 %v3595
    %v3678 = vunpack.c.l.b16 %v3596
    %v3679 = vunpack.c.h.b16 %v3596
    %v3680 = vunpack.c.l.b16 %v3597
    %v3681 = vunpack.c.h.b16 %v3597
    %v3682 = vunpack.c.l.b16 %v3598
    %v3683 = vunpack.c.h.b16 %v3598
    %v3684 = vunpack.c.l.b16 %v3599
    %v3685 = vunpack.c.h.b16 %v3599
    %v3686 = vunpack.c.l.b16 %v3600
    %v3687 = vunpack.c.h.b16 %v3600
    %v3688 = vunpack.c.l.b16 %v3601
    %v3689 = vunpack.c.h.b16 %v3601
    %v3690 = vunpack.c.l.b16 %v3602
    %v3691 = vunpack.c.h.b16 %v3602
    %v3692 = vunpack.c.l.b16 %v3603
    %v3693 = vunpack.c.h.b16 %v3603
    %v3694 = vunpack.c.l.b16 %v3604
    %v3695 = vunpack.c.h.b16 %v3604
    %v3696 = vunpack.c.l.b16 %v3605
    %v3697 = vunpack.c.h.b16 %v3605
    %v3698 = vunpack.c.l.b16 %v3606
    %v3699 = vunpack.c.h.b16 %v3606
    %v3700 = vunpack.c.l.b16 %v3607
    %v3701 = vunpack.c.h.b16 %v3607
    %v3702 = vunpack.c.l.b16 %v3608
    %v3703 = vunpack.c.h.b16 %v3608
    %v3704 = vunpack.c.l.b16 %v3609
    %v3705 = vunpack.c.h.b16 %v3609
    %v3706 = vpack.c.b16 %v3646, %v3642
    %v3707 = vpack.c.b16 %v3647, %v3643
    %v3708 = vpack.c.b16 %v3648, %v3644
    %v3709 = vpack.c.b16 %v3649, %v3645
    %v3710 = vpack.c.b16 %v3654, %v3650
    %v3711 = vpack.c.b16 %v3655, %v3651
    %v3712 = vpack.c.b16 %v3656, %v3652
    %v3713 = vpack.c.b16 %v3657, %v3653
    %v3714 = vpack.c.b16 %v3662, %v3658
    %v3715 = vpack.c.b16 %v3663, %v3659
    %v3716 = vpack.c.b16 %v3664, %v3660
    %v3717 = vpack.c.b16 %v3665, %v3661
    %v3718 = vpack.c.b16 %v3670, %v3666
    %v3719 = vpack.c.b16 %v3671, %v3667
    %v3720 = vpack.c.b16 %v3672, %v3668
    %v3721 = vpack.c.b16 %v3673, %v3669
    %v3722 = vpack.c.b16 %v3678, %v3674
    %v3723 = vpack.c.b16 %v3679, %v3675
    %v3724 = vpack.c.b16 %v3680, %v3676
    %v3725 = vpack.c.b16 %v3681, %v3677
    %v3726 = vpack.c.b16 %v3686, %v3682
    %v3727 = vpack.c.b16 %v3687, %v3683
    %v3728 = vpack.c.b16 %v3688, %v3684
    %v3729 = vpack.c.b16 %v3689, %v3685
    %v3730 = vpack.c.b16 %v3694, %v3690
    %v3731 = vpack.c.b16 %v3695, %v3691
    %v3732 = vpack.c.b16 %v3696, %v3692
    %v3733 = vpack.c.b16 %v3697, %v3693
    %v3734 = vpack.c.b16 %v3702, %v3698
    %v3735 = vpack.c.b16 %v3703, %v3699
    %v3736 = vpack.c.b16 %v3704, %v3700
    %v3737 = vpack.c.b16 %v3705, %v3701
    %3770 = vmatprep.subr.bf16.mxu0 %v3707
    %3771 = vmatpush1.bf16.msra.mxu0 %v3706
    %3772 = vmatprep.subr.bf16.mxu0 %v3711
    %3773 = vmatpush1.bf16.msra.mxu0 %v3710
    %3774 = vmatprep.subr.bf16.mxu0 %v3715
    %3775 = vmatpush1.bf16.msra.mxu0 %v3714
    %3776 = vmatprep.subr.bf16.mxu0 %v3719
    %3777 = vmatpush1.bf16.msra.mxu0 %v3718
    %3778 = vmatprep.subr.bf16.mxu0 %v3723
    %3779 = vmatpush1.bf16.msra.mxu0 %v3722
    %3780 = vmatprep.subr.bf16.mxu0 %v3727
    %3781 = vmatpush1.bf16.msra.mxu0 %v3726
    %3782 = vmatprep.subr.bf16.mxu0 %v3731
    %3783 = vmatpush1.bf16.msra.mxu0 %v3730
    %3784 = vmatprep.subr.bf16.mxu0 %v3735
    %3785 = vmatpush1.bf16.msra.mxu0 %v3734
    %3786 = vmatprep.subr.bf16.mxu0 0
    %3787 = vmatpush1.bf16.msra.mxu0 0
    %3788 = vmatprep.subr.bf16.mxu0 0
    %3789 = vmatpush1.bf16.msra.mxu0 0
    %3790 = vmatprep.subr.bf16.mxu0 0
    %3791 = vmatpush1.bf16.msra.mxu0 0
    %3792 = vmatprep.subr.bf16.mxu0 0
    %3793 = vmatpush1.bf16.msra.mxu0 0
    %3794 = vmatprep.subr.bf16.mxu0 0
    %3795 = vmatpush1.bf16.msra.mxu0 0
    %3796 = vmatprep.subr.bf16.mxu0 0
    %3797 = vmatpush1.bf16.msra.mxu0 0
    %3798 = vmatprep.subr.bf16.mxu0 0
    %3799 = vmatpush1.bf16.msra.mxu0 0
    %3800 = vmatprep.subr.bf16.mxu0 0
    %3801 = vmatpush1.bf16.msra.mxu0 0
    %3802 = vmatprep.mubr.bf16.mxu0 0
    %3803 = vmatmul.mubr.bf16.gmra.mrb[0].mxu0 %v3577
    %v3804 = vpop.f32.mrb[0].mxu0
    %v3805 = vadd.f32 0.0, %v3804
    %v3806 = vpop.f32.mrb[0].mxu0
    %v3807 = vadd.f32 0.0, %v3806
    %v3808 = vpop.f32.mrb[0].mxu0
    %v3809 = vpop.f32.mrb[0].mxu0
    %3810 = vdwg.mxu0
    %3811 = vmatprep.subr.bf16.mxu0 %v3709
    %3812 = vmatpush1.bf16.msra.mxu0 %v3708
    %3813 = vmatprep.subr.bf16.mxu0 %v3713
    %3814 = vmatpush1.bf16.msra.mxu0 %v3712
    %3815 = vmatprep.subr.bf16.mxu0 %v3717
    %3816 = vmatpush1.bf16.msra.mxu0 %v3716
    %3817 = vmatprep.subr.bf16.mxu0 %v3721
    %3818 = vmatpush1.bf16.msra.mxu0 %v3720
    %3819 = vmatprep.subr.bf16.mxu0 %v3725
    %3820 = vmatpush1.bf16.msra.mxu0 %v3724
    %3821 = vmatprep.subr.bf16.mxu0 %v3729
    %3822 = vmatpush1.bf16.msra.mxu0 %v3728
    %3823 = vmatprep.subr.bf16.mxu0 %v3733
    %3824 = vmatpush1.bf16.msra.mxu0 %v3732
    %3825 = vmatprep.subr.bf16.mxu0 %v3737
    %3826 = vmatpush1.bf16.msra.mxu0 %v3736
    %3827 = vmatprep.subr.bf16.mxu0 0
    %3828 = vmatpush1.bf16.msra.mxu0 0
    %3829 = vmatprep.subr.bf16.mxu0 0
    %3830 = vmatpush1.bf16.msra.mxu0 0
    %3831 = vmatprep.subr.bf16.mxu0 0
    %3832 = vmatpush1.bf16.msra.mxu0 0
    %3833 = vmatprep.subr.bf16.mxu0 0
    %3834 = vmatpush1.bf16.msra.mxu0 0
    %3835 = vmatprep.subr.bf16.mxu0 0
    %3836 = vmatpush1.bf16.msra.mxu0 0
    %3837 = vmatprep.subr.bf16.mxu0 0
    %3838 = vmatpush1.bf16.msra.mxu0 0
    %3839 = vmatprep.subr.bf16.mxu0 0
    %3840 = vmatpush1.bf16.msra.mxu0 0
    %3841 = vmatprep.subr.bf16.mxu0 0
    %3842 = vmatpush1.bf16.msra.mxu0 0
    %3843 = vmatprep.mubr.bf16.mxu0 0
    %3844 = vmatmul.mubr.bf16.gmra.mrb[0].mxu0 %v3577
    %v3845 = vpop.f32.mrb[0].mxu0
    %v3846 = vadd.f32 0.0, %v3845
    %v3847 = vpop.f32.mrb[0].mxu0
    %v3848 = vadd.f32 0.0, %v3847
    %v3849 = vpop.f32.mrb[0].mxu0
    %v3850 = vpop.f32.mrb[0].mxu0
    %3851 = vdwg.mxu0
    %v3852 = vadd.f32 %v3573, %v3805
    %v3853 = vadd.f32 %v3574, %v3807
    %v3854 = vadd.f32 %v3575, %v3846
    %v3855 = vadd.f32 %v3576, %v3848
    %v3856 = vxor.u32 %v3852, 2147483648
    %v3857 = vmul.f32 %v3856, 1.442695
    %v3858 = vpow.pop %v3857
    %v3859 = vadd.f32 %v3858, 1.0
    %v3860 = vrcp.pop %v3859
    %v3861 = vmul.f32 1.0, %v3860
    %v3862 = vxor.u32 %v3853, 2147483648
    %v3863 = vmul.f32 %v3862, 1.442695
    %v3864 = vpow.pop %v3863
    %v3865 = vadd.f32 %v3864, 1.0
    %v3866 = vrcp.pop %v3865
    %v3867 = vmul.f32 1.0, %v3866
    %v3868 = vtanh.pop %v3854
    %v3869 = vxor.u32 %v3855, 2147483648
    %v3870 = vmul.f32 %v3869, 1.442695
    %v3871 = vpow.pop %v3870
    %v3872 = vadd.f32 %v3871, 1.0
    %v3873 = vrcp.pop %v3872
    %v3874 = vmul.f32 1.0, %v3873
    %v3875 = vmul.f32 %v3867, %v3572
    %v3876 = vmul.f32 %v3861, %v3868
    %v3877 = vadd.f32 %v3875, %v3876
    %v3878 = vtanh.pop %v3877
    %v3879 = vmul.f32 %v3874, %v3878
    %3880 = vst [vmem:[#allocation4] sm:$0xff] %v3879
    %3881 = vst [vmem:[#allocation5] sm:$0xff] %v3877
    %3882 = vst [vmem:[#allocation2] sm:$0xff] %v3879
    %v3883 = vld [vmem:[#allocation4] sm:$0xff]
    %v3884 = vld [vmem:[#allocation5] sm:$0xff]
    %v3885 = vld [vmem:[#allocation3 + $0x20] sm:$0xff]
    %v3886 = vld [vmem:[#allocation3 + $0x28] sm:$0xff]
    %v3887 = vld [vmem:[#allocation3 + $0x30] sm:$0xff]
    %v3888 = vld [vmem:[#allocation3 + $0x38] sm:$0xff]
    %v3889 = vpack.c.bf16 %v3883, %v3883
    %v3890 = vld [vmem:[#allocation14] sm:$0xff]
    %v3891 = vld [vmem:[#allocation14 + $0x8] sm:$0xff]
    %v3892 = vld [vmem:[#allocation14 + $0x10] sm:$0xff]
    %v3893 = vld [vmem:[#allocation14 + $0x18] sm:$0xff]
    %v3894 = vld [vmem:[#allocation14 + $0x20] sm:$0xff]
    %v3895 = vld [vmem:[#allocation14 + $0x28] sm:$0xff]
    %v3896 = vld [vmem:[#allocation14 + $0x30] sm:$0xff]
    %v3897 = vld [vmem:[#allocation14 + $0x38] sm:$0xff]
    %v3898 = vld [vmem:[#allocation14 + $0x40] sm:$0xff]
    %v3899 = vld [vmem:[#allocation14 + $0x48] sm:$0xff]
    %v3900 = vld [vmem:[#allocation14 + $0x50] sm:$0xff]
    %v3901 = vld [vmem:[#allocation14 + $0x58] sm:$0xff]
    %v3902 = vld [vmem:[#allocation14 + $0x60] sm:$0xff]
    %v3903 = vld [vmem:[#allocation14 + $0x68] sm:$0xff]
    %v3904 = vld [vmem:[#allocation14 + $0x70] sm:$0xff]
    %v3905 = vld [vmem:[#allocation14 + $0x78] sm:$0xff]
    %v3906 = vld [vmem:[#allocation14 + $0x80] sm:$0xff]
    %v3907 = vld [vmem:[#allocation14 + $0x88] sm:$0xff]
    %v3908 = vld [vmem:[#allocation14 + $0x90] sm:$0xff]
    %v3909 = vld [vmem:[#allocation14 + $0x98] sm:$0xff]
    %v3910 = vld [vmem:[#allocation14 + $0xa0] sm:$0xff]
    %v3911 = vld [vmem:[#allocation14 + $0xa8] sm:$0xff]
    %v3912 = vld [vmem:[#allocation14 + $0xb0] sm:$0xff]
    %v3913 = vld [vmem:[#allocation14 + $0xb8] sm:$0xff]
    %v3914 = vld [vmem:[#allocation14 + $0xc0] sm:$0xff]
    %v3915 = vld [vmem:[#allocation14 + $0xc8] sm:$0xff]
    %v3916 = vld [vmem:[#allocation14 + $0xd0] sm:$0xff]
    %v3917 = vld [vmem:[#allocation14 + $0xd8] sm:$0xff]
    %v3918 = vld [vmem:[#allocation14 + $0xe0] sm:$0xff]
    %v3919 = vld [vmem:[#allocation14 + $0xe8] sm:$0xff]
    %v3920 = vld [vmem:[#allocation14 + $0xf0] sm:$0xff]
    %v3921 = vld [vmem:[#allocation14 + $0xf8] sm:$0xff]
    %v3954 = vunpack.c.l.b16 %v3890
    %v3955 = vunpack.c.h.b16 %v3890
    %v3956 = vunpack.c.l.b16 %v3891
    %v3957 = vunpack.c.h.b16 %v3891
    %v3958 = vunpack.c.l.b16 %v3892
    %v3959 = vunpack.c.h.b16 %v3892
    %v3960 = vunpack.c.l.b16 %v3893
    %v3961 = vunpack.c.h.b16 %v3893
    %v3962 = vunpack.c.l.b16 %v3894
    %v3963 = vunpack.c.h.b16 %v3894
    %v3964 = vunpack.c.l.b16 %v3895
    %v3965 = vunpack.c.h.b16 %v3895
    %v3966 = vunpack.c.l.b16 %v3896
    %v3967 = vunpack.c.h.b16 %v3896
    %v3968 = vunpack.c.l.b16 %v3897
    %v3969 = vunpack.c.h.b16 %v3897
    %v3970 = vunpack.c.l.b16 %v3898
    %v3971 = vunpack.c.h.b16 %v3898
    %v3972 = vunpack.c.l.b16 %v3899
    %v3973 = vunpack.c.h.b16 %v3899
    %v3974 = vunpack.c.l.b16 %v3900
    %v3975 = vunpack.c.h.b16 %v3900
    %v3976 = vunpack.c.l.b16 %v3901
    %v3977 = vunpack.c.h.b16 %v3901
    %v3978 = vunpack.c.l.b16 %v3902
    %v3979 = vunpack.c.h.b16 %v3902
    %v3980 = vunpack.c.l.b16 %v3903
    %v3981 = vunpack.c.h.b16 %v3903
    %v3982 = vunpack.c.l.b16 %v3904
    %v3983 = vunpack.c.h.b16 %v3904
    %v3984 = vunpack.c.l.b16 %v3905
    %v3985 = vunpack.c.h.b16 %v3905
    %v3986 = vunpack.c.l.b16 %v3906
    %v3987 = vunpack.c.h.b16 %v3906
    %v3988 = vunpack.c.l.b16 %v3907
    %v3989 = vunpack.c.h.b16 %v3907
    %v3990 = vunpack.c.l.b16 %v3908
    %v3991 = vunpack.c.h.b16 %v3908
    %v3992 = vunpack.c.l.b16 %v3909
    %v3993 = vunpack.c.h.b16 %v3909
    %v3994 = vunpack.c.l.b16 %v3910
    %v3995 = vunpack.c.h.b16 %v3910
    %v3996 = vunpack.c.l.b16 %v3911
    %v3997 = vunpack.c.h.b16 %v3911
    %v3998 = vunpack.c.l.b16 %v3912
    %v3999 = vunpack.c.h.b16 %v3912
    %v4000 = vunpack.c.l.b16 %v3913
    %v4001 = vunpack.c.h.b16 %v3913
    %v4002 = vunpack.c.l.b16 %v3914
    %v4003 = vunpack.c.h.b16 %v3914
    %v4004 = vunpack.c.l.b16 %v3915
    %v4005 = vunpack.c.h.b16 %v3915
    %v4006 = vunpack.c.l.b16 %v3916
    %v4007 = vunpack.c.h.b16 %v3916
    %v4008 = vunpack.c.l.b16 %v3917
    %v4009 = vunpack.c.h.b16 %v3917
    %v4010 = vunpack.c.l.b16 %v3918
    %v4011 = vunpack.c.h.b16 %v3918
    %v4012 = vunpack.c.l.b16 %v3919
    %v4013 = vunpack.c.h.b16 %v3919
    %v4014 = vunpack.c.l.b16 %v3920
    %v4015 = vunpack.c.h.b16 %v3920
    %v4016 = vunpack.c.l.b16 %v3921
    %v4017 = vunpack.c.h.b16 %v3921
    %v4018 = vpack.c.b16 %v3958, %v3954
    %v4019 = vpack.c.b16 %v3959, %v3955
    %v4020 = vpack.c.b16 %v3960, %v3956
    %v4021 = vpack.c.b16 %v3961, %v3957
    %v4022 = vpack.c.b16 %v3966, %v3962
    %v4023 = vpack.c.b16 %v3967, %v3963
    %v4024 = vpack.c.b16 %v3968, %v3964
    %v4025 = vpack.c.b16 %v3969, %v3965
    %v4026 = vpack.c.b16 %v3974, %v3970
    %v4027 = vpack.c.b16 %v3975, %v3971
    %v4028 = vpack.c.b16 %v3976, %v3972
    %v4029 = vpack.c.b16 %v3977, %v3973
    %v4030 = vpack.c.b16 %v3982, %v3978
    %v4031 = vpack.c.b16 %v3983, %v3979
    %v4032 = vpack.c.b16 %v3984, %v3980
    %v4033 = vpack.c.b16 %v3985, %v3981
    %v4034 = vpack.c.b16 %v3990, %v3986
    %v4035 = vpack.c.b16 %v3991, %v3987
    %v4036 = vpack.c.b16 %v3992, %v3988
    %v4037 = vpack.c.b16 %v3993, %v3989
    %v4038 = vpack.c.b16 %v3998, %v3994
    %v4039 = vpack.c.b16 %v3999, %v3995
    %v4040 = vpack.c.b16 %v4000, %v3996
    %v4041 = vpack.c.b16 %v4001, %v3997
    %v4042 = vpack.c.b16 %v4006, %v4002
    %v4043 = vpack.c.b16 %v4007, %v4003
    %v4044 = vpack.c.b16 %v4008, %v4004
    %v4045 = vpack.c.b16 %v4009, %v4005
    %v4046 = vpack.c.b16 %v4014, %v4010
    %v4047 = vpack.c.b16 %v4015, %v4011
    %v4048 = vpack.c.b16 %v4016, %v4012
    %v4049 = vpack.c.b16 %v4017, %v4013
    %4082 = vmatprep.subr.bf16.mxu0 %v4019
    %4083 = vmatpush1.bf16.msra.mxu0 %v4018
    %4084 = vmatprep.subr.bf16.mxu0 %v4023
    %4085 = vmatpush1.bf16.msra.mxu0 %v4022
    %4086 = vmatprep.subr.bf16.mxu0 %v4027
    %4087 = vmatpush1.bf16.msra.mxu0 %v4026
    %4088 = vmatprep.subr.bf16.mxu0 %v4031
    %4089 = vmatpush1.bf16.msra.mxu0 %v4030
    %4090 = vmatprep.subr.bf16.mxu0 %v4035
    %4091 = vmatpush1.bf16.msra.mxu0 %v4034
    %4092 = vmatprep.subr.bf16.mxu0 %v4039
    %4093 = vmatpush1.bf16.msra.mxu0 %v4038
    %4094 = vmatprep.subr.bf16.mxu0 %v4043
    %4095 = vmatpush1.bf16.msra.mxu0 %v4042
    %4096 = vmatprep.subr.bf16.mxu0 %v4047
    %4097 = vmatpush1.bf16.msra.mxu0 %v4046
    %4098 = vmatprep.subr.bf16.mxu0 0
    %4099 = vmatpush1.bf16.msra.mxu0 0
    %4100 = vmatprep.subr.bf16.mxu0 0
    %4101 = vmatpush1.bf16.msra.mxu0 0
    %4102 = vmatprep.subr.bf16.mxu0 0
    %4103 = vmatpush1.bf16.msra.mxu0 0
    %4104 = vmatprep.subr.bf16.mxu0 0
    %4105 = vmatpush1.bf16.msra.mxu0 0
    %4106 = vmatprep.subr.bf16.mxu0 0
    %4107 = vmatpush1.bf16.msra.mxu0 0
    %4108 = vmatprep.subr.bf16.mxu0 0
    %4109 = vmatpush1.bf16.msra.mxu0 0
    %4110 = vmatprep.subr.bf16.mxu0 0
    %4111 = vmatpush1.bf16.msra.mxu0 0
    %4112 = vmatprep.subr.bf16.mxu0 0
    %4113 = vmatpush1.bf16.msra.mxu0 0
    %4114 = vmatprep.mubr.bf16.mxu0 0
    %4115 = vmatmul.mubr.bf16.gmra.mrb[0].mxu0 %v3889
    %v4116 = vpop.f32.mrb[0].mxu0
    %v4117 = vadd.f32 0.0, %v4116
    %v4118 = vpop.f32.mrb[0].mxu0
    %v4119 = vadd.f32 0.0, %v4118
    %v4120 = vpop.f32.mrb[0].mxu0
    %v4121 = vpop.f32.mrb[0].mxu0
    %4122 = vdwg.mxu0
    %4123 = vmatprep.subr.bf16.mxu0 %v4021
    %4124 = vmatpush1.bf16.msra.mxu0 %v4020
    %4125 = vmatprep.subr.bf16.mxu0 %v4025
    %4126 = vmatpush1.bf16.msra.mxu0 %v4024
    %4127 = vmatprep.subr.bf16.mxu0 %v4029
    %4128 = vmatpush1.bf16.msra.mxu0 %v4028
    %4129 = vmatprep.subr.bf16.mxu0 %v4033
    %4130 = vmatpush1.bf16.msra.mxu0 %v4032
    %4131 = vmatprep.subr.bf16.mxu0 %v4037
    %4132 = vmatpush1.bf16.msra.mxu0 %v4036
    %4133 = vmatprep.subr.bf16.mxu0 %v4041
    %4134 = vmatpush1.bf16.msra.mxu0 %v4040
    %4135 = vmatprep.subr.bf16.mxu0 %v4045
    %4136 = vmatpush1.bf16.msra.mxu0 %v4044
    %4137 = vmatprep.subr.bf16.mxu0 %v4049
    %4138 = vmatpush1.bf16.msra.mxu0 %v4048
    %4139 = vmatprep.subr.bf16.mxu0 0
    %4140 = vmatpush1.bf16.msra.mxu0 0
    %4141 = vmatprep.subr.bf16.mxu0 0
    %4142 = vmatpush1.bf16.msra.mxu0 0
    %4143 = vmatprep.subr.bf16.mxu0 0
    %4144 = vmatpush1.bf16.msra.mxu0 0
    %4145 = vmatprep.subr.bf16.mxu0 0
    %4146 = vmatpush1.bf16.msra.mxu0 0
    %4147 = vmatprep.subr.bf16.mxu0 0
    %4148 = vmatpush1.bf16.msra.mxu0 0
    %4149 = vmatprep.subr.bf16.mxu0 0
    %4150 = vmatpush1.bf16.msra.mxu0 0
    %4151 = vmatprep.subr.bf16.mxu0 0
    %4152 = vmatpush1.bf16.msra.mxu0 0
    %4153 = vmatprep.subr.bf16.mxu0 0
    %4154 = vmatpush1.bf16.msra.mxu0 0
    %4155 = vmatprep.mubr.bf16.mxu0 0
    %4156 = vmatmul.mubr.bf16.gmra.mrb[0].mxu0 %v3889
    %v4157 = vpop.f32.mrb[0].mxu0
    %v4158 = vadd.f32 0.0, %v4157
    %v4159 = vpop.f32.mrb[0].mxu0
    %v4160 = vadd.f32 0.0, %v4159
    %v4161 = vpop.f32.mrb[0].mxu0
    %v4162 = vpop.f32.mrb[0].mxu0
    %4163 = vdwg.mxu0
    %v4164 = vadd.f32 %v3885, %v4117
    %v4165 = vadd.f32 %v3886, %v4119
    %v4166 = vadd.f32 %v3887, %v4158
    %v4167 = vadd.f32 %v3888, %v4160
    %v4168 = vxor.u32 %v4164, 2147483648
    %v4169 = vmul.f32 %v4168, 1.442695
    %v4170 = vpow.pop %v4169
    %v4171 = vadd.f32 %v4170, 1.0
    %v4172 = vrcp.pop %v4171
    %v4173 = vmul.f32 1.0, %v4172
    %v4174 = vxor.u32 %v4165, 2147483648
    %v4175 = vmul.f32 %v4174, 1.442695
    %v4176 = vpow.pop %v4175
    %v4177 = vadd.f32 %v4176, 1.0
    %v4178 = vrcp.pop %v4177
    %v4179 = vmul.f32 1.0, %v4178
    %v4180 = vtanh.pop %v4166
    %v4181 = vxor.u32 %v4167, 2147483648
    %v4182 = vmul.f32 %v4181, 1.442695
    %v4183 = vpow.pop %v4182
    %v4184 = vadd.f32 %v4183, 1.0
    %v4185 = vrcp.pop %v4184
    %v4186 = vmul.f32 1.0, %v4185
    %v4187 = vmul.f32 %v4179, %v3884
    %v4188 = vmul.f32 %v4173, %v4180
    %v4189 = vadd.f32 %v4187, %v4188
    %v4190 = vtanh.pop %v4189
    %v4191 = vmul.f32 %v4186, %v4190
    %4192 = vst [vmem:[#allocation4] sm:$0xff] %v4191
    %4193 = vst [vmem:[#allocation5] sm:$0xff] %v4189
    %4194 = vst [vmem:[#allocation2 + $0x8] sm:$0xff] %v4191
    %v4195 = vld [vmem:[#allocation4] sm:$0xff]
    %v4196 = vld [vmem:[#allocation5] sm:$0xff]
    %v4197 = vld [vmem:[#allocation3 + $0x40] sm:$0xff]
    %v4198 = vld [vmem:[#allocation3 + $0x48] sm:$0xff]
    %v4199 = vld [vmem:[#allocation3 + $0x50] sm:$0xff]
    %v4200 = vld [vmem:[#allocation3 + $0x58] sm:$0xff]
    %v4201 = vpack.c.bf16 %v4195, %v4195
    %v4202 = vld [vmem:[#allocation14] sm:$0xff]
    %v4203 = vld [vmem:[#allocation14 + $0x8] sm:$0xff]
    %v4204 = vld [vmem:[#allocation14 + $0x10] sm:$0xff]
    %v4205 = vld [vmem:[#allocation14 + $0x18] sm:$0xff]
    %v4206 = vld [vmem:[#allocation14 + $0x20] sm:$0xff]
    %v4207 = vld [vmem:[#allocation14 + $0x28] sm:$0xff]
    %v4208 = vld [vmem:[#allocation14 + $0x30] sm:$0xff]
    %v4209 = vld [vmem:[#allocation14 + $0x38] sm:$0xff]
    %v4210 = vld [vmem:[#allocation14 + $0x40] sm:$0xff]
    %v4211 = vld [vmem:[#allocation14 + $0x48] sm:$0xff]
    %v4212 = vld [vmem:[#allocation14 + $0x50] sm:$0xff]
    %v4213 = vld [vmem:[#allocation14 + $0x58] sm:$0xff]
    %v4214 = vld [vmem:[#allocation14 + $0x60] sm:$0xff]
    %v4215 = vld [vmem:[#allocation14 + $0x68] sm:$0xff]
    %v4216 = vld [vmem:[#allocation14 + $0x70] sm:$0xff]
    %v4217 = vld [vmem:[#allocation14 + $0x78] sm:$0xff]
    %v4218 = vld [vmem:[#allocation14 + $0x80] sm:$0xff]
    %v4219 = vld [vmem:[#allocation14 + $0x88] sm:$0xff]
    %v4220 = vld [vmem:[#allocation14 + $0x90] sm:$0xff]
    %v4221 = vld [vmem:[#allocation14 + $0x98] sm:$0xff]
    %v4222 = vld [vmem:[#allocation14 + $0xa0] sm:$0xff]
    %v4223 = vld [vmem:[#allocation14 + $0xa8] sm:$0xff]
    %v4224 = vld [vmem:[#allocation14 + $0xb0] sm:$0xff]
    %v4225 = vld [vmem:[#allocation14 + $0xb8] sm:$0xff]
    %v4226 = vld [vmem:[#allocation14 + $0xc0] sm:$0xff]
    %v4227 = vld [vmem:[#allocation14 + $0xc8] sm:$0xff]
    %v4228 = vld [vmem:[#allocation14 + $0xd0] sm:$0xff]
    %v4229 = vld [vmem:[#allocation14 + $0xd8] sm:$0xff]
    %v4230 = vld [vmem:[#allocation14 + $0xe0] sm:$0xff]
    %v4231 = vld [vmem:[#allocation14 + $0xe8] sm:$0xff]
    %v4232 = vld [vmem:[#allocation14 + $0xf0] sm:$0xff]
    %v4233 = vld [vmem:[#allocation14 + $0xf8] sm:$0xff]
    %v4266 = vunpack.c.l.b16 %v4202
    %v4267 = vunpack.c.h.b16 %v4202
    %v4268 = vunpack.c.l.b16 %v4203
    %v4269 = vunpack.c.h.b16 %v4203
    %v4270 = vunpack.c.l.b16 %v4204
    %v4271 = vunpack.c.h.b16 %v4204
    %v4272 = vunpack.c.l.b16 %v4205
    %v4273 = vunpack.c.h.b16 %v4205
    %v4274 = vunpack.c.l.b16 %v4206
    %v4275 = vunpack.c.h.b16 %v4206
    %v4276 = vunpack.c.l.b16 %v4207
    %v4277 = vunpack.c.h.b16 %v4207
    %v4278 = vunpack.c.l.b16 %v4208
    %v4279 = vunpack.c.h.b16 %v4208
    %v4280 = vunpack.c.l.b16 %v4209
    %v4281 = vunpack.c.h.b16 %v4209
    %v4282 = vunpack.c.l.b16 %v4210
    %v4283 = vunpack.c.h.b16 %v4210
    %v4284 = vunpack.c.l.b16 %v4211
    %v4285 = vunpack.c.h.b16 %v4211
    %v4286 = vunpack.c.l.b16 %v4212
    %v4287 = vunpack.c.h.b16 %v4212
    %v4288 = vunpack.c.l.b16 %v4213
    %v4289 = vunpack.c.h.b16 %v4213
    %v4290 = vunpack.c.l.b16 %v4214
    %v4291 = vunpack.c.h.b16 %v4214
    %v4292 = vunpack.c.l.b16 %v4215
    %v4293 = vunpack.c.h.b16 %v4215
    %v4294 = vunpack.c.l.b16 %v4216
    %v4295 = vunpack.c.h.b16 %v4216
    %v4296 = vunpack.c.l.b16 %v4217
    %v4297 = vunpack.c.h.b16 %v4217
    %v4298 = vunpack.c.l.b16 %v4218
    %v4299 = vunpack.c.h.b16 %v4218
    %v4300 = vunpack.c.l.b16 %v4219
    %v4301 = vunpack.c.h.b16 %v4219
    %v4302 = vunpack.c.l.b16 %v4220
    %v4303 = vunpack.c.h.b16 %v4220
    %v4304 = vunpack.c.l.b16 %v4221
    %v4305 = vunpack.c.h.b16 %v4221
    %v4306 = vunpack.c.l.b16 %v4222
    %v4307 = vunpack.c.h.b16 %v4222
    %v4308 = vunpack.c.l.b16 %v4223
    %v4309 = vunpack.c.h.b16 %v4223
    %v4310 = vunpack.c.l.b16 %v4224
    %v4311 = vunpack.c.h.b16 %v4224
    %v4312 = vunpack.c.l.b16 %v4225
    %v4313 = vunpack.c.h.b16 %v4225
    %v4314 = vunpack.c.l.b16 %v4226
    %v4315 = vunpack.c.h.b16 %v4226
    %v4316 = vunpack.c.l.b16 %v4227
    %v4317 = vunpack.c.h.b16 %v4227
    %v4318 = vunpack.c.l.b16 %v4228
    %v4319 = vunpack.c.h.b16 %v4228
    %v4320 = vunpack.c.l.b16 %v4229
    %v4321 = vunpack.c.h.b16 %v4229
    %v4322 = vunpack.c.l.b16 %v4230
    %v4323 = vunpack.c.h.b16 %v4230
    %v4324 = vunpack.c.l.b16 %v4231
    %v4325 = vunpack.c.h.b16 %v4231
    %v4326 = vunpack.c.l.b16 %v4232
    %v4327 = vunpack.c.h.b16 %v4232
    %v4328 = vunpack.c.l.b16 %v4233
    %v4329 = vunpack.c.h.b16 %v4233
    %v4330 = vpack.c.b16 %v4270, %v4266
    %v4331 = vpack.c.b16 %v4271, %v4267
    %v4332 = vpack.c.b16 %v4272, %v4268
    %v4333 = vpack.c.b16 %v4273, %v4269
    %v4334 = vpack.c.b16 %v4278, %v4274
    %v4335 = vpack.c.b16 %v4279, %v4275
    %v4336 = vpack.c.b16 %v4280, %v4276
    %v4337 = vpack.c.b16 %v4281, %v4277
    %v4338 = vpack.c.b16 %v4286, %v4282
    %v4339 = vpack.c.b16 %v4287, %v4283
    %v4340 = vpack.c.b16 %v4288, %v4284
    %v4341 = vpack.c.b16 %v4289, %v4285
    %v4342 = vpack.c.b16 %v4294, %v4290
    %v4343 = vpack.c.b16 %v4295, %v4291
    %v4344 = vpack.c.b16 %v4296, %v4292
    %v4345 = vpack.c.b16 %v4297, %v4293
    %v4346 = vpack.c.b16 %v4302, %v4298
    %v4347 = vpack.c.b16 %v4303, %v4299
    %v4348 = vpack.c.b16 %v4304, %v4300
    %v4349 = vpack.c.b16 %v4305, %v4301
    %v4350 = vpack.c.b16 %v4310, %v4306
    %v4351 = vpack.c.b16 %v4311, %v4307
    %v4352 = vpack.c.b16 %v4312, %v4308
    %v4353 = vpack.c.b16 %v4313, %v4309
    %v4354 = vpack.c.b16 %v4318, %v4314
    %v4355 = vpack.c.b16 %v4319, %v4315
    %v4356 = vpack.c.b16 %v4320, %v4316
    %v4357 = vpack.c.b16 %v4321, %v4317
    %v4358 = vpack.c.b16 %v4326, %v4322
    %v4359 = vpack.c.b16 %v4327, %v4323
    %v4360 = vpack.c.b16 %v4328, %v4324
    %v4361 = vpack.c.b16 %v4329, %v4325
    %4394 = vmatprep.subr.bf16.mxu0 %v4331
    %4395 = vmatpush1.bf16.msra.mxu0 %v4330
    %4396 = vmatprep.subr.bf16.mxu0 %v4335
    %4397 = vmatpush1.bf16.msra.mxu0 %v4334
    %4398 = vmatprep.subr.bf16.mxu0 %v4339
    %4399 = vmatpush1.bf16.msra.mxu0 %v4338
    %4400 = vmatprep.subr.bf16.mxu0 %v4343
    %4401 = vmatpush1.bf16.msra.mxu0 %v4342
    %4402 = vmatprep.subr.bf16.mxu0 %v4347
    %4403 = vmatpush1.bf16.msra.mxu0 %v4346
    %4404 = vmatprep.subr.bf16.mxu0 %v4351
    %4405 = vmatpush1.bf16.msra.mxu0 %v4350
    %4406 = vmatprep.subr.bf16.mxu0 %v4355
    %4407 = vmatpush1.bf16.msra.mxu0 %v4354
    %4408 = vmatprep.subr.bf16.mxu0 %v4359
    %4409 = vmatpush1.bf16.msra.mxu0 %v4358
    %4410 = vmatprep.subr.bf16.mxu0 0
    %4411 = vmatpush1.bf16.msra.mxu0 0
    %4412 = vmatprep.subr.bf16.mxu0 0
    %4413 = vmatpush1.bf16.msra.mxu0 0
    %4414 = vmatprep.subr.bf16.mxu0 0
    %4415 = vmatpush1.bf16.msra.mxu0 0
    %4416 = vmatprep.subr.bf16.mxu0 0
    %4417 = vmatpush1.bf16.msra.mxu0 0
    %4418 = vmatprep.subr.bf16.mxu0 0
    %4419 = vmatpush1.bf16.msra.mxu0 0
    %4420 = vmatprep.subr.bf16.mxu0 0
    %4421 = vmatpush1.bf16.msra.mxu0 0
    %4422 = vmatprep.subr.bf16.mxu0 0
    %4423 = vmatpush1.bf16.msra.mxu0 0
    %4424 = vmatprep.subr.bf16.mxu0 0
    %4425 = vmatpush1.bf16.msra.mxu0 0
    %4426 = vmatprep.mubr.bf16.mxu0 0
    %4427 = vmatmul.mubr.bf16.gmra.mrb[0].mxu0 %v4201
    %v4428 = vpop.f32.mrb[0].mxu0
    %v4429 = vadd.f32 0.0, %v4428
    %v4430 = vpop.f32.mrb[0].mxu0
    %v4431 = vadd.f32 0.0, %v4430
    %v4432 = vpop.f32.mrb[0].mxu0
    %v4433 = vpop.f32.mrb[0].mxu0
    %4434 = vdwg.mxu0
    %4435 = vmatprep.subr.bf16.mxu0 %v4333
    %4436 = vmatpush1.bf16.msra.mxu0 %v4332
    %4437 = vmatprep.subr.bf16.mxu0 %v4337
    %4438 = vmatpush1.bf16.msra.mxu0 %v4336
    %4439 = vmatprep.subr.bf16.mxu0 %v4341
    %4440 = vmatpush1.bf16.msra.mxu0 %v4340
    %4441 = vmatprep.subr.bf16.mxu0 %v4345
    %4442 = vmatpush1.bf16.msra.mxu0 %v4344
    %4443 = vmatprep.subr.bf16.mxu0 %v4349
    %4444 = vmatpush1.bf16.msra.mxu0 %v4348
    %4445 = vmatprep.subr.bf16.mxu0 %v4353
    %4446 = vmatpush1.bf16.msra.mxu0 %v4352
    %4447 = vmatprep.subr.bf16.mxu0 %v4357
    %4448 = vmatpush1.bf16.msra.mxu0 %v4356
    %4449 = vmatprep.subr.bf16.mxu0 %v4361
    %4450 = vmatpush1.bf16.msra.mxu0 %v4360
    %4451 = vmatprep.subr.bf16.mxu0 0
    %4452 = vmatpush1.bf16.msra.mxu0 0
    %4453 = vmatprep.subr.bf16.mxu0 0
    %4454 = vmatpush1.bf16.msra.mxu0 0
    %4455 = vmatprep.subr.bf16.mxu0 0
    %4456 = vmatpush1.bf16.msra.mxu0 0
    %4457 = vmatprep.subr.bf16.mxu0 0
    %4458 = vmatpush1.bf16.msra.mxu0 0
    %4459 = vmatprep.subr.bf16.mxu0 0
    %4460 = vmatpush1.bf16.msra.mxu0 0
    %4461 = vmatprep.subr.bf16.mxu0 0
    %4462 = vmatpush1.bf16.msra.mxu0 0
    %4463 = vmatprep.subr.bf16.mxu0 0
    %4464 = vmatpush1.bf16.msra.mxu0 0
    %4465 = vmatprep.subr.bf16.mxu0 0
    %4466 = vmatpush1.bf16.msra.mxu0 0
    %4467 = vmatprep.mubr.bf16.mxu0 0
    %4468 = vmatmul.mubr.bf16.gmra.mrb[0].mxu0 %v4201
    %v4469 = vpop.f32.mrb[0].mxu0
    %v4470 = vadd.f32 0.0, %v4469
    %v4471 = vpop.f32.mrb[0].mxu0
    %v4472 = vadd.f32 0.0, %v4471
    %v4473 = vpop.f32.mrb[0].mxu0
    %v4474 = vpop.f32.mrb[0].mxu0
    %4475 = vdwg.mxu0
    %v4476 = vadd.f32 %v4197, %v4429
    %v4477 = vadd.f32 %v4198, %v4431
    %v4478 = vadd.f32 %v4199, %v4470
    %v4479 = vadd.f32 %v4200, %v4472
    %v4480 = vxor.u32 %v4476, 2147483648
    %v4481 = vmul.f32 %v4480, 1.442695
    %v4482 = vpow.pop %v4481
    %v4483 = vadd.f32 %v4482, 1.0
    %v4484 = vrcp.pop %v4483
    %v4485 = vmul.f32 1.0, %v4484
    %v4486 = vxor.u32 %v4477, 2147483648
    %v4487 = vmul.f32 %v4486, 1.442695
    %v4488 = vpow.pop %v4487
    %v4489 = vadd.f32 %v4488, 1.0
    %v4490 = vrcp.pop %v4489
    %v4491 = vmul.f32 1.0, %v4490
    %v4492 = vtanh.pop %v4478
    %v4493 = vxor.u32 %v4479, 2147483648
    %v4494 = vmul.f32 %v4493, 1.442695
    %v4495 = vpow.pop %v4494
    %v4496 = vadd.f32 %v4495, 1.0
    %v4497 = vrcp.pop %v4496
    %v4498 = vmul.f32 1.0, %v4497
    %v4499 = vmul.f32 %v4491, %v4196
    %v4500 = vmul.f32 %v4485, %v4492
    %v4501 = vadd.f32 %v4499, %v4500
    %v4502 = vtanh.pop %v4501
    %v4503 = vmul.f32 %v4498, %v4502
    %4504 = vst [vmem:[#allocation4] sm:$0xff] %v4503
    %4505 = vst [vmem:[#allocation5] sm:$0xff] %v4501
    %4506 = vst [vmem:[#allocation2 + $0x10] sm:$0xff] %v4503
    %v4507 = vld [vmem:[#allocation4] sm:$0xff]
    %v4508 = vld [vmem:[#allocation5] sm:$0xff]
    %v4509 = vld [vmem:[#allocation3 + $0x60] sm:$0xff]
    %v4510 = vld [vmem:[#allocation3 + $0x68] sm:$0xff]
    %v4511 = vld [vmem:[#allocation3 + $0x70] sm:$0xff]
    %v4512 = vld [vmem:[#allocation3 + $0x78] sm:$0xff]
    %v4513 = vpack.c.bf16 %v4507, %v4507
    %v4514 = vld [vmem:[#allocation14] sm:$0xff]
    %v4515 = vld [vmem:[#allocation14 + $0x8] sm:$0xff]
    %v4516 = vld [vmem:[#allocation14 + $0x10] sm:$0xff]
    %v4517 = vld [vmem:[#allocation14 + $0x18] sm:$0xff]
    %v4518 = vld [vmem:[#allocation14 + $0x20] sm:$0xff]
    %v4519 = vld [vmem:[#allocation14 + $0x28] sm:$0xff]
    %v4520 = vld [vmem:[#allocation14 + $0x30] sm:$0xff]
    %v4521 = vld [vmem:[#allocation14 + $0x38] sm:$0xff]
    %v4522 = vld [vmem:[#allocation14 + $0x40] sm:$0xff]
    %v4523 = vld [vmem:[#allocation14 + $0x48] sm:$0xff]
    %v4524 = vld [vmem:[#allocation14 + $0x50] sm:$0xff]
    %v4525 = vld [vmem:[#allocation14 + $0x58] sm:$0xff]
    %v4526 = vld [vmem:[#allocation14 + $0x60] sm:$0xff]
    %v4527 = vld [vmem:[#allocation14 + $0x68] sm:$0xff]
    %v4528 = vld [vmem:[#allocation14 + $0x70] sm:$0xff]
    %v4529 = vld [vmem:[#allocation14 + $0x78] sm:$0xff]
    %v4530 = vld [vmem:[#allocation14 + $0x80] sm:$0xff]
    %v4531 = vld [vmem:[#allocation14 + $0x88] sm:$0xff]
    %v4532 = vld [vmem:[#allocation14 + $0x90] sm:$0xff]
    %v4533 = vld [vmem:[#allocation14 + $0x98] sm:$0xff]
    %v4534 = vld [vmem:[#allocation14 + $0xa0] sm:$0xff]
    %v4535 = vld [vmem:[#allocation14 + $0xa8] sm:$0xff]
    %v4536 = vld [vmem:[#allocation14 + $0xb0] sm:$0xff]
    %v4537 = vld [vmem:[#allocation14 + $0xb8] sm:$0xff]
    %v4538 = vld [vmem:[#allocation14 + $0xc0] sm:$0xff]
    %v4539 = vld [vmem:[#allocation14 + $0xc8] sm:$0xff]
    %v4540 = vld [vmem:[#allocation14 + $0xd0] sm:$0xff]
    %v4541 = vld [vmem:[#allocation14 + $0xd8] sm:$0xff]
    %v4542 = vld [vmem:[#allocation14 + $0xe0] sm:$0xff]
    %v4543 = vld [vmem:[#allocation14 + $0xe8] sm:$0xff]
    %v4544 = vld [vmem:[#allocation14 + $0xf0] sm:$0xff]
    %v4545 = vld [vmem:[#allocation14 + $0xf8] sm:$0xff]
    %v4578 = vunpack.c.l.b16 %v4514
    %v4579 = vunpack.c.h.b16 %v4514
    %v4580 = vunpack.c.l.b16 %v4515
    %v4581 = vunpack.c.h.b16 %v4515
    %v4582 = vunpack.c.l.b16 %v4516
    %v4583 = vunpack.c.h.b16 %v4516
    %v4584 = vunpack.c.l.b16 %v4517
    %v4585 = vunpack.c.h.b16 %v4517
    %v4586 = vunpack.c.l.b16 %v4518
    %v4587 = vunpack.c.h.b16 %v4518
    %v4588 = vunpack.c.l.b16 %v4519
    %v4589 = vunpack.c.h.b16 %v4519
    %v4590 = vunpack.c.l.b16 %v4520
    %v4591 = vunpack.c.h.b16 %v4520
    %v4592 = vunpack.c.l.b16 %v4521
    %v4593 = vunpack.c.h.b16 %v4521
    %v4594 = vunpack.c.l.b16 %v4522
    %v4595 = vunpack.c.h.b16 %v4522
    %v4596 = vunpack.c.l.b16 %v4523
    %v4597 = vunpack.c.h.b16 %v4523
    %v4598 = vunpack.c.l.b16 %v4524
    %v4599 = vunpack.c.h.b16 %v4524
    %v4600 = vunpack.c.l.b16 %v4525
    %v4601 = vunpack.c.h.b16 %v4525
    %v4602 = vunpack.c.l.b16 %v4526
    %v4603 = vunpack.c.h.b16 %v4526
    %v4604 = vunpack.c.l.b16 %v4527
    %v4605 = vunpack.c.h.b16 %v4527
    %v4606 = vunpack.c.l.b16 %v4528
    %v4607 = vunpack.c.h.b16 %v4528
    %v4608 = vunpack.c.l.b16 %v4529
    %v4609 = vunpack.c.h.b16 %v4529
    %v4610 = vunpack.c.l.b16 %v4530
    %v4611 = vunpack.c.h.b16 %v4530
    %v4612 = vunpack.c.l.b16 %v4531
    %v4613 = vunpack.c.h.b16 %v4531
    %v4614 = vunpack.c.l.b16 %v4532
    %v4615 = vunpack.c.h.b16 %v4532
    %v4616 = vunpack.c.l.b16 %v4533
    %v4617 = vunpack.c.h.b16 %v4533
    %v4618 = vunpack.c.l.b16 %v4534
    %v4619 = vunpack.c.h.b16 %v4534
    %v4620 = vunpack.c.l.b16 %v4535
    %v4621 = vunpack.c.h.b16 %v4535
    %v4622 = vunpack.c.l.b16 %v4536
    %v4623 = vunpack.c.h.b16 %v4536
    %v4624 = vunpack.c.l.b16 %v4537
    %v4625 = vunpack.c.h.b16 %v4537
    %v4626 = vunpack.c.l.b16 %v4538
    %v4627 = vunpack.c.h.b16 %v4538
    %v4628 = vunpack.c.l.b16 %v4539
    %v4629 = vunpack.c.h.b16 %v4539
    %v4630 = vunpack.c.l.b16 %v4540
    %v4631 = vunpack.c.h.b16 %v4540
    %v4632 = vunpack.c.l.b16 %v4541
    %v4633 = vunpack.c.h.b16 %v4541
    %v4634 = vunpack.c.l.b16 %v4542
    %v4635 = vunpack.c.h.b16 %v4542
    %v4636 = vunpack.c.l.b16 %v4543
    %v4637 = vunpack.c.h.b16 %v4543
    %v4638 = vunpack.c.l.b16 %v4544
    %v4639 = vunpack.c.h.b16 %v4544
    %v4640 = vunpack.c.l.b16 %v4545
    %v4641 = vunpack.c.h.b16 %v4545
    %v4642 = vpack.c.b16 %v4582, %v4578
    %v4643 = vpack.c.b16 %v4583, %v4579
    %v4644 = vpack.c.b16 %v4584, %v4580
    %v4645 = vpack.c.b16 %v4585, %v4581
    %v4646 = vpack.c.b16 %v4590, %v4586
    %v4647 = vpack.c.b16 %v4591, %v4587
    %v4648 = vpack.c.b16 %v4592, %v4588
    %v4649 = vpack.c.b16 %v4593, %v4589
    %v4650 = vpack.c.b16 %v4598, %v4594
    %v4651 = vpack.c.b16 %v4599, %v4595
    %v4652 = vpack.c.b16 %v4600, %v4596
    %v4653 = vpack.c.b16 %v4601, %v4597
    %v4654 = vpack.c.b16 %v4606, %v4602
    %v4655 = vpack.c.b16 %v4607, %v4603
    %v4656 = vpack.c.b16 %v4608, %v4604
    %v4657 = vpack.c.b16 %v4609, %v4605
    %v4658 = vpack.c.b16 %v4614, %v4610
    %v4659 = vpack.c.b16 %v4615, %v4611
    %v4660 = vpack.c.b16 %v4616, %v4612
    %v4661 = vpack.c.b16 %v4617, %v4613
    %v4662 = vpack.c.b16 %v4622, %v4618
    %v4663 = vpack.c.b16 %v4623, %v4619
    %v4664 = vpack.c.b16 %v4624, %v4620
    %v4665 = vpack.c.b16 %v4625, %v4621
    %v4666 = vpack.c.b16 %v4630, %v4626
    %v4667 = vpack.c.b16 %v4631, %v4627
    %v4668 = vpack.c.b16 %v4632, %v4628
    %v4669 = vpack.c.b16 %v4633, %v4629
    %v4670 = vpack.c.b16 %v4638, %v4634
    %v4671 = vpack.c.b16 %v4639, %v4635
    %v4672 = vpack.c.b16 %v4640, %v4636
    %v4673 = vpack.c.b16 %v4641, %v4637
    %4706 = vmatprep.subr.bf16.mxu0 %v4643
    %4707 = vmatpush1.bf16.msra.mxu0 %v4642
    %4708 = vmatprep.subr.bf16.mxu0 %v4647
    %4709 = vmatpush1.bf16.msra.mxu0 %v4646
    %4710 = vmatprep.subr.bf16.mxu0 %v4651
    %4711 = vmatpush1.bf16.msra.mxu0 %v4650
    %4712 = vmatprep.subr.bf16.mxu0 %v4655
    %4713 = vmatpush1.bf16.msra.mxu0 %v4654
    %4714 = vmatprep.subr.bf16.mxu0 %v4659
    %4715 = vmatpush1.bf16.msra.mxu0 %v4658
    %4716 = vmatprep.subr.bf16.mxu0 %v4663
    %4717 = vmatpush1.bf16.msra.mxu0 %v4662
    %4718 = vmatprep.subr.bf16.mxu0 %v4667
    %4719 = vmatpush1.bf16.msra.mxu0 %v4666
    %4720 = vmatprep.subr.bf16.mxu0 %v4671
    %4721 = vmatpush1.bf16.msra.mxu0 %v4670
    %4722 = vmatprep.subr.bf16.mxu0 0
    %4723 = vmatpush1.bf16.msra.mxu0 0
    %4724 = vmatprep.subr.bf16.mxu0 0
    %4725 = vmatpush1.bf16.msra.mxu0 0
    %4726 = vmatprep.subr.bf16.mxu0 0
    %4727 = vmatpush1.bf16.msra.mxu0 0
    %4728 = vmatprep.subr.bf16.mxu0 0
    %4729 = vmatpush1.bf16.msra.mxu0 0
    %4730 = vmatprep.subr.bf16.mxu0 0
    %4731 = vmatpush1.bf16.msra.mxu0 0
    %4732 = vmatprep.subr.bf16.mxu0 0
    %4733 = vmatpush1.bf16.msra.mxu0 0
    %4734 = vmatprep.subr.bf16.mxu0 0
    %4735 = vmatpush1.bf16.msra.mxu0 0
    %4736 = vmatprep.subr.bf16.mxu0 0
    %4737 = vmatpush1.bf16.msra.mxu0 0
    %4738 = vmatprep.mubr.bf16.mxu0 0
    %4739 = vmatmul.mubr.bf16.gmra.mrb[0].mxu0 %v4513
    %v4740 = vpop.f32.mrb[0].mxu0
    %v4741 = vadd.f32 0.0, %v4740
    %v4742 = vpop.f32.mrb[0].mxu0
    %v4743 = vadd.f32 0.0, %v4742
    %v4744 = vpop.f32.mrb[0].mxu0
    %v4745 = vpop.f32.mrb[0].mxu0
    %4746 = vdwg.mxu0
    %4747 = vmatprep.subr.bf16.mxu0 %v4645
    %4748 = vmatpush1.bf16.msra.mxu0 %v4644
    %4749 = vmatprep.subr.bf16.mxu0 %v4649
    %4750 = vmatpush1.bf16.msra.mxu0 %v4648
    %4751 = vmatprep.subr.bf16.mxu0 %v4653
    %4752 = vmatpush1.bf16.msra.mxu0 %v4652
    %4753 = vmatprep.subr.bf16.mxu0 %v4657
    %4754 = vmatpush1.bf16.msra.mxu0 %v4656
    %4755 = vmatprep.subr.bf16.mxu0 %v4661
    %4756 = vmatpush1.bf16.msra.mxu0 %v4660
    %4757 = vmatprep.subr.bf16.mxu0 %v4665
    %4758 = vmatpush1.bf16.msra.mxu0 %v4664
    %4759 = vmatprep.subr.bf16.mxu0 %v4669
    %4760 = vmatpush1.bf16.msra.mxu0 %v4668
    %4761 = vmatprep.subr.bf16.mxu0 %v4673
    %4762 = vmatpush1.bf16.msra.mxu0 %v4672
    %4763 = vmatprep.subr.bf16.mxu0 0
    %4764 = vmatpush1.bf16.msra.mxu0 0
    %4765 = vmatprep.subr.bf16.mxu0 0
    %4766 = vmatpush1.bf16.msra.mxu0 0
    %4767 = vmatprep.subr.bf16.mxu0 0
    %4768 = vmatpush1.bf16.msra.mxu0 0
    %4769 = vmatprep.subr.bf16.mxu0 0
    %4770 = vmatpush1.bf16.msra.mxu0 0
    %4771 = vmatprep.subr.bf16.mxu0 0
    %4772 = vmatpush1.bf16.msra.mxu0 0
    %4773 = vmatprep.subr.bf16.mxu0 0
    %4774 = vmatpush1.bf16.msra.mxu0 0
    %4775 = vmatprep.subr.bf16.mxu0 0
    %4776 = vmatpush1.bf16.msra.mxu0 0
    %4777 = vmatprep.subr.bf16.mxu0 0
    %4778 = vmatpush1.bf16.msra.mxu0 0
    %4779 = vmatprep.mubr.bf16.mxu0 0
    %4780 = vmatmul.mubr.bf16.gmra.mrb[0].mxu0 %v4513
    %v4781 = vpop.f32.mrb[0].mxu0
    %v4782 = vadd.f32 0.0, %v4781
    %v4783 = vpop.f32.mrb[0].mxu0
    %v4784 = vadd.f32 0.0, %v4783
    %v4785 = vpop.f32.mrb[0].mxu0
    %v4786 = vpop.f32.mrb[0].mxu0
    %4787 = vdwg.mxu0
    %v4788 = vadd.f32 %v4509, %v4741
    %v4789 = vadd.f32 %v4510, %v4743
    %v4790 = vadd.f32 %v4511, %v4782
    %v4791 = vadd.f32 %v4512, %v4784
    %v4792 = vxor.u32 %v4788, 2147483648
    %v4793 = vmul.f32 %v4792, 1.442695
    %v4794 = vpow.pop %v4793
    %v4795 = vadd.f32 %v4794, 1.0
    %v4796 = vrcp.pop %v4795
    %v4797 = vmul.f32 1.0, %v4796
    %v4798 = vxor.u32 %v4789, 2147483648
    %v4799 = vmul.f32 %v4798, 1.442695
    %v4800 = vpow.pop %v4799
    %v4801 = vadd.f32 %v4800, 1.0
    %v4802 = vrcp.pop %v4801
    %v4803 = vmul.f32 1.0, %v4802
    %v4804 = vtanh.pop %v4790
    %v4805 = vxor.u32 %v4791, 2147483648
    %v4806 = vmul.f32 %v4805, 1.442695
    %v4807 = vpow.pop %v4806
    %v4808 = vadd.f32 %v4807, 1.0
    %v4809 = vrcp.pop %v4808
    %v4810 = vmul.f32 1.0, %v4809
    %v4811 = vmul.f32 %v4803, %v4508
    %v4812 = vmul.f32 %v4797, %v4804
    %v4813 = vadd.f32 %v4811, %v4812
    %v4814 = vtanh.pop %v4813
    %v4815 = vmul.f32 %v4810, %v4814
    %4816 = vst [vmem:[#allocation4] sm:$0xff] %v4815
    %4817 = vst [vmem:[#allocation5] sm:$0xff] %v4813
    %4818 = vst [vmem:[#allocation2 + $0x18] sm:$0xff] %v4815
    %v4819 = vld [vmem:[#allocation4] sm:$0xff]
    %v4820 = vld [vmem:[#allocation5] sm:$0xff]
    %v4821 = vld [vmem:[#allocation3 + $0x80] sm:$0xff]
    %v4822 = vld [vmem:[#allocation3 + $0x88] sm:$0xff]
    %v4823 = vld [vmem:[#allocation3 + $0x90] sm:$0xff]
    %v4824 = vld [vmem:[#allocation3 + $0x98] sm:$0xff]
    %v4825 = vpack.c.bf16 %v4819, %v4819
    %v4826 = vld [vmem:[#allocation14] sm:$0xff]
    %v4827 = vld [vmem:[#allocation14 + $0x8] sm:$0xff]
    %v4828 = vld [vmem:[#allocation14 + $0x10] sm:$0xff]
    %v4829 = vld [vmem:[#allocation14 + $0x18] sm:$0xff]
    %v4830 = vld [vmem:[#allocation14 + $0x20] sm:$0xff]
    %v4831 = vld [vmem:[#allocation14 + $0x28] sm:$0xff]
    %v4832 = vld [vmem:[#allocation14 + $0x30] sm:$0xff]
    %v4833 = vld [vmem:[#allocation14 + $0x38] sm:$0xff]
    %v4834 = vld [vmem:[#allocation14 + $0x40] sm:$0xff]
    %v4835 = vld [vmem:[#allocation14 + $0x48] sm:$0xff]
    %v4836 = vld [vmem:[#allocation14 + $0x50] sm:$0xff]
    %v4837 = vld [vmem:[#allocation14 + $0x58] sm:$0xff]
    %v4838 = vld [vmem:[#allocation14 + $0x60] sm:$0xff]
    %v4839 = vld [vmem:[#allocation14 + $0x68] sm:$0xff]
    %v4840 = vld [vmem:[#allocation14 + $0x70] sm:$0xff]
    %v4841 = vld [vmem:[#allocation14 + $0x78] sm:$0xff]
    %v4842 = vld [vmem:[#allocation14 + $0x80] sm:$0xff]
    %v4843 = vld [vmem:[#allocation14 + $0x88] sm:$0xff]
    %v4844 = vld [vmem:[#allocation14 + $0x90] sm:$0xff]
    %v4845 = vld [vmem:[#allocation14 + $0x98] sm:$0xff]
    %v4846 = vld [vmem:[#allocation14 + $0xa0] sm:$0xff]
    %v4847 = vld [vmem:[#allocation14 + $0xa8] sm:$0xff]
    %v4848 = vld [vmem:[#allocation14 + $0xb0] sm:$0xff]
    %v4849 = vld [vmem:[#allocation14 + $0xb8] sm:$0xff]
    %v4850 = vld [vmem:[#allocation14 + $0xc0] sm:$0xff]
    %v4851 = vld [vmem:[#allocation14 + $0xc8] sm:$0xff]
    %v4852 = vld [vmem:[#allocation14 + $0xd0] sm:$0xff]
    %v4853 = vld [vmem:[#allocation14 + $0xd8] sm:$0xff]
    %v4854 = vld [vmem:[#allocation14 + $0xe0] sm:$0xff]
    %v4855 = vld [vmem:[#allocation14 + $0xe8] sm:$0xff]
    %v4856 = vld [vmem:[#allocation14 + $0xf0] sm:$0xff]
    %v4857 = vld [vmem:[#allocation14 + $0xf8] sm:$0xff]
    %v4890 = vunpack.c.l.b16 %v4826
    %v4891 = vunpack.c.h.b16 %v4826
    %v4892 = vunpack.c.l.b16 %v4827
    %v4893 = vunpack.c.h.b16 %v4827
    %v4894 = vunpack.c.l.b16 %v4828
    %v4895 = vunpack.c.h.b16 %v4828
    %v4896 = vunpack.c.l.b16 %v4829
    %v4897 = vunpack.c.h.b16 %v4829
    %v4898 = vunpack.c.l.b16 %v4830
    %v4899 = vunpack.c.h.b16 %v4830
    %v4900 = vunpack.c.l.b16 %v4831
    %v4901 = vunpack.c.h.b16 %v4831
    %v4902 = vunpack.c.l.b16 %v4832
    %v4903 = vunpack.c.h.b16 %v4832
    %v4904 = vunpack.c.l.b16 %v4833
    %v4905 = vunpack.c.h.b16 %v4833
    %v4906 = vunpack.c.l.b16 %v4834
    %v4907 = vunpack.c.h.b16 %v4834
    %v4908 = vunpack.c.l.b16 %v4835
    %v4909 = vunpack.c.h.b16 %v4835
    %v4910 = vunpack.c.l.b16 %v4836
    %v4911 = vunpack.c.h.b16 %v4836
    %v4912 = vunpack.c.l.b16 %v4837
    %v4913 = vunpack.c.h.b16 %v4837
    %v4914 = vunpack.c.l.b16 %v4838
    %v4915 = vunpack.c.h.b16 %v4838
    %v4916 = vunpack.c.l.b16 %v4839
    %v4917 = vunpack.c.h.b16 %v4839
    %v4918 = vunpack.c.l.b16 %v4840
    %v4919 = vunpack.c.h.b16 %v4840
    %v4920 = vunpack.c.l.b16 %v4841
    %v4921 = vunpack.c.h.b16 %v4841
    %v4922 = vunpack.c.l.b16 %v4842
    %v4923 = vunpack.c.h.b16 %v4842
    %v4924 = vunpack.c.l.b16 %v4843
    %v4925 = vunpack.c.h.b16 %v4843
    %v4926 = vunpack.c.l.b16 %v4844
    %v4927 = vunpack.c.h.b16 %v4844
    %v4928 = vunpack.c.l.b16 %v4845
    %v4929 = vunpack.c.h.b16 %v4845
    %v4930 = vunpack.c.l.b16 %v4846
    %v4931 = vunpack.c.h.b16 %v4846
    %v4932 = vunpack.c.l.b16 %v4847
    %v4933 = vunpack.c.h.b16 %v4847
    %v4934 = vunpack.c.l.b16 %v4848
    %v4935 = vunpack.c.h.b16 %v4848
    %v4936 = vunpack.c.l.b16 %v4849
    %v4937 = vunpack.c.h.b16 %v4849
    %v4938 = vunpack.c.l.b16 %v4850
    %v4939 = vunpack.c.h.b16 %v4850
    %v4940 = vunpack.c.l.b16 %v4851
    %v4941 = vunpack.c.h.b16 %v4851
    %v4942 = vunpack.c.l.b16 %v4852
    %v4943 = vunpack.c.h.b16 %v4852
    %v4944 = vunpack.c.l.b16 %v4853
    %v4945 = vunpack.c.h.b16 %v4853
    %v4946 = vunpack.c.l.b16 %v4854
    %v4947 = vunpack.c.h.b16 %v4854
    %v4948 = vunpack.c.l.b16 %v4855
    %v4949 = vunpack.c.h.b16 %v4855
    %v4950 = vunpack.c.l.b16 %v4856
    %v4951 = vunpack.c.h.b16 %v4856
    %v4952 = vunpack.c.l.b16 %v4857
    %v4953 = vunpack.c.h.b16 %v4857
    %v4954 = vpack.c.b16 %v4894, %v4890
    %v4955 = vpack.c.b16 %v4895, %v4891
    %v4956 = vpack.c.b16 %v4896, %v4892
    %v4957 = vpack.c.b16 %v4897, %v4893
    %v4958 = vpack.c.b16 %v4902, %v4898
    %v4959 = vpack.c.b16 %v4903, %v4899
    %v4960 = vpack.c.b16 %v4904, %v4900
    %v4961 = vpack.c.b16 %v4905, %v4901
    %v4962 = vpack.c.b16 %v4910, %v4906
    %v4963 = vpack.c.b16 %v4911, %v4907
    %v4964 = vpack.c.b16 %v4912, %v4908
    %v4965 = vpack.c.b16 %v4913, %v4909
    %v4966 = vpack.c.b16 %v4918, %v4914
    %v4967 = vpack.c.b16 %v4919, %v4915
    %v4968 = vpack.c.b16 %v4920, %v4916
    %v4969 = vpack.c.b16 %v4921, %v4917
    %v4970 = vpack.c.b16 %v4926, %v4922
    %v4971 = vpack.c.b16 %v4927, %v4923
    %v4972 = vpack.c.b16 %v4928, %v4924
    %v4973 = vpack.c.b16 %v4929, %v4925
    %v4974 = vpack.c.b16 %v4934, %v4930
    %v4975 = vpack.c.b16 %v4935, %v4931
    %v4976 = vpack.c.b16 %v4936, %v4932
    %v4977 = vpack.c.b16 %v4937, %v4933
    %v4978 = vpack.c.b16 %v4942, %v4938
    %v4979 = vpack.c.b16 %v4943, %v4939
    %v4980 = vpack.c.b16 %v4944, %v4940
    %v4981 = vpack.c.b16 %v4945, %v4941
    %v4982 = vpack.c.b16 %v4950, %v4946
    %v4983 = vpack.c.b16 %v4951, %v4947
    %v4984 = vpack.c.b16 %v4952, %v4948
    %v4985 = vpack.c.b16 %v4953, %v4949
    %5018 = vmatprep.subr.bf16.mxu0 %v4955
    %5019 = vmatpush1.bf16.msra.mxu0 %v4954
    %5020 = vmatprep.subr.bf16.mxu0 %v4959
    %5021 = vmatpush1.bf16.msra.mxu0 %v4958
    %5022 = vmatprep.subr.bf16.mxu0 %v4963
    %5023 = vmatpush1.bf16.msra.mxu0 %v4962
    %5024 = vmatprep.subr.bf16.mxu0 %v4967
    %5025 = vmatpush1.bf16.msra.mxu0 %v4966
    %5026 = vmatprep.subr.bf16.mxu0 %v4971
    %5027 = vmatpush1.bf16.msra.mxu0 %v4970
    %5028 = vmatprep.subr.bf16.mxu0 %v4975
    %5029 = vmatpush1.bf16.msra.mxu0 %v4974
    %5030 = vmatprep.subr.bf16.mxu0 %v4979
    %5031 = vmatpush1.bf16.msra.mxu0 %v4978
    %5032 = vmatprep.subr.bf16.mxu0 %v4983
    %5033 = vmatpush1.bf16.msra.mxu0 %v4982
    %5034 = vmatprep.subr.bf16.mxu0 0
    %5035 = vmatpush1.bf16.msra.mxu0 0
    %5036 = vmatprep.subr.bf16.mxu0 0
    %5037 = vmatpush1.bf16.msra.mxu0 0
    %5038 = vmatprep.subr.bf16.mxu0 0
    %5039 = vmatpush1.bf16.msra.mxu0 0
    %5040 = vmatprep.subr.bf16.mxu0 0
    %5041 = vmatpush1.bf16.msra.mxu0 0
    %5042 = vmatprep.subr.bf16.mxu0 0
    %5043 = vmatpush1.bf16.msra.mxu0 0
    %5044 = vmatprep.subr.bf16.mxu0 0
    %5045 = vmatpush1.bf16.msra.mxu0 0
    %5046 = vmatprep.subr.bf16.mxu0 0
    %5047 = vmatpush1.bf16.msra.mxu0 0
    %5048 = vmatprep.subr.bf16.mxu0 0
    %5049 = vmatpush1.bf16.msra.mxu0 0
    %5050 = vmatprep.mubr.bf16.mxu0 0
    %5051 = vmatmul.mubr.bf16.gmra.mrb[0].mxu0 %v4825
    %v5052 = vpop.f32.mrb[0].mxu0
    %v5053 = vadd.f32 0.0, %v5052
    %v5054 = vpop.f32.mrb[0].mxu0
    %v5055 = vadd.f32 0.0, %v5054
    %v5056 = vpop.f32.mrb[0].mxu0
    %v5057 = vpop.f32.mrb[0].mxu0
    %5058 = vdwg.mxu0
    %5059 = vmatprep.subr.bf16.mxu0 %v4957
    %5060 = vmatpush1.bf16.msra.mxu0 %v4956
    %5061 = vmatprep.subr.bf16.mxu0 %v4961
    %5062 = vmatpush1.bf16.msra.mxu0 %v4960
    %5063 = vmatprep.subr.bf16.mxu0 %v4965
    %5064 = vmatpush1.bf16.msra.mxu0 %v4964
    %5065 = vmatprep.subr.bf16.mxu0 %v4969
    %5066 = vmatpush1.bf16.msra.mxu0 %v4968
    %5067 = vmatprep.subr.bf16.mxu0 %v4973
    %5068 = vmatpush1.bf16.msra.mxu0 %v4972
    %5069 = vmatprep.subr.bf16.mxu0 %v4977
    %5070 = vmatpush1.bf16.msra.mxu0 %v4976
    %5071 = vmatprep.subr.bf16.mxu0 %v4981
    %5072 = vmatpush1.bf16.msra.mxu0 %v4980
    %5073 = vmatprep.subr.bf16.mxu0 %v4985
    %5074 = vmatpush1.bf16.msra.mxu0 %v4984
    %5075 = vmatprep.subr.bf16.mxu0 0
    %5076 = vmatpush1.bf16.msra.mxu0 0
    %5077 = vmatprep.subr.bf16.mxu0 0
    %5078 = vmatpush1.bf16.msra.mxu0 0
    %5079 = vmatprep.subr.bf16.mxu0 0
    %5080 = vmatpush1.bf16.msra.mxu0 0
    %5081 = vmatprep.subr.bf16.mxu0 0
    %5082 = vmatpush1.bf16.msra.mxu0 0
    %5083 = vmatprep.subr.bf16.mxu0 0
    %5084 = vmatpush1.bf16.msra.mxu0 0
    %5085 = vmatprep.subr.bf16.mxu0 0
    %5086 = vmatpush1.bf16.msra.mxu0 0
    %5087 = vmatprep.subr.bf16.mxu0 0
    %5088 = vmatpush1.bf16.msra.mxu0 0
    %5089 = vmatprep.subr.bf16.mxu0 0
    %5090 = vmatpush1.bf16.msra.mxu0 0
    %5091 = vmatprep.mubr.bf16.mxu0 0
    %5092 = vmatmul.mubr.bf16.gmra.mrb[0].mxu0 %v4825
    %v5093 = vpop.f32.mrb[0].mxu0
    %v5094 = vadd.f32 0.0, %v5093
    %v5095 = vpop.f32.mrb[0].mxu0
    %v5096 = vadd.f32 0.0, %v5095
    %v5097 = vpop.f32.mrb[0].mxu0
    %v5098 = vpop.f32.mrb[0].mxu0
    %5099 = vdwg.mxu0
    %v5100 = vadd.f32 %v4821, %v5053
    %v5101 = vadd.f32 %v4822, %v5055
    %v5102 = vadd.f32 %v4823, %v5094
    %v5103 = vadd.f32 %v4824, %v5096
    %v5104 = vxor.u32 %v5100, 2147483648
    %v5105 = vmul.f32 %v5104, 1.442695
    %v5106 = vpow.pop %v5105
    %v5107 = vadd.f32 %v5106, 1.0
    %v5108 = vrcp.pop %v5107
    %v5109 = vmul.f32 1.0, %v5108
    %v5110 = vxor.u32 %v5101, 2147483648
    %v5111 = vmul.f32 %v5110, 1.442695
    %v5112 = vpow.pop %v5111
    %v5113 = vadd.f32 %v5112, 1.0
    %v5114 = vrcp.pop %v5113
    %v5115 = vmul.f32 1.0, %v5114
    %v5116 = vtanh.pop %v5102
    %v5117 = vxor.u32 %v5103, 2147483648
    %v5118 = vmul.f32 %v5117, 1.442695
    %v5119 = vpow.pop %v5118
    %v5120 = vadd.f32 %v5119, 1.0
    %v5121 = vrcp.pop %v5120
    %v5122 = vmul.f32 1.0, %v5121
    %v5123 = vmul.f32 %v5115, %v4820
    %v5124 = vmul.f32 %v5109, %v5116
    %v5125 = vadd.f32 %v5123, %v5124
    %v5126 = vtanh.pop %v5125
    %v5127 = vmul.f32 %v5122, %v5126
    %5128 = vst [vmem:[#allocation4] sm:$0xff] %v5127
    %5129 = vst [vmem:[#allocation5] sm:$0xff] %v5125
    %5130 = vst [vmem:[#allocation2 + $0x20] sm:$0xff] %v5127
    %v5131 = vld [vmem:[#allocation4] sm:$0xff]
    %v5132 = vld [vmem:[#allocation5] sm:$0xff]
    %v5133 = vld [vmem:[#allocation3 + $0xa0] sm:$0xff]
    %v5134 = vld [vmem:[#allocation3 + $0xa8] sm:$0xff]
    %v5135 = vld [vmem:[#allocation3 + $0xb0] sm:$0xff]
    %v5136 = vld [vmem:[#allocation3 + $0xb8] sm:$0xff]
    %v5137 = vpack.c.bf16 %v5131, %v5131
    %v5138 = vld [vmem:[#allocation14] sm:$0xff]
    %v5139 = vld [vmem:[#allocation14 + $0x8] sm:$0xff]
    %v5140 = vld [vmem:[#allocation14 + $0x10] sm:$0xff]
    %v5141 = vld [vmem:[#allocation14 + $0x18] sm:$0xff]
    %v5142 = vld [vmem:[#allocation14 + $0x20] sm:$0xff]
    %v5143 = vld [vmem:[#allocation14 + $0x28] sm:$0xff]
    %v5144 = vld [vmem:[#allocation14 + $0x30] sm:$0xff]
    %v5145 = vld [vmem:[#allocation14 + $0x38] sm:$0xff]
    %v5146 = vld [vmem:[#allocation14 + $0x40] sm:$0xff]
    %v5147 = vld [vmem:[#allocation14 + $0x48] sm:$0xff]
    %v5148 = vld [vmem:[#allocation14 + $0x50] sm:$0xff]
    %v5149 = vld [vmem:[#allocation14 + $0x58] sm:$0xff]
    %v5150 = vld [vmem:[#allocation14 + $0x60] sm:$0xff]
    %v5151 = vld [vmem:[#allocation14 + $0x68] sm:$0xff]
    %v5152 = vld [vmem:[#allocation14 + $0x70] sm:$0xff]
    %v5153 = vld [vmem:[#allocation14 + $0x78] sm:$0xff]
    %v5154 = vld [vmem:[#allocation14 + $0x80] sm:$0xff]
    %v5155 = vld [vmem:[#allocation14 + $0x88] sm:$0xff]
    %v5156 = vld [vmem:[#allocation14 + $0x90] sm:$0xff]
    %v5157 = vld [vmem:[#allocation14 + $0x98] sm:$0xff]
    %v5158 = vld [vmem:[#allocation14 + $0xa0] sm:$0xff]
    %v5159 = vld [vmem:[#allocation14 + $0xa8] sm:$0xff]
    %v5160 = vld [vmem:[#allocation14 + $0xb0] sm:$0xff]
    %v5161 = vld [vmem:[#allocation14 + $0xb8] sm:$0xff]
    %v5162 = vld [vmem:[#allocation14 + $0xc0] sm:$0xff]
    %v5163 = vld [vmem:[#allocation14 + $0xc8] sm:$0xff]
    %v5164 = vld [vmem:[#allocation14 + $0xd0] sm:$0xff]
    %v5165 = vld [vmem:[#allocation14 + $0xd8] sm:$0xff]
    %v5166 = vld [vmem:[#allocation14 + $0xe0] sm:$0xff]
    %v5167 = vld [vmem:[#allocation14 + $0xe8] sm:$0xff]
    %v5168 = vld [vmem:[#allocation14 + $0xf0] sm:$0xff]
    %v5169 = vld [vmem:[#allocation14 + $0xf8] sm:$0xff]
    %v5202 = vunpack.c.l.b16 %v5138
    %v5203 = vunpack.c.h.b16 %v5138
    %v5204 = vunpack.c.l.b16 %v5139
    %v5205 = vunpack.c.h.b16 %v5139
    %v5206 = vunpack.c.l.b16 %v5140
    %v5207 = vunpack.c.h.b16 %v5140
    %v5208 = vunpack.c.l.b16 %v5141
    %v5209 = vunpack.c.h.b16 %v5141
    %v5210 = vunpack.c.l.b16 %v5142
    %v5211 = vunpack.c.h.b16 %v5142
    %v5212 = vunpack.c.l.b16 %v5143
    %v5213 = vunpack.c.h.b16 %v5143
    %v5214 = vunpack.c.l.b16 %v5144
    %v5215 = vunpack.c.h.b16 %v5144
    %v5216 = vunpack.c.l.b16 %v5145
    %v5217 = vunpack.c.h.b16 %v5145
    %v5218 = vunpack.c.l.b16 %v5146
    %v5219 = vunpack.c.h.b16 %v5146
    %v5220 = vunpack.c.l.b16 %v5147
    %v5221 = vunpack.c.h.b16 %v5147
    %v5222 = vunpack.c.l.b16 %v5148
    %v5223 = vunpack.c.h.b16 %v5148
    %v5224 = vunpack.c.l.b16 %v5149
    %v5225 = vunpack.c.h.b16 %v5149
    %v5226 = vunpack.c.l.b16 %v5150
    %v5227 = vunpack.c.h.b16 %v5150
    %v5228 = vunpack.c.l.b16 %v5151
    %v5229 = vunpack.c.h.b16 %v5151
    %v5230 = vunpack.c.l.b16 %v5152
    %v5231 = vunpack.c.h.b16 %v5152
    %v5232 = vunpack.c.l.b16 %v5153
    %v5233 = vunpack.c.h.b16 %v5153
    %v5234 = vunpack.c.l.b16 %v5154
    %v5235 = vunpack.c.h.b16 %v5154
    %v5236 = vunpack.c.l.b16 %v5155
    %v5237 = vunpack.c.h.b16 %v5155
    %v5238 = vunpack.c.l.b16 %v5156
    %v5239 = vunpack.c.h.b16 %v5156
    %v5240 = vunpack.c.l.b16 %v5157
    %v5241 = vunpack.c.h.b16 %v5157
    %v5242 = vunpack.c.l.b16 %v5158
    %v5243 = vunpack.c.h.b16 %v5158
    %v5244 = vunpack.c.l.b16 %v5159
    %v5245 = vunpack.c.h.b16 %v5159
    %v5246 = vunpack.c.l.b16 %v5160
    %v5247 = vunpack.c.h.b16 %v5160
    %v5248 = vunpack.c.l.b16 %v5161
    %v5249 = vunpack.c.h.b16 %v5161
    %v5250 = vunpack.c.l.b16 %v5162
    %v5251 = vunpack.c.h.b16 %v5162
    %v5252 = vunpack.c.l.b16 %v5163
    %v5253 = vunpack.c.h.b16 %v5163
    %v5254 = vunpack.c.l.b16 %v5164
    %v5255 = vunpack.c.h.b16 %v5164
    %v5256 = vunpack.c.l.b16 %v5165
    %v5257 = vunpack.c.h.b16 %v5165
    %v5258 = vunpack.c.l.b16 %v5166
    %v5259 = vunpack.c.h.b16 %v5166
    %v5260 = vunpack.c.l.b16 %v5167
    %v5261 = vunpack.c.h.b16 %v5167
    %v5262 = vunpack.c.l.b16 %v5168
    %v5263 = vunpack.c.h.b16 %v5168
    %v5264 = vunpack.c.l.b16 %v5169
    %v5265 = vunpack.c.h.b16 %v5169
    %v5266 = vpack.c.b16 %v5206, %v5202
    %v5267 = vpack.c.b16 %v5207, %v5203
    %v5268 = vpack.c.b16 %v5208, %v5204
    %v5269 = vpack.c.b16 %v5209, %v5205
    %v5270 = vpack.c.b16 %v5214, %v5210
    %v5271 = vpack.c.b16 %v5215, %v5211
    %v5272 = vpack.c.b16 %v5216, %v5212
    %v5273 = vpack.c.b16 %v5217, %v5213
    %v5274 = vpack.c.b16 %v5222, %v5218
    %v5275 = vpack.c.b16 %v5223, %v5219
    %v5276 = vpack.c.b16 %v5224, %v5220
    %v5277 = vpack.c.b16 %v5225, %v5221
    %v5278 = vpack.c.b16 %v5230, %v5226
    %v5279 = vpack.c.b16 %v5231, %v5227
    %v5280 = vpack.c.b16 %v5232, %v5228
    %v5281 = vpack.c.b16 %v5233, %v5229
    %v5282 = vpack.c.b16 %v5238, %v5234
    %v5283 = vpack.c.b16 %v5239, %v5235
    %v5284 = vpack.c.b16 %v5240, %v5236
    %v5285 = vpack.c.b16 %v5241, %v5237
    %v5286 = vpack.c.b16 %v5246, %v5242
    %v5287 = vpack.c.b16 %v5247, %v5243
    %v5288 = vpack.c.b16 %v5248, %v5244
    %v5289 = vpack.c.b16 %v5249, %v5245
    %v5290 = vpack.c.b16 %v5254, %v5250
    %v5291 = vpack.c.b16 %v5255, %v5251
    %v5292 = vpack.c.b16 %v5256, %v5252
    %v5293 = vpack.c.b16 %v5257, %v5253
    %v5294 = vpack.c.b16 %v5262, %v5258
    %v5295 = vpack.c.b16 %v5263, %v5259
    %v5296 = vpack.c.b16 %v5264, %v5260
    %v5297 = vpack.c.b16 %v5265, %v5261
    %5330 = vmatprep.subr.bf16.mxu0 %v5267
    %5331 = vmatpush1.bf16.msra.mxu0 %v5266
    %5332 = vmatprep.subr.bf16.mxu0 %v5271
    %5333 = vmatpush1.bf16.msra.mxu0 %v5270
    %5334 = vmatprep.subr.bf16.mxu0 %v5275
    %5335 = vmatpush1.bf16.msra.mxu0 %v5274
    %5336 = vmatprep.subr.bf16.mxu0 %v5279
    %5337 = vmatpush1.bf16.msra.mxu0 %v5278
    %5338 = vmatprep.subr.bf16.mxu0 %v5283
    %5339 = vmatpush1.bf16.msra.mxu0 %v5282
    %5340 = vmatprep.subr.bf16.mxu0 %v5287
    %5341 = vmatpush1.bf16.msra.mxu0 %v5286
    %5342 = vmatprep.subr.bf16.mxu0 %v5291
    %5343 = vmatpush1.bf16.msra.mxu0 %v5290
    %5344 = vmatprep.subr.bf16.mxu0 %v5295
    %5345 = vmatpush1.bf16.msra.mxu0 %v5294
    %5346 = vmatprep.subr.bf16.mxu0 0
    %5347 = vmatpush1.bf16.msra.mxu0 0
    %5348 = vmatprep.subr.bf16.mxu0 0
    %5349 = vmatpush1.bf16.msra.mxu0 0
    %5350 = vmatprep.subr.bf16.mxu0 0
    %5351 = vmatpush1.bf16.msra.mxu0 0
    %5352 = vmatprep.subr.bf16.mxu0 0
    %5353 = vmatpush1.bf16.msra.mxu0 0
    %5354 = vmatprep.subr.bf16.mxu0 0
    %5355 = vmatpush1.bf16.msra.mxu0 0
    %5356 = vmatprep.subr.bf16.mxu0 0
    %5357 = vmatpush1.bf16.msra.mxu0 0
    %5358 = vmatprep.subr.bf16.mxu0 0
    %5359 = vmatpush1.bf16.msra.mxu0 0
    %5360 = vmatprep.subr.bf16.mxu0 0
    %5361 = vmatpush1.bf16.msra.mxu0 0
    %5362 = vmatprep.mubr.bf16.mxu0 0
    %5363 = vmatmul.mubr.bf16.gmra.mrb[0].mxu0 %v5137
    %v5364 = vpop.f32.mrb[0].mxu0
    %v5365 = vadd.f32 0.0, %v5364
    %v5366 = vpop.f32.mrb[0].mxu0
    %v5367 = vadd.f32 0.0, %v5366
    %v5368 = vpop.f32.mrb[0].mxu0
    %v5369 = vpop.f32.mrb[0].mxu0
    %5370 = vdwg.mxu0
    %5371 = vmatprep.subr.bf16.mxu0 %v5269
    %5372 = vmatpush1.bf16.msra.mxu0 %v5268
    %5373 = vmatprep.subr.bf16.mxu0 %v5273
    %5374 = vmatpush1.bf16.msra.mxu0 %v5272
    %5375 = vmatprep.subr.bf16.mxu0 %v5277
    %5376 = vmatpush1.bf16.msra.mxu0 %v5276
    %5377 = vmatprep.subr.bf16.mxu0 %v5281
    %5378 = vmatpush1.bf16.msra.mxu0 %v5280
    %5379 = vmatprep.subr.bf16.mxu0 %v5285
    %5380 = vmatpush1.bf16.msra.mxu0 %v5284
    %5381 = vmatprep.subr.bf16.mxu0 %v5289
    %5382 = vmatpush1.bf16.msra.mxu0 %v5288
    %5383 = vmatprep.subr.bf16.mxu0 %v5293
    %5384 = vmatpush1.bf16.msra.mxu0 %v5292
    %5385 = vmatprep.subr.bf16.mxu0 %v5297
    %5386 = vmatpush1.bf16.msra.mxu0 %v5296
    %5387 = vmatprep.subr.bf16.mxu0 0
    %5388 = vmatpush1.bf16.msra.mxu0 0
    %5389 = vmatprep.subr.bf16.mxu0 0
    %5390 = vmatpush1.bf16.msra.mxu0 0
    %5391 = vmatprep.subr.bf16.mxu0 0
    %5392 = vmatpush1.bf16.msra.mxu0 0
    %5393 = vmatprep.subr.bf16.mxu0 0
    %5394 = vmatpush1.bf16.msra.mxu0 0
    %5395 = vmatprep.subr.bf16.mxu0 0
    %5396 = vmatpush1.bf16.msra.mxu0 0
    %5397 = vmatprep.subr.bf16.mxu0 0
    %5398 = vmatpush1.bf16.msra.mxu0 0
    %5399 = vmatprep.subr.bf16.mxu0 0
    %5400 = vmatpush1.bf16.msra.mxu0 0
    %5401 = vmatprep.subr.bf16.mxu0 0
    %5402 = vmatpush1.bf16.msra.mxu0 0
    %5403 = vmatprep.mubr.bf16.mxu0 0
    %5404 = vmatmul.mubr.bf16.gmra.mrb[0].mxu0 %v5137
    %v5405 = vpop.f32.mrb[0].mxu0
    %v5406 = vadd.f32 0.0, %v5405
    %v5407 = vpop.f32.mrb[0].mxu0
    %v5408 = vadd.f32 0.0, %v5407
    %v5409 = vpop.f32.mrb[0].mxu0
    %v5410 = vpop.f32.mrb[0].mxu0
    %5411 = vdwg.mxu0
    %v5412 = vadd.f32 %v5133, %v5365
    %v5413 = vadd.f32 %v5134, %v5367
    %v5414 = vadd.f32 %v5135, %v5406
    %v5415 = vadd.f32 %v5136, %v5408
    %v5416 = vxor.u32 %v5412, 2147483648
    %v5417 = vmul.f32 %v5416, 1.442695
    %v5418 = vpow.pop %v5417
    %v5419 = vadd.f32 %v5418, 1.0
    %v5420 = vrcp.pop %v5419
    %v5421 = vmul.f32 1.0, %v5420
    %v5422 = vxor.u32 %v5413, 2147483648
    %v5423 = vmul.f32 %v5422, 1.442695
    %v5424 = vpow.pop %v5423
    %v5425 = vadd.f32 %v5424, 1.0
    %v5426 = vrcp.pop %v5425
    %v5427 = vmul.f32 1.0, %v5426
    %v5428 = vtanh.pop %v5414
    %v5429 = vxor.u32 %v5415, 2147483648
    %v5430 = vmul.f32 %v5429, 1.442695
    %v5431 = vpow.pop %v5430
    %v5432 = vadd.f32 %v5431, 1.0
    %v5433 = vrcp.pop %v5432
    %v5434 = vmul.f32 1.0, %v5433
    %v5435 = vmul.f32 %v5427, %v5132
    %v5436 = vmul.f32 %v5421, %v5428
    %v5437 = vadd.f32 %v5435, %v5436
    %v5438 = vtanh.pop %v5437
    %v5439 = vmul.f32 %v5434, %v5438
    %5440 = vst [vmem:[#allocation4] sm:$0xff] %v5439
    %5441 = vst [vmem:[#allocation5] sm:$0xff] %v5437
    %5442 = vst [vmem:[#allocation2 + $0x28] sm:$0xff] %v5439
    %v5443 = vld [vmem:[#allocation4] sm:$0xff]
    %v5444 = vld [vmem:[#allocation5] sm:$0xff]
    %v5445 = vld [vmem:[#allocation3 + $0xc0] sm:$0xff]
    %v5446 = vld [vmem:[#allocation3 + $0xc8] sm:$0xff]
    %v5447 = vld [vmem:[#allocation3 + $0xd0] sm:$0xff]
    %v5448 = vld [vmem:[#allocation3 + $0xd8] sm:$0xff]
    %v5449 = vpack.c.bf16 %v5443, %v5443
    %v5450 = vld [vmem:[#allocation14] sm:$0xff]
    %v5451 = vld [vmem:[#allocation14 + $0x8] sm:$0xff]
    %v5452 = vld [vmem:[#allocation14 + $0x10] sm:$0xff]
    %v5453 = vld [vmem:[#allocation14 + $0x18] sm:$0xff]
    %v5454 = vld [vmem:[#allocation14 + $0x20] sm:$0xff]
    %v5455 = vld [vmem:[#allocation14 + $0x28] sm:$0xff]
    %v5456 = vld [vmem:[#allocation14 + $0x30] sm:$0xff]
    %v5457 = vld [vmem:[#allocation14 + $0x38] sm:$0xff]
    %v5458 = vld [vmem:[#allocation14 + $0x40] sm:$0xff]
    %v5459 = vld [vmem:[#allocation14 + $0x48] sm:$0xff]
    %v5460 = vld [vmem:[#allocation14 + $0x50] sm:$0xff]
    %v5461 = vld [vmem:[#allocation14 + $0x58] sm:$0xff]
    %v5462 = vld [vmem:[#allocation14 + $0x60] sm:$0xff]
    %v5463 = vld [vmem:[#allocation14 + $0x68] sm:$0xff]
    %v5464 = vld [vmem:[#allocation14 + $0x70] sm:$0xff]
    %v5465 = vld [vmem:[#allocation14 + $0x78] sm:$0xff]
    %v5466 = vld [vmem:[#allocation14 + $0x80] sm:$0xff]
    %v5467 = vld [vmem:[#allocation14 + $0x88] sm:$0xff]
    %v5468 = vld [vmem:[#allocation14 + $0x90] sm:$0xff]
    %v5469 = vld [vmem:[#allocation14 + $0x98] sm:$0xff]
    %v5470 = vld [vmem:[#allocation14 + $0xa0] sm:$0xff]
    %v5471 = vld [vmem:[#allocation14 + $0xa8] sm:$0xff]
    %v5472 = vld [vmem:[#allocation14 + $0xb0] sm:$0xff]
    %v5473 = vld [vmem:[#allocation14 + $0xb8] sm:$0xff]
    %v5474 = vld [vmem:[#allocation14 + $0xc0] sm:$0xff]
    %v5475 = vld [vmem:[#allocation14 + $0xc8] sm:$0xff]
    %v5476 = vld [vmem:[#allocation14 + $0xd0] sm:$0xff]
    %v5477 = vld [vmem:[#allocation14 + $0xd8] sm:$0xff]
    %v5478 = vld [vmem:[#allocation14 + $0xe0] sm:$0xff]
    %v5479 = vld [vmem:[#allocation14 + $0xe8] sm:$0xff]
    %v5480 = vld [vmem:[#allocation14 + $0xf0] sm:$0xff]
    %v5481 = vld [vmem:[#allocation14 + $0xf8] sm:$0xff]
    %v5514 = vunpack.c.l.b16 %v5450
    %v5515 = vunpack.c.h.b16 %v5450
    %v5516 = vunpack.c.l.b16 %v5451
    %v5517 = vunpack.c.h.b16 %v5451
    %v5518 = vunpack.c.l.b16 %v5452
    %v5519 = vunpack.c.h.b16 %v5452
    %v5520 = vunpack.c.l.b16 %v5453
    %v5521 = vunpack.c.h.b16 %v5453
    %v5522 = vunpack.c.l.b16 %v5454
    %v5523 = vunpack.c.h.b16 %v5454
    %v5524 = vunpack.c.l.b16 %v5455
    %v5525 = vunpack.c.h.b16 %v5455
    %v5526 = vunpack.c.l.b16 %v5456
    %v5527 = vunpack.c.h.b16 %v5456
    %v5528 = vunpack.c.l.b16 %v5457
    %v5529 = vunpack.c.h.b16 %v5457
    %v5530 = vunpack.c.l.b16 %v5458
    %v5531 = vunpack.c.h.b16 %v5458
    %v5532 = vunpack.c.l.b16 %v5459
    %v5533 = vunpack.c.h.b16 %v5459
    %v5534 = vunpack.c.l.b16 %v5460
    %v5535 = vunpack.c.h.b16 %v5460
    %v5536 = vunpack.c.l.b16 %v5461
    %v5537 = vunpack.c.h.b16 %v5461
    %v5538 = vunpack.c.l.b16 %v5462
    %v5539 = vunpack.c.h.b16 %v5462
    %v5540 = vunpack.c.l.b16 %v5463
    %v5541 = vunpack.c.h.b16 %v5463
    %v5542 = vunpack.c.l.b16 %v5464
    %v5543 = vunpack.c.h.b16 %v5464
    %v5544 = vunpack.c.l.b16 %v5465
    %v5545 = vunpack.c.h.b16 %v5465
    %v5546 = vunpack.c.l.b16 %v5466
    %v5547 = vunpack.c.h.b16 %v5466
    %v5548 = vunpack.c.l.b16 %v5467
    %v5549 = vunpack.c.h.b16 %v5467
    %v5550 = vunpack.c.l.b16 %v5468
    %v5551 = vunpack.c.h.b16 %v5468
    %v5552 = vunpack.c.l.b16 %v5469
    %v5553 = vunpack.c.h.b16 %v5469
    %v5554 = vunpack.c.l.b16 %v5470
    %v5555 = vunpack.c.h.b16 %v5470
    %v5556 = vunpack.c.l.b16 %v5471
    %v5557 = vunpack.c.h.b16 %v5471
    %v5558 = vunpack.c.l.b16 %v5472
    %v5559 = vunpack.c.h.b16 %v5472
    %v5560 = vunpack.c.l.b16 %v5473
    %v5561 = vunpack.c.h.b16 %v5473
    %v5562 = vunpack.c.l.b16 %v5474
    %v5563 = vunpack.c.h.b16 %v5474
    %v5564 = vunpack.c.l.b16 %v5475
    %v5565 = vunpack.c.h.b16 %v5475
    %v5566 = vunpack.c.l.b16 %v5476
    %v5567 = vunpack.c.h.b16 %v5476
    %v5568 = vunpack.c.l.b16 %v5477
    %v5569 = vunpack.c.h.b16 %v5477
    %v5570 = vunpack.c.l.b16 %v5478
    %v5571 = vunpack.c.h.b16 %v5478
    %v5572 = vunpack.c.l.b16 %v5479
    %v5573 = vunpack.c.h.b16 %v5479
    %v5574 = vunpack.c.l.b16 %v5480
    %v5575 = vunpack.c.h.b16 %v5480
    %v5576 = vunpack.c.l.b16 %v5481
    %v5577 = vunpack.c.h.b16 %v5481
    %v5578 = vpack.c.b16 %v5518, %v5514
    %v5579 = vpack.c.b16 %v5519, %v5515
    %v5580 = vpack.c.b16 %v5520, %v5516
    %v5581 = vpack.c.b16 %v5521, %v5517
    %v5582 = vpack.c.b16 %v5526, %v5522
    %v5583 = vpack.c.b16 %v5527, %v5523
    %v5584 = vpack.c.b16 %v5528, %v5524
    %v5585 = vpack.c.b16 %v5529, %v5525
    %v5586 = vpack.c.b16 %v5534, %v5530
    %v5587 = vpack.c.b16 %v5535, %v5531
    %v5588 = vpack.c.b16 %v5536, %v5532
    %v5589 = vpack.c.b16 %v5537, %v5533
    %v5590 = vpack.c.b16 %v5542, %v5538
    %v5591 = vpack.c.b16 %v5543, %v5539
    %v5592 = vpack.c.b16 %v5544, %v5540
    %v5593 = vpack.c.b16 %v5545, %v5541
    %v5594 = vpack.c.b16 %v5550, %v5546
    %v5595 = vpack.c.b16 %v5551, %v5547
    %v5596 = vpack.c.b16 %v5552, %v5548
    %v5597 = vpack.c.b16 %v5553, %v5549
    %v5598 = vpack.c.b16 %v5558, %v5554
    %v5599 = vpack.c.b16 %v5559, %v5555
    %v5600 = vpack.c.b16 %v5560, %v5556
    %v5601 = vpack.c.b16 %v5561, %v5557
    %v5602 = vpack.c.b16 %v5566, %v5562
    %v5603 = vpack.c.b16 %v5567, %v5563
    %v5604 = vpack.c.b16 %v5568, %v5564
    %v5605 = vpack.c.b16 %v5569, %v5565
    %v5606 = vpack.c.b16 %v5574, %v5570
    %v5607 = vpack.c.b16 %v5575, %v5571
    %v5608 = vpack.c.b16 %v5576, %v5572
    %v5609 = vpack.c.b16 %v5577, %v5573
    %5642 = vmatprep.subr.bf16.mxu0 %v5579
    %5643 = vmatpush1.bf16.msra.mxu0 %v5578
    %5644 = vmatprep.subr.bf16.mxu0 %v5583
    %5645 = vmatpush1.bf16.msra.mxu0 %v5582
    %5646 = vmatprep.subr.bf16.mxu0 %v5587
    %5647 = vmatpush1.bf16.msra.mxu0 %v5586
    %5648 = vmatprep.subr.bf16.mxu0 %v5591
    %5649 = vmatpush1.bf16.msra.mxu0 %v5590
    %5650 = vmatprep.subr.bf16.mxu0 %v5595
    %5651 = vmatpush1.bf16.msra.mxu0 %v5594
    %5652 = vmatprep.subr.bf16.mxu0 %v5599
    %5653 = vmatpush1.bf16.msra.mxu0 %v5598
    %5654 = vmatprep.subr.bf16.mxu0 %v5603
    %5655 = vmatpush1.bf16.msra.mxu0 %v5602
    %5656 = vmatprep.subr.bf16.mxu0 %v5607
    %5657 = vmatpush1.bf16.msra.mxu0 %v5606
    %5658 = vmatprep.subr.bf16.mxu0 0
    %5659 = vmatpush1.bf16.msra.mxu0 0
    %5660 = vmatprep.subr.bf16.mxu0 0
    %5661 = vmatpush1.bf16.msra.mxu0 0
    %5662 = vmatprep.subr.bf16.mxu0 0
    %5663 = vmatpush1.bf16.msra.mxu0 0
    %5664 = vmatprep.subr.bf16.mxu0 0
    %5665 = vmatpush1.bf16.msra.mxu0 0
    %5666 = vmatprep.subr.bf16.mxu0 0
    %5667 = vmatpush1.bf16.msra.mxu0 0
    %5668 = vmatprep.subr.bf16.mxu0 0
    %5669 = vmatpush1.bf16.msra.mxu0 0
    %5670 = vmatprep.subr.bf16.mxu0 0
    %5671 = vmatpush1.bf16.msra.mxu0 0
    %5672 = vmatprep.subr.bf16.mxu0 0
    %5673 = vmatpush1.bf16.msra.mxu0 0
    %5674 = vmatprep.mubr.bf16.mxu0 0
    %5675 = vmatmul.mubr.bf16.gmra.mrb[0].mxu0 %v5449
    %v5676 = vpop.f32.mrb[0].mxu0
    %v5677 = vadd.f32 0.0, %v5676
    %v5678 = vpop.f32.mrb[0].mxu0
    %v5679 = vadd.f32 0.0, %v5678
    %v5680 = vpop.f32.mrb[0].mxu0
    %v5681 = vpop.f32.mrb[0].mxu0
    %5682 = vdwg.mxu0
    %5683 = vmatprep.subr.bf16.mxu0 %v5581
    %5684 = vmatpush1.bf16.msra.mxu0 %v5580
    %5685 = vmatprep.subr.bf16.mxu0 %v5585
    %5686 = vmatpush1.bf16.msra.mxu0 %v5584
    %5687 = vmatprep.subr.bf16.mxu0 %v5589
    %5688 = vmatpush1.bf16.msra.mxu0 %v5588
    %5689 = vmatprep.subr.bf16.mxu0 %v5593
    %5690 = vmatpush1.bf16.msra.mxu0 %v5592
    %5691 = vmatprep.subr.bf16.mxu0 %v5597
    %5692 = vmatpush1.bf16.msra.mxu0 %v5596
    %5693 = vmatprep.subr.bf16.mxu0 %v5601
    %5694 = vmatpush1.bf16.msra.mxu0 %v5600
    %5695 = vmatprep.subr.bf16.mxu0 %v5605
    %5696 = vmatpush1.bf16.msra.mxu0 %v5604
    %5697 = vmatprep.subr.bf16.mxu0 %v5609
    %5698 = vmatpush1.bf16.msra.mxu0 %v5608
    %5699 = vmatprep.subr.bf16.mxu0 0
    %5700 = vmatpush1.bf16.msra.mxu0 0
    %5701 = vmatprep.subr.bf16.mxu0 0
    %5702 = vmatpush1.bf16.msra.mxu0 0
    %5703 = vmatprep.subr.bf16.mxu0 0
    %5704 = vmatpush1.bf16.msra.mxu0 0
    %5705 = vmatprep.subr.bf16.mxu0 0
    %5706 = vmatpush1.bf16.msra.mxu0 0
    %5707 = vmatprep.subr.bf16.mxu0 0
    %5708 = vmatpush1.bf16.msra.mxu0 0
    %5709 = vmatprep.subr.bf16.mxu0 0
    %5710 = vmatpush1.bf16.msra.mxu0 0
    %5711 = vmatprep.subr.bf16.mxu0 0
    %5712 = vmatpush1.bf16.msra.mxu0 0
    %5713 = vmatprep.subr.bf16.mxu0 0
    %5714 = vmatpush1.bf16.msra.mxu0 0
    %5715 = vmatprep.mubr.bf16.mxu0 0
    %5716 = vmatmul.mubr.bf16.gmra.mrb[0].mxu0 %v5449
    %v5717 = vpop.f32.mrb[0].mxu0
    %v5718 = vadd.f32 0.0, %v5717
    %v5719 = vpop.f32.mrb[0].mxu0
    %v5720 = vadd.f32 0.0, %v5719
    %v5721 = vpop.f32.mrb[0].mxu0
    %v5722 = vpop.f32.mrb[0].mxu0
    %5723 = vdwg.mxu0
    %v5724 = vadd.f32 %v5445, %v5677
    %v5725 = vadd.f32 %v5446, %v5679
    %v5726 = vadd.f32 %v5447, %v5718
    %v5727 = vadd.f32 %v5448, %v5720
    %v5728 = vxor.u32 %v5724, 2147483648
    %v5729 = vmul.f32 %v5728, 1.442695
    %v5730 = vpow.pop %v5729
    %v5731 = vadd.f32 %v5730, 1.0
    %v5732 = vrcp.pop %v5731
    %v5733 = vmul.f32 1.0, %v5732
    %v5734 = vxor.u32 %v5725, 2147483648
    %v5735 = vmul.f32 %v5734, 1.442695
    %v5736 = vpow.pop %v5735
    %v5737 = vadd.f32 %v5736, 1.0
    %v5738 = vrcp.pop %v5737
    %v5739 = vmul.f32 1.0, %v5738
    %v5740 = vtanh.pop %v5726
    %v5741 = vxor.u32 %v5727, 2147483648
    %v5742 = vmul.f32 %v5741, 1.442695
    %v5743 = vpow.pop %v5742
    %v5744 = vadd.f32 %v5743, 1.0
    %v5745 = vrcp.pop %v5744
    %v5746 = vmul.f32 1.0, %v5745
    %v5747 = vmul.f32 %v5739, %v5444
    %v5748 = vmul.f32 %v5733, %v5740
    %v5749 = vadd.f32 %v5747, %v5748
    %v5750 = vtanh.pop %v5749
    %v5751 = vmul.f32 %v5746, %v5750
    %5752 = vst [vmem:[#allocation4] sm:$0xff] %v5751
    %5753 = vst [vmem:[#allocation5] sm:$0xff] %v5749
    %5754 = vst [vmem:[#allocation2 + $0x30] sm:$0xff] %v5751
    %v5755 = vld [vmem:[#allocation4] sm:$0xff]
    %v5756 = vld [vmem:[#allocation5] sm:$0xff]
    %v5757 = vld [vmem:[#allocation3 + $0xe0] sm:$0xff]
    %v5758 = vld [vmem:[#allocation3 + $0xe8] sm:$0xff]
    %v5759 = vld [vmem:[#allocation3 + $0xf0] sm:$0xff]
    %v5760 = vld [vmem:[#allocation3 + $0xf8] sm:$0xff]
    %v5761 = vpack.c.bf16 %v5755, %v5755
    %v5762 = vld [vmem:[#allocation14] sm:$0xff]
    %v5763 = vld [vmem:[#allocation14 + $0x8] sm:$0xff]
    %v5764 = vld [vmem:[#allocation14 + $0x10] sm:$0xff]
    %v5765 = vld [vmem:[#allocation14 + $0x18] sm:$0xff]
    %v5766 = vld [vmem:[#allocation14 + $0x20] sm:$0xff]
    %v5767 = vld [vmem:[#allocation14 + $0x28] sm:$0xff]
    %v5768 = vld [vmem:[#allocation14 + $0x30] sm:$0xff]
    %v5769 = vld [vmem:[#allocation14 + $0x38] sm:$0xff]
    %v5770 = vld [vmem:[#allocation14 + $0x40] sm:$0xff]
    %v5771 = vld [vmem:[#allocation14 + $0x48] sm:$0xff]
    %v5772 = vld [vmem:[#allocation14 + $0x50] sm:$0xff]
    %v5773 = vld [vmem:[#allocation14 + $0x58] sm:$0xff]
    %v5774 = vld [vmem:[#allocation14 + $0x60] sm:$0xff]
    %v5775 = vld [vmem:[#allocation14 + $0x68] sm:$0xff]
    %v5776 = vld [vmem:[#allocation14 + $0x70] sm:$0xff]
    %v5777 = vld [vmem:[#allocation14 + $0x78] sm:$0xff]
    %v5778 = vld [vmem:[#allocation14 + $0x80] sm:$0xff]
    %v5779 = vld [vmem:[#allocation14 + $0x88] sm:$0xff]
    %v5780 = vld [vmem:[#allocation14 + $0x90] sm:$0xff]
    %v5781 = vld [vmem:[#allocation14 + $0x98] sm:$0xff]
    %v5782 = vld [vmem:[#allocation14 + $0xa0] sm:$0xff]
    %v5783 = vld [vmem:[#allocation14 + $0xa8] sm:$0xff]
    %v5784 = vld [vmem:[#allocation14 + $0xb0] sm:$0xff]
    %v5785 = vld [vmem:[#allocation14 + $0xb8] sm:$0xff]
    %v5786 = vld [vmem:[#allocation14 + $0xc0] sm:$0xff]
    %v5787 = vld [vmem:[#allocation14 + $0xc8] sm:$0xff]
    %v5788 = vld [vmem:[#allocation14 + $0xd0] sm:$0xff]
    %v5789 = vld [vmem:[#allocation14 + $0xd8] sm:$0xff]
    %v5790 = vld [vmem:[#allocation14 + $0xe0] sm:$0xff]
    %v5791 = vld [vmem:[#allocation14 + $0xe8] sm:$0xff]
    %v5792 = vld [vmem:[#allocation14 + $0xf0] sm:$0xff]
    %v5793 = vld [vmem:[#allocation14 + $0xf8] sm:$0xff]
    %v5826 = vunpack.c.l.b16 %v5762
    %v5827 = vunpack.c.h.b16 %v5762
    %v5828 = vunpack.c.l.b16 %v5763
    %v5829 = vunpack.c.h.b16 %v5763
    %v5830 = vunpack.c.l.b16 %v5764
    %v5831 = vunpack.c.h.b16 %v5764
    %v5832 = vunpack.c.l.b16 %v5765
    %v5833 = vunpack.c.h.b16 %v5765
    %v5834 = vunpack.c.l.b16 %v5766
    %v5835 = vunpack.c.h.b16 %v5766
    %v5836 = vunpack.c.l.b16 %v5767
    %v5837 = vunpack.c.h.b16 %v5767
    %v5838 = vunpack.c.l.b16 %v5768
    %v5839 = vunpack.c.h.b16 %v5768
    %v5840 = vunpack.c.l.b16 %v5769
    %v5841 = vunpack.c.h.b16 %v5769
    %v5842 = vunpack.c.l.b16 %v5770
    %v5843 = vunpack.c.h.b16 %v5770
    %v5844 = vunpack.c.l.b16 %v5771
    %v5845 = vunpack.c.h.b16 %v5771
    %v5846 = vunpack.c.l.b16 %v5772
    %v5847 = vunpack.c.h.b16 %v5772
    %v5848 = vunpack.c.l.b16 %v5773
    %v5849 = vunpack.c.h.b16 %v5773
    %v5850 = vunpack.c.l.b16 %v5774
    %v5851 = vunpack.c.h.b16 %v5774
    %v5852 = vunpack.c.l.b16 %v5775
    %v5853 = vunpack.c.h.b16 %v5775
    %v5854 = vunpack.c.l.b16 %v5776
    %v5855 = vunpack.c.h.b16 %v5776
    %v5856 = vunpack.c.l.b16 %v5777
    %v5857 = vunpack.c.h.b16 %v5777
    %v5858 = vunpack.c.l.b16 %v5778
    %v5859 = vunpack.c.h.b16 %v5778
    %v5860 = vunpack.c.l.b16 %v5779
    %v5861 = vunpack.c.h.b16 %v5779
    %v5862 = vunpack.c.l.b16 %v5780
    %v5863 = vunpack.c.h.b16 %v5780
    %v5864 = vunpack.c.l.b16 %v5781
    %v5865 = vunpack.c.h.b16 %v5781
    %v5866 = vunpack.c.l.b16 %v5782
    %v5867 = vunpack.c.h.b16 %v5782
    %v5868 = vunpack.c.l.b16 %v5783
    %v5869 = vunpack.c.h.b16 %v5783
    %v5870 = vunpack.c.l.b16 %v5784
    %v5871 = vunpack.c.h.b16 %v5784
    %v5872 = vunpack.c.l.b16 %v5785
    %v5873 = vunpack.c.h.b16 %v5785
    %v5874 = vunpack.c.l.b16 %v5786
    %v5875 = vunpack.c.h.b16 %v5786
    %v5876 = vunpack.c.l.b16 %v5787
    %v5877 = vunpack.c.h.b16 %v5787
    %v5878 = vunpack.c.l.b16 %v5788
    %v5879 = vunpack.c.h.b16 %v5788
    %v5880 = vunpack.c.l.b16 %v5789
    %v5881 = vunpack.c.h.b16 %v5789
    %v5882 = vunpack.c.l.b16 %v5790
    %v5883 = vunpack.c.h.b16 %v5790
    %v5884 = vunpack.c.l.b16 %v5791
    %v5885 = vunpack.c.h.b16 %v5791
    %v5886 = vunpack.c.l.b16 %v5792
    %v5887 = vunpack.c.h.b16 %v5792
    %v5888 = vunpack.c.l.b16 %v5793
    %v5889 = vunpack.c.h.b16 %v5793
    %v5890 = vpack.c.b16 %v5830, %v5826
    %v5891 = vpack.c.b16 %v5831, %v5827
    %v5892 = vpack.c.b16 %v5832, %v5828
    %v5893 = vpack.c.b16 %v5833, %v5829
    %v5894 = vpack.c.b16 %v5838, %v5834
    %v5895 = vpack.c.b16 %v5839, %v5835
    %v5896 = vpack.c.b16 %v5840, %v5836
    %v5897 = vpack.c.b16 %v5841, %v5837
    %v5898 = vpack.c.b16 %v5846, %v5842
    %v5899 = vpack.c.b16 %v5847, %v5843
    %v5900 = vpack.c.b16 %v5848, %v5844
    %v5901 = vpack.c.b16 %v5849, %v5845
    %v5902 = vpack.c.b16 %v5854, %v5850
    %v5903 = vpack.c.b16 %v5855, %v5851
    %v5904 = vpack.c.b16 %v5856, %v5852
    %v5905 = vpack.c.b16 %v5857, %v5853
    %v5906 = vpack.c.b16 %v5862, %v5858
    %v5907 = vpack.c.b16 %v5863, %v5859
    %v5908 = vpack.c.b16 %v5864, %v5860
    %v5909 = vpack.c.b16 %v5865, %v5861
    %v5910 = vpack.c.b16 %v5870, %v5866
    %v5911 = vpack.c.b16 %v5871, %v5867
    %v5912 = vpack.c.b16 %v5872, %v5868
    %v5913 = vpack.c.b16 %v5873, %v5869
    %v5914 = vpack.c.b16 %v5878, %v5874
    %v5915 = vpack.c.b16 %v5879, %v5875
    %v5916 = vpack.c.b16 %v5880, %v5876
    %v5917 = vpack.c.b16 %v5881, %v5877
    %v5918 = vpack.c.b16 %v5886, %v5882
    %v5919 = vpack.c.b16 %v5887, %v5883
    %v5920 = vpack.c.b16 %v5888, %v5884
    %v5921 = vpack.c.b16 %v5889, %v5885
    %5954 = vmatprep.subr.bf16.mxu0 %v5891
    %5955 = vmatpush1.bf16.msra.mxu0 %v5890
    %5956 = vmatprep.subr.bf16.mxu0 %v5895
    %5957 = vmatpush1.bf16.msra.mxu0 %v5894
    %5958 = vmatprep.subr.bf16.mxu0 %v5899
    %5959 = vmatpush1.bf16.msra.mxu0 %v5898
    %5960 = vmatprep.subr.bf16.mxu0 %v5903
    %5961 = vmatpush1.bf16.msra.mxu0 %v5902
    %5962 = vmatprep.subr.bf16.mxu0 %v5907
    %5963 = vmatpush1.bf16.msra.mxu0 %v5906
    %5964 = vmatprep.subr.bf16.mxu0 %v5911
    %5965 = vmatpush1.bf16.msra.mxu0 %v5910
    %5966 = vmatprep.subr.bf16.mxu0 %v5915
    %5967 = vmatpush1.bf16.msra.mxu0 %v5914
    %5968 = vmatprep.subr.bf16.mxu0 %v5919
    %5969 = vmatpush1.bf16.msra.mxu0 %v5918
    %5970 = vmatprep.subr.bf16.mxu0 0
    %5971 = vmatpush1.bf16.msra.mxu0 0
    %5972 = vmatprep.subr.bf16.mxu0 0
    %5973 = vmatpush1.bf16.msra.mxu0 0
    %5974 = vmatprep.subr.bf16.mxu0 0
    %5975 = vmatpush1.bf16.msra.mxu0 0
    %5976 = vmatprep.subr.bf16.mxu0 0
    %5977 = vmatpush1.bf16.msra.mxu0 0
    %5978 = vmatprep.subr.bf16.mxu0 0
    %5979 = vmatpush1.bf16.msra.mxu0 0
    %5980 = vmatprep.subr.bf16.mxu0 0
    %5981 = vmatpush1.bf16.msra.mxu0 0
    %5982 = vmatprep.subr.bf16.mxu0 0
    %5983 = vmatpush1.bf16.msra.mxu0 0
    %5984 = vmatprep.subr.bf16.mxu0 0
    %5985 = vmatpush1.bf16.msra.mxu0 0
    %5986 = vmatprep.mubr.bf16.mxu0 0
    %5987 = vmatmul.mubr.bf16.gmra.mrb[0].mxu0 %v5761
    %v5988 = vpop.f32.mrb[0].mxu0
    %v5989 = vadd.f32 0.0, %v5988
    %v5990 = vpop.f32.mrb[0].mxu0
    %v5991 = vadd.f32 0.0, %v5990
    %v5992 = vpop.f32.mrb[0].mxu0
    %v5993 = vpop.f32.mrb[0].mxu0
    %5994 = vdwg.mxu0
    %5995 = vmatprep.subr.bf16.mxu0 %v5893
    %5996 = vmatpush1.bf16.msra.mxu0 %v5892
    %5997 = vmatprep.subr.bf16.mxu0 %v5897
    %5998 = vmatpush1.bf16.msra.mxu0 %v5896
    %5999 = vmatprep.subr.bf16.mxu0 %v5901
    %6000 = vmatpush1.bf16.msra.mxu0 %v5900
    %6001 = vmatprep.subr.bf16.mxu0 %v5905
    %6002 = vmatpush1.bf16.msra.mxu0 %v5904
    %6003 = vmatprep.subr.bf16.mxu0 %v5909
    %6004 = vmatpush1.bf16.msra.mxu0 %v5908
    %6005 = vmatprep.subr.bf16.mxu0 %v5913
    %6006 = vmatpush1.bf16.msra.mxu0 %v5912
    %6007 = vmatprep.subr.bf16.mxu0 %v5917
    %6008 = vmatpush1.bf16.msra.mxu0 %v5916
    %6009 = vmatprep.subr.bf16.mxu0 %v5921
    %6010 = vmatpush1.bf16.msra.mxu0 %v5920
    %6011 = vmatprep.subr.bf16.mxu0 0
    %6012 = vmatpush1.bf16.msra.mxu0 0
    %6013 = vmatprep.subr.bf16.mxu0 0
    %6014 = vmatpush1.bf16.msra.mxu0 0
    %6015 = vmatprep.subr.bf16.mxu0 0
    %6016 = vmatpush1.bf16.msra.mxu0 0
    %6017 = vmatprep.subr.bf16.mxu0 0
    %6018 = vmatpush1.bf16.msra.mxu0 0
    %6019 = vmatprep.subr.bf16.mxu0 0
    %6020 = vmatpush1.bf16.msra.mxu0 0
    %6021 = vmatprep.subr.bf16.mxu0 0
    %6022 = vmatpush1.bf16.msra.mxu0 0
    %6023 = vmatprep.subr.bf16.mxu0 0
    %6024 = vmatpush1.bf16.msra.mxu0 0
    %6025 = vmatprep.subr.bf16.mxu0 0
    %6026 = vmatpush1.bf16.msra.mxu0 0
    %6027 = vmatprep.mubr.bf16.mxu0 0
    %6028 = vmatmul.mubr.bf16.gmra.mrb[0].mxu0 %v5761
    %v6029 = vpop.f32.mrb[0].mxu0
    %v6030 = vadd.f32 0.0, %v6029
    %v6031 = vpop.f32.mrb[0].mxu0
    %v6032 = vadd.f32 0.0, %v6031
    %v6033 = vpop.f32.mrb[0].mxu0
    %v6034 = vpop.f32.mrb[0].mxu0
    %6035 = vdwg.mxu0
    %v6036 = vadd.f32 %v5757, %v5989
    %v6037 = vadd.f32 %v5758, %v5991
    %v6038 = vadd.f32 %v5759, %v6030
    %v6039 = vadd.f32 %v5760, %v6032
    %v6040 = vxor.u32 %v6036, 2147483648
    %v6041 = vmul.f32 %v6040, 1.442695
    %v6042 = vpow.pop %v6041
    %v6043 = vadd.f32 %v6042, 1.0
    %v6044 = vrcp.pop %v6043
    %v6045 = vmul.f32 1.0, %v6044
    %v6046 = vxor.u32 %v6037, 2147483648
    %v6047 = vmul.f32 %v6046, 1.442695
    %v6048 = vpow.pop %v6047
    %v6049 = vadd.f32 %v6048, 1.0
    %v6050 = vrcp.pop %v6049
    %v6051 = vmul.f32 1.0, %v6050
    %v6052 = vtanh.pop %v6038
    %v6053 = vxor.u32 %v6039, 2147483648
    %v6054 = vmul.f32 %v6053, 1.442695
    %v6055 = vpow.pop %v6054
    %v6056 = vadd.f32 %v6055, 1.0
    %v6057 = vrcp.pop %v6056
    %v6058 = vmul.f32 1.0, %v6057
    %v6059 = vmul.f32 %v6051, %v5756
    %v6060 = vmul.f32 %v6045, %v6052
    %v6061 = vadd.f32 %v6059, %v6060
    %v6062 = vtanh.pop %v6061
    %v6063 = vmul.f32 %v6058, %v6062
    %6064 = vst [vmem:[#allocation4] sm:$0xff] %v6063
    %6065 = vst [vmem:[#allocation5] sm:$0xff] %v6061
    %6066 = vst [vmem:[#allocation2 + $0x38] sm:$0xff] %v6063
    %v6067 = vld [vmem:[#allocation4] sm:$0xff]
    %s6068 = scalar_lea.vmem [#allocation18], 8
    %6069 = vst [vmem:[%s6068] sm:$0xff] %v6067
    %v6070 = vld [vmem:[#allocation5] sm:$0xff]
    %s6071 = scalar_lea.vmem [#allocation20], 8
    %6072 = vst [vmem:[%s6071] sm:$0xff] %v6070
    %v6073 = vld [vmem:[#allocation2] sm:$0xff]
    %v6074 = vld [vmem:[#allocation2 + $0x8] sm:$0xff]
    %v6075 = vld [vmem:[#allocation2 + $0x10] sm:$0xff]
    %v6076 = vld [vmem:[#allocation2 + $0x18] sm:$0xff]
    %v6077 = vld [vmem:[#allocation2 + $0x20] sm:$0xff]
    %v6078 = vld [vmem:[#allocation2 + $0x28] sm:$0xff]
    %v6079 = vld [vmem:[#allocation2 + $0x30] sm:$0xff]
    %v6080 = vld [vmem:[#allocation2 + $0x38] sm:$0xff]
    %v6081 = vpack.c.bf16 %v6074, %v6073
    %v6082 = vpack.c.bf16 %v6076, %v6075
    %v6083 = vpack.c.bf16 %v6078, %v6077
    %v6084 = vpack.c.bf16 %v6080, %v6079
    %v6085 = vld [vmem:[#allocation15] sm:$0xf]
    %v6086 = vld [vmem:[#allocation15 + $0x4] sm:$0xf]
    %v6087 = vld [vmem:[#allocation15 + $0x8] sm:$0xf]
    %v6088 = vld [vmem:[#allocation15 + $0xc] sm:$0xf]
    %v6089 = vld [vmem:[#allocation15 + $0x10] sm:$0xf]
    %v6090 = vld [vmem:[#allocation15 + $0x14] sm:$0xf]
    %v6091 = vld [vmem:[#allocation15 + $0x18] sm:$0xf]
    %v6092 = vld [vmem:[#allocation15 + $0x1c] sm:$0xf]
    %v6093 = vld [vmem:[#allocation15 + $0x20] sm:$0xf]
    %v6094 = vld [vmem:[#allocation15 + $0x24] sm:$0xf]
    %v6095 = vld [vmem:[#allocation15 + $0x28] sm:$0xf]
    %v6096 = vld [vmem:[#allocation15 + $0x2c] sm:$0xf]
    %v6097 = vld [vmem:[#allocation15 + $0x30] sm:$0xf]
    %v6098 = vld [vmem:[#allocation15 + $0x34] sm:$0xf]
    %v6099 = vld [vmem:[#allocation15 + $0x38] sm:$0xf]
    %v6100 = vld [vmem:[#allocation15 + $0x3c] sm:$0xf]
    %v6101 = vld [vmem:[%s10] sm:$0x1]
    %v6103 = vlaneseq
    %v6104 = vshrl.u32 %v6103, 7
    %v6105 = vsub.s32 0, %v6104
    %v6106 = vrot.slane %v6101, %v6105
    %v6124 = vunpack.c.l.b16 %v6085
    %v6125 = vunpack.c.l.b16 %v6086
    %v6126 = vunpack.c.l.b16 %v6087
    %v6127 = vunpack.c.l.b16 %v6088
    %v6128 = vunpack.c.l.b16 %v6089
    %v6129 = vunpack.c.l.b16 %v6090
    %v6130 = vunpack.c.l.b16 %v6091
    %v6131 = vunpack.c.l.b16 %v6092
    %v6132 = vunpack.c.l.b16 %v6093
    %v6133 = vunpack.c.l.b16 %v6094
    %v6134 = vunpack.c.l.b16 %v6095
    %v6135 = vunpack.c.l.b16 %v6096
    %v6136 = vunpack.c.l.b16 %v6097
    %v6137 = vunpack.c.l.b16 %v6098
    %v6138 = vunpack.c.l.b16 %v6099
    %v6139 = vunpack.c.l.b16 %v6100
    %v6140 = vpack.c.b16 %v6125, %v6124
    %v6141 = vpack.c.b16 %v6127, %v6126
    %v6142 = vpack.c.b16 %v6129, %v6128
    %v6143 = vpack.c.b16 %v6131, %v6130
    %v6144 = vpack.c.b16 %v6133, %v6132
    %v6145 = vpack.c.b16 %v6135, %v6134
    %v6146 = vpack.c.b16 %v6137, %v6136
    %v6147 = vpack.c.b16 %v6139, %v6138
    %6156 = vmatprep.subr.bf16.mxu0 0
    %6157 = vmatpush1.bf16.msra.mxu0 %v6140
    %6158 = vmatprep.subr.bf16.mxu0 0
    %6159 = vmatpush1.bf16.msra.mxu0 %v6141
    %6160 = vmatprep.subr.bf16.mxu0 0
    %6161 = vmatpush1.bf16.msra.mxu0 %v6142
    %6162 = vmatprep.subr.bf16.mxu0 0
    %6163 = vmatpush1.bf16.msra.mxu0 %v6143
    %6164 = vmatprep.subr.bf16.mxu0 0
    %6165 = vmatpush1.bf16.msra.mxu0 %v6144
    %6166 = vmatprep.subr.bf16.mxu0 0
    %6167 = vmatpush1.bf16.msra.mxu0 %v6145
    %6168 = vmatprep.subr.bf16.mxu0 0
    %6169 = vmatpush1.bf16.msra.mxu0 %v6146
    %6170 = vmatprep.subr.bf16.mxu0 0
    %6171 = vmatpush1.bf16.msra.mxu0 %v6147
    %6172 = vmatprep.subr.bf16.mxu0 0
    %6173 = vmatpush1.bf16.msra.mxu0 0
    %6174 = vmatprep.subr.bf16.mxu0 0
    %6175 = vmatpush1.bf16.msra.mxu0 0
    %6176 = vmatprep.subr.bf16.mxu0 0
    %6177 = vmatpush1.bf16.msra.mxu0 0
    %6178 = vmatprep.subr.bf16.mxu0 0
    %6179 = vmatpush1.bf16.msra.mxu0 0
    %6180 = vmatprep.subr.bf16.mxu0 0
    %6181 = vmatpush1.bf16.msra.mxu0 0
    %6182 = vmatprep.subr.bf16.mxu0 0
    %6183 = vmatpush1.bf16.msra.mxu0 0
    %6184 = vmatprep.subr.bf16.mxu0 0
    %6185 = vmatpush1.bf16.msra.mxu0 0
    %6186 = vmatprep.subr.bf16.mxu0 0
    %6187 = vmatpush1.bf16.msra.mxu0 0
    %6188 = vmatprep.mubr.bf16.mxu0 0
    %6189 = vmatmul.mubr.bf16.gmra.mrb[0].mxu0 %v6081
    %v6190 = vpop.f32.mrb[0].mxu0
    %v6191 = vadd.f32 %v6106, %v6190
    %v6192 = vpop.f32.mrb[0].mxu0
    %v6193 = vpop.f32.mrb[0].mxu0
    %v6194 = vadd.f32 %v6106, %v6193
    %v6195 = vpop.f32.mrb[0].mxu0
    %6196 = vmatprep.mubr.bf16.mxu0 0
    %6197 = vmatmul.mubr.bf16.gmra.mrb[0].mxu0 %v6082
    %v6198 = vpop.f32.mrb[0].mxu0
    %v6199 = vadd.f32 %v6106, %v6198
    %v6200 = vpop.f32.mrb[0].mxu0
    %v6201 = vpop.f32.mrb[0].mxu0
    %v6202 = vadd.f32 %v6106, %v6201
    %v6203 = vpop.f32.mrb[0].mxu0
    %6204 = vmatprep.mubr.bf16.mxu0 0
    %6205 = vmatmul.mubr.bf16.gmra.mrb[0].mxu0 %v6083
    %v6206 = vpop.f32.mrb[0].mxu0
    %v6207 = vadd.f32 %v6106, %v6206
    %v6208 = vpop.f32.mrb[0].mxu0
    %v6209 = vpop.f32.mrb[0].mxu0
    %v6210 = vadd.f32 %v6106, %v6209
    %v6211 = vpop.f32.mrb[0].mxu0
    %6212 = vmatprep.mubr.bf16.mxu0 0
    %6213 = vmatmul.mubr.bf16.gmra.mrb[0].mxu0 %v6084
    %v6214 = vpop.f32.mrb[0].mxu0
    %v6215 = vadd.f32 %v6106, %v6214
    %v6216 = vpop.f32.mrb[0].mxu0
    %v6217 = vpop.f32.mrb[0].mxu0
    %v6218 = vadd.f32 %v6106, %v6217
    %v6219 = vpop.f32.mrb[0].mxu0
    %6220 = vdwg.mxu0
    %v6221 = vld [vmem:[%s11] sm:$0x1]
    %v6222 = vld [vmem:[%s12] sm:$0x1]
    %6223 = vadd.xlane.f32.xlu0 %v6191
    %v6224 = vpop.xlane.xlu0 %6223
    %6225 = vadd.xlane.f32.xlu0 %v6194
    %v6226 = vpop.xlane.xlu0 %6225
    %6227 = vadd.xlane.f32.xlu0 %v6199
    %v6228 = vpop.xlane.xlu0 %6227
    %6229 = vadd.xlane.f32.xlu0 %v6202
    %v6230 = vpop.xlane.xlu0 %6229
    %6231 = vadd.xlane.f32.xlu0 %v6207
    %v6232 = vpop.xlane.xlu0 %6231
    %6233 = vadd.xlane.f32.xlu0 %v6210
    %v6234 = vpop.xlane.xlu0 %6233
    %6235 = vadd.xlane.f32.xlu0 %v6215
    %v6236 = vpop.xlane.xlu0 %6235
    %6237 = vadd.xlane.f32.xlu0 %v6218
    %v6238 = vpop.xlane.xlu0 %6237
    %v6239 = vmul.f32 %v6224, %v166
    %v6240 = vmul.f32 %v6226, %v166
    %v6241 = vmul.f32 %v6228, %v166
    %v6242 = vmul.f32 %v6230, %v166
    %v6243 = vmul.f32 %v6232, %v166
    %v6244 = vmul.f32 %v6234, %v166
    %v6245 = vmul.f32 %v6236, %v166
    %v6246 = vmul.f32 %v6238, %v166
    %v6247 = vsub.f32 %v6191, %v6239
    %v6248 = vsub.f32 %v6194, %v6240
    %v6249 = vsub.f32 %v6199, %v6241
    %v6250 = vsub.f32 %v6202, %v6242
    %v6251 = vsub.f32 %v6207, %v6243
    %v6252 = vsub.f32 %v6210, %v6244
    %v6253 = vsub.f32 %v6215, %v6245
    %v6254 = vsub.f32 %v6218, %v6246
    %v6255 = vmul.f32 %v6247, %v6247
    %v6256 = vmul.f32 %v6248, %v6248
    %v6257 = vmul.f32 %v6249, %v6249
    %v6258 = vmul.f32 %v6250, %v6250
    %v6259 = vmul.f32 %v6251, %v6251
    %v6260 = vmul.f32 %v6252, %v6252
    %v6261 = vmul.f32 %v6253, %v6253
    %v6262 = vmul.f32 %v6254, %v6254
    %6263 = vadd.xlane.f32.xlu0 %v6255
    %v6264 = vpop.xlane.xlu0 %6263
    %6265 = vadd.xlane.f32.xlu0 %v6256
    %v6266 = vpop.xlane.xlu0 %6265
    %6267 = vadd.xlane.f32.xlu0 %v6257
    %v6268 = vpop.xlane.xlu0 %6267
    %6269 = vadd.xlane.f32.xlu0 %v6258
    %v6270 = vpop.xlane.xlu0 %6269
    %6271 = vadd.xlane.f32.xlu0 %v6259
    %v6272 = vpop.xlane.xlu0 %6271
    %6273 = vadd.xlane.f32.xlu0 %v6260
    %v6274 = vpop.xlane.xlu0 %6273
    %6275 = vadd.xlane.f32.xlu0 %v6261
    %v6276 = vpop.xlane.xlu0 %6275
    %6277 = vadd.xlane.f32.xlu0 %v6262
    %v6278 = vpop.xlane.xlu0 %6277
    %v6279 = vmul.f32 %v6264, %v166
    %v6280 = vmul.f32 %v6266, %v166
    %v6281 = vmul.f32 %v6268, %v166
    %v6282 = vmul.f32 %v6270, %v166
    %v6283 = vmul.f32 %v6272, %v166
    %v6284 = vmul.f32 %v6274, %v166
    %v6285 = vmul.f32 %v6276, %v166
    %v6286 = vmul.f32 %v6278, %v166
    %v6287 = vadd.f32 %v6279, 1e-05
    %v6288 = vadd.f32 %v6280, 1e-05
    %v6289 = vadd.f32 %v6281, 1e-05
    %v6290 = vadd.f32 %v6282, 1e-05
    %v6291 = vadd.f32 %v6283, 1e-05
    %v6292 = vadd.f32 %v6284, 1e-05
    %v6293 = vadd.f32 %v6285, 1e-05
    %v6294 = vadd.f32 %v6286, 1e-05
    %v6295 = vrsqrt.pop %v6287
    %v6296 = vrsqrt.pop %v6288
    %v6297 = vrsqrt.pop %v6289
    %v6298 = vrsqrt.pop %v6290
    %v6299 = vrsqrt.pop %v6291
    %v6300 = vrsqrt.pop %v6292
    %v6301 = vrsqrt.pop %v6293
    %v6302 = vrsqrt.pop %v6294
    %v6303 = vmul.f32 %v6247, %v6295
    %v6304 = vmul.f32 %v6248, %v6296
    %v6305 = vmul.f32 %v6249, %v6297
    %v6306 = vmul.f32 %v6250, %v6298
    %v6307 = vmul.f32 %v6251, %v6299
    %v6308 = vmul.f32 %v6252, %v6300
    %v6309 = vmul.f32 %v6253, %v6301
    %v6310 = vmul.f32 %v6254, %v6302
    %v6312 = vlaneseq
    %v6313 = vshrl.u32 %v6312, 7
    %v6314 = vsub.s32 0, %v6313
    %v6315 = vrot.slane %v6221, %v6314
    %v6317 = vmul.f32 %v6303, %v6315
    %v6318 = vmul.f32 %v6304, %v6315
    %v6319 = vmul.f32 %v6305, %v6315
    %v6320 = vmul.f32 %v6306, %v6315
    %v6321 = vmul.f32 %v6307, %v6315
    %v6322 = vmul.f32 %v6308, %v6315
    %v6323 = vmul.f32 %v6309, %v6315
    %v6324 = vmul.f32 %v6310, %v6315
    %v6326 = vlaneseq
    %v6327 = vshrl.u32 %v6326, 7
    %v6328 = vsub.s32 0, %v6327
    %v6329 = vrot.slane %v6222, %v6328
    %v6331 = vadd.f32 %v6317, %v6329
    %v6332 = vadd.f32 %v6318, %v6329
    %v6333 = vadd.f32 %v6319, %v6329
    %v6334 = vadd.f32 %v6320, %v6329
    %v6335 = vadd.f32 %v6321, %v6329
    %v6336 = vadd.f32 %v6322, %v6329
    %v6337 = vadd.f32 %v6323, %v6329
    %v6338 = vadd.f32 %v6324, %v6329
    %6339 = vst [vmem:[#allocation17] sm:$0xff] %v6331
    %6340 = vst [vmem:[#allocation17 + $0x8] sm:$0xff] %v6332
    %6341 = vst [vmem:[#allocation17 + $0x10] sm:$0xff] %v6333
    %6342 = vst [vmem:[#allocation17 + $0x18] sm:$0xff] %v6334
    %6343 = vst [vmem:[#allocation17 + $0x20] sm:$0xff] %v6335
    %6344 = vst [vmem:[#allocation17 + $0x28] sm:$0xff] %v6336
    %6345 = vst [vmem:[#allocation17 + $0x30] sm:$0xff] %v6337
    %6346 = vst [vmem:[#allocation17 + $0x38] sm:$0xff] %v6338
    // Predicated region
    $region78: #{tpu_custom_call.1} parent=1 // pred_check
      _
    $region79: #{tpu_custom_call.1} parent=1 // pred_check_branch
      %6348 = sbr.rel (0) target = $region81
    $region80: #{tpu_custom_call.1} parent=1 // pred_region
      %s6350 = ssub.s32 1024, 1024
      %6351 = vsyncadd [#allocation8], %s6350
      %s6352 = sshll.u32 [#allocation17], 4
      %s6353 = int_to_ptr.vmem [resolvable:$true] %s6352
      %6358 = dma.vmem_to_hbm [thread:$0]  %s6353, 1024, %s13, [#allocation8], 128, 128, 8
    $region81: #{tpu_custom_call.1} parent=1 // pred_fallthru
      _
    // Predicated region
    $region82: #{tpu_custom_call.1} parent=1 // pred_check
      _
    $region83: #{tpu_custom_call.1} parent=1 // pred_check_branch
      %6360 = sbr.rel (0) target = $region85
    $region84: #{tpu_custom_call.1} parent=1 // pred_region
      %s6362 = ssub.s32 256, 256
      %6363 = vsyncadd [#allocation19], %s6362
      %s6364 = sshll.u32 [#allocation18], 4
      %s6365 = int_to_ptr.vmem [resolvable:$true] %s6364
      %6370 = dma.vmem_to_hbm [thread:$0]  %s6365, 256, %s14, [#allocation19], 128, 128, 8
    $region85: #{tpu_custom_call.1} parent=1 // pred_fallthru
      _
    // Predicated region
    $region86: #{tpu_custom_call.1} parent=1 // pred_check
      _
    $region87: #{tpu_custom_call.1} parent=1 // pred_check_branch
      %6372 = sbr.rel (0) target = $region89
    $region88: #{tpu_custom_call.1} parent=1 // pred_region
      %s6374 = ssub.s32 256, 256
      %6375 = vsyncadd [#allocation19], %s6374
      %s6376 = sshll.u32 [#allocation20], 4
      %s6377 = int_to_ptr.vmem [resolvable:$true] %s6376
      %6382 = dma.vmem_to_hbm [thread:$0]  %s6377, 256, %s15, [#allocation19], 128, 128, 8
    $region89: #{tpu_custom_call.1} parent=1 // pred_fallthru
      _
    // Predicated region
    $region90: #{tpu_custom_call.1} parent=1 // pred_check
      _
    $region91: #{tpu_custom_call.1} parent=1 // pred_check_branch
      %6384 = sbr.rel (0) target = $region93
    $region92: #{tpu_custom_call.1} parent=1 // pred_region
      %6385 = dma.done [#allocation8], 1024
    $region93: #{tpu_custom_call.1} parent=1 // pred_fallthru
      _
    // Predicated region
    $region94: #{tpu_custom_call.1} parent=1 // pred_check
      _
    $region95: #{tpu_custom_call.1} parent=1 // pred_check_branch
      %6387 = sbr.rel (0) target = $region97
    $region96: #{tpu_custom_call.1} parent=1 // pred_region
      %6388 = dma.done [#allocation19], 256
    $region97: #{tpu_custom_call.1} parent=1 // pred_fallthru
      _
    // Predicated region
    $region98: #{tpu_custom_call.1} parent=1 // pred_check
      _
    $region99: #{tpu_custom_call.1} parent=1 // pred_check_branch
      %6390 = sbr.rel (0) target = $region101
    $region100: #{tpu_custom_call.1} parent=1 // pred_region
      %6391 = dma.done [#allocation19], 256
    $region101: #{tpu_custom_call.1} parent=1 // pred_fallthru
      _
    %6392 = vsyncpa [#allocation7], 1
    %6393 = vsyncpa [#allocation10], 1
    %6394 = vsyncpa [#allocation13], 1
    %6395 = vsyncpa [#allocation16], 1
    %6396 = vsyncpa [#allocation8], 1
    %6397 = vsyncpa [#allocation19], 1

</llo_original>
